<compile_context>
chip_gen: v5e
topology: v5e:2x2
jax: 0.10.0
libtpu: 0.0.40
codegen_flags: <defaults>
</compile_context>

<pallas_src>
import functools

import jax
import jax.numpy as jnp
from jax.experimental import pallas as pl
from jax.experimental.pallas import tpu as pltpu


# ----------------------------------------------------------------------------
# Pallas kernel: full-K matmul + bias + fused activation (single-shot epilogue)
# ----------------------------------------------------------------------------
def _mm_bias_act_kernel(a_ref, b_ref, bias_ref, o_ref, *, act):
    y = jnp.dot(a_ref[...], b_ref[...], preferred_element_type=jnp.float32)
    y = y + bias_ref[...]                     # (1, tn) broadcasts over (tm, tn)
    if act == "leaky":
        y = jnp.maximum(y, 0.2 * y)           # LeakyReLU(0.2)
    elif act == "tanh":
        y = jnp.tanh(y)
    o_ref[...] = y.astype(o_ref.dtype)


def _round_up(x, m):
    return ((x + m - 1) // m) * m


def _choose_tm(M):
    """Row-tile size: a multiple of 8 sized to M (never blow tiny M up to 128)."""
    Mr = _round_up(M, 8)
    if Mr <= 256:
        return Mr                              # single M tile, no padding
    for tm in (512, 256, 128):
        if Mr % tm == 0 and Mr // tm >= 2:     # keep >=2 M tiles (v7x 2nd core)
            return tm
    return 256


def _choose_tn(N):
    """Lane-dense column tile: up to 512 wide so tiny-M layers are one grid step."""
    Np = _round_up(N, 128)
    if Np <= 512:
        return Np
    for tn in (512, 384, 256, 128):
        if Np % tn == 0:
            return tn
    return 128


def matmul_bias_act(a, b, bias, act, out_dtype=jnp.float32):
    """y = act(a @ b + bias).  a:[M,K]  b:[K,N]  bias:[N]  -> [M,N] (out_dtype).

    Full-K blocks (K is never padded), bf16 operands, f32 accumulate + epilogue.
    """
    M, K = a.shape
    N = b.shape[1]

    tm = _choose_tm(M)
    tn = _choose_tn(N)
    Mp = _round_up(M, tm)
    Np = _round_up(N, tn)

    a_p = a if Mp == M else jnp.pad(a, ((0, Mp - M), (0, 0)))
    b_p = b if Np == N else jnp.pad(b, ((0, 0), (0, Np - N)))
    bias_p = bias.reshape(1, -1).astype(jnp.float32)
    if Np != N:
        bias_p = jnp.pad(bias_p, ((0, 0), (0, Np - N)))

    grid = (Mp // tm, Np // tn)

    out = pl.pallas_call(
        functools.partial(_mm_bias_act_kernel, act=act),
        out_shape=jax.ShapeDtypeStruct((Mp, Np), out_dtype),
        grid_spec=pltpu.PrefetchScalarGridSpec(
            num_scalar_prefetch=0,
            grid=grid,
            in_specs=[
                pl.BlockSpec((tm, K), lambda i, j: (i, 0)),   # full-K LHS tile
                pl.BlockSpec((K, tn), lambda i, j: (0, j)),   # full-K RHS tile
                pl.BlockSpec((1, tn), lambda i, j: (0, j)),   # bias row
            ],
            out_specs=pl.BlockSpec((tm, tn), lambda i, j: (i, j)),
        ),
        compiler_params=pltpu.CompilerParams(
            dimension_semantics=("parallel", "parallel"),
            vmem_limit_bytes=48 * 1024 * 1024),
    )(a_p.astype(jnp.bfloat16), b_p.astype(jnp.bfloat16), bias_p)

    if Mp == M and Np == N:
        return out
    return out[:M, :N]


# ----------------------------------------------------------------------------
# Channels-last Conv3d / ConvTranspose3d built on the Pallas matmul kernel
# ----------------------------------------------------------------------------
def conv3d_cl(x, w, b, stride, padding, act, out_dtype):
    """x:[N,D,H,W,Cin]  w:[Cout,Cin,k,k,k] (PyTorch layout)  b:[Cout]."""
    N, D, H, W, Cin = x.shape
    Cout, _, k, _, _ = w.shape
    Do = (D + 2 * padding - k) // stride + 1
    Ho = (H + 2 * padding - k) // stride + 1
    Wo = (W + 2 * padding - k) // stride + 1

    xp = jnp.pad(x, ((0, 0), (padding, padding), (padding, padding),
                     (padding, padding), (0, 0)))

    # im2col directly in [M, k^3*Cin] order: (kd,kh,kw) major, cin minor.
    slices = []
    for kd in range(k):
        for kh in range(k):
            for kw in range(k):
                slices.append(xp[:,
                                 kd:kd + stride * Do:stride,
                                 kh:kh + stride * Ho:stride,
                                 kw:kw + stride * Wo:stride, :])
    patches = jnp.concatenate(slices, axis=-1)                    # [N,Do,Ho,Wo,k^3*Cin]
    patches = patches.reshape(N * Do * Ho * Wo, k * k * k * Cin)

    wmat = jnp.transpose(w, (2, 3, 4, 1, 0)).reshape(k * k * k * Cin, Cout)
    y = matmul_bias_act(patches, wmat, b, act, out_dtype=out_dtype)
    return y.reshape(N, Do, Ho, Wo, Cout)


def conv_transpose3d_s1_cl(x, w, b, padding, act, out_dtype):
    """stride=1 ConvTranspose3d == stride-1 conv with flipped/channel-swapped kernel.

    x:[N,D,H,W,Cin]  w:[Cin,Cout,k,k,k] (PyTorch ConvTranspose layout).
    """
    k = w.shape[2]
    w_conv = jnp.flip(w, axis=(2, 3, 4)).transpose(1, 0, 2, 3, 4)  # [Cout,Cin,k,k,k]
    return conv3d_cl(x, w_conv, b, stride=1, padding=k - 1 - padding,
                     act=act, out_dtype=out_dtype)


def _phase_weight_matrix(w):
    """Phase-combined weight for ConvTranspose3d(k=3, stride=2, pad=1, out_pad=1).

    w: [Cin, Cout, 3, 3, 3] (PyTorch ConvTranspose layout).
    Returns B: [8*Cin, 8*Cout]; rows ordered (jd,jh,jw) major / cin minor,
    cols ordered (pd,ph,pw) major / cout minor.

    Per dim, output o = 2*m + p (phase p):
      p=0: uses x[m]   with kernel tap 1
      p=1: uses x[m]   with kernel tap 2, and x[m+1] with kernel tap 0
    """
    Cin, Cout = w.shape[0], w.shape[1]
    tap = jnp.array([[1, 0], [2, 0]], jnp.int32)          # tap[p, j]; invalid -> 0
    valid = jnp.array([[1.0, 0.0], [1.0, 1.0]], w.dtype)  # valid[p, j]
    w_t = jnp.transpose(w, (2, 3, 4, 0, 1))               # [3,3,3,Cin,Cout]
    # gather -> blocks[pd, jd, ph, jh, pw, jw, cin, cout]
    blocks = w_t[tap[:, :, None, None, None, None],
                 tap[None, None, :, :, None, None],
                 tap[None, None, None, None, :, :]]
    scale = (valid[:, :, None, None, None, None]
             * valid[None, None, :, :, None, None]
             * valid[None, None, None, None, :, :])
    blocks = blocks * scale[..., None, None]
    # -> (jd, jh, jw, cin, pd, ph, pw, cout)
    blocks = jnp.transpose(blocks, (1, 3, 5, 6, 0, 2, 4, 7))
    return blocks.reshape(8 * Cin, 8 * Cout)


def conv_transpose3d_s2_cl(x, w, b, act, out_dtype):
    """ConvTranspose3d(k=3, stride=2, padding=1, output_padding=1) via subpixel
    decomposition: one 2x2x2 stride-1 im2col + one matmul against a
    phase-combined [8*Cin, 8*Cout] weight matrix, then pixel-shuffle.
    """
    N, D, H, W, Cin = x.shape
    Cout = w.shape[1]

    # 2x2x2-window im2col over the UNdilated input (right-pad 1 zero per dim).
    xp = jnp.pad(x, ((0, 0), (0, 1), (0, 1), (0, 1), (0, 0)))
    slices = []
    for jd in (0, 1):
        for jh in (0, 1):
            for jw in (0, 1):
                slices.append(xp[:, jd:jd + D, jh:jh + H, jw:jw + W, :])
    patches = jnp.concatenate(slices, axis=-1).reshape(N * D * H * W, 8 * Cin)

    B = _phase_weight_matrix(w)                       # [8*Cin, 8*Cout]
    bias8 = jnp.tile(b, 8)                            # phase major / cout minor

    y = matmul_bias_act(patches, B, bias8, act, out_dtype=out_dtype)  # [M, 8*Cout]
    y = y.reshape(N, D, H, W, 2, 2, 2, Cout)
    y = y.transpose(0, 1, 4, 2, 5, 3, 6, 7)           # [N, D, 2, H, 2, W, 2, Cout]
    return y.reshape(N, 2 * D, 2 * H, 2 * W, Cout)


# ----------------------------------------------------------------------------
# Model: parameter init + forward
# ----------------------------------------------------------------------------
def init_params(key, in_channels=3):
    def conv_w(key, cout, cin, k=3):
        fan_in = cin * k * k * k
        bound = 1.0 / jnp.sqrt(fan_in)
        kw, kb = jax.random.split(key)
        w = jax.random.uniform(kw, (cout, cin, k, k, k), jnp.float32, -bound, bound)
        b = jax.random.uniform(kb, (cout,), jnp.float32, -bound, bound)
        return w, b

    def convT_w(key, cin, cout, k=3):
        fan_in = cout * k * k * k
        bound = 1.0 / jnp.sqrt(fan_in)
        kw, kb = jax.random.split(key)
        w = jax.random.uniform(kw, (cin, cout, k, k, k), jnp.float32, -bound, bound)
        b = jax.random.uniform(kb, (cout,), jnp.float32, -bound, bound)
        return w, b

    keys = jax.random.split(key, 8)
    return {
        "enc1": conv_w(keys[0], 32, in_channels),
        "enc2": conv_w(keys[1], 64, 32),
        "enc3": conv_w(keys[2], 128, 64),
        "enc4": conv_w(keys[3], 64, 128),
        "dec1": convT_w(keys[4], 64, 128),
        "dec2": convT_w(keys[5], 128, 64),
        "dec3": convT_w(keys[6], 64, 32),
        "dec4": convT_w(keys[7], 32, in_channels),
    }


def autoencoder3d_forward(x, params):
    bf = jnp.bfloat16
    h = jnp.transpose(x, (0, 2, 3, 4, 1)).astype(bf)  # NCDHW -> NDHWC + bf16 (once)
    # encoder
    h = conv3d_cl(h, *params["enc1"], stride=2, padding=1, act="leaky", out_dtype=bf)
    h = conv3d_cl(h, *params["enc2"], stride=2, padding=1, act="leaky", out_dtype=bf)
    h = conv3d_cl(h, *params["enc3"], stride=2, padding=1, act="leaky", out_dtype=bf)
    h = conv3d_cl(h, *params["enc4"], stride=1, padding=1, act="leaky", out_dtype=bf)
    # decoder
    h = conv_transpose3d_s1_cl(h, *params["dec1"], padding=1, act="leaky", out_dtype=bf)
    h = conv_transpose3d_s2_cl(h, *params["dec2"], act="leaky", out_dtype=bf)
    h = conv_transpose3d_s2_cl(h, *params["dec3"], act="leaky", out_dtype=bf)
    h = conv_transpose3d_s2_cl(h, *params["dec4"], act="tanh", out_dtype=jnp.float32)
    # With D,H,W divisible by 8 the decoder output matches the input shape, so
    # the F.interpolate branch of the PyTorch module is a no-op here.
    # TODO(synk): trilinear F.interpolate fallback (only used for spatial sizes
    # not divisible by 8) is not implemented as a Pallas kernel.
    return jnp.transpose(h, (0, 4, 1, 2, 3))          # NDHWC -> NCDHW


if __name__ == "__main__":
    key = jax.random.PRNGKey(0)
    kx, kp = jax.random.split(key)

    # small video clip: batch=2, channels=3, frames=8, 16x16 spatial (NCDHW)
    x = jax.random.normal(kx, (2, 3, 8, 16, 16), jnp.float32)
    params = init_params(kp, in_channels=3)

    fwd = jax.jit(autoencoder3d_forward)
    out = jax.block_until_ready(fwd(x, params))

    assert out.shape == x.shape, (out.shape, x.shape)
    assert bool(jnp.all(jnp.isfinite(out)))
    assert bool(jnp.all(jnp.abs(out) <= 1.0 + 1e-6))  # tanh output range
    print("KERNEL_OK")
</pallas_src>

<mosaic_0001>
module attributes {stable_mosaic.version = 11 : i64} {
  func.func @_mm_bias_act_kernel(%arg0: i32, %arg1: i32, %arg2: memref<256x81xbf16, #tpu.memory_space<vmem>>, %arg3: memref<81x128xbf16, #tpu.memory_space<vmem>>, %arg4: memref<1x128xf32, #tpu.memory_space<vmem>>, %arg5: memref<256x128xbf16, #tpu.memory_space<vmem>>) attributes {dimension_semantics = [#tpu.dimension_semantics<parallel>, #tpu.dimension_semantics<parallel>], iteration_bounds = array<i64: 2, 1>, scalar_prefetch = 0 : i64, scratch_operands = 0 : i64, tpu.core_type = #tpu.core_type<tc>, window_params = [{transform_indices = @transform_0, window_bounds = array<i64: 256, 81>}, {transform_indices = @transform_1, window_bounds = array<i64: 81, 128>}, {transform_indices = @transform_2, window_bounds = array<i64: 1, 128>}, {transform_indices = @transform_3, window_bounds = array<i64: 256, 128>}]} {
    %c0 = arith.constant 0 : index
    %c0_0 = arith.constant 0 : index
    %0 = vector.load %arg2[%c0, %c0_0] : memref<256x81xbf16, #tpu.memory_space<vmem>>, vector<256x81xbf16>
    %c0_1 = arith.constant 0 : index
    %c0_2 = arith.constant 0 : index
    %1 = vector.load %arg3[%c0_1, %c0_2] : memref<81x128xbf16, #tpu.memory_space<vmem>>, vector<81x128xbf16>
    %cst = arith.constant dense<0.000000e+00> : vector<256x128xf32>
    %2 = tpu.matmul %0, %1, %cst {dimension_numbers = #tpu.dot_dimension_numbers<[1], [0], [0], [1], [0, 0, 1, 1], [], []>} : vector<256x81xbf16>, vector<81x128xbf16>, vector<256x128xf32> -> vector<256x128xf32>
    %c0_3 = arith.constant 0 : index
    %c0_4 = arith.constant 0 : index
    %3 = vector.load %arg4[%c0_3, %c0_4] : memref<1x128xf32, #tpu.memory_space<vmem>>, vector<1x128xf32>
    %4 = vector.broadcast %3 : vector<1x128xf32> to vector<256x128xf32>
    %5 = arith.addf %2, %4 : vector<256x128xf32>
    %cst_5 = arith.constant 2.000000e-01 : f32
    %6 = vector.broadcast %cst_5 : f32 to vector<256x128xf32>
    %7 = arith.mulf %6, %5 : vector<256x128xf32>
    %8 = arith.maximumf %5, %7 : vector<256x128xf32>
    %9 = arith.truncf %8 : vector<256x128xf32> to vector<256x128xbf16>
    %c0_6 = arith.constant 0 : index
    %c0_7 = arith.constant 0 : index
    %10 = vector.load %arg5[%c0_6, %c0_7] : memref<256x128xbf16, #tpu.memory_space<vmem>>, vector<256x128xbf16>
    tpu.vector_store %arg5[%c0_6, %c0_7], %9 {strides = array<i32>} : memref<256x128xbf16, #tpu.memory_space<vmem>>, vector<256x128xbf16>,
    return
  }
  func.func @transform_0(%arg0: i32, %arg1: i32) -> (i32, i32) {
    %c0_i32 = arith.constant 0 : i32
    %c0_i32_0 = arith.constant 0 : i32
    return %arg0, %c0_i32 : i32, i32
  }
  func.func @transform_1(%arg0: i32, %arg1: i32) -> (i32, i32) {
    %c0_i32 = arith.constant 0 : i32
    %c0_i32_0 = arith.constant 0 : i32
    return %c0_i32, %arg1 : i32, i32
  }
  func.func @transform_2(%arg0: i32, %arg1: i32) -> (i32, i32) {
    %c0_i32 = arith.constant 0 : i32
    %c0_i32_0 = arith.constant 0 : i32
    return %c0_i32, %arg1 : i32, i32
  }
  func.func @transform_3(%arg0: i32, %arg1: i32) -> (i32, i32) {
    %c0_i32 = arith.constant 0 : i32
    return %arg0, %arg1 : i32, i32
  }
}

module attributes {stable_mosaic.version = 11 : i64} {
  func.func @_mm_bias_act_kernel(%arg0: i32, %arg1: i32, %arg2: memref<64x864xbf16, #tpu.memory_space<vmem>>, %arg3: memref<864x128xbf16, #tpu.memory_space<vmem>>, %arg4: memref<1x128xf32, #tpu.memory_space<vmem>>, %arg5: memref<64x128xbf16, #tpu.memory_space<vmem>>) attributes {dimension_semantics = [#tpu.dimension_semantics<parallel>, #tpu.dimension_semantics<parallel>], iteration_bounds = array<i64: 1, 1>, scalar_prefetch = 0 : i64, scratch_operands = 0 : i64, tpu.core_type = #tpu.core_type<tc>, window_params = [{transform_indices = @transform_0, window_bounds = array<i64: 64, 864>}, {transform_indices = @transform_1, window_bounds = array<i64: 864, 128>}, {transform_indices = @transform_2, window_bounds = array<i64: 1, 128>}, {transform_indices = @transform_3, window_bounds = array<i64: 64, 128>}]} {
    %c0 = arith.constant 0 : index
    %c0_0 = arith.constant 0 : index
    %0 = vector.load %arg2[%c0, %c0_0] : memref<64x864xbf16, #tpu.memory_space<vmem>>, vector<64x864xbf16>
    %c0_1 = arith.constant 0 : index
    %c0_2 = arith.constant 0 : index
    %1 = vector.load %arg3[%c0_1, %c0_2] : memref<864x128xbf16, #tpu.memory_space<vmem>>, vector<864x128xbf16>
    %cst = arith.constant dense<0.000000e+00> : vector<64x128xf32>
    %2 = tpu.matmul %0, %1, %cst {dimension_numbers = #tpu.dot_dimension_numbers<[1], [0], [0], [1], [0, 0, 1, 1], [], []>} : vector<64x864xbf16>, vector<864x128xbf16>, vector<64x128xf32> -> vector<64x128xf32>
    %c0_3 = arith.constant 0 : index
    %c0_4 = arith.constant 0 : index
    %3 = vector.load %arg4[%c0_3, %c0_4] : memref<1x128xf32, #tpu.memory_space<vmem>>, vector<1x128xf32>
    %4 = vector.broadcast %3 : vector<1x128xf32> to vector<64x128xf32>
    %5 = arith.addf %2, %4 : vector<64x128xf32>
    %cst_5 = arith.constant 2.000000e-01 : f32
    %6 = vector.broadcast %cst_5 : f32 to vector<64x128xf32>
    %7 = arith.mulf %6, %5 : vector<64x128xf32>
    %8 = arith.maximumf %5, %7 : vector<64x128xf32>
    %9 = arith.truncf %8 : vector<64x128xf32> to vector<64x128xbf16>
    %c0_6 = arith.constant 0 : index
    %c0_7 = arith.constant 0 : index
    %10 = vector.load %arg5[%c0_6, %c0_7] : memref<64x128xbf16, #tpu.memory_space<vmem>>, vector<64x128xbf16>
    tpu.vector_store %arg5[%c0_6, %c0_7], %9 {strides = array<i32>} : memref<64x128xbf16, #tpu.memory_space<vmem>>, vector<64x128xbf16>,
    return
  }
  func.func @transform_0(%arg0: i32, %arg1: i32) -> (i32, i32) {
    %c0_i32 = arith.constant 0 : i32
    %c0_i32_0 = arith.constant 0 : i32
    return %arg0, %c0_i32 : i32, i32
  }
  func.func @transform_1(%arg0: i32, %arg1: i32) -> (i32, i32) {
    %c0_i32 = arith.constant 0 : i32
    %c0_i32_0 = arith.constant 0 : i32
    return %c0_i32, %arg1 : i32, i32
  }
  func.func @transform_2(%arg0: i32, %arg1: i32) -> (i32, i32) {
    %c0_i32 = arith.constant 0 : i32
    %c0_i32_0 = arith.constant 0 : i32
    return %c0_i32, %arg1 : i32, i32
  }
  func.func @transform_3(%arg0: i32, %arg1: i32) -> (i32, i32) {
    %c0_i32 = arith.constant 0 : i32
    return %arg0, %arg1 : i32, i32
  }
}

module attributes {stable_mosaic.version = 11 : i64} {
  func.func @_mm_bias_act_kernel(%arg0: i32, %arg1: i32, %arg2: memref<8x1728xbf16, #tpu.memory_space<vmem>>, %arg3: memref<1728x128xbf16, #tpu.memory_space<vmem>>, %arg4: memref<1x128xf32, #tpu.memory_space<vmem>>, %arg5: memref<8x128xbf16, #tpu.memory_space<vmem>>) attributes {dimension_semantics = [#tpu.dimension_semantics<parallel>, #tpu.dimension_semantics<parallel>], iteration_bounds = array<i64: 1, 1>, scalar_prefetch = 0 : i64, scratch_operands = 0 : i64, tpu.core_type = #tpu.core_type<tc>, window_params = [{transform_indices = @transform_0, window_bounds = array<i64: 8, 1728>}, {transform_indices = @transform_1, window_bounds = array<i64: 1728, 128>}, {transform_indices = @transform_2, window_bounds = array<i64: 1, 128>}, {transform_indices = @transform_3, window_bounds = array<i64: 8, 128>}]} {
    %c0 = arith.constant 0 : index
    %c0_0 = arith.constant 0 : index
    %0 = vector.load %arg2[%c0, %c0_0] : memref<8x1728xbf16, #tpu.memory_space<vmem>>, vector<8x1728xbf16>
    %c0_1 = arith.constant 0 : index
    %c0_2 = arith.constant 0 : index
    %1 = vector.load %arg3[%c0_1, %c0_2] : memref<1728x128xbf16, #tpu.memory_space<vmem>>, vector<1728x128xbf16>
    %cst = arith.constant dense<0.000000e+00> : vector<8x128xf32>
    %2 = tpu.matmul %0, %1, %cst {dimension_numbers = #tpu.dot_dimension_numbers<[1], [0], [0], [1], [0, 0, 1, 1], [], []>} : vector<8x1728xbf16>, vector<1728x128xbf16>, vector<8x128xf32> -> vector<8x128xf32>
    %c0_3 = arith.constant 0 : index
    %c0_4 = arith.constant 0 : index
    %3 = vector.load %arg4[%c0_3, %c0_4] : memref<1x128xf32, #tpu.memory_space<vmem>>, vector<1x128xf32>
    %4 = vector.broadcast %3 : vector<1x128xf32> to vector<8x128xf32>
    %5 = arith.addf %2, %4 : vector<8x128xf32>
    %cst_5 = arith.constant 2.000000e-01 : f32
    %6 = vector.broadcast %cst_5 : f32 to vector<8x128xf32>
    %7 = arith.mulf %6, %5 : vector<8x128xf32>
    %8 = arith.maximumf %5, %7 : vector<8x128xf32>
    %9 = arith.truncf %8 : vector<8x128xf32> to vector<8x128xbf16>
    %c0_6 = arith.constant 0 : index
    %c0_7 = arith.constant 0 : index
    %10 = vector.load %arg5[%c0_6, %c0_7] : memref<8x128xbf16, #tpu.memory_space<vmem>>, vector<8x128xbf16>
    tpu.vector_store %arg5[%c0_6, %c0_7], %9 {strides = array<i32>} : memref<8x128xbf16, #tpu.memory_space<vmem>>, vector<8x128xbf16>,
    return
  }
  func.func @transform_0(%arg0: i32, %arg1: i32) -> (i32, i32) {
    %c0_i32 = arith.constant 0 : i32
    %c0_i32_0 = arith.constant 0 : i32
    return %arg0, %c0_i32 : i32, i32
  }
  func.func @transform_1(%arg0: i32, %arg1: i32) -> (i32, i32) {
    %c0_i32 = arith.constant 0 : i32
    %c0_i32_0 = arith.constant 0 : i32
    return %c0_i32, %arg1 : i32, i32
  }
  func.func @transform_2(%arg0: i32, %arg1: i32) -> (i32, i32) {
    %c0_i32 = arith.constant 0 : i32
    %c0_i32_0 = arith.constant 0 : i32
    return %c0_i32, %arg1 : i32, i32
  }
  func.func @transform_3(%arg0: i32, %arg1: i32) -> (i32, i32) {
    %c0_i32 = arith.constant 0 : i32
    return %arg0, %arg1 : i32, i32
  }
}

module attributes {stable_mosaic.version = 11 : i64} {
  func.func @_mm_bias_act_kernel(%arg0: i32, %arg1: i32, %arg2: memref<8x3456xbf16, #tpu.memory_space<vmem>>, %arg3: memref<3456x128xbf16, #tpu.memory_space<vmem>>, %arg4: memref<1x128xf32, #tpu.memory_space<vmem>>, %arg5: memref<8x128xbf16, #tpu.memory_space<vmem>>) attributes {dimension_semantics = [#tpu.dimension_semantics<parallel>, #tpu.dimension_semantics<parallel>], iteration_bounds = array<i64: 1, 1>, scalar_prefetch = 0 : i64, scratch_operands = 0 : i64, tpu.core_type = #tpu.core_type<tc>, window_params = [{transform_indices = @transform_0, window_bounds = array<i64: 8, 3456>}, {transform_indices = @transform_1, window_bounds = array<i64: 3456, 128>}, {transform_indices = @transform_2, window_bounds = array<i64: 1, 128>}, {transform_indices = @transform_3, window_bounds = array<i64: 8, 128>}]} {
    %c0 = arith.constant 0 : index
    %c0_0 = arith.constant 0 : index
    %0 = vector.load %arg2[%c0, %c0_0] : memref<8x3456xbf16, #tpu.memory_space<vmem>>, vector<8x3456xbf16>
    %c0_1 = arith.constant 0 : index
    %c0_2 = arith.constant 0 : index
    %1 = vector.load %arg3[%c0_1, %c0_2] : memref<3456x128xbf16, #tpu.memory_space<vmem>>, vector<3456x128xbf16>
    %cst = arith.constant dense<0.000000e+00> : vector<8x128xf32>
    %2 = tpu.matmul %0, %1, %cst {dimension_numbers = #tpu.dot_dimension_numbers<[1], [0], [0], [1], [0, 0, 1, 1], [], []>} : vector<8x3456xbf16>, vector<3456x128xbf16>, vector<8x128xf32> -> vector<8x128xf32>
    %c0_3 = arith.constant 0 : index
    %c0_4 = arith.constant 0 : index
    %3 = vector.load %arg4[%c0_3, %c0_4] : memref<1x128xf32, #tpu.memory_space<vmem>>, vector<1x128xf32>
    %4 = vector.broadcast %3 : vector<1x128xf32> to vector<8x128xf32>
    %5 = arith.addf %2, %4 : vector<8x128xf32>
    %cst_5 = arith.constant 2.000000e-01 : f32
    %6 = vector.broadcast %cst_5 : f32 to vector<8x128xf32>
    %7 = arith.mulf %6, %5 : vector<8x128xf32>
    %8 = arith.maximumf %5, %7 : vector<8x128xf32>
    %9 = arith.truncf %8 : vector<8x128xf32> to vector<8x128xbf16>
    %c0_6 = arith.constant 0 : index
    %c0_7 = arith.constant 0 : index
    %10 = vector.load %arg5[%c0_6, %c0_7] : memref<8x128xbf16, #tpu.memory_space<vmem>>, vector<8x128xbf16>
    tpu.vector_store %arg5[%c0_6, %c0_7], %9 {strides = array<i32>} : memref<8x128xbf16, #tpu.memory_space<vmem>>, vector<8x128xbf16>,
    return
  }
  func.func @transform_0(%arg0: i32, %arg1: i32) -> (i32, i32) {
    %c0_i32 = arith.constant 0 : i32
    %c0_i32_0 = arith.constant 0 : i32
    return %arg0, %c0_i32 : i32, i32
  }
  func.func @transform_1(%arg0: i32, %arg1: i32) -> (i32, i32) {
    %c0_i32 = arith.constant 0 : i32
    %c0_i32_0 = arith.constant 0 : i32
    return %c0_i32, %arg1 : i32, i32
  }
  func.func @transform_2(%arg0: i32, %arg1: i32) -> (i32, i32) {
    %c0_i32 = arith.constant 0 : i32
    %c0_i32_0 = arith.constant 0 : i32
    return %c0_i32, %arg1 : i32, i32
  }
  func.func @transform_3(%arg0: i32, %arg1: i32) -> (i32, i32) {
    %c0_i32 = arith.constant 0 : i32
    return %arg0, %arg1 : i32, i32
  }
}

module attributes {stable_mosaic.version = 11 : i64} {
  func.func @_mm_bias_act_kernel(%arg0: i32, %arg1: i32, %arg2: memref<8x1024xbf16, #tpu.memory_space<vmem>>, %arg3: memref<1024x512xbf16, #tpu.memory_space<vmem>>, %arg4: memref<1x512xf32, #tpu.memory_space<vmem>>, %arg5: memref<8x512xbf16, #tpu.memory_space<vmem>>) attributes {dimension_semantics = [#tpu.dimension_semantics<parallel>, #tpu.dimension_semantics<parallel>], iteration_bounds = array<i64: 1, 1>, scalar_prefetch = 0 : i64, scratch_operands = 0 : i64, tpu.core_type = #tpu.core_type<tc>, window_params = [{transform_indices = @transform_0, window_bounds = array<i64: 8, 1024>}, {transform_indices = @transform_1, window_bounds = array<i64: 1024, 512>}, {transform_indices = @transform_2, window_bounds = array<i64: 1, 512>}, {transform_indices = @transform_3, window_bounds = array<i64: 8, 512>}]} {
    %c0 = arith.constant 0 : index
    %c0_0 = arith.constant 0 : index
    %0 = vector.load %arg2[%c0, %c0_0] : memref<8x1024xbf16, #tpu.memory_space<vmem>>, vector<8x1024xbf16>
    %c0_1 = arith.constant 0 : index
    %c0_2 = arith.constant 0 : index
    %1 = vector.load %arg3[%c0_1, %c0_2] : memref<1024x512xbf16, #tpu.memory_space<vmem>>, vector<1024x512xbf16>
    %cst = arith.constant dense<0.000000e+00> : vector<8x512xf32>
    %2 = tpu.matmul %0, %1, %cst {dimension_numbers = #tpu.dot_dimension_numbers<[1], [0], [0], [1], [0, 0, 1, 1], [], []>} : vector<8x1024xbf16>, vector<1024x512xbf16>, vector<8x512xf32> -> vector<8x512xf32>
    %c0_3 = arith.constant 0 : index
    %c0_4 = arith.constant 0 : index
    %3 = vector.load %arg4[%c0_3, %c0_4] : memref<1x512xf32, #tpu.memory_space<vmem>>, vector<1x512xf32>
    %4 = vector.broadcast %3 : vector<1x512xf32> to vector<8x512xf32>
    %5 = arith.addf %2, %4 : vector<8x512xf32>
    %cst_5 = arith.constant 2.000000e-01 : f32
    %6 = vector.broadcast %cst_5 : f32 to vector<8x512xf32>
    %7 = arith.mulf %6, %5 : vector<8x512xf32>
    %8 = arith.maximumf %5, %7 : vector<8x512xf32>
    %9 = arith.truncf %8 : vector<8x512xf32> to vector<8x512xbf16>
    %c0_6 = arith.constant 0 : index
    %c0_7 = arith.constant 0 : index
    %10 = vector.load %arg5[%c0_6, %c0_7] : memref<8x512xbf16, #tpu.memory_space<vmem>>, vector<8x512xbf16>
    tpu.vector_store %arg5[%c0_6, %c0_7], %9 {strides = array<i32>} : memref<8x512xbf16, #tpu.memory_space<vmem>>, vector<8x512xbf16>,
    return
  }
  func.func @transform_0(%arg0: i32, %arg1: i32) -> (i32, i32) {
    %c0_i32 = arith.constant 0 : i32
    %c0_i32_0 = arith.constant 0 : i32
    return %arg0, %c0_i32 : i32, i32
  }
  func.func @transform_1(%arg0: i32, %arg1: i32) -> (i32, i32) {
    %c0_i32 = arith.constant 0 : i32
    %c0_i32_0 = arith.constant 0 : i32
    return %c0_i32, %arg1 : i32, i32
  }
  func.func @transform_2(%arg0: i32, %arg1: i32) -> (i32, i32) {
    %c0_i32 = arith.constant 0 : i32
    %c0_i32_0 = arith.constant 0 : i32
    return %c0_i32, %arg1 : i32, i32
  }
  func.func @transform_3(%arg0: i32, %arg1: i32) -> (i32, i32) {
    %c0_i32 = arith.constant 0 : i32
    return %arg0, %arg1 : i32, i32
  }
}

module attributes {stable_mosaic.version = 11 : i64} {
  func.func @_mm_bias_act_kernel(%arg0: i32, %arg1: i32, %arg2: memref<64x512xbf16, #tpu.memory_space<vmem>>, %arg3: memref<512x256xbf16, #tpu.memory_space<vmem>>, %arg4: memref<1x256xf32, #tpu.memory_space<vmem>>, %arg5: memref<64x256xbf16, #tpu.memory_space<vmem>>) attributes {dimension_semantics = [#tpu.dimension_semantics<parallel>, #tpu.dimension_semantics<parallel>], iteration_bounds = array<i64: 1, 1>, scalar_prefetch = 0 : i64, scratch_operands = 0 : i64, tpu.core_type = #tpu.core_type<tc>, window_params = [{transform_indices = @transform_0, window_bounds = array<i64: 64, 512>}, {transform_indices = @transform_1, window_bounds = array<i64: 512, 256>}, {transform_indices = @transform_2, window_bounds = array<i64: 1, 256>}, {transform_indices = @transform_3, window_bounds = array<i64: 64, 256>}]} {
    %c0 = arith.constant 0 : index
    %c0_0 = arith.constant 0 : index
    %0 = vector.load %arg2[%c0, %c0_0] : memref<64x512xbf16, #tpu.memory_space<vmem>>, vector<64x512xbf16>
    %c0_1 = arith.constant 0 : index
    %c0_2 = arith.constant 0 : index
    %1 = vector.load %arg3[%c0_1, %c0_2] : memref<512x256xbf16, #tpu.memory_space<vmem>>, vector<512x256xbf16>
    %cst = arith.constant dense<0.000000e+00> : vector<64x256xf32>
    %2 = tpu.matmul %0, %1, %cst {dimension_numbers = #tpu.dot_dimension_numbers<[1], [0], [0], [1], [0, 0, 1, 1], [], []>} : vector<64x512xbf16>, vector<512x256xbf16>, vector<64x256xf32> -> vector<64x256xf32>
    %c0_3 = arith.constant 0 : index
    %c0_4 = arith.constant 0 : index
    %3 = vector.load %arg4[%c0_3, %c0_4] : memref<1x256xf32, #tpu.memory_space<vmem>>, vector<1x256xf32>
    %4 = vector.broadcast %3 : vector<1x256xf32> to vector<64x256xf32>
    %5 = arith.addf %2, %4 : vector<64x256xf32>
    %cst_5 = arith.constant 2.000000e-01 : f32
    %6 = vector.broadcast %cst_5 : f32 to vector<64x256xf32>
    %7 = arith.mulf %6, %5 : vector<64x256xf32>
    %8 = arith.maximumf %5, %7 : vector<64x256xf32>
    %9 = arith.truncf %8 : vector<64x256xf32> to vector<64x256xbf16>
    %c0_6 = arith.constant 0 : index
    %c0_7 = arith.constant 0 : index
    %10 = vector.load %arg5[%c0_6, %c0_7] : memref<64x256xbf16, #tpu.memory_space<vmem>>, vector<64x256xbf16>
    tpu.vector_store %arg5[%c0_6, %c0_7], %9 {strides = array<i32>} : memref<64x256xbf16, #tpu.memory_space<vmem>>, vector<64x256xbf16>,
    return
  }
  func.func @transform_0(%arg0: i32, %arg1: i32) -> (i32, i32) {
    %c0_i32 = arith.constant 0 : i32
    %c0_i32_0 = arith.constant 0 : i32
    return %arg0, %c0_i32 : i32, i32
  }
  func.func @transform_1(%arg0: i32, %arg1: i32) -> (i32, i32) {
    %c0_i32 = arith.constant 0 : i32
    %c0_i32_0 = arith.constant 0 : i32
    return %c0_i32, %arg1 : i32, i32
  }
  func.func @transform_2(%arg0: i32, %arg1: i32) -> (i32, i32) {
    %c0_i32 = arith.constant 0 : i32
    %c0_i32_0 = arith.constant 0 : i32
    return %c0_i32, %arg1 : i32, i32
  }
  func.func @transform_3(%arg0: i32, %arg1: i32) -> (i32, i32) {
    %c0_i32 = arith.constant 0 : i32
    return %arg0, %arg1 : i32, i32
  }
}

module attributes {stable_mosaic.version = 11 : i64} {
  func.func @_mm_bias_act_kernel(%arg0: i32, %arg1: i32, %arg2: memref<256x256xbf16, #tpu.memory_space<vmem>>, %arg3: memref<256x128xbf16, #tpu.memory_space<vmem>>, %arg4: memref<1x128xf32, #tpu.memory_space<vmem>>, %arg5: memref<256x128xf32, #tpu.memory_space<vmem>>) attributes {dimension_semantics = [#tpu.dimension_semantics<parallel>, #tpu.dimension_semantics<parallel>], iteration_bounds = array<i64: 2, 1>, scalar_prefetch = 0 : i64, scratch_operands = 0 : i64, tpu.core_type = #tpu.core_type<tc>, window_params = [{transform_indices = @transform_0, window_bounds = array<i64: 256, 256>}, {transform_indices = @transform_1, window_bounds = array<i64: 256, 128>}, {transform_indices = @transform_2, window_bounds = array<i64: 1, 128>}, {transform_indices = @transform_3, window_bounds = array<i64: 256, 128>}]} {
    %c0 = arith.constant 0 : index
    %c0_0 = arith.constant 0 : index
    %0 = vector.load %arg2[%c0, %c0_0] : memref<256x256xbf16, #tpu.memory_space<vmem>>, vector<256x256xbf16>
    %c0_1 = arith.constant 0 : index
    %c0_2 = arith.constant 0 : index
    %1 = vector.load %arg3[%c0_1, %c0_2] : memref<256x128xbf16, #tpu.memory_space<vmem>>, vector<256x128xbf16>
    %cst = arith.constant dense<0.000000e+00> : vector<256x128xf32>
    %2 = tpu.matmul %0, %1, %cst {dimension_numbers = #tpu.dot_dimension_numbers<[1], [0], [0], [1], [0, 0, 1, 1], [], []>} : vector<256x256xbf16>, vector<256x128xbf16>, vector<256x128xf32> -> vector<256x128xf32>
    %c0_3 = arith.constant 0 : index
    %c0_4 = arith.constant 0 : index
    %3 = vector.load %arg4[%c0_3, %c0_4] : memref<1x128xf32, #tpu.memory_space<vmem>>, vector<1x128xf32>
    %4 = vector.broadcast %3 : vector<1x128xf32> to vector<256x128xf32>
    %5 = arith.addf %2, %4 : vector<256x128xf32>
    %6 = math.tanh %5 : vector<256x128xf32>
    %c0_5 = arith.constant 0 : index
    %c0_6 = arith.constant 0 : index
    %7 = vector.load %arg5[%c0_5, %c0_6] : memref<256x128xf32, #tpu.memory_space<vmem>>, vector<256x128xf32>
    tpu.vector_store %arg5[%c0_5, %c0_6], %6 {strides = array<i32>} : memref<256x128xf32, #tpu.memory_space<vmem>>, vector<256x128xf32>,
    return
  }
  func.func @transform_0(%arg0: i32, %arg1: i32) -> (i32, i32) {
    %c0_i32 = arith.constant 0 : i32
    %c0_i32_0 = arith.constant 0 : i32
    return %arg0, %c0_i32 : i32, i32
  }
  func.func @transform_1(%arg0: i32, %arg1: i32) -> (i32, i32) {
    %c0_i32 = arith.constant 0 : i32
    %c0_i32_0 = arith.constant 0 : i32
    return %c0_i32, %arg1 : i32, i32
  }
  func.func @transform_2(%arg0: i32, %arg1: i32) -> (i32, i32) {
    %c0_i32 = arith.constant 0 : i32
    %c0_i32_0 = arith.constant 0 : i32
    return %c0_i32, %arg1 : i32, i32
  }
  func.func @transform_3(%arg0: i32, %arg1: i32) -> (i32, i32) {
    %c0_i32 = arith.constant 0 : i32
    return %arg0, %arg1 : i32, i32
  }
}

</mosaic_0001>

<llo_original>
// kernel: tile.19
$region0: #{tile.19}
  %s0 = inlined_call_operand.vmem [shape: f32[8,64], index: 0, kind: input, shape index: {}]
  %s1 = inlined_call_operand.vmem [shape: f32[1,512], index: 1, kind: output, shape index: {}]
  $region1: #{tile.19} parent=0
    #allocation0 [shape = 'u8[16384]{0}', space=vmem, size = 0x4000, scoped, tag = 'scoped mem for output reshape']
    %v2 = vld [vmem:[%s0] ss:$2 sm:$0xf]
    %vm3 = vcmask 523264
    %4 = vst.msk [vmem:[#allocation0] ss:$8 sm:$0xf] %vm3, %v2
    %s5 = scalar_lea.vmem %s0, 1
    %v6 = vld [vmem:[%s5] ss:$2 sm:$0xf]
    %7 = vrot.lane.b32.xlu0 %v6, 64
    %v8 = vpop.permute.xlu0 %7
    %vm9 = vcmask 1048064
    %10 = vst.msk [vmem:[#allocation0] ss:$8 sm:$0xf] %vm9, %v8
    %s12 = ssub.s32 2, 1
    %v13 = vld [vmem:[#allocation0] sm:%s12]
    %s15 = ssub.s32 2, 1
    %16 = vst [vmem:[%s1] sm:%s15] %v13
    %s17 = scalar_lea.vmem [#allocation0], 8
    %v18 = vld [vmem:[%s17] sm:%s12]
    %s20 = ssub.s32 2, 1
    %s21 = scalar_lea.vmem %s1, 1
    %22 = vst [vmem:[%s21] sm:%s20] %v18
    %s23 = scalar_lea.vmem [#allocation0], 16
    %v24 = vld [vmem:[%s23] sm:%s12]
    %s26 = ssub.s32 2, 1
    %s27 = scalar_lea.vmem %s1, 2
    %28 = vst [vmem:[%s27] sm:%s26] %v24
    %s29 = scalar_lea.vmem [#allocation0], 24
    %v30 = vld [vmem:[%s29] sm:%s12]
    %s32 = ssub.s32 2, 1
    %s33 = scalar_lea.vmem %s1, 3
    %34 = vst [vmem:[%s33] sm:%s32] %v30

// kernel: tile.18
$region0: #{tile.18}
  #allocation2 [shape = 's32[1]{0}', space=sflag, size = 0x4, scoped, tag = 'scoped memory for tile.18']
  %s0 = inlined_call_operand.hbm [shape: f32[64], index: 0, kind: input, shape index: {}]
  %s1 = inlined_call_operand.vmem [shape: f32[8,64], index: 1, kind: output, shape index: {}]
  $region1: #{tile.18} parent=0
    #allocation0 [shape = 'u8[512]{0}', space=vmem, size = 0x400, scoped, tag = 'operand span for operand 0']
    #allocation1 [shape = 's32[1]{0}', space=sflag, size = 0x4, scoped, tag = 'scoped memory for tile.18']
    %2 = vsyncpa [#allocation1], 0
    // Predicated region
    $region2: #{tile.18} parent=1 // pred_check
      _
    $region3: #{tile.18} parent=1 // pred_check_branch
      %4 = sbr.rel (0) target = $region5
    $region4: #{tile.18} parent=1 // pred_region
      %6 = vsyncadd [#allocation1], 0
      %s8 = sshll.u32 %s0, 4
      %s9 = int_to_ptr.hbm [resolvable:$true] %s8
      %s10 = sshll.u32 [#allocation0], 4
      %s11 = int_to_ptr.vmem [resolvable:$true] %s10
      %13 = dma.hbm_to_vmem [thread:$0]  %s9, 16, %s11, [#allocation1]
    $region5: #{tile.18} parent=1 // pred_fallthru
      _
    // Predicated region
    $region6: #{tile.18} parent=1 // pred_check
      _
    $region7: #{tile.18} parent=1 // pred_check_branch
      %15 = sbr.rel (0) target = $region9
    $region8: #{tile.18} parent=1 // pred_region
      %17 = dma.done [#allocation1], 16
    $region9: #{tile.18} parent=1 // pred_fallthru
      _
    %v18 = vld [vmem:[#allocation0] ss:$0 sm:$0xff]
    %19 = vst [vmem:[%s1] sm:$0xff] %v18
    %20 = vsyncpa [#allocation1], 1

// kernel: tile.24
$region0: #{tile.24}
  %s0 = inlined_call_operand.vmem [shape: f32[8,32], index: 0, kind: input, shape index: {}]
  %s1 = inlined_call_operand.vmem [shape: f32[1,256], index: 1, kind: output, shape index: {}]
  $region1: #{tile.24} parent=0
    #allocation0 [shape = 'u8[8192]{0}', space=vmem, size = 0x2000, scoped, tag = 'scoped mem for output reshape']
    %s2 = smov 3
    %v3 = vld [vmem:[%s0] ss:$4 sm:%s2]
    %vm4 = vcmask 261120
    %5 = vst.msk [vmem:[#allocation0] ss:$8 sm:$0x3] %vm4, %v3
    %s6 = scalar_lea.vmem %s0, 3
    %s7 = smov 3
    %v8 = vld [vmem:[%s6] ss:$4 sm:%s7]
    %9 = vrot.lane.b32.xlu0 %v8, 96
    %v10 = vpop.permute.xlu0 %9
    %vm11 = vcmask 1048320
    %12 = vst.msk [vmem:[#allocation0] ss:$8 sm:$0x3] %vm11, %v10
    %s13 = scalar_lea.vmem %s0, 2
    %s14 = smov 3
    %v15 = vld [vmem:[%s13] ss:$4 sm:%s14]
    %16 = vrot.lane.b32.xlu0 %v15, 64
    %v17 = vpop.permute.xlu0 %16
    %vm18 = vcmask 785920
    %19 = vst.msk [vmem:[#allocation0] ss:$8 sm:$0x3] %vm18, %v17
    %s20 = scalar_lea.vmem %s0, 1
    %s21 = smov 3
    %v22 = vld [vmem:[%s20] ss:$4 sm:%s21]
    %23 = vrot.lane.b32.xlu0 %v22, 32
    %v24 = vpop.permute.xlu0 %23
    %vm25 = vcmask 523520
    %26 = vst.msk [vmem:[#allocation0] ss:$8 sm:$0x3] %vm25, %v24
    %s28 = ssub.s32 2, 1
    %v29 = vld [vmem:[#allocation0] sm:%s28]
    %s31 = ssub.s32 2, 1
    %32 = vst [vmem:[%s1] sm:%s31] %v29
    %s33 = scalar_lea.vmem [#allocation0], 8
    %v34 = vld [vmem:[%s33] sm:%s28]
    %s36 = ssub.s32 2, 1
    %s37 = scalar_lea.vmem %s1, 1
    %38 = vst [vmem:[%s37] sm:%s36] %v34

// kernel: tile.28
$region0: #{tile.28}
  #allocation2 [shape = 's32[1]{0}', space=sflag, size = 0x4, scoped, tag = 'scoped memory for tile.28']
  %s0 = inlined_call_operand.hbm [shape: f32[3], index: 0, kind: input, shape index: {}]
  %s1 = inlined_call_operand.vmem [shape: f32[8,3], index: 1, kind: output, shape index: {}]
  $region1: #{tile.28} parent=0
    #allocation0 [shape = 'u8[512]{0}', space=vmem, size = 0x400, scoped, tag = 'operand span for operand 0']
    #allocation1 [shape = 's32[1]{0}', space=sflag, size = 0x4, scoped, tag = 'scoped memory for tile.28']
    %2 = vsyncpa [#allocation1], 0
    // Predicated region
    $region2: #{tile.28} parent=1 // pred_check
      _
    $region3: #{tile.28} parent=1 // pred_check_branch
      %4 = sbr.rel (0) target = $region5
    $region4: #{tile.28} parent=1 // pred_region
      %6 = vsyncadd [#allocation1], 0
      %s8 = sshll.u32 %s0, 4
      %s9 = int_to_ptr.hbm [resolvable:$true] %s8
      %s10 = sshll.u32 [#allocation0], 4
      %s11 = int_to_ptr.vmem [resolvable:$true] %s10
      %13 = dma.hbm_to_vmem [thread:$0]  %s9, 16, %s11, [#allocation1]
    $region5: #{tile.28} parent=1 // pred_fallthru
      _
    // Predicated region
    $region6: #{tile.28} parent=1 // pred_check
      _
    $region7: #{tile.28} parent=1 // pred_check_branch
      %15 = sbr.rel (0) target = $region9
    $region8: #{tile.28} parent=1 // pred_region
      %17 = dma.done [#allocation1], 16
    $region9: #{tile.28} parent=1 // pred_fallthru
      _
    %v18 = vld [vmem:[#allocation0] ss:$0 sm:$0xff]
    %19 = vst [vmem:[%s1] sm:$0xff] %v18
    %20 = vsyncpa [#allocation1], 1

// kernel: tile.23
$region0: #{tile.23}
  #allocation2 [shape = 's32[1]{0}', space=sflag, size = 0x4, scoped, tag = 'scoped memory for tile.23']
  %s0 = inlined_call_operand.hbm [shape: f32[32], index: 0, kind: input, shape index: {}]
  %s1 = inlined_call_operand.vmem [shape: f32[8,32], index: 1, kind: output, shape index: {}]
  $region1: #{tile.23} parent=0
    #allocation0 [shape = 'u8[512]{0}', space=vmem, size = 0x400, scoped, tag = 'operand span for operand 0']
    #allocation1 [shape = 's32[1]{0}', space=sflag, size = 0x4, scoped, tag = 'scoped memory for tile.23']
    %2 = vsyncpa [#allocation1], 0
    // Predicated region
    $region2: #{tile.23} parent=1 // pred_check
      _
    $region3: #{tile.23} parent=1 // pred_check_branch
      %4 = sbr.rel (0) target = $region5
    $region4: #{tile.23} parent=1 // pred_region
      %6 = vsyncadd [#allocation1], 0
      %s8 = sshll.u32 %s0, 4
      %s9 = int_to_ptr.hbm [resolvable:$true] %s8
      %s10 = sshll.u32 [#allocation0], 4
      %s11 = int_to_ptr.vmem [resolvable:$true] %s10
      %13 = dma.hbm_to_vmem [thread:$0]  %s9, 16, %s11, [#allocation1]
    $region5: #{tile.23} parent=1 // pred_fallthru
      _
    // Predicated region
    $region6: #{tile.23} parent=1 // pred_check
      _
    $region7: #{tile.23} parent=1 // pred_check_branch
      %15 = sbr.rel (0) target = $region9
    $region8: #{tile.23} parent=1 // pred_region
      %17 = dma.done [#allocation1], 16
    $region9: #{tile.23} parent=1 // pred_fallthru
      _
    %v18 = vld [vmem:[#allocation0] ss:$0 sm:$0xff]
    %19 = vst [vmem:[%s1] sm:$0xff] %v18
    %20 = vsyncpa [#allocation1], 1

// kernel: tile.29
$region0: #{tile.29}
  %s0 = inlined_call_operand.vmem [shape: f32[8,3], index: 0, kind: input, shape index: {}]
  %s1 = inlined_call_operand.vmem [shape: f32[1,24], index: 1, kind: output, shape index: {}]
  $region1: #{tile.29} parent=0
    #allocation0 [shape = 'u8[4096]{0}', space=vmem, size = 0x1000, scoped, tag = 'scoped mem for output reshape']
    %v2 = vld [vmem:[%s0] sm:$0x1]
    %vm3 = vcmask 23552
    %4 = vst.msk [vmem:[#allocation0] sm:$0x1] %vm3, %v2
    %s5 = scalar_lea.vmem %s0, 7
    %v6 = vld [vmem:[%s5] sm:$0x1]
    %7 = vrot.lane.b32.xlu0 %v6, 21
    %v8 = vpop.permute.xlu0 %7
    %vm9 = vcmask 195752
    %10 = vst.msk [vmem:[#allocation0] sm:$0x1] %vm9, %v8
    %s11 = scalar_lea.vmem %s0, 6
    %v12 = vld [vmem:[%s11] sm:$0x1]
    %13 = vrot.lane.b32.xlu0 %v12, 18
    %v14 = vpop.permute.xlu0 %13
    %vm15 = vcmask 171152
    %16 = vst.msk [vmem:[#allocation0] sm:$0x1] %vm15, %v14
    %s17 = scalar_lea.vmem %s0, 5
    %v18 = vld [vmem:[%s17] sm:$0x1]
    %19 = vrot.lane.b32.xlu0 %v18, 15
    %v20 = vpop.permute.xlu0 %19
    %vm21 = vcmask 146552
    %22 = vst.msk [vmem:[#allocation0] sm:$0x1] %vm21, %v20
    %s23 = scalar_lea.vmem %s0, 4
    %v24 = vld [vmem:[%s23] sm:$0x1]
    %25 = vrot.lane.b32.xlu0 %v24, 12
    %v26 = vpop.permute.xlu0 %25
    %vm27 = vcmask 121952
    %28 = vst.msk [vmem:[#allocation0] sm:$0x1] %vm27, %v26
    %s29 = scalar_lea.vmem %s0, 3
    %v30 = vld [vmem:[%s29] sm:$0x1]
    %31 = vrot.lane.b32.xlu0 %v30, 9
    %v32 = vpop.permute.xlu0 %31
    %vm33 = vcmask 97352
    %34 = vst.msk [vmem:[#allocation0] sm:$0x1] %vm33, %v32
    %s35 = scalar_lea.vmem %s0, 2
    %v36 = vld [vmem:[%s35] sm:$0x1]
    %37 = vrot.lane.b32.xlu0 %v36, 6
    %v38 = vpop.permute.xlu0 %37
    %vm39 = vcmask 72752
    %40 = vst.msk [vmem:[#allocation0] sm:$0x1] %vm39, %v38
    %s41 = scalar_lea.vmem %s0, 1
    %v42 = vld [vmem:[%s41] sm:$0x1]
    %43 = vrot.lane.b32.xlu0 %v42, 3
    %v44 = vpop.permute.xlu0 %43
    %vm45 = vcmask 48152
    %46 = vst.msk [vmem:[#allocation0] sm:$0x1] %vm45, %v44
    %s48 = ssub.s32 2, 1
    %v49 = vld [vmem:[#allocation0] sm:%s48]
    %s51 = ssub.s32 2, 1
    %52 = vst [vmem:[%s1] sm:%s51] %v49

// kernel: autoencoder3d_forward.8
$region0: #{autoencoder3d_forward.8}
  #allocation0 [shape = 'u32[]', space=smem, size = 0x4, offset = 0x4, fixed_abs, tag = 'smem constant byte address 0x4 - core index']
  #allocation1 [shape = 'u32[72,128]{1,0:T(1,128)}', space=vmem, size = 0x9000, scoped, tag = 'internal scratch']
  %s0 = inlined_call_operand.vmem [shape: bf16[512,81], index: 0, kind: input, shape index: {}]
  %s1 = inlined_call_operand.vmem [shape: bf16[81,128], index: 1, kind: input, shape index: {}]
  %s2 = inlined_call_operand.vmem [shape: f32[1,128], index: 2, kind: input, shape index: {}]
  %s3 = inlined_call_operand.vmem [shape: bf16[512,128], index: 3, kind: output, shape index: {}]
  %s4 = sld [smem:[#allocation0]]
  $region45: #{autoencoder3d_forward.8} parent=0
    _
  %s6 = ssub.s32 1, %s4
  %s7 = scalar_select 0, %s6, %s4
  loop: start=0, step=1, limit=4
  $region2: #{autoencoder3d_forward.8} parent=0 // loop_pre_header
    _
  $region3: #{autoencoder3d_forward.8} parent=0 // loop_header
    %s9 = sphi 0, %s13
    %p10 = scmp.ge.s32.totalorder %s9, 4
    %s16 = sphi 0, %s28
    %s17 = sphi 0, %s24
    %s18 = sphi 0, %s16
    %s19 = sphi 0, %s17
    %s20 = sphi 0, %s18
    %s21 = sphi 0, %s19
    %s31 = sphi 0, %s33
    %s34 = sphi 0, %s31
    %s35 = sphi 0, %s34
    %s51 = sphi 0, %s35
    %s57 = sphi 0, %s59
    %s60 = sphi 0, %s57
    %s61 = sphi 0, %s60
    %s77 = sphi 0, %s61
    %s83 = sphi 0, %s85
    %s86 = sphi 0, %s83
    %s87 = sphi 0, %s86
    %s103 = sphi 0, %s87
    %s111 = sphi 0, %s113
    %s114 = sphi 0, %s111
    %s115 = sphi 0, %s114
    %s131 = sphi 0, %s115
  $region4: #{autoencoder3d_forward.8} parent=0 // loop_header_branch
    %12 = sbr.rel (%p10) target = $region8
  $region5: #{autoencoder3d_forward.8} parent=0 // loop_body
    %s14 = ssub.s32 %s9, 1
    %s15 = ssub.s32 %s9, 2
    %s22 = sadd.s32 1, %s17
    %p23 = scmp.ge.s32.totalorder %s22, 1
    %s24 = scalar_select %p23, 0, %s22
    %s25 = sadd.s32 1, %s16
    %s26 = scalar_select %p23, %s25, %s16
    %p27 = scmp.ge.s32.totalorder %s26, 2
    %s28 = scalar_select %p27, 0, %s26
    %s29 = ssub.s32 %s16, %s28
    %p30 = scmp.eq.s32.totalorder %s29, 0
    %s32 = sadd.s32 %s31, 1
    %s33 = scalar_select %p30, %s31, %s32
    %p36 = pneg %p30
    %p37 = scmp.eq.s32.totalorder %s9, 1
    %p38 = por %p36, %p37
    %p39 = scmp.ne.s32.totalorder %s31, %s34
    %p40 = scmp.eq.s32.totalorder %s9, 0
    %p41 = por %p39, %p40
    %p42 = scmp.ne.s32.totalorder %s31, %s34
    %p43 = scmp.eq.s32.totalorder %s14, 1
    %p44 = por %p42, %p43
    %p45 = scmp.ne.s32.totalorder %s34, %s35
    %p46 = scmp.eq.s32.totalorder %s14, 0
    %p47 = por %p45, %p46
    %p48 = scmp.ne.s32.totalorder %s34, %s35
    %p49 = scmp.eq.s32.totalorder %s15, 1
    %p50 = por %p48, %p49
    %p52 = scmp.ne.s32.totalorder %s35, %s51
    %p53 = scmp.eq.s32.totalorder %s15, 0
    %p54 = por %p52, %p53
    %s55 = ssub.s32 %s17, %s24
    %p56 = scmp.eq.s32.totalorder %s55, 0
    %s58 = sadd.s32 %s57, 1
    %s59 = scalar_select %p56, %s57, %s58
    %p62 = pneg %p56
    %p63 = scmp.eq.s32.totalorder %s9, 1
    %p64 = por %p62, %p63
    %p65 = scmp.ne.s32.totalorder %s57, %s60
    %p66 = scmp.eq.s32.totalorder %s9, 0
    %p67 = por %p65, %p66
    %p68 = scmp.ne.s32.totalorder %s57, %s60
    %p69 = scmp.eq.s32.totalorder %s14, 1
    %p70 = por %p68, %p69
    %p71 = scmp.ne.s32.totalorder %s60, %s61
    %p72 = scmp.eq.s32.totalorder %s14, 0
    %p73 = por %p71, %p72
    %p74 = scmp.ne.s32.totalorder %s60, %s61
    %p75 = scmp.eq.s32.totalorder %s15, 1
    %p76 = por %p74, %p75
    %p78 = scmp.ne.s32.totalorder %s61, %s77
    %p79 = scmp.eq.s32.totalorder %s15, 0
    %p80 = por %p78, %p79
    %s81 = ssub.s32 %s17, %s24
    %p82 = scmp.eq.s32.totalorder %s81, 0
    %s84 = sadd.s32 %s83, 1
    %s85 = scalar_select %p82, %s83, %s84
    %p88 = pneg %p82
    %p89 = scmp.eq.s32.totalorder %s9, 1
    %p90 = por %p88, %p89
    %p91 = scmp.ne.s32.totalorder %s83, %s86
    %p92 = scmp.eq.s32.totalorder %s9, 0
    %p93 = por %p91, %p92
    %p94 = scmp.ne.s32.totalorder %s83, %s86
    %p95 = scmp.eq.s32.totalorder %s14, 1
    %p96 = por %p94, %p95
    %p97 = scmp.ne.s32.totalorder %s86, %s87
    %p98 = scmp.eq.s32.totalorder %s14, 0
    %p99 = por %p97, %p98
    %p100 = scmp.ne.s32.totalorder %s86, %s87
    %p101 = scmp.eq.s32.totalorder %s15, 1
    %p102 = por %p100, %p101
    %p104 = scmp.ne.s32.totalorder %s87, %s103
    %p105 = scmp.eq.s32.totalorder %s15, 0
    %p106 = por %p104, %p105
    %s107 = ssub.s32 %s16, %s28
    %s108 = ssub.s32 %s17, %s24
    %s109 = sor.u32 %s107, %s108
    %p110 = scmp.eq.s32.totalorder %s109, 0
    %s112 = sadd.s32 %s111, 1
    %s113 = scalar_select %p110, %s111, %s112
    %p116 = pneg %p110
    %p117 = scmp.eq.s32.totalorder %s9, 1
    %p118 = por %p116, %p117
    %p119 = scmp.ne.s32.totalorder %s111, %s114
    %p120 = scmp.eq.s32.totalorder %s9, 0
    %p121 = por %p119, %p120
    %p122 = scmp.ne.s32.totalorder %s111, %s114
    %p123 = scmp.eq.s32.totalorder %s14, 1
    %p124 = por %p122, %p123
    %p125 = scmp.ne.s32.totalorder %s114, %s115
    %p126 = scmp.eq.s32.totalorder %s14, 0
    %p127 = por %p125, %p126
    %p128 = scmp.ne.s32.totalorder %s114, %s115
    %p129 = scmp.eq.s32.totalorder %s15, 1
    %p130 = por %p128, %p129
    %p132 = scmp.ne.s32.totalorder %s115, %s131
    %p133 = scmp.eq.s32.totalorder %s15, 0
    %p134 = por %p132, %p133
    %p135 = scmp.le.s32.totalorder 1, %s9
    %p136 = scmp.lt.s32.totalorder %s9, 3
    %p137 = pnand %p135, %p136
    %p138 = pneg %p137
    // Predicated region
    $region9: #{autoencoder3d_forward.8} parent=5 // pred_check
      _
    $region10: #{autoencoder3d_forward.8} parent=5 // pred_check_branch
      %140 = sbr.rel (%p137) target = $region12
    $region11: #{autoencoder3d_forward.8} parent=5 // pred_region
      %s141 = ssub.s32 %s9, 1
      // Predicated region
      $region13: #{autoencoder3d_forward.8} parent=11 // pred_check
        %p142 = pneg %p73
      $region14: #{autoencoder3d_forward.8} parent=11 // pred_check_branch
        %144 = sbr.rel (%p142) target = $region16
      $region15: #{autoencoder3d_forward.8} parent=11 // pred_region
        %p145 = scmp.lt.s32.totalorder %s19, 0
        %s146 = scalar_select %p145, %s19, 0
        %s147 = smul.addr %s146, 4
        %s148 = scalar_lea.vmem %s1, %s147
      $region16: #{autoencoder3d_forward.8} parent=11 // pred_fallthru
        _
      // Predicated region
      $region17: #{autoencoder3d_forward.8} parent=11 // pred_check
        %p149 = pneg %p99
      $region18: #{autoencoder3d_forward.8} parent=11 // pred_check_branch
        %151 = sbr.rel (%p149) target = $region20
      $region19: #{autoencoder3d_forward.8} parent=11 // pred_region
        %p152 = scmp.lt.s32.totalorder %s19, 0
        %s153 = scalar_select %p152, %s19, 0
        %s154 = scalar_lea.vmem %s2, %s153
      $region20: #{autoencoder3d_forward.8} parent=11 // pred_fallthru
        _
    $region12: #{autoencoder3d_forward.8} parent=5 // pred_fallthru
      _
    %p155 = scmp.lt.s32.totalorder %s9, 2
    // Predicated region
    $region21: #{autoencoder3d_forward.8} parent=5 // pred_check
      %p156 = pneg %p155
    $region22: #{autoencoder3d_forward.8} parent=5 // pred_check_branch
      %158 = sbr.rel (%p156) target = $region24
    $region23: #{autoencoder3d_forward.8} parent=5 // pred_region
      // Predicated region
      $region25: #{autoencoder3d_forward.8} parent=23 // pred_check
        %p159 = pneg %p41
      $region26: #{autoencoder3d_forward.8} parent=23 // pred_check_branch
        %161 = sbr.rel (%p159) target = $region28
      $region27: #{autoencoder3d_forward.8} parent=23 // pred_region
        %s162 = smul.u32 32, %s16
        %p163 = scmp.lt.s32.totalorder %s162, 63
        %s164 = scalar_select %p163, %s162, 63
        %s165 = smul.addr %s164, 4
        %s166 = scalar_lea.vmem %s0, %s165
        %s167 = smul.u32 32, %s16
      $region28: #{autoencoder3d_forward.8} parent=23 // pred_fallthru
        _
    $region24: #{autoencoder3d_forward.8} parent=5 // pred_fallthru
      _
    %p168 = scmp.le.s32.totalorder 1, %s9
    %p169 = scmp.lt.s32.totalorder %s9, 3
    %p170 = pnand %p168, %p169
    %p171 = pneg %p170
    // Predicated region
    $region29: #{autoencoder3d_forward.8} parent=5 // pred_check
      _
    $region30: #{autoencoder3d_forward.8} parent=5 // pred_check_branch
      %173 = sbr.rel (%p170) target = $region32
    $region31: #{autoencoder3d_forward.8} parent=5 // pred_region
      %s174 = ssub.s32 %s9, 1
      %s175 = smul.u32 32, %s18
      %p176 = scmp.lt.s32.totalorder %s175, 63
      %s177 = scalar_select %p176, %s175, 63
      %s178 = smul.addr %s177, 4
      %s179 = scalar_lea.vmem %s0, %s178
      %p180 = pneg %p47
      %p181 = pneg %p44
      %p182 = scmp.lt.s32.totalorder %s19, 0
      %s183 = scalar_select %p182, %s19, 0
      %s184 = smul.addr %s183, 4
      %s185 = scalar_lea.vmem %s1, %s184
      %p186 = pneg %p73
      %p187 = pneg %p70
      %p188 = scmp.lt.s32.totalorder %s19, 0
      %s189 = scalar_select %p188, %s19, 0
      %s190 = scalar_lea.vmem %s2, %s189
      %p191 = pneg %p99
      %p192 = pneg %p96
      %p193 = pneg %p127
      %p194 = pneg %p124
      %s195 = smul.u32 32, %s18
      %p196 = scmp.lt.s32.totalorder %s195, 63
      %s197 = scalar_select %p196, %s195, 63
      %p198 = scmp.lt.s32.totalorder %s19, 0
      %s199 = scalar_select %p198, %s19, 0
      %s200 = sadd.s32 %s199, %s197
      %s201 = smul.addr %s200, 4
      %s202 = scalar_lea.vmem %s3, %s201
      %s203 = smul.u32 32, %s18
      %p204 = scmp.lt.s32.totalorder %s203, 63
      %s205 = scalar_select %p204, %s203, 63
      %s206 = smul.addr %s205, 4
      %s207 = scalar_lea.vmem %s0, %s206
      %s208 = smul.u32 32, %s18
      %p209 = scmp.lt.s32.totalorder %s19, 0
      %s210 = scalar_select %p209, %s19, 0
      %s211 = smul.addr %s210, 4
      %s212 = scalar_lea.vmem %s1, %s211
      %p213 = scmp.lt.s32.totalorder %s19, 0
      %s214 = scalar_select %p213, %s19, 0
      %s215 = scalar_lea.vmem %s2, %s214
      %s216 = smul.u32 32, %s18
      %p217 = scmp.lt.s32.totalorder %s216, 63
      %s218 = scalar_select %p217, %s216, 63
      %p219 = scmp.lt.s32.totalorder %s19, 0
      %s220 = scalar_select %p219, %s19, 0
      %s221 = sadd.s32 %s220, %s218
      %s222 = smul.addr %s221, 4
      %s223 = scalar_lea.vmem %s3, %s222
      %s224 = smul.u32 32, %s18
      %v226 = vld [vmem:[%s207] sm:$0xf]
      %v227 = vld [vmem:[%s207 + $0x4] sm:$0xf]
      %v228 = vld [vmem:[%s207 + $0x8] sm:$0xf]
      %v229 = vld [vmem:[%s207 + $0xc] sm:$0xf]
      %v230 = vld [vmem:[%s207 + $0x10] sm:$0xf]
      %v231 = vld [vmem:[%s207 + $0x14] sm:$0xf]
      %v232 = vld [vmem:[%s207 + $0x18] sm:$0xf]
      %v233 = vld [vmem:[%s207 + $0x1c] sm:$0xf]
      %v234 = vld [vmem:[%s207 + $0x20] sm:$0xf]
      %v235 = vld [vmem:[%s207 + $0x24] sm:$0xf]
      %v236 = vld [vmem:[%s207 + $0x28] sm:$0xf]
      %v237 = vld [vmem:[%s207 + $0x2c] sm:$0xf]
      %v238 = vld [vmem:[%s207 + $0x30] sm:$0xf]
      %v239 = vld [vmem:[%s207 + $0x34] sm:$0xf]
      %v240 = vld [vmem:[%s207 + $0x38] sm:$0xf]
      %v241 = vld [vmem:[%s207 + $0x3c] sm:$0xf]
      %v242 = vld [vmem:[%s207 + $0x40] sm:$0xf]
      %v243 = vld [vmem:[%s207 + $0x44] sm:$0xf]
      %v244 = vld [vmem:[%s207 + $0x48] sm:$0xf]
      %v245 = vld [vmem:[%s207 + $0x4c] sm:$0xf]
      %v246 = vld [vmem:[%s207 + $0x50] sm:$0xf]
      %v247 = vld [vmem:[%s207 + $0x54] sm:$0xf]
      %v248 = vld [vmem:[%s207 + $0x58] sm:$0xf]
      %v249 = vld [vmem:[%s207 + $0x5c] sm:$0xf]
      %v250 = vld [vmem:[%s207 + $0x60] sm:$0xf]
      %v251 = vld [vmem:[%s207 + $0x64] sm:$0xf]
      %v252 = vld [vmem:[%s207 + $0x68] sm:$0xf]
      %v253 = vld [vmem:[%s207 + $0x6c] sm:$0xf]
      %v254 = vld [vmem:[%s207 + $0x70] sm:$0xf]
      %v255 = vld [vmem:[%s207 + $0x74] sm:$0xf]
      %v256 = vld [vmem:[%s207 + $0x78] sm:$0xf]
      %v257 = vld [vmem:[%s207 + $0x7c] sm:$0xf]
      %v258 = vld [vmem:[%s212] sm:$0xf]
      %v259 = vld [vmem:[%s212 + $0x4] sm:$0xf]
      %v260 = vld [vmem:[%s212 + $0x8] sm:$0xf]
      %v261 = vld [vmem:[%s212 + $0xc] sm:$0xf]
      %v262 = vld [vmem:[%s212 + $0x10] sm:$0xf]
      %v263 = vld [vmem:[%s212 + $0x14] sm:$0xf]
      %v264 = vld [vmem:[%s212 + $0x18] sm:$0xf]
      %v265 = vld [vmem:[%s212 + $0x1c] sm:$0xf]
      %v266 = vld [vmem:[%s212 + $0x20] sm:$0xf]
      %v267 = vld [vmem:[%s212 + $0x24] sm:$0xf]
      %v268 = vld [vmem:[%s212 + $0x28] sm:$0x1]
      %v269 = vld [vmem:[%s215] sm:$0x1]
      %v271 = vperm.slane %v269, 0
      %v305 = vunpack.c.l.b16 %v226
      %v306 = vunpack.c.l.b16 %v227
      %v307 = vunpack.c.l.b16 %v228
      %v308 = vunpack.c.l.b16 %v229
      %v309 = vunpack.c.l.b16 %v230
      %v310 = vunpack.c.l.b16 %v231
      %v311 = vunpack.c.l.b16 %v232
      %v312 = vunpack.c.l.b16 %v233
      %v313 = vunpack.c.l.b16 %v234
      %v314 = vunpack.c.l.b16 %v235
      %v315 = vunpack.c.l.b16 %v236
      %v316 = vunpack.c.l.b16 %v237
      %v317 = vunpack.c.l.b16 %v238
      %v318 = vunpack.c.l.b16 %v239
      %v319 = vunpack.c.l.b16 %v240
      %v320 = vunpack.c.l.b16 %v241
      %v321 = vunpack.c.l.b16 %v242
      %v322 = vunpack.c.l.b16 %v243
      %v323 = vunpack.c.l.b16 %v244
      %v324 = vunpack.c.l.b16 %v245
      %v325 = vunpack.c.l.b16 %v246
      %v326 = vunpack.c.l.b16 %v247
      %v327 = vunpack.c.l.b16 %v248
      %v328 = vunpack.c.l.b16 %v249
      %v329 = vunpack.c.l.b16 %v250
      %v330 = vunpack.c.l.b16 %v251
      %v331 = vunpack.c.l.b16 %v252
      %v332 = vunpack.c.l.b16 %v253
      %v333 = vunpack.c.l.b16 %v254
      %v334 = vunpack.c.l.b16 %v255
      %v335 = vunpack.c.l.b16 %v256
      %v336 = vunpack.c.l.b16 %v257
      %v337 = vpack.c.b16 %v306, %v305
      %v338 = vpack.c.b16 %v308, %v307
      %v339 = vpack.c.b16 %v310, %v309
      %v340 = vpack.c.b16 %v312, %v311
      %v341 = vpack.c.b16 %v314, %v313
      %v342 = vpack.c.b16 %v316, %v315
      %v343 = vpack.c.b16 %v318, %v317
      %v344 = vpack.c.b16 %v320, %v319
      %v345 = vpack.c.b16 %v322, %v321
      %v346 = vpack.c.b16 %v324, %v323
      %v347 = vpack.c.b16 %v326, %v325
      %v348 = vpack.c.b16 %v328, %v327
      %v349 = vpack.c.b16 %v330, %v329
      %v350 = vpack.c.b16 %v332, %v331
      %v351 = vpack.c.b16 %v334, %v333
      %v352 = vpack.c.b16 %v336, %v335
      %v364 = vunpack.c.l.b16 %v258
      %v365 = vunpack.c.l.b16 %v259
      %v366 = vunpack.c.l.b16 %v260
      %v367 = vunpack.c.l.b16 %v261
      %v368 = vunpack.c.l.b16 %v262
      %v369 = vunpack.c.l.b16 %v263
      %v370 = vunpack.c.l.b16 %v264
      %v371 = vunpack.c.l.b16 %v265
      %v372 = vunpack.c.l.b16 %v266
      %v373 = vunpack.c.l.b16 %v267
      %v374 = vunpack.c.l.b16 %v268
      %v375 = vpack.c.b16 %v365, %v364
      %v376 = vpack.c.b16 %v367, %v366
      %v377 = vpack.c.b16 %v369, %v368
      %v378 = vpack.c.b16 %v371, %v370
      %v379 = vpack.c.b16 %v373, %v372
      %v380 = vpack.c.b16 %v374, %v374
      %vm386 = vcmask 662528
      %v388 = vsel %vm386, %v337, 0
      %v391 = vsel %vm386, %v338, 0
      %v394 = vsel %vm386, %v339, 0
      %v397 = vsel %vm386, %v340, 0
      %v400 = vsel %vm386, %v341, 0
      %v403 = vsel %vm386, %v342, 0
      %v406 = vsel %vm386, %v343, 0
      %v409 = vsel %vm386, %v344, 0
      %v412 = vsel %vm386, %v345, 0
      %v415 = vsel %vm386, %v346, 0
      %v418 = vsel %vm386, %v347, 0
      %v421 = vsel %vm386, %v348, 0
      %v424 = vsel %vm386, %v349, 0
      %v427 = vsel %vm386, %v350, 0
      %v430 = vsel %vm386, %v351, 0
      %v433 = vsel %vm386, %v352, 0
      %vm435 = vcmask 1040384
      %v436 = vsel 0, 4294967295, 65535
      %v437 = vsel %vm435, %v436, 0
      %v439 = vand.u32 %v380, %v437
      %441 = vmatpush.bf16.msra.mxu0 0
      %442 = vmatpush.bf16.msra.mxu0 0
      %443 = vmatpush.bf16.msra.mxu0 %v439
      %444 = vmatpush.bf16.msra.mxu0 %v379
      %445 = vmatpush.bf16.msra.mxu0 %v378
      %446 = vmatpush.bf16.msra.mxu0 %v377
      %447 = vmatpush.bf16.msra.mxu0 %v376
      %448 = vmatpush.bf16.msra.mxu0 %v375
      %449 = vmatmul.bf16.gmra.mxu0 %v388
      %v450 = vpop.f32.mrf.mxu0
      %v451 = vadd.f32 %v271, %v450
      %v452 = vpop.f32.mrf.mxu0
      %v453 = vadd.f32 %v271, %v452
      %454 = vmatmul.bf16.gmra.mxu0 %v391
      %v455 = vpop.f32.mrf.mxu0
      %v456 = vadd.f32 %v271, %v455
      %v457 = vpop.f32.mrf.mxu0
      %v458 = vadd.f32 %v271, %v457
      %459 = vmatmul.bf16.gmra.mxu0 %v394
      %v460 = vpop.f32.mrf.mxu0
      %v461 = vadd.f32 %v271, %v460
      %v462 = vpop.f32.mrf.mxu0
      %v463 = vadd.f32 %v271, %v462
      %464 = vmatmul.bf16.gmra.mxu0 %v397
      %v465 = vpop.f32.mrf.mxu0
      %v466 = vadd.f32 %v271, %v465
      %v467 = vpop.f32.mrf.mxu0
      %v468 = vadd.f32 %v271, %v467
      %469 = vmatmul.bf16.gmra.mxu0 %v400
      %v470 = vpop.f32.mrf.mxu0
      %v471 = vadd.f32 %v271, %v470
      %v472 = vpop.f32.mrf.mxu0
      %v473 = vadd.f32 %v271, %v472
      %474 = vmatmul.bf16.gmra.mxu0 %v403
      %v475 = vpop.f32.mrf.mxu0
      %v476 = vadd.f32 %v271, %v475
      %v477 = vpop.f32.mrf.mxu0
      %v478 = vadd.f32 %v271, %v477
      %479 = vmatmul.bf16.gmra.mxu0 %v406
      %v480 = vpop.f32.mrf.mxu0
      %v481 = vadd.f32 %v271, %v480
      %v482 = vpop.f32.mrf.mxu0
      %v483 = vadd.f32 %v271, %v482
      %484 = vmatmul.bf16.gmra.mxu0 %v409
      %v485 = vpop.f32.mrf.mxu0
      %v486 = vadd.f32 %v271, %v485
      %v487 = vpop.f32.mrf.mxu0
      %v488 = vadd.f32 %v271, %v487
      %489 = vmatmul.bf16.gmra.mxu0 %v412
      %v490 = vpop.f32.mrf.mxu0
      %v491 = vadd.f32 %v271, %v490
      %v492 = vpop.f32.mrf.mxu0
      %v493 = vadd.f32 %v271, %v492
      %494 = vmatmul.bf16.gmra.mxu0 %v415
      %v495 = vpop.f32.mrf.mxu0
      %v496 = vadd.f32 %v271, %v495
      %v497 = vpop.f32.mrf.mxu0
      %v498 = vadd.f32 %v271, %v497
      %499 = vmatmul.bf16.gmra.mxu0 %v418
      %v500 = vpop.f32.mrf.mxu0
      %v501 = vadd.f32 %v271, %v500
      %v502 = vpop.f32.mrf.mxu0
      %v503 = vadd.f32 %v271, %v502
      %504 = vmatmul.bf16.gmra.mxu0 %v421
      %v505 = vpop.f32.mrf.mxu0
      %v506 = vadd.f32 %v271, %v505
      %v507 = vpop.f32.mrf.mxu0
      %v508 = vadd.f32 %v271, %v507
      %509 = vmatmul.bf16.gmra.mxu0 %v424
      %v510 = vpop.f32.mrf.mxu0
      %v511 = vadd.f32 %v271, %v510
      %v512 = vpop.f32.mrf.mxu0
      %v513 = vadd.f32 %v271, %v512
      %514 = vmatmul.bf16.gmra.mxu0 %v427
      %v515 = vpop.f32.mrf.mxu0
      %v516 = vadd.f32 %v271, %v515
      %v517 = vpop.f32.mrf.mxu0
      %v518 = vadd.f32 %v271, %v517
      %519 = vmatmul.bf16.gmra.mxu0 %v430
      %v520 = vpop.f32.mrf.mxu0
      %v521 = vadd.f32 %v271, %v520
      %v522 = vpop.f32.mrf.mxu0
      %v523 = vadd.f32 %v271, %v522
      %524 = vmatmul.bf16.gmra.mxu0 %v433
      %v525 = vpop.f32.mrf.mxu0
      %v526 = vadd.f32 %v271, %v525
      %v527 = vpop.f32.mrf.mxu0
      %v528 = vadd.f32 %v271, %v527
      %529 = vdwg.mxu0
      %v530 = vmul.f32 %v451, 0.2
      %v531 = vmul.f32 %v453, 0.2
      %v532 = vmul.f32 %v456, 0.2
      %v533 = vmul.f32 %v458, 0.2
      %v534 = vmul.f32 %v461, 0.2
      %v535 = vmul.f32 %v463, 0.2
      %v536 = vmul.f32 %v466, 0.2
      %v537 = vmul.f32 %v468, 0.2
      %v538 = vmul.f32 %v471, 0.2
      %v539 = vmul.f32 %v473, 0.2
      %v540 = vmul.f32 %v476, 0.2
      %v541 = vmul.f32 %v478, 0.2
      %v542 = vmul.f32 %v481, 0.2
      %v543 = vmul.f32 %v483, 0.2
      %v544 = vmul.f32 %v486, 0.2
      %v545 = vmul.f32 %v488, 0.2
      %v546 = vmul.f32 %v491, 0.2
      %v547 = vmul.f32 %v493, 0.2
      %v548 = vmul.f32 %v496, 0.2
      %v549 = vmul.f32 %v498, 0.2
      %v550 = vmul.f32 %v501, 0.2
      %v551 = vmul.f32 %v503, 0.2
      %v552 = vmul.f32 %v506, 0.2
      %v553 = vmul.f32 %v508, 0.2
      %v554 = vmul.f32 %v511, 0.2
      %v555 = vmul.f32 %v513, 0.2
      %v556 = vmul.f32 %v516, 0.2
      %v557 = vmul.f32 %v518, 0.2
      %v558 = vmul.f32 %v521, 0.2
      %v559 = vmul.f32 %v523, 0.2
      %v560 = vmul.f32 %v526, 0.2
      %v561 = vmul.f32 %v528, 0.2
      %v562 = vmax.f32 %v451, %v530
      %v563 = vmax.f32 %v453, %v531
      %v564 = vmax.f32 %v456, %v532
      %v565 = vmax.f32 %v458, %v533
      %v566 = vmax.f32 %v461, %v534
      %v567 = vmax.f32 %v463, %v535
      %v568 = vmax.f32 %v466, %v536
      %v569 = vmax.f32 %v468, %v537
      %v570 = vmax.f32 %v471, %v538
      %v571 = vmax.f32 %v473, %v539
      %v572 = vmax.f32 %v476, %v540
      %v573 = vmax.f32 %v478, %v541
      %v574 = vmax.f32 %v481, %v542
      %v575 = vmax.f32 %v483, %v543
      %v576 = vmax.f32 %v486, %v544
      %v577 = vmax.f32 %v488, %v545
      %v578 = vmax.f32 %v491, %v546
      %v579 = vmax.f32 %v493, %v547
      %v580 = vmax.f32 %v496, %v548
      %v581 = vmax.f32 %v498, %v549
      %v582 = vmax.f32 %v501, %v550
      %v583 = vmax.f32 %v503, %v551
      %v584 = vmax.f32 %v506, %v552
      %v585 = vmax.f32 %v508, %v553
      %v586 = vmax.f32 %v511, %v554
      %v587 = vmax.f32 %v513, %v555
      %v588 = vmax.f32 %v516, %v556
      %v589 = vmax.f32 %v518, %v557
      %v590 = vmax.f32 %v521, %v558
      %v591 = vmax.f32 %v523, %v559
      %v592 = vmax.f32 %v526, %v560
      %v593 = vmax.f32 %v528, %v561
      %v594 = vpack.c.bf16 %v562, %v562
      %v595 = vpack.c.bf16 %v563, %v563
      %v596 = vpack.c.bf16 %v564, %v564
      %v597 = vpack.c.bf16 %v565, %v565
      %v598 = vpack.c.bf16 %v566, %v566
      %v599 = vpack.c.bf16 %v567, %v567
      %v600 = vpack.c.bf16 %v568, %v568
      %v601 = vpack.c.bf16 %v569, %v569
      %v602 = vpack.c.bf16 %v570, %v570
      %v603 = vpack.c.bf16 %v571, %v571
      %v604 = vpack.c.bf16 %v572, %v572
      %v605 = vpack.c.bf16 %v573, %v573
      %v606 = vpack.c.bf16 %v574, %v574
      %v607 = vpack.c.bf16 %v575, %v575
      %v608 = vpack.c.bf16 %v576, %v576
      %v609 = vpack.c.bf16 %v577, %v577
      %v610 = vpack.c.bf16 %v578, %v578
      %v611 = vpack.c.bf16 %v579, %v579
      %v612 = vpack.c.bf16 %v580, %v580
      %v613 = vpack.c.bf16 %v581, %v581
      %v614 = vpack.c.bf16 %v582, %v582
      %v615 = vpack.c.bf16 %v583, %v583
      %v616 = vpack.c.bf16 %v584, %v584
      %v617 = vpack.c.bf16 %v585, %v585
      %v618 = vpack.c.bf16 %v586, %v586
      %v619 = vpack.c.bf16 %v587, %v587
      %v620 = vpack.c.bf16 %v588, %v588
      %v621 = vpack.c.bf16 %v589, %v589
      %v622 = vpack.c.bf16 %v590, %v590
      %v623 = vpack.c.bf16 %v591, %v591
      %v624 = vpack.c.bf16 %v592, %v592
      %v625 = vpack.c.bf16 %v593, %v593
      %626 = vst [vmem:[%s223] sm:$0xf] %v594
      %627 = vst [vmem:[%s223 + $0x4] sm:$0xf] %v595
      %628 = vst [vmem:[%s223 + $0x8] sm:$0xf] %v596
      %629 = vst [vmem:[%s223 + $0xc] sm:$0xf] %v597
      %630 = vst [vmem:[%s223 + $0x10] sm:$0xf] %v598
      %631 = vst [vmem:[%s223 + $0x14] sm:$0xf] %v599
      %632 = vst [vmem:[%s223 + $0x18] sm:$0xf] %v600
      %633 = vst [vmem:[%s223 + $0x1c] sm:$0xf] %v601
      %634 = vst [vmem:[%s223 + $0x20] sm:$0xf] %v602
      %635 = vst [vmem:[%s223 + $0x24] sm:$0xf] %v603
      %636 = vst [vmem:[%s223 + $0x28] sm:$0xf] %v604
      %637 = vst [vmem:[%s223 + $0x2c] sm:$0xf] %v605
      %638 = vst [vmem:[%s223 + $0x30] sm:$0xf] %v606
      %639 = vst [vmem:[%s223 + $0x34] sm:$0xf] %v607
      %640 = vst [vmem:[%s223 + $0x38] sm:$0xf] %v608
      %641 = vst [vmem:[%s223 + $0x3c] sm:$0xf] %v609
      %642 = vst [vmem:[%s223 + $0x40] sm:$0xf] %v610
      %643 = vst [vmem:[%s223 + $0x44] sm:$0xf] %v611
      %644 = vst [vmem:[%s223 + $0x48] sm:$0xf] %v612
      %645 = vst [vmem:[%s223 + $0x4c] sm:$0xf] %v613
      %646 = vst [vmem:[%s223 + $0x50] sm:$0xf] %v614
      %647 = vst [vmem:[%s223 + $0x54] sm:$0xf] %v615
      %648 = vst [vmem:[%s223 + $0x58] sm:$0xf] %v616
      %649 = vst [vmem:[%s223 + $0x5c] sm:$0xf] %v617
      %650 = vst [vmem:[%s223 + $0x60] sm:$0xf] %v618
      %651 = vst [vmem:[%s223 + $0x64] sm:$0xf] %v619
      %652 = vst [vmem:[%s223 + $0x68] sm:$0xf] %v620
      %653 = vst [vmem:[%s223 + $0x6c] sm:$0xf] %v621
      %654 = vst [vmem:[%s223 + $0x70] sm:$0xf] %v622
      %655 = vst [vmem:[%s223 + $0x74] sm:$0xf] %v623
      %656 = vst [vmem:[%s223 + $0x78] sm:$0xf] %v624
      %657 = vst [vmem:[%s223 + $0x7c] sm:$0xf] %v625
      %s658 = smul.u32 32, %s18
      %p659 = scmp.lt.s32.totalorder %s658, 63
      %s660 = scalar_select %p659, %s658, 63
      %p661 = scmp.lt.s32.totalorder %s19, 0
      %s662 = scalar_select %p661, %s19, 0
      %s663 = sadd.s32 %s662, %s660
      %s664 = smul.addr %s663, 4
      %s665 = scalar_lea.vmem %s3, %s664
      // Predicated region
      $region33: #{autoencoder3d_forward.8} parent=31 // pred_check
        %p666 = pneg %p124
      $region34: #{autoencoder3d_forward.8} parent=31 // pred_check_branch
        %668 = sbr.rel (%p666) target = $region36
      $region35: #{autoencoder3d_forward.8} parent=31 // pred_region
        %s669 = smul.u32 32, %s18
      $region36: #{autoencoder3d_forward.8} parent=31 // pred_fallthru
        _
    $region32: #{autoencoder3d_forward.8} parent=5 // pred_fallthru
      _
    %p670 = scmp.le.s32.totalorder 2, %s9
    // Predicated region
    $region37: #{autoencoder3d_forward.8} parent=5 // pred_check
      %p671 = pneg %p670
    $region38: #{autoencoder3d_forward.8} parent=5 // pred_check_branch
      %673 = sbr.rel (%p671) target = $region40
    $region39: #{autoencoder3d_forward.8} parent=5 // pred_region
      %s674 = ssub.s32 %s9, 2
      // Predicated region
      $region41: #{autoencoder3d_forward.8} parent=39 // pred_check
        %p675 = pneg %p130
      $region42: #{autoencoder3d_forward.8} parent=39 // pred_check_branch
        %677 = sbr.rel (%p675) target = $region44
      $region43: #{autoencoder3d_forward.8} parent=39 // pred_region
        %s678 = smul.u32 32, %s20
        %p679 = scmp.lt.s32.totalorder %s678, 63
        %s680 = scalar_select %p679, %s678, 63
        %p681 = scmp.lt.s32.totalorder %s21, 0
        %s682 = scalar_select %p681, %s21, 0
        %s683 = sadd.s32 %s682, %s680
        %s684 = smul.addr %s683, 4
        %s685 = scalar_lea.vmem %s3, %s684
      $region44: #{autoencoder3d_forward.8} parent=39 // pred_fallthru
        _
    $region40: #{autoencoder3d_forward.8} parent=5 // pred_fallthru
      _
  $region6: #{autoencoder3d_forward.8} parent=0 // loop_footer
    %s13 = sadd.s32 1, %s9
  $region7: #{autoencoder3d_forward.8} parent=0 // loop_footer_branch
    %8 = sbr.rel target = $region3
  $region8: #{autoencoder3d_forward.8} parent=0 // loop_exit
    _

// kernel: autoencoder3d_forward.9
$region0: #{autoencoder3d_forward.9}
  #allocation0 [shape = 'u32[]', space=smem, size = 0x4, offset = 0x4, fixed_abs, tag = 'smem constant byte address 0x4 - core index']
  #allocation1 [shape = 'u32[72,128]{1,0:T(1,128)}', space=vmem, size = 0x9000, scoped, tag = 'internal scratch']
  %s0 = inlined_call_operand.vmem [shape: bf16[64,864], index: 0, kind: input, shape index: {}]
  %s1 = inlined_call_operand.vmem [shape: bf16[864,128], index: 1, kind: input, shape index: {}]
  %s2 = inlined_call_operand.vmem [shape: f32[1,128], index: 2, kind: input, shape index: {}]
  %s3 = inlined_call_operand.vmem [shape: bf16[64,128], index: 3, kind: output, shape index: {}]
  %s4 = sld [smem:[#allocation0]]
  $region22: #{autoencoder3d_forward.9} parent=0
    _
  %s6 = ssub.s32 1, %s4
  %s7 = scalar_select 0, %s6, %s4
  // Predicated region
  $region2: #{autoencoder3d_forward.9} parent=0 // pred_check
    _
  $region3: #{autoencoder3d_forward.9} parent=0 // pred_check_branch
    %9 = sbr.rel (0) target = $region5
  $region4: #{autoencoder3d_forward.9} parent=0 // pred_region
    _
  $region5: #{autoencoder3d_forward.9} parent=0 // pred_fallthru
    _
  // Predicated region
  $region6: #{autoencoder3d_forward.9} parent=0 // pred_check
    _
  $region7: #{autoencoder3d_forward.9} parent=0 // pred_check_branch
    %11 = sbr.rel (0) target = $region9
  $region8: #{autoencoder3d_forward.9} parent=0 // pred_region
    _
  $region9: #{autoencoder3d_forward.9} parent=0 // pred_fallthru
    _
  // Predicated region
  $region10: #{autoencoder3d_forward.9} parent=0 // pred_check
    _
  $region11: #{autoencoder3d_forward.9} parent=0 // pred_check_branch
    %13 = sbr.rel (0) target = $region13
  $region12: #{autoencoder3d_forward.9} parent=0 // pred_region
    _
  $region13: #{autoencoder3d_forward.9} parent=0 // pred_fallthru
    _
  %v15 = vld [vmem:[%s0] sm:$0xff]
  %v16 = vld [vmem:[%s0 + $0x8] sm:$0xff]
  %v17 = vld [vmem:[%s0 + $0x10] sm:$0xff]
  %v18 = vld [vmem:[%s0 + $0x18] sm:$0xf]
  %v19 = vld [vmem:[%s0 + $0x1c] sm:$0xff]
  %v20 = vld [vmem:[%s0 + $0x24] sm:$0xff]
  %v21 = vld [vmem:[%s0 + $0x2c] sm:$0xff]
  %v22 = vld [vmem:[%s0 + $0x34] sm:$0xf]
  %v23 = vld [vmem:[%s0 + $0x38] sm:$0xff]
  %v24 = vld [vmem:[%s0 + $0x40] sm:$0xff]
  %v25 = vld [vmem:[%s0 + $0x48] sm:$0xff]
  %v26 = vld [vmem:[%s0 + $0x50] sm:$0xf]
  %v27 = vld [vmem:[%s0 + $0x54] sm:$0xff]
  %v28 = vld [vmem:[%s0 + $0x5c] sm:$0xff]
  %v29 = vld [vmem:[%s0 + $0x64] sm:$0xff]
  %v30 = vld [vmem:[%s0 + $0x6c] sm:$0xf]
  %v31 = vld [vmem:[%s0 + $0x70] sm:$0xff]
  %v32 = vld [vmem:[%s0 + $0x78] sm:$0xff]
  %v33 = vld [vmem:[%s0 + $0x80] sm:$0xff]
  %v34 = vld [vmem:[%s0 + $0x88] sm:$0xf]
  %v35 = vld [vmem:[%s0 + $0x8c] sm:$0xff]
  %v36 = vld [vmem:[%s0 + $0x94] sm:$0xff]
  %v37 = vld [vmem:[%s0 + $0x9c] sm:$0xff]
  %v38 = vld [vmem:[%s0 + $0xa4] sm:$0xf]
  %v39 = vld [vmem:[%s0 + $0xa8] sm:$0xff]
  %v40 = vld [vmem:[%s0 + $0xb0] sm:$0xff]
  %v41 = vld [vmem:[%s0 + $0xb8] sm:$0xff]
  %v42 = vld [vmem:[%s0 + $0xc0] sm:$0xf]
  %v43 = vld [vmem:[%s0 + $0xc4] sm:$0xff]
  %v44 = vld [vmem:[%s0 + $0xcc] sm:$0xff]
  %v45 = vld [vmem:[%s0 + $0xd4] sm:$0xff]
  %v46 = vld [vmem:[%s0 + $0xdc] sm:$0xf]
  %v47 = vld [vmem:[%s1] sm:$0xf]
  %v48 = vld [vmem:[%s1 + $0x4] sm:$0xf]
  %v49 = vld [vmem:[%s1 + $0x8] sm:$0xf]
  %v50 = vld [vmem:[%s1 + $0xc] sm:$0xf]
  %v51 = vld [vmem:[%s1 + $0x10] sm:$0xf]
  %v52 = vld [vmem:[%s1 + $0x14] sm:$0xf]
  %v53 = vld [vmem:[%s1 + $0x18] sm:$0xf]
  %v54 = vld [vmem:[%s1 + $0x1c] sm:$0xf]
  %v55 = vld [vmem:[%s1 + $0x20] sm:$0xf]
  %v56 = vld [vmem:[%s1 + $0x24] sm:$0xf]
  %v57 = vld [vmem:[%s1 + $0x28] sm:$0xf]
  %v58 = vld [vmem:[%s1 + $0x2c] sm:$0xf]
  %v59 = vld [vmem:[%s1 + $0x30] sm:$0xf]
  %v60 = vld [vmem:[%s1 + $0x34] sm:$0xf]
  %v61 = vld [vmem:[%s1 + $0x38] sm:$0xf]
  %v62 = vld [vmem:[%s1 + $0x3c] sm:$0xf]
  %v63 = vld [vmem:[%s1 + $0x40] sm:$0xf]
  %v64 = vld [vmem:[%s1 + $0x44] sm:$0xf]
  %v65 = vld [vmem:[%s1 + $0x48] sm:$0xf]
  %v66 = vld [vmem:[%s1 + $0x4c] sm:$0xf]
  %v67 = vld [vmem:[%s1 + $0x50] sm:$0xf]
  %v68 = vld [vmem:[%s1 + $0x54] sm:$0xf]
  %v69 = vld [vmem:[%s1 + $0x58] sm:$0xf]
  %v70 = vld [vmem:[%s1 + $0x5c] sm:$0xf]
  %v71 = vld [vmem:[%s1 + $0x60] sm:$0xf]
  %v72 = vld [vmem:[%s1 + $0x64] sm:$0xf]
  %v73 = vld [vmem:[%s1 + $0x68] sm:$0xf]
  %v74 = vld [vmem:[%s1 + $0x6c] sm:$0xf]
  %v75 = vld [vmem:[%s1 + $0x70] sm:$0xf]
  %v76 = vld [vmem:[%s1 + $0x74] sm:$0xf]
  %v77 = vld [vmem:[%s1 + $0x78] sm:$0xf]
  %v78 = vld [vmem:[%s1 + $0x7c] sm:$0xf]
  %v79 = vld [vmem:[%s1 + $0x80] sm:$0xf]
  %v80 = vld [vmem:[%s1 + $0x84] sm:$0xf]
  %v81 = vld [vmem:[%s1 + $0x88] sm:$0xf]
  %v82 = vld [vmem:[%s1 + $0x8c] sm:$0xf]
  %v83 = vld [vmem:[%s1 + $0x90] sm:$0xf]
  %v84 = vld [vmem:[%s1 + $0x94] sm:$0xf]
  %v85 = vld [vmem:[%s1 + $0x98] sm:$0xf]
  %v86 = vld [vmem:[%s1 + $0x9c] sm:$0xf]
  %v87 = vld [vmem:[%s1 + $0xa0] sm:$0xf]
  %v88 = vld [vmem:[%s1 + $0xa4] sm:$0xf]
  %v89 = vld [vmem:[%s1 + $0xa8] sm:$0xf]
  %v90 = vld [vmem:[%s1 + $0xac] sm:$0xf]
  %v91 = vld [vmem:[%s1 + $0xb0] sm:$0xf]
  %v92 = vld [vmem:[%s1 + $0xb4] sm:$0xf]
  %v93 = vld [vmem:[%s1 + $0xb8] sm:$0xf]
  %v94 = vld [vmem:[%s1 + $0xbc] sm:$0xf]
  %v95 = vld [vmem:[%s1 + $0xc0] sm:$0xf]
  %v96 = vld [vmem:[%s1 + $0xc4] sm:$0xf]
  %v97 = vld [vmem:[%s1 + $0xc8] sm:$0xf]
  %v98 = vld [vmem:[%s1 + $0xcc] sm:$0xf]
  %v99 = vld [vmem:[%s1 + $0xd0] sm:$0xf]
  %v100 = vld [vmem:[%s1 + $0xd4] sm:$0xf]
  %v101 = vld [vmem:[%s1 + $0xd8] sm:$0xf]
  %v102 = vld [vmem:[%s1 + $0xdc] sm:$0xf]
  %v103 = vld [vmem:[%s1 + $0xe0] sm:$0xf]
  %v104 = vld [vmem:[%s1 + $0xe4] sm:$0xf]
  %v105 = vld [vmem:[%s1 + $0xe8] sm:$0xf]
  %v106 = vld [vmem:[%s1 + $0xec] sm:$0xf]
  %v107 = vld [vmem:[%s1 + $0xf0] sm:$0xf]
  %v108 = vld [vmem:[%s1 + $0xf4] sm:$0xf]
  %v109 = vld [vmem:[%s1 + $0xf8] sm:$0xf]
  %v110 = vld [vmem:[%s1 + $0xfc] sm:$0xf]
  %v111 = vld [vmem:[%s1 + $0x100] sm:$0xf]
  %v112 = vld [vmem:[%s1 + $0x104] sm:$0xf]
  %v113 = vld [vmem:[%s1 + $0x108] sm:$0xf]
  %v114 = vld [vmem:[%s1 + $0x10c] sm:$0xf]
  %v115 = vld [vmem:[%s1 + $0x110] sm:$0xf]
  %v116 = vld [vmem:[%s1 + $0x114] sm:$0xf]
  %v117 = vld [vmem:[%s1 + $0x118] sm:$0xf]
  %v118 = vld [vmem:[%s1 + $0x11c] sm:$0xf]
  %v119 = vld [vmem:[%s1 + $0x120] sm:$0xf]
  %v120 = vld [vmem:[%s1 + $0x124] sm:$0xf]
  %v121 = vld [vmem:[%s1 + $0x128] sm:$0xf]
  %v122 = vld [vmem:[%s1 + $0x12c] sm:$0xf]
  %v123 = vld [vmem:[%s1 + $0x130] sm:$0xf]
  %v124 = vld [vmem:[%s1 + $0x134] sm:$0xf]
  %v125 = vld [vmem:[%s1 + $0x138] sm:$0xf]
  %v126 = vld [vmem:[%s1 + $0x13c] sm:$0xf]
  %v127 = vld [vmem:[%s1 + $0x140] sm:$0xf]
  %v128 = vld [vmem:[%s1 + $0x144] sm:$0xf]
  %v129 = vld [vmem:[%s1 + $0x148] sm:$0xf]
  %v130 = vld [vmem:[%s1 + $0x14c] sm:$0xf]
  %v131 = vld [vmem:[%s1 + $0x150] sm:$0xf]
  %v132 = vld [vmem:[%s1 + $0x154] sm:$0xf]
  %v133 = vld [vmem:[%s1 + $0x158] sm:$0xf]
  %v134 = vld [vmem:[%s1 + $0x15c] sm:$0xf]
  %v135 = vld [vmem:[%s1 + $0x160] sm:$0xf]
  %v136 = vld [vmem:[%s1 + $0x164] sm:$0xf]
  %v137 = vld [vmem:[%s1 + $0x168] sm:$0xf]
  %v138 = vld [vmem:[%s1 + $0x16c] sm:$0xf]
  %v139 = vld [vmem:[%s1 + $0x170] sm:$0xf]
  %v140 = vld [vmem:[%s1 + $0x174] sm:$0xf]
  %v141 = vld [vmem:[%s1 + $0x178] sm:$0xf]
  %v142 = vld [vmem:[%s1 + $0x17c] sm:$0xf]
  %v143 = vld [vmem:[%s1 + $0x180] sm:$0xf]
  %v144 = vld [vmem:[%s1 + $0x184] sm:$0xf]
  %v145 = vld [vmem:[%s1 + $0x188] sm:$0xf]
  %v146 = vld [vmem:[%s1 + $0x18c] sm:$0xf]
  %v147 = vld [vmem:[%s1 + $0x190] sm:$0xf]
  %v148 = vld [vmem:[%s1 + $0x194] sm:$0xf]
  %v149 = vld [vmem:[%s1 + $0x198] sm:$0xf]
  %v150 = vld [vmem:[%s1 + $0x19c] sm:$0xf]
  %v151 = vld [vmem:[%s1 + $0x1a0] sm:$0xf]
  %v152 = vld [vmem:[%s1 + $0x1a4] sm:$0xf]
  %v153 = vld [vmem:[%s1 + $0x1a8] sm:$0xf]
  %v154 = vld [vmem:[%s1 + $0x1ac] sm:$0xf]
  %v155 = vld [vmem:[%s2] sm:$0x1]
  %v157 = vperm.slane %v155, 0
  %v191 = vunpack.c.l.b16 %v15
  %v192 = vunpack.c.h.b16 %v15
  %v193 = vunpack.c.l.b16 %v16
  %v194 = vunpack.c.h.b16 %v16
  %v195 = vunpack.c.l.b16 %v17
  %v196 = vunpack.c.h.b16 %v17
  %v197 = vunpack.c.l.b16 %v18
  %v198 = vunpack.c.l.b16 %v19
  %v199 = vunpack.c.h.b16 %v19
  %v200 = vunpack.c.l.b16 %v20
  %v201 = vunpack.c.h.b16 %v20
  %v202 = vunpack.c.l.b16 %v21
  %v203 = vunpack.c.h.b16 %v21
  %v204 = vunpack.c.l.b16 %v22
  %v205 = vunpack.c.l.b16 %v23
  %v206 = vunpack.c.h.b16 %v23
  %v207 = vunpack.c.l.b16 %v24
  %v208 = vunpack.c.h.b16 %v24
  %v209 = vunpack.c.l.b16 %v25
  %v210 = vunpack.c.h.b16 %v25
  %v211 = vunpack.c.l.b16 %v26
  %v212 = vunpack.c.l.b16 %v27
  %v213 = vunpack.c.h.b16 %v27
  %v214 = vunpack.c.l.b16 %v28
  %v215 = vunpack.c.h.b16 %v28
  %v216 = vunpack.c.l.b16 %v29
  %v217 = vunpack.c.h.b16 %v29
  %v218 = vunpack.c.l.b16 %v30
  %v219 = vunpack.c.l.b16 %v31
  %v220 = vunpack.c.h.b16 %v31
  %v221 = vunpack.c.l.b16 %v32
  %v222 = vunpack.c.h.b16 %v32
  %v223 = vunpack.c.l.b16 %v33
  %v224 = vunpack.c.h.b16 %v33
  %v225 = vunpack.c.l.b16 %v34
  %v226 = vunpack.c.l.b16 %v35
  %v227 = vunpack.c.h.b16 %v35
  %v228 = vunpack.c.l.b16 %v36
  %v229 = vunpack.c.h.b16 %v36
  %v230 = vunpack.c.l.b16 %v37
  %v231 = vunpack.c.h.b16 %v37
  %v232 = vunpack.c.l.b16 %v38
  %v233 = vunpack.c.l.b16 %v39
  %v234 = vunpack.c.h.b16 %v39
  %v235 = vunpack.c.l.b16 %v40
  %v236 = vunpack.c.h.b16 %v40
  %v237 = vunpack.c.l.b16 %v41
  %v238 = vunpack.c.h.b16 %v41
  %v239 = vunpack.c.l.b16 %v42
  %v240 = vunpack.c.l.b16 %v43
  %v241 = vunpack.c.h.b16 %v43
  %v242 = vunpack.c.l.b16 %v44
  %v243 = vunpack.c.h.b16 %v44
  %v244 = vunpack.c.l.b16 %v45
  %v245 = vunpack.c.h.b16 %v45
  %v246 = vunpack.c.l.b16 %v46
  %v247 = vpack.c.b16 %v198, %v191
  %v248 = vpack.c.b16 %v199, %v192
  %v249 = vpack.c.b16 %v200, %v193
  %v250 = vpack.c.b16 %v201, %v194
  %v251 = vpack.c.b16 %v202, %v195
  %v252 = vpack.c.b16 %v203, %v196
  %v253 = vpack.c.b16 %v204, %v197
  %v254 = vpack.c.b16 %v212, %v205
  %v255 = vpack.c.b16 %v213, %v206
  %v256 = vpack.c.b16 %v214, %v207
  %v257 = vpack.c.b16 %v215, %v208
  %v258 = vpack.c.b16 %v216, %v209
  %v259 = vpack.c.b16 %v217, %v210
  %v260 = vpack.c.b16 %v218, %v211
  %v261 = vpack.c.b16 %v226, %v219
  %v262 = vpack.c.b16 %v227, %v220
  %v263 = vpack.c.b16 %v228, %v221
  %v264 = vpack.c.b16 %v229, %v222
  %v265 = vpack.c.b16 %v230, %v223
  %v266 = vpack.c.b16 %v231, %v224
  %v267 = vpack.c.b16 %v232, %v225
  %v268 = vpack.c.b16 %v240, %v233
  %v269 = vpack.c.b16 %v241, %v234
  %v270 = vpack.c.b16 %v242, %v235
  %v271 = vpack.c.b16 %v243, %v236
  %v272 = vpack.c.b16 %v244, %v237
  %v273 = vpack.c.b16 %v245, %v238
  %v274 = vpack.c.b16 %v246, %v239
  %v407 = vunpack.c.l.b16 %v47
  %v408 = vunpack.c.l.b16 %v48
  %v409 = vunpack.c.l.b16 %v49
  %v410 = vunpack.c.l.b16 %v50
  %v411 = vunpack.c.l.b16 %v51
  %v412 = vunpack.c.l.b16 %v52
  %v413 = vunpack.c.l.b16 %v53
  %v414 = vunpack.c.l.b16 %v54
  %v415 = vunpack.c.l.b16 %v55
  %v416 = vunpack.c.l.b16 %v56
  %v417 = vunpack.c.l.b16 %v57
  %v418 = vunpack.c.l.b16 %v58
  %v419 = vunpack.c.l.b16 %v59
  %v420 = vunpack.c.l.b16 %v60
  %v421 = vunpack.c.l.b16 %v61
  %v422 = vunpack.c.l.b16 %v62
  %v423 = vunpack.c.l.b16 %v63
  %v424 = vunpack.c.l.b16 %v64
  %v425 = vunpack.c.l.b16 %v65
  %v426 = vunpack.c.l.b16 %v66
  %v427 = vunpack.c.l.b16 %v67
  %v428 = vunpack.c.l.b16 %v68
  %v429 = vunpack.c.l.b16 %v69
  %v430 = vunpack.c.l.b16 %v70
  %v431 = vunpack.c.l.b16 %v71
  %v432 = vunpack.c.l.b16 %v72
  %v433 = vunpack.c.l.b16 %v73
  %v434 = vunpack.c.l.b16 %v74
  %v435 = vunpack.c.l.b16 %v75
  %v436 = vunpack.c.l.b16 %v76
  %v437 = vunpack.c.l.b16 %v77
  %v438 = vunpack.c.l.b16 %v78
  %v439 = vunpack.c.l.b16 %v79
  %v440 = vunpack.c.l.b16 %v80
  %v441 = vunpack.c.l.b16 %v81
  %v442 = vunpack.c.l.b16 %v82
  %v443 = vunpack.c.l.b16 %v83
  %v444 = vunpack.c.l.b16 %v84
  %v445 = vunpack.c.l.b16 %v85
  %v446 = vunpack.c.l.b16 %v86
  %v447 = vunpack.c.l.b16 %v87
  %v448 = vunpack.c.l.b16 %v88
  %v449 = vunpack.c.l.b16 %v89
  %v450 = vunpack.c.l.b16 %v90
  %v451 = vunpack.c.l.b16 %v91
  %v452 = vunpack.c.l.b16 %v92
  %v453 = vunpack.c.l.b16 %v93
  %v454 = vunpack.c.l.b16 %v94
  %v455 = vunpack.c.l.b16 %v95
  %v456 = vunpack.c.l.b16 %v96
  %v457 = vunpack.c.l.b16 %v97
  %v458 = vunpack.c.l.b16 %v98
  %v459 = vunpack.c.l.b16 %v99
  %v460 = vunpack.c.l.b16 %v100
  %v461 = vunpack.c.l.b16 %v101
  %v462 = vunpack.c.l.b16 %v102
  %v463 = vunpack.c.l.b16 %v103
  %v464 = vunpack.c.l.b16 %v104
  %v465 = vunpack.c.l.b16 %v105
  %v466 = vunpack.c.l.b16 %v106
  %v467 = vunpack.c.l.b16 %v107
  %v468 = vunpack.c.l.b16 %v108
  %v469 = vunpack.c.l.b16 %v109
  %v470 = vunpack.c.l.b16 %v110
  %v471 = vunpack.c.l.b16 %v111
  %v472 = vunpack.c.l.b16 %v112
  %v473 = vunpack.c.l.b16 %v113
  %v474 = vunpack.c.l.b16 %v114
  %v475 = vunpack.c.l.b16 %v115
  %v476 = vunpack.c.l.b16 %v116
  %v477 = vunpack.c.l.b16 %v117
  %v478 = vunpack.c.l.b16 %v118
  %v479 = vunpack.c.l.b16 %v119
  %v480 = vunpack.c.l.b16 %v120
  %v481 = vunpack.c.l.b16 %v121
  %v482 = vunpack.c.l.b16 %v122
  %v483 = vunpack.c.l.b16 %v123
  %v484 = vunpack.c.l.b16 %v124
  %v485 = vunpack.c.l.b16 %v125
  %v486 = vunpack.c.l.b16 %v126
  %v487 = vunpack.c.l.b16 %v127
  %v488 = vunpack.c.l.b16 %v128
  %v489 = vunpack.c.l.b16 %v129
  %v490 = vunpack.c.l.b16 %v130
  %v491 = vunpack.c.l.b16 %v131
  %v492 = vunpack.c.l.b16 %v132
  %v493 = vunpack.c.l.b16 %v133
  %v494 = vunpack.c.l.b16 %v134
  %v495 = vunpack.c.l.b16 %v135
  %v496 = vunpack.c.l.b16 %v136
  %v497 = vunpack.c.l.b16 %v137
  %v498 = vunpack.c.l.b16 %v138
  %v499 = vunpack.c.l.b16 %v139
  %v500 = vunpack.c.l.b16 %v140
  %v501 = vunpack.c.l.b16 %v141
  %v502 = vunpack.c.l.b16 %v142
  %v503 = vunpack.c.l.b16 %v143
  %v504 = vunpack.c.l.b16 %v144
  %v505 = vunpack.c.l.b16 %v145
  %v506 = vunpack.c.l.b16 %v146
  %v507 = vunpack.c.l.b16 %v147
  %v508 = vunpack.c.l.b16 %v148
  %v509 = vunpack.c.l.b16 %v149
  %v510 = vunpack.c.l.b16 %v150
  %v511 = vunpack.c.l.b16 %v151
  %v512 = vunpack.c.l.b16 %v152
  %v513 = vunpack.c.l.b16 %v153
  %v514 = vunpack.c.l.b16 %v154
  %v515 = vpack.c.b16 %v408, %v407
  %v516 = vpack.c.b16 %v410, %v409
  %v517 = vpack.c.b16 %v412, %v411
  %v518 = vpack.c.b16 %v414, %v413
  %v519 = vpack.c.b16 %v416, %v415
  %v520 = vpack.c.b16 %v418, %v417
  %v521 = vpack.c.b16 %v420, %v419
  %v522 = vpack.c.b16 %v422, %v421
  %v523 = vpack.c.b16 %v424, %v423
  %v524 = vpack.c.b16 %v426, %v425
  %v525 = vpack.c.b16 %v428, %v427
  %v526 = vpack.c.b16 %v430, %v429
  %v527 = vpack.c.b16 %v432, %v431
  %v528 = vpack.c.b16 %v434, %v433
  %v529 = vpack.c.b16 %v436, %v435
  %v530 = vpack.c.b16 %v438, %v437
  %v531 = vpack.c.b16 %v440, %v439
  %v532 = vpack.c.b16 %v442, %v441
  %v533 = vpack.c.b16 %v444, %v443
  %v534 = vpack.c.b16 %v446, %v445
  %v535 = vpack.c.b16 %v448, %v447
  %v536 = vpack.c.b16 %v450, %v449
  %v537 = vpack.c.b16 %v452, %v451
  %v538 = vpack.c.b16 %v454, %v453
  %v539 = vpack.c.b16 %v456, %v455
  %v540 = vpack.c.b16 %v458, %v457
  %v541 = vpack.c.b16 %v460, %v459
  %v542 = vpack.c.b16 %v462, %v461
  %v543 = vpack.c.b16 %v464, %v463
  %v544 = vpack.c.b16 %v466, %v465
  %v545 = vpack.c.b16 %v468, %v467
  %v546 = vpack.c.b16 %v470, %v469
  %v547 = vpack.c.b16 %v472, %v471
  %v548 = vpack.c.b16 %v474, %v473
  %v549 = vpack.c.b16 %v476, %v475
  %v550 = vpack.c.b16 %v478, %v477
  %v551 = vpack.c.b16 %v480, %v479
  %v552 = vpack.c.b16 %v482, %v481
  %v553 = vpack.c.b16 %v484, %v483
  %v554 = vpack.c.b16 %v486, %v485
  %v555 = vpack.c.b16 %v488, %v487
  %v556 = vpack.c.b16 %v490, %v489
  %v557 = vpack.c.b16 %v492, %v491
  %v558 = vpack.c.b16 %v494, %v493
  %v559 = vpack.c.b16 %v496, %v495
  %v560 = vpack.c.b16 %v498, %v497
  %v561 = vpack.c.b16 %v500, %v499
  %v562 = vpack.c.b16 %v502, %v501
  %v563 = vpack.c.b16 %v504, %v503
  %v564 = vpack.c.b16 %v506, %v505
  %v565 = vpack.c.b16 %v508, %v507
  %v566 = vpack.c.b16 %v510, %v509
  %v567 = vpack.c.b16 %v512, %v511
  %v568 = vpack.c.b16 %v514, %v513
  %vm623 = vcmask 785408
  %v625 = vsel %vm623, %v253, 0
  %v628 = vsel %vm623, %v260, 0
  %v631 = vsel %vm623, %v267, 0
  %v634 = vsel %vm623, %v274, 0
  %636 = vmatpush.bf16.msra.mxu0 %v522
  %637 = vmatpush.bf16.msra.mxu0 %v521
  %638 = vmatpush.bf16.msra.mxu0 %v520
  %639 = vmatpush.bf16.msra.mxu0 %v519
  %640 = vmatpush.bf16.msra.mxu0 %v518
  %641 = vmatpush.bf16.msra.mxu0 %v517
  %642 = vmatpush.bf16.msra.mxu0 %v516
  %643 = vmatpush.bf16.msra.mxu0 %v515
  %644 = vmatmul.bf16.gmra.mxu0 %v247
  %v645 = vpop.f32.mrf.mxu0
  %v646 = vadd.f32 %v157, %v645
  %v647 = vpop.f32.mrf.mxu0
  %v648 = vadd.f32 %v157, %v647
  %649 = vmatmul.bf16.gmra.mxu0 %v254
  %v650 = vpop.f32.mrf.mxu0
  %v651 = vadd.f32 %v157, %v650
  %v652 = vpop.f32.mrf.mxu0
  %v653 = vadd.f32 %v157, %v652
  %654 = vmatmul.bf16.gmra.mxu0 %v261
  %v655 = vpop.f32.mrf.mxu0
  %v656 = vadd.f32 %v157, %v655
  %v657 = vpop.f32.mrf.mxu0
  %v658 = vadd.f32 %v157, %v657
  %659 = vmatmul.bf16.gmra.mxu0 %v268
  %v660 = vpop.f32.mrf.mxu0
  %v661 = vadd.f32 %v157, %v660
  %v662 = vpop.f32.mrf.mxu0
  %v663 = vadd.f32 %v157, %v662
  %664 = vdwg.mxu0
  %665 = vmatpush.bf16.msra.mxu0 %v530
  %666 = vmatpush.bf16.msra.mxu0 %v529
  %667 = vmatpush.bf16.msra.mxu0 %v528
  %668 = vmatpush.bf16.msra.mxu0 %v527
  %669 = vmatpush.bf16.msra.mxu0 %v526
  %670 = vmatpush.bf16.msra.mxu0 %v525
  %671 = vmatpush.bf16.msra.mxu0 %v524
  %672 = vmatpush.bf16.msra.mxu0 %v523
  %673 = vmatmul.bf16.gmra.mxu0 %v248
  %v674 = vpop.f32.mrf.mxu0
  %v675 = vadd.f32 %v646, %v674
  %v676 = vpop.f32.mrf.mxu0
  %v677 = vadd.f32 %v648, %v676
  %678 = vmatmul.bf16.gmra.mxu0 %v255
  %v679 = vpop.f32.mrf.mxu0
  %v680 = vadd.f32 %v651, %v679
  %v681 = vpop.f32.mrf.mxu0
  %v682 = vadd.f32 %v653, %v681
  %683 = vmatmul.bf16.gmra.mxu0 %v262
  %v684 = vpop.f32.mrf.mxu0
  %v685 = vadd.f32 %v656, %v684
  %v686 = vpop.f32.mrf.mxu0
  %v687 = vadd.f32 %v658, %v686
  %688 = vmatmul.bf16.gmra.mxu0 %v269
  %v689 = vpop.f32.mrf.mxu0
  %v690 = vadd.f32 %v661, %v689
  %v691 = vpop.f32.mrf.mxu0
  %v692 = vadd.f32 %v663, %v691
  %693 = vdwg.mxu0
  %694 = vmatpush.bf16.msra.mxu0 %v538
  %695 = vmatpush.bf16.msra.mxu0 %v537
  %696 = vmatpush.bf16.msra.mxu0 %v536
  %697 = vmatpush.bf16.msra.mxu0 %v535
  %698 = vmatpush.bf16.msra.mxu0 %v534
  %699 = vmatpush.bf16.msra.mxu0 %v533
  %700 = vmatpush.bf16.msra.mxu0 %v532
  %701 = vmatpush.bf16.msra.mxu0 %v531
  %702 = vmatmul.bf16.gmra.mxu0 %v249
  %v703 = vpop.f32.mrf.mxu0
  %v704 = vadd.f32 %v675, %v703
  %v705 = vpop.f32.mrf.mxu0
  %v706 = vadd.f32 %v677, %v705
  %707 = vmatmul.bf16.gmra.mxu0 %v256
  %v708 = vpop.f32.mrf.mxu0
  %v709 = vadd.f32 %v680, %v708
  %v710 = vpop.f32.mrf.mxu0
  %v711 = vadd.f32 %v682, %v710
  %712 = vmatmul.bf16.gmra.mxu0 %v263
  %v713 = vpop.f32.mrf.mxu0
  %v714 = vadd.f32 %v685, %v713
  %v715 = vpop.f32.mrf.mxu0
  %v716 = vadd.f32 %v687, %v715
  %717 = vmatmul.bf16.gmra.mxu0 %v270
  %v718 = vpop.f32.mrf.mxu0
  %v719 = vadd.f32 %v690, %v718
  %v720 = vpop.f32.mrf.mxu0
  %v721 = vadd.f32 %v692, %v720
  %722 = vdwg.mxu0
  %723 = vmatpush.bf16.msra.mxu0 %v546
  %724 = vmatpush.bf16.msra.mxu0 %v545
  %725 = vmatpush.bf16.msra.mxu0 %v544
  %726 = vmatpush.bf16.msra.mxu0 %v543
  %727 = vmatpush.bf16.msra.mxu0 %v542
  %728 = vmatpush.bf16.msra.mxu0 %v541
  %729 = vmatpush.bf16.msra.mxu0 %v540
  %730 = vmatpush.bf16.msra.mxu0 %v539
  %731 = vmatmul.bf16.gmra.mxu0 %v250
  %v732 = vpop.f32.mrf.mxu0
  %v733 = vadd.f32 %v704, %v732
  %v734 = vpop.f32.mrf.mxu0
  %v735 = vadd.f32 %v706, %v734
  %736 = vmatmul.bf16.gmra.mxu0 %v257
  %v737 = vpop.f32.mrf.mxu0
  %v738 = vadd.f32 %v709, %v737
  %v739 = vpop.f32.mrf.mxu0
  %v740 = vadd.f32 %v711, %v739
  %741 = vmatmul.bf16.gmra.mxu0 %v264
  %v742 = vpop.f32.mrf.mxu0
  %v743 = vadd.f32 %v714, %v742
  %v744 = vpop.f32.mrf.mxu0
  %v745 = vadd.f32 %v716, %v744
  %746 = vmatmul.bf16.gmra.mxu0 %v271
  %v747 = vpop.f32.mrf.mxu0
  %v748 = vadd.f32 %v719, %v747
  %v749 = vpop.f32.mrf.mxu0
  %v750 = vadd.f32 %v721, %v749
  %751 = vdwg.mxu0
  %752 = vmatpush.bf16.msra.mxu0 %v554
  %753 = vmatpush.bf16.msra.mxu0 %v553
  %754 = vmatpush.bf16.msra.mxu0 %v552
  %755 = vmatpush.bf16.msra.mxu0 %v551
  %756 = vmatpush.bf16.msra.mxu0 %v550
  %757 = vmatpush.bf16.msra.mxu0 %v549
  %758 = vmatpush.bf16.msra.mxu0 %v548
  %759 = vmatpush.bf16.msra.mxu0 %v547
  %760 = vmatmul.bf16.gmra.mxu0 %v251
  %v761 = vpop.f32.mrf.mxu0
  %v762 = vadd.f32 %v733, %v761
  %v763 = vpop.f32.mrf.mxu0
  %v764 = vadd.f32 %v735, %v763
  %765 = vmatmul.bf16.gmra.mxu0 %v258
  %v766 = vpop.f32.mrf.mxu0
  %v767 = vadd.f32 %v738, %v766
  %v768 = vpop.f32.mrf.mxu0
  %v769 = vadd.f32 %v740, %v768
  %770 = vmatmul.bf16.gmra.mxu0 %v265
  %v771 = vpop.f32.mrf.mxu0
  %v772 = vadd.f32 %v743, %v771
  %v773 = vpop.f32.mrf.mxu0
  %v774 = vadd.f32 %v745, %v773
  %775 = vmatmul.bf16.gmra.mxu0 %v272
  %v776 = vpop.f32.mrf.mxu0
  %v777 = vadd.f32 %v748, %v776
  %v778 = vpop.f32.mrf.mxu0
  %v779 = vadd.f32 %v750, %v778
  %780 = vdwg.mxu0
  %781 = vmatpush.bf16.msra.mxu0 %v562
  %782 = vmatpush.bf16.msra.mxu0 %v561
  %783 = vmatpush.bf16.msra.mxu0 %v560
  %784 = vmatpush.bf16.msra.mxu0 %v559
  %785 = vmatpush.bf16.msra.mxu0 %v558
  %786 = vmatpush.bf16.msra.mxu0 %v557
  %787 = vmatpush.bf16.msra.mxu0 %v556
  %788 = vmatpush.bf16.msra.mxu0 %v555
  %789 = vmatmul.bf16.gmra.mxu0 %v252
  %v790 = vpop.f32.mrf.mxu0
  %v791 = vadd.f32 %v762, %v790
  %v792 = vpop.f32.mrf.mxu0
  %v793 = vadd.f32 %v764, %v792
  %794 = vmatmul.bf16.gmra.mxu0 %v259
  %v795 = vpop.f32.mrf.mxu0
  %v796 = vadd.f32 %v767, %v795
  %v797 = vpop.f32.mrf.mxu0
  %v798 = vadd.f32 %v769, %v797
  %799 = vmatmul.bf16.gmra.mxu0 %v266
  %v800 = vpop.f32.mrf.mxu0
  %v801 = vadd.f32 %v772, %v800
  %v802 = vpop.f32.mrf.mxu0
  %v803 = vadd.f32 %v774, %v802
  %804 = vmatmul.bf16.gmra.mxu0 %v273
  %v805 = vpop.f32.mrf.mxu0
  %v806 = vadd.f32 %v777, %v805
  %v807 = vpop.f32.mrf.mxu0
  %v808 = vadd.f32 %v779, %v807
  %809 = vdwg.mxu0
  %810 = vmatpush.bf16.msra.mxu0 0
  %811 = vmatpush.bf16.msra.mxu0 0
  %812 = vmatpush.bf16.msra.mxu0 %v568
  %813 = vmatpush.bf16.msra.mxu0 %v567
  %814 = vmatpush.bf16.msra.mxu0 %v566
  %815 = vmatpush.bf16.msra.mxu0 %v565
  %816 = vmatpush.bf16.msra.mxu0 %v564
  %817 = vmatpush.bf16.msra.mxu0 %v563
  %818 = vmatmul.bf16.gmra.mxu0 %v625
  %v819 = vpop.f32.mrf.mxu0
  %v820 = vadd.f32 %v791, %v819
  %v821 = vpop.f32.mrf.mxu0
  %v822 = vadd.f32 %v793, %v821
  %823 = vmatmul.bf16.gmra.mxu0 %v628
  %v824 = vpop.f32.mrf.mxu0
  %v825 = vadd.f32 %v796, %v824
  %v826 = vpop.f32.mrf.mxu0
  %v827 = vadd.f32 %v798, %v826
  %828 = vmatmul.bf16.gmra.mxu0 %v631
  %v829 = vpop.f32.mrf.mxu0
  %v830 = vadd.f32 %v801, %v829
  %v831 = vpop.f32.mrf.mxu0
  %v832 = vadd.f32 %v803, %v831
  %833 = vmatmul.bf16.gmra.mxu0 %v634
  %v834 = vpop.f32.mrf.mxu0
  %v835 = vadd.f32 %v806, %v834
  %v836 = vpop.f32.mrf.mxu0
  %v837 = vadd.f32 %v808, %v836
  %838 = vdwg.mxu0
  %v839 = vmul.f32 %v820, 0.2
  %v840 = vmul.f32 %v822, 0.2
  %v841 = vmul.f32 %v825, 0.2
  %v842 = vmul.f32 %v827, 0.2
  %v843 = vmul.f32 %v830, 0.2
  %v844 = vmul.f32 %v832, 0.2
  %v845 = vmul.f32 %v835, 0.2
  %v846 = vmul.f32 %v837, 0.2
  %v847 = vmax.f32 %v820, %v839
  %v848 = vmax.f32 %v822, %v840
  %v849 = vmax.f32 %v825, %v841
  %v850 = vmax.f32 %v827, %v842
  %v851 = vmax.f32 %v830, %v843
  %v852 = vmax.f32 %v832, %v844
  %v853 = vmax.f32 %v835, %v845
  %v854 = vmax.f32 %v837, %v846
  %v855 = vpack.c.bf16 %v847, %v847
  %v856 = vpack.c.bf16 %v848, %v848
  %v857 = vpack.c.bf16 %v849, %v849
  %v858 = vpack.c.bf16 %v850, %v850
  %v859 = vpack.c.bf16 %v851, %v851
  %v860 = vpack.c.bf16 %v852, %v852
  %v861 = vpack.c.bf16 %v853, %v853
  %v862 = vpack.c.bf16 %v854, %v854
  %863 = vst [vmem:[%s3] sm:$0xf] %v855
  %864 = vst [vmem:[%s3 + $0x4] sm:$0xf] %v856
  %865 = vst [vmem:[%s3 + $0x8] sm:$0xf] %v857
  %866 = vst [vmem:[%s3 + $0xc] sm:$0xf] %v858
  %867 = vst [vmem:[%s3 + $0x10] sm:$0xf] %v859
  %868 = vst [vmem:[%s3 + $0x14] sm:$0xf] %v860
  %869 = vst [vmem:[%s3 + $0x18] sm:$0xf] %v861
  %870 = vst [vmem:[%s3 + $0x1c] sm:$0xf] %v862
  // Predicated region
  $region14: #{autoencoder3d_forward.9} parent=0 // pred_check
    _
  $region15: #{autoencoder3d_forward.9} parent=0 // pred_check_branch
    %872 = sbr.rel (0) target = $region17
  $region16: #{autoencoder3d_forward.9} parent=0 // pred_region
    _
  $region17: #{autoencoder3d_forward.9} parent=0 // pred_fallthru
    _
  // Predicated region
  $region18: #{autoencoder3d_forward.9} parent=0 // pred_check
    _
  $region19: #{autoencoder3d_forward.9} parent=0 // pred_check_branch
    %874 = sbr.rel (0) target = $region21
  $region20: #{autoencoder3d_forward.9} parent=0 // pred_region
    _
  $region21: #{autoencoder3d_forward.9} parent=0 // pred_fallthru
    _

// kernel: autoencoder3d_forward.10
$region0: #{autoencoder3d_forward.10}
  #allocation0 [shape = 'u32[]', space=smem, size = 0x4, offset = 0x4, fixed_abs, tag = 'smem constant byte address 0x4 - core index']
  #allocation1 [shape = 'u32[72,128]{1,0:T(1,128)}', space=vmem, size = 0x9000, scoped, tag = 'internal scratch']
  %s0 = inlined_call_operand.vmem [shape: bf16[8,1728], index: 0, kind: input, shape index: {}]
  %s1 = inlined_call_operand.vmem [shape: bf16[1728,128], index: 1, kind: input, shape index: {}]
  %s2 = inlined_call_operand.vmem [shape: f32[1,128], index: 2, kind: input, shape index: {}]
  %s3 = inlined_call_operand.vmem [shape: bf16[8,128], index: 3, kind: output, shape index: {}]
  %s4 = sld [smem:[#allocation0]]
  $region22: #{autoencoder3d_forward.10} parent=0
    _
  %s6 = ssub.s32 1, %s4
  %s7 = scalar_select 0, %s6, %s4
  // Predicated region
  $region2: #{autoencoder3d_forward.10} parent=0 // pred_check
    _
  $region3: #{autoencoder3d_forward.10} parent=0 // pred_check_branch
    %9 = sbr.rel (0) target = $region5
  $region4: #{autoencoder3d_forward.10} parent=0 // pred_region
    _
  $region5: #{autoencoder3d_forward.10} parent=0 // pred_fallthru
    _
  // Predicated region
  $region6: #{autoencoder3d_forward.10} parent=0 // pred_check
    _
  $region7: #{autoencoder3d_forward.10} parent=0 // pred_check_branch
    %11 = sbr.rel (0) target = $region9
  $region8: #{autoencoder3d_forward.10} parent=0 // pred_region
    _
  $region9: #{autoencoder3d_forward.10} parent=0 // pred_fallthru
    _
  // Predicated region
  $region10: #{autoencoder3d_forward.10} parent=0 // pred_check
    _
  $region11: #{autoencoder3d_forward.10} parent=0 // pred_check_branch
    %13 = sbr.rel (0) target = $region13
  $region12: #{autoencoder3d_forward.10} parent=0 // pred_region
    _
  $region13: #{autoencoder3d_forward.10} parent=0 // pred_fallthru
    _
  %v15 = vld [vmem:[%s0] sm:$0xff]
  %v16 = vld [vmem:[%s0 + $0x8] sm:$0xff]
  %v17 = vld [vmem:[%s0 + $0x10] sm:$0xff]
  %v18 = vld [vmem:[%s0 + $0x18] sm:$0xff]
  %v19 = vld [vmem:[%s0 + $0x20] sm:$0xff]
  %v20 = vld [vmem:[%s0 + $0x28] sm:$0xff]
  %v21 = vld [vmem:[%s0 + $0x30] sm:$0xff]
  %v22 = vld [vmem:[%s1] sm:$0xf]
  %v23 = vld [vmem:[%s1 + $0x4] sm:$0xf]
  %v24 = vld [vmem:[%s1 + $0x8] sm:$0xf]
  %v25 = vld [vmem:[%s1 + $0xc] sm:$0xf]
  %v26 = vld [vmem:[%s1 + $0x10] sm:$0xf]
  %v27 = vld [vmem:[%s1 + $0x14] sm:$0xf]
  %v28 = vld [vmem:[%s1 + $0x18] sm:$0xf]
  %v29 = vld [vmem:[%s1 + $0x1c] sm:$0xf]
  %v30 = vld [vmem:[%s1 + $0x20] sm:$0xf]
  %v31 = vld [vmem:[%s1 + $0x24] sm:$0xf]
  %v32 = vld [vmem:[%s1 + $0x28] sm:$0xf]
  %v33 = vld [vmem:[%s1 + $0x2c] sm:$0xf]
  %v34 = vld [vmem:[%s1 + $0x30] sm:$0xf]
  %v35 = vld [vmem:[%s1 + $0x34] sm:$0xf]
  %v36 = vld [vmem:[%s1 + $0x38] sm:$0xf]
  %v37 = vld [vmem:[%s1 + $0x3c] sm:$0xf]
  %v38 = vld [vmem:[%s1 + $0x40] sm:$0xf]
  %v39 = vld [vmem:[%s1 + $0x44] sm:$0xf]
  %v40 = vld [vmem:[%s1 + $0x48] sm:$0xf]
  %v41 = vld [vmem:[%s1 + $0x4c] sm:$0xf]
  %v42 = vld [vmem:[%s1 + $0x50] sm:$0xf]
  %v43 = vld [vmem:[%s1 + $0x54] sm:$0xf]
  %v44 = vld [vmem:[%s1 + $0x58] sm:$0xf]
  %v45 = vld [vmem:[%s1 + $0x5c] sm:$0xf]
  %v46 = vld [vmem:[%s1 + $0x60] sm:$0xf]
  %v47 = vld [vmem:[%s1 + $0x64] sm:$0xf]
  %v48 = vld [vmem:[%s1 + $0x68] sm:$0xf]
  %v49 = vld [vmem:[%s1 + $0x6c] sm:$0xf]
  %v50 = vld [vmem:[%s1 + $0x70] sm:$0xf]
  %v51 = vld [vmem:[%s1 + $0x74] sm:$0xf]
  %v52 = vld [vmem:[%s1 + $0x78] sm:$0xf]
  %v53 = vld [vmem:[%s1 + $0x7c] sm:$0xf]
  %v54 = vld [vmem:[%s1 + $0x80] sm:$0xf]
  %v55 = vld [vmem:[%s1 + $0x84] sm:$0xf]
  %v56 = vld [vmem:[%s1 + $0x88] sm:$0xf]
  %v57 = vld [vmem:[%s1 + $0x8c] sm:$0xf]
  %v58 = vld [vmem:[%s1 + $0x90] sm:$0xf]
  %v59 = vld [vmem:[%s1 + $0x94] sm:$0xf]
  %v60 = vld [vmem:[%s1 + $0x98] sm:$0xf]
  %v61 = vld [vmem:[%s1 + $0x9c] sm:$0xf]
  %v62 = vld [vmem:[%s1 + $0xa0] sm:$0xf]
  %v63 = vld [vmem:[%s1 + $0xa4] sm:$0xf]
  %v64 = vld [vmem:[%s1 + $0xa8] sm:$0xf]
  %v65 = vld [vmem:[%s1 + $0xac] sm:$0xf]
  %v66 = vld [vmem:[%s1 + $0xb0] sm:$0xf]
  %v67 = vld [vmem:[%s1 + $0xb4] sm:$0xf]
  %v68 = vld [vmem:[%s1 + $0xb8] sm:$0xf]
  %v69 = vld [vmem:[%s1 + $0xbc] sm:$0xf]
  %v70 = vld [vmem:[%s1 + $0xc0] sm:$0xf]
  %v71 = vld [vmem:[%s1 + $0xc4] sm:$0xf]
  %v72 = vld [vmem:[%s1 + $0xc8] sm:$0xf]
  %v73 = vld [vmem:[%s1 + $0xcc] sm:$0xf]
  %v74 = vld [vmem:[%s1 + $0xd0] sm:$0xf]
  %v75 = vld [vmem:[%s1 + $0xd4] sm:$0xf]
  %v76 = vld [vmem:[%s1 + $0xd8] sm:$0xf]
  %v77 = vld [vmem:[%s1 + $0xdc] sm:$0xf]
  %v78 = vld [vmem:[%s1 + $0xe0] sm:$0xf]
  %v79 = vld [vmem:[%s1 + $0xe4] sm:$0xf]
  %v80 = vld [vmem:[%s1 + $0xe8] sm:$0xf]
  %v81 = vld [vmem:[%s1 + $0xec] sm:$0xf]
  %v82 = vld [vmem:[%s1 + $0xf0] sm:$0xf]
  %v83 = vld [vmem:[%s1 + $0xf4] sm:$0xf]
  %v84 = vld [vmem:[%s1 + $0xf8] sm:$0xf]
  %v85 = vld [vmem:[%s1 + $0xfc] sm:$0xf]
  %v86 = vld [vmem:[%s1 + $0x100] sm:$0xf]
  %v87 = vld [vmem:[%s1 + $0x104] sm:$0xf]
  %v88 = vld [vmem:[%s1 + $0x108] sm:$0xf]
  %v89 = vld [vmem:[%s1 + $0x10c] sm:$0xf]
  %v90 = vld [vmem:[%s1 + $0x110] sm:$0xf]
  %v91 = vld [vmem:[%s1 + $0x114] sm:$0xf]
  %v92 = vld [vmem:[%s1 + $0x118] sm:$0xf]
  %v93 = vld [vmem:[%s1 + $0x11c] sm:$0xf]
  %v94 = vld [vmem:[%s1 + $0x120] sm:$0xf]
  %v95 = vld [vmem:[%s1 + $0x124] sm:$0xf]
  %v96 = vld [vmem:[%s1 + $0x128] sm:$0xf]
  %v97 = vld [vmem:[%s1 + $0x12c] sm:$0xf]
  %v98 = vld [vmem:[%s1 + $0x130] sm:$0xf]
  %v99 = vld [vmem:[%s1 + $0x134] sm:$0xf]
  %v100 = vld [vmem:[%s1 + $0x138] sm:$0xf]
  %v101 = vld [vmem:[%s1 + $0x13c] sm:$0xf]
  %v102 = vld [vmem:[%s1 + $0x140] sm:$0xf]
  %v103 = vld [vmem:[%s1 + $0x144] sm:$0xf]
  %v104 = vld [vmem:[%s1 + $0x148] sm:$0xf]
  %v105 = vld [vmem:[%s1 + $0x14c] sm:$0xf]
  %v106 = vld [vmem:[%s1 + $0x150] sm:$0xf]
  %v107 = vld [vmem:[%s1 + $0x154] sm:$0xf]
  %v108 = vld [vmem:[%s1 + $0x158] sm:$0xf]
  %v109 = vld [vmem:[%s1 + $0x15c] sm:$0xf]
  %v110 = vld [vmem:[%s1 + $0x160] sm:$0xf]
  %v111 = vld [vmem:[%s1 + $0x164] sm:$0xf]
  %v112 = vld [vmem:[%s1 + $0x168] sm:$0xf]
  %v113 = vld [vmem:[%s1 + $0x16c] sm:$0xf]
  %v114 = vld [vmem:[%s1 + $0x170] sm:$0xf]
  %v115 = vld [vmem:[%s1 + $0x174] sm:$0xf]
  %v116 = vld [vmem:[%s1 + $0x178] sm:$0xf]
  %v117 = vld [vmem:[%s1 + $0x17c] sm:$0xf]
  %v118 = vld [vmem:[%s1 + $0x180] sm:$0xf]
  %v119 = vld [vmem:[%s1 + $0x184] sm:$0xf]
  %v120 = vld [vmem:[%s1 + $0x188] sm:$0xf]
  %v121 = vld [vmem:[%s1 + $0x18c] sm:$0xf]
  %v122 = vld [vmem:[%s1 + $0x190] sm:$0xf]
  %v123 = vld [vmem:[%s1 + $0x194] sm:$0xf]
  %v124 = vld [vmem:[%s1 + $0x198] sm:$0xf]
  %v125 = vld [vmem:[%s1 + $0x19c] sm:$0xf]
  %v126 = vld [vmem:[%s1 + $0x1a0] sm:$0xf]
  %v127 = vld [vmem:[%s1 + $0x1a4] sm:$0xf]
  %v128 = vld [vmem:[%s1 + $0x1a8] sm:$0xf]
  %v129 = vld [vmem:[%s1 + $0x1ac] sm:$0xf]
  %v130 = vld [vmem:[%s1 + $0x1b0] sm:$0xf]
  %v131 = vld [vmem:[%s1 + $0x1b4] sm:$0xf]
  %v132 = vld [vmem:[%s1 + $0x1b8] sm:$0xf]
  %v133 = vld [vmem:[%s1 + $0x1bc] sm:$0xf]
  %v134 = vld [vmem:[%s1 + $0x1c0] sm:$0xf]
  %v135 = vld [vmem:[%s1 + $0x1c4] sm:$0xf]
  %v136 = vld [vmem:[%s1 + $0x1c8] sm:$0xf]
  %v137 = vld [vmem:[%s1 + $0x1cc] sm:$0xf]
  %v138 = vld [vmem:[%s1 + $0x1d0] sm:$0xf]
  %v139 = vld [vmem:[%s1 + $0x1d4] sm:$0xf]
  %v140 = vld [vmem:[%s1 + $0x1d8] sm:$0xf]
  %v141 = vld [vmem:[%s1 + $0x1dc] sm:$0xf]
  %v142 = vld [vmem:[%s1 + $0x1e0] sm:$0xf]
  %v143 = vld [vmem:[%s1 + $0x1e4] sm:$0xf]
  %v144 = vld [vmem:[%s1 + $0x1e8] sm:$0xf]
  %v145 = vld [vmem:[%s1 + $0x1ec] sm:$0xf]
  %v146 = vld [vmem:[%s1 + $0x1f0] sm:$0xf]
  %v147 = vld [vmem:[%s1 + $0x1f4] sm:$0xf]
  %v148 = vld [vmem:[%s1 + $0x1f8] sm:$0xf]
  %v149 = vld [vmem:[%s1 + $0x1fc] sm:$0xf]
  %v150 = vld [vmem:[%s1 + $0x200] sm:$0xf]
  %v151 = vld [vmem:[%s1 + $0x204] sm:$0xf]
  %v152 = vld [vmem:[%s1 + $0x208] sm:$0xf]
  %v153 = vld [vmem:[%s1 + $0x20c] sm:$0xf]
  %v154 = vld [vmem:[%s1 + $0x210] sm:$0xf]
  %v155 = vld [vmem:[%s1 + $0x214] sm:$0xf]
  %v156 = vld [vmem:[%s1 + $0x218] sm:$0xf]
  %v157 = vld [vmem:[%s1 + $0x21c] sm:$0xf]
  %v158 = vld [vmem:[%s1 + $0x220] sm:$0xf]
  %v159 = vld [vmem:[%s1 + $0x224] sm:$0xf]
  %v160 = vld [vmem:[%s1 + $0x228] sm:$0xf]
  %v161 = vld [vmem:[%s1 + $0x22c] sm:$0xf]
  %v162 = vld [vmem:[%s1 + $0x230] sm:$0xf]
  %v163 = vld [vmem:[%s1 + $0x234] sm:$0xf]
  %v164 = vld [vmem:[%s1 + $0x238] sm:$0xf]
  %v165 = vld [vmem:[%s1 + $0x23c] sm:$0xf]
  %v166 = vld [vmem:[%s1 + $0x240] sm:$0xf]
  %v167 = vld [vmem:[%s1 + $0x244] sm:$0xf]
  %v168 = vld [vmem:[%s1 + $0x248] sm:$0xf]
  %v169 = vld [vmem:[%s1 + $0x24c] sm:$0xf]
  %v170 = vld [vmem:[%s1 + $0x250] sm:$0xf]
  %v171 = vld [vmem:[%s1 + $0x254] sm:$0xf]
  %v172 = vld [vmem:[%s1 + $0x258] sm:$0xf]
  %v173 = vld [vmem:[%s1 + $0x25c] sm:$0xf]
  %v174 = vld [vmem:[%s1 + $0x260] sm:$0xf]
  %v175 = vld [vmem:[%s1 + $0x264] sm:$0xf]
  %v176 = vld [vmem:[%s1 + $0x268] sm:$0xf]
  %v177 = vld [vmem:[%s1 + $0x26c] sm:$0xf]
  %v178 = vld [vmem:[%s1 + $0x270] sm:$0xf]
  %v179 = vld [vmem:[%s1 + $0x274] sm:$0xf]
  %v180 = vld [vmem:[%s1 + $0x278] sm:$0xf]
  %v181 = vld [vmem:[%s1 + $0x27c] sm:$0xf]
  %v182 = vld [vmem:[%s1 + $0x280] sm:$0xf]
  %v183 = vld [vmem:[%s1 + $0x284] sm:$0xf]
  %v184 = vld [vmem:[%s1 + $0x288] sm:$0xf]
  %v185 = vld [vmem:[%s1 + $0x28c] sm:$0xf]
  %v186 = vld [vmem:[%s1 + $0x290] sm:$0xf]
  %v187 = vld [vmem:[%s1 + $0x294] sm:$0xf]
  %v188 = vld [vmem:[%s1 + $0x298] sm:$0xf]
  %v189 = vld [vmem:[%s1 + $0x29c] sm:$0xf]
  %v190 = vld [vmem:[%s1 + $0x2a0] sm:$0xf]
  %v191 = vld [vmem:[%s1 + $0x2a4] sm:$0xf]
  %v192 = vld [vmem:[%s1 + $0x2a8] sm:$0xf]
  %v193 = vld [vmem:[%s1 + $0x2ac] sm:$0xf]
  %v194 = vld [vmem:[%s1 + $0x2b0] sm:$0xf]
  %v195 = vld [vmem:[%s1 + $0x2b4] sm:$0xf]
  %v196 = vld [vmem:[%s1 + $0x2b8] sm:$0xf]
  %v197 = vld [vmem:[%s1 + $0x2bc] sm:$0xf]
  %v198 = vld [vmem:[%s1 + $0x2c0] sm:$0xf]
  %v199 = vld [vmem:[%s1 + $0x2c4] sm:$0xf]
  %v200 = vld [vmem:[%s1 + $0x2c8] sm:$0xf]
  %v201 = vld [vmem:[%s1 + $0x2cc] sm:$0xf]
  %v202 = vld [vmem:[%s1 + $0x2d0] sm:$0xf]
  %v203 = vld [vmem:[%s1 + $0x2d4] sm:$0xf]
  %v204 = vld [vmem:[%s1 + $0x2d8] sm:$0xf]
  %v205 = vld [vmem:[%s1 + $0x2dc] sm:$0xf]
  %v206 = vld [vmem:[%s1 + $0x2e0] sm:$0xf]
  %v207 = vld [vmem:[%s1 + $0x2e4] sm:$0xf]
  %v208 = vld [vmem:[%s1 + $0x2e8] sm:$0xf]
  %v209 = vld [vmem:[%s1 + $0x2ec] sm:$0xf]
  %v210 = vld [vmem:[%s1 + $0x2f0] sm:$0xf]
  %v211 = vld [vmem:[%s1 + $0x2f4] sm:$0xf]
  %v212 = vld [vmem:[%s1 + $0x2f8] sm:$0xf]
  %v213 = vld [vmem:[%s1 + $0x2fc] sm:$0xf]
  %v214 = vld [vmem:[%s1 + $0x300] sm:$0xf]
  %v215 = vld [vmem:[%s1 + $0x304] sm:$0xf]
  %v216 = vld [vmem:[%s1 + $0x308] sm:$0xf]
  %v217 = vld [vmem:[%s1 + $0x30c] sm:$0xf]
  %v218 = vld [vmem:[%s1 + $0x310] sm:$0xf]
  %v219 = vld [vmem:[%s1 + $0x314] sm:$0xf]
  %v220 = vld [vmem:[%s1 + $0x318] sm:$0xf]
  %v221 = vld [vmem:[%s1 + $0x31c] sm:$0xf]
  %v222 = vld [vmem:[%s1 + $0x320] sm:$0xf]
  %v223 = vld [vmem:[%s1 + $0x324] sm:$0xf]
  %v224 = vld [vmem:[%s1 + $0x328] sm:$0xf]
  %v225 = vld [vmem:[%s1 + $0x32c] sm:$0xf]
  %v226 = vld [vmem:[%s1 + $0x330] sm:$0xf]
  %v227 = vld [vmem:[%s1 + $0x334] sm:$0xf]
  %v228 = vld [vmem:[%s1 + $0x338] sm:$0xf]
  %v229 = vld [vmem:[%s1 + $0x33c] sm:$0xf]
  %v230 = vld [vmem:[%s1 + $0x340] sm:$0xf]
  %v231 = vld [vmem:[%s1 + $0x344] sm:$0xf]
  %v232 = vld [vmem:[%s1 + $0x348] sm:$0xf]
  %v233 = vld [vmem:[%s1 + $0x34c] sm:$0xf]
  %v234 = vld [vmem:[%s1 + $0x350] sm:$0xf]
  %v235 = vld [vmem:[%s1 + $0x354] sm:$0xf]
  %v236 = vld [vmem:[%s1 + $0x358] sm:$0xf]
  %v237 = vld [vmem:[%s1 + $0x35c] sm:$0xf]
  %v238 = vld [vmem:[%s2] sm:$0x1]
  %v240 = vperm.slane %v238, 0
  %v249 = vunpack.c.l.b16 %v15
  %v250 = vunpack.c.h.b16 %v15
  %v251 = vunpack.c.l.b16 %v16
  %v252 = vunpack.c.h.b16 %v16
  %v253 = vunpack.c.l.b16 %v17
  %v254 = vunpack.c.h.b16 %v17
  %v255 = vunpack.c.l.b16 %v18
  %v256 = vunpack.c.h.b16 %v18
  %v257 = vunpack.c.l.b16 %v19
  %v258 = vunpack.c.h.b16 %v19
  %v259 = vunpack.c.l.b16 %v20
  %v260 = vunpack.c.h.b16 %v20
  %v261 = vunpack.c.l.b16 %v21
  %v262 = vunpack.c.h.b16 %v21
  %v263 = vpack.c.b16 %v249, %v249
  %v264 = vpack.c.b16 %v250, %v250
  %v265 = vpack.c.b16 %v251, %v251
  %v266 = vpack.c.b16 %v252, %v252
  %v267 = vpack.c.b16 %v253, %v253
  %v268 = vpack.c.b16 %v254, %v254
  %v269 = vpack.c.b16 %v255, %v255
  %v270 = vpack.c.b16 %v256, %v256
  %v271 = vpack.c.b16 %v257, %v257
  %v272 = vpack.c.b16 %v258, %v258
  %v273 = vpack.c.b16 %v259, %v259
  %v274 = vpack.c.b16 %v260, %v260
  %v275 = vpack.c.b16 %v261, %v261
  %v276 = vpack.c.b16 %v262, %v262
  %v506 = vunpack.c.l.b16 %v22
  %v507 = vunpack.c.l.b16 %v23
  %v508 = vunpack.c.l.b16 %v24
  %v509 = vunpack.c.l.b16 %v25
  %v510 = vunpack.c.l.b16 %v26
  %v511 = vunpack.c.l.b16 %v27
  %v512 = vunpack.c.l.b16 %v28
  %v513 = vunpack.c.l.b16 %v29
  %v514 = vunpack.c.l.b16 %v30
  %v515 = vunpack.c.l.b16 %v31
  %v516 = vunpack.c.l.b16 %v32
  %v517 = vunpack.c.l.b16 %v33
  %v518 = vunpack.c.l.b16 %v34
  %v519 = vunpack.c.l.b16 %v35
  %v520 = vunpack.c.l.b16 %v36
  %v521 = vunpack.c.l.b16 %v37
  %v522 = vunpack.c.l.b16 %v38
  %v523 = vunpack.c.l.b16 %v39
  %v524 = vunpack.c.l.b16 %v40
  %v525 = vunpack.c.l.b16 %v41
  %v526 = vunpack.c.l.b16 %v42
  %v527 = vunpack.c.l.b16 %v43
  %v528 = vunpack.c.l.b16 %v44
  %v529 = vunpack.c.l.b16 %v45
  %v530 = vunpack.c.l.b16 %v46
  %v531 = vunpack.c.l.b16 %v47
  %v532 = vunpack.c.l.b16 %v48
  %v533 = vunpack.c.l.b16 %v49
  %v534 = vunpack.c.l.b16 %v50
  %v535 = vunpack.c.l.b16 %v51
  %v536 = vunpack.c.l.b16 %v52
  %v537 = vunpack.c.l.b16 %v53
  %v538 = vunpack.c.l.b16 %v54
  %v539 = vunpack.c.l.b16 %v55
  %v540 = vunpack.c.l.b16 %v56
  %v541 = vunpack.c.l.b16 %v57
  %v542 = vunpack.c.l.b16 %v58
  %v543 = vunpack.c.l.b16 %v59
  %v544 = vunpack.c.l.b16 %v60
  %v545 = vunpack.c.l.b16 %v61
  %v546 = vunpack.c.l.b16 %v62
  %v547 = vunpack.c.l.b16 %v63
  %v548 = vunpack.c.l.b16 %v64
  %v549 = vunpack.c.l.b16 %v65
  %v550 = vunpack.c.l.b16 %v66
  %v551 = vunpack.c.l.b16 %v67
  %v552 = vunpack.c.l.b16 %v68
  %v553 = vunpack.c.l.b16 %v69
  %v554 = vunpack.c.l.b16 %v70
  %v555 = vunpack.c.l.b16 %v71
  %v556 = vunpack.c.l.b16 %v72
  %v557 = vunpack.c.l.b16 %v73
  %v558 = vunpack.c.l.b16 %v74
  %v559 = vunpack.c.l.b16 %v75
  %v560 = vunpack.c.l.b16 %v76
  %v561 = vunpack.c.l.b16 %v77
  %v562 = vunpack.c.l.b16 %v78
  %v563 = vunpack.c.l.b16 %v79
  %v564 = vunpack.c.l.b16 %v80
  %v565 = vunpack.c.l.b16 %v81
  %v566 = vunpack.c.l.b16 %v82
  %v567 = vunpack.c.l.b16 %v83
  %v568 = vunpack.c.l.b16 %v84
  %v569 = vunpack.c.l.b16 %v85
  %v570 = vunpack.c.l.b16 %v86
  %v571 = vunpack.c.l.b16 %v87
  %v572 = vunpack.c.l.b16 %v88
  %v573 = vunpack.c.l.b16 %v89
  %v574 = vunpack.c.l.b16 %v90
  %v575 = vunpack.c.l.b16 %v91
  %v576 = vunpack.c.l.b16 %v92
  %v577 = vunpack.c.l.b16 %v93
  %v578 = vunpack.c.l.b16 %v94
  %v579 = vunpack.c.l.b16 %v95
  %v580 = vunpack.c.l.b16 %v96
  %v581 = vunpack.c.l.b16 %v97
  %v582 = vunpack.c.l.b16 %v98
  %v583 = vunpack.c.l.b16 %v99
  %v584 = vunpack.c.l.b16 %v100
  %v585 = vunpack.c.l.b16 %v101
  %v586 = vunpack.c.l.b16 %v102
  %v587 = vunpack.c.l.b16 %v103
  %v588 = vunpack.c.l.b16 %v104
  %v589 = vunpack.c.l.b16 %v105
  %v590 = vunpack.c.l.b16 %v106
  %v591 = vunpack.c.l.b16 %v107
  %v592 = vunpack.c.l.b16 %v108
  %v593 = vunpack.c.l.b16 %v109
  %v594 = vunpack.c.l.b16 %v110
  %v595 = vunpack.c.l.b16 %v111
  %v596 = vunpack.c.l.b16 %v112
  %v597 = vunpack.c.l.b16 %v113
  %v598 = vunpack.c.l.b16 %v114
  %v599 = vunpack.c.l.b16 %v115
  %v600 = vunpack.c.l.b16 %v116
  %v601 = vunpack.c.l.b16 %v117
  %v602 = vunpack.c.l.b16 %v118
  %v603 = vunpack.c.l.b16 %v119
  %v604 = vunpack.c.l.b16 %v120
  %v605 = vunpack.c.l.b16 %v121
  %v606 = vunpack.c.l.b16 %v122
  %v607 = vunpack.c.l.b16 %v123
  %v608 = vunpack.c.l.b16 %v124
  %v609 = vunpack.c.l.b16 %v125
  %v610 = vunpack.c.l.b16 %v126
  %v611 = vunpack.c.l.b16 %v127
  %v612 = vunpack.c.l.b16 %v128
  %v613 = vunpack.c.l.b16 %v129
  %v614 = vunpack.c.l.b16 %v130
  %v615 = vunpack.c.l.b16 %v131
  %v616 = vunpack.c.l.b16 %v132
  %v617 = vunpack.c.l.b16 %v133
  %v618 = vunpack.c.l.b16 %v134
  %v619 = vunpack.c.l.b16 %v135
  %v620 = vunpack.c.l.b16 %v136
  %v621 = vunpack.c.l.b16 %v137
  %v622 = vunpack.c.l.b16 %v138
  %v623 = vunpack.c.l.b16 %v139
  %v624 = vunpack.c.l.b16 %v140
  %v625 = vunpack.c.l.b16 %v141
  %v626 = vunpack.c.l.b16 %v142
  %v627 = vunpack.c.l.b16 %v143
  %v628 = vunpack.c.l.b16 %v144
  %v629 = vunpack.c.l.b16 %v145
  %v630 = vunpack.c.l.b16 %v146
  %v631 = vunpack.c.l.b16 %v147
  %v632 = vunpack.c.l.b16 %v148
  %v633 = vunpack.c.l.b16 %v149
  %v634 = vunpack.c.l.b16 %v150
  %v635 = vunpack.c.l.b16 %v151
  %v636 = vunpack.c.l.b16 %v152
  %v637 = vunpack.c.l.b16 %v153
  %v638 = vunpack.c.l.b16 %v154
  %v639 = vunpack.c.l.b16 %v155
  %v640 = vunpack.c.l.b16 %v156
  %v641 = vunpack.c.l.b16 %v157
  %v642 = vunpack.c.l.b16 %v158
  %v643 = vunpack.c.l.b16 %v159
  %v644 = vunpack.c.l.b16 %v160
  %v645 = vunpack.c.l.b16 %v161
  %v646 = vunpack.c.l.b16 %v162
  %v647 = vunpack.c.l.b16 %v163
  %v648 = vunpack.c.l.b16 %v164
  %v649 = vunpack.c.l.b16 %v165
  %v650 = vunpack.c.l.b16 %v166
  %v651 = vunpack.c.l.b16 %v167
  %v652 = vunpack.c.l.b16 %v168
  %v653 = vunpack.c.l.b16 %v169
  %v654 = vunpack.c.l.b16 %v170
  %v655 = vunpack.c.l.b16 %v171
  %v656 = vunpack.c.l.b16 %v172
  %v657 = vunpack.c.l.b16 %v173
  %v658 = vunpack.c.l.b16 %v174
  %v659 = vunpack.c.l.b16 %v175
  %v660 = vunpack.c.l.b16 %v176
  %v661 = vunpack.c.l.b16 %v177
  %v662 = vunpack.c.l.b16 %v178
  %v663 = vunpack.c.l.b16 %v179
  %v664 = vunpack.c.l.b16 %v180
  %v665 = vunpack.c.l.b16 %v181
  %v666 = vunpack.c.l.b16 %v182
  %v667 = vunpack.c.l.b16 %v183
  %v668 = vunpack.c.l.b16 %v184
  %v669 = vunpack.c.l.b16 %v185
  %v670 = vunpack.c.l.b16 %v186
  %v671 = vunpack.c.l.b16 %v187
  %v672 = vunpack.c.l.b16 %v188
  %v673 = vunpack.c.l.b16 %v189
  %v674 = vunpack.c.l.b16 %v190
  %v675 = vunpack.c.l.b16 %v191
  %v676 = vunpack.c.l.b16 %v192
  %v677 = vunpack.c.l.b16 %v193
  %v678 = vunpack.c.l.b16 %v194
  %v679 = vunpack.c.l.b16 %v195
  %v680 = vunpack.c.l.b16 %v196
  %v681 = vunpack.c.l.b16 %v197
  %v682 = vunpack.c.l.b16 %v198
  %v683 = vunpack.c.l.b16 %v199
  %v684 = vunpack.c.l.b16 %v200
  %v685 = vunpack.c.l.b16 %v201
  %v686 = vunpack.c.l.b16 %v202
  %v687 = vunpack.c.l.b16 %v203
  %v688 = vunpack.c.l.b16 %v204
  %v689 = vunpack.c.l.b16 %v205
  %v690 = vunpack.c.l.b16 %v206
  %v691 = vunpack.c.l.b16 %v207
  %v692 = vunpack.c.l.b16 %v208
  %v693 = vunpack.c.l.b16 %v209
  %v694 = vunpack.c.l.b16 %v210
  %v695 = vunpack.c.l.b16 %v211
  %v696 = vunpack.c.l.b16 %v212
  %v697 = vunpack.c.l.b16 %v213
  %v698 = vunpack.c.l.b16 %v214
  %v699 = vunpack.c.l.b16 %v215
  %v700 = vunpack.c.l.b16 %v216
  %v701 = vunpack.c.l.b16 %v217
  %v702 = vunpack.c.l.b16 %v218
  %v703 = vunpack.c.l.b16 %v219
  %v704 = vunpack.c.l.b16 %v220
  %v705 = vunpack.c.l.b16 %v221
  %v706 = vunpack.c.l.b16 %v222
  %v707 = vunpack.c.l.b16 %v223
  %v708 = vunpack.c.l.b16 %v224
  %v709 = vunpack.c.l.b16 %v225
  %v710 = vunpack.c.l.b16 %v226
  %v711 = vunpack.c.l.b16 %v227
  %v712 = vunpack.c.l.b16 %v228
  %v713 = vunpack.c.l.b16 %v229
  %v714 = vunpack.c.l.b16 %v230
  %v715 = vunpack.c.l.b16 %v231
  %v716 = vunpack.c.l.b16 %v232
  %v717 = vunpack.c.l.b16 %v233
  %v718 = vunpack.c.l.b16 %v234
  %v719 = vunpack.c.l.b16 %v235
  %v720 = vunpack.c.l.b16 %v236
  %v721 = vunpack.c.l.b16 %v237
  %v722 = vpack.c.b16 %v507, %v506
  %v723 = vpack.c.b16 %v509, %v508
  %v724 = vpack.c.b16 %v511, %v510
  %v725 = vpack.c.b16 %v513, %v512
  %v726 = vpack.c.b16 %v515, %v514
  %v727 = vpack.c.b16 %v517, %v516
  %v728 = vpack.c.b16 %v519, %v518
  %v729 = vpack.c.b16 %v521, %v520
  %v730 = vpack.c.b16 %v523, %v522
  %v731 = vpack.c.b16 %v525, %v524
  %v732 = vpack.c.b16 %v527, %v526
  %v733 = vpack.c.b16 %v529, %v528
  %v734 = vpack.c.b16 %v531, %v530
  %v735 = vpack.c.b16 %v533, %v532
  %v736 = vpack.c.b16 %v535, %v534
  %v737 = vpack.c.b16 %v537, %v536
  %v738 = vpack.c.b16 %v539, %v538
  %v739 = vpack.c.b16 %v541, %v540
  %v740 = vpack.c.b16 %v543, %v542
  %v741 = vpack.c.b16 %v545, %v544
  %v742 = vpack.c.b16 %v547, %v546
  %v743 = vpack.c.b16 %v549, %v548
  %v744 = vpack.c.b16 %v551, %v550
  %v745 = vpack.c.b16 %v553, %v552
  %v746 = vpack.c.b16 %v555, %v554
  %v747 = vpack.c.b16 %v557, %v556
  %v748 = vpack.c.b16 %v559, %v558
  %v749 = vpack.c.b16 %v561, %v560
  %v750 = vpack.c.b16 %v563, %v562
  %v751 = vpack.c.b16 %v565, %v564
  %v752 = vpack.c.b16 %v567, %v566
  %v753 = vpack.c.b16 %v569, %v568
  %v754 = vpack.c.b16 %v571, %v570
  %v755 = vpack.c.b16 %v573, %v572
  %v756 = vpack.c.b16 %v575, %v574
  %v757 = vpack.c.b16 %v577, %v576
  %v758 = vpack.c.b16 %v579, %v578
  %v759 = vpack.c.b16 %v581, %v580
  %v760 = vpack.c.b16 %v583, %v582
  %v761 = vpack.c.b16 %v585, %v584
  %v762 = vpack.c.b16 %v587, %v586
  %v763 = vpack.c.b16 %v589, %v588
  %v764 = vpack.c.b16 %v591, %v590
  %v765 = vpack.c.b16 %v593, %v592
  %v766 = vpack.c.b16 %v595, %v594
  %v767 = vpack.c.b16 %v597, %v596
  %v768 = vpack.c.b16 %v599, %v598
  %v769 = vpack.c.b16 %v601, %v600
  %v770 = vpack.c.b16 %v603, %v602
  %v771 = vpack.c.b16 %v605, %v604
  %v772 = vpack.c.b16 %v607, %v606
  %v773 = vpack.c.b16 %v609, %v608
  %v774 = vpack.c.b16 %v611, %v610
  %v775 = vpack.c.b16 %v613, %v612
  %v776 = vpack.c.b16 %v615, %v614
  %v777 = vpack.c.b16 %v617, %v616
  %v778 = vpack.c.b16 %v619, %v618
  %v779 = vpack.c.b16 %v621, %v620
  %v780 = vpack.c.b16 %v623, %v622
  %v781 = vpack.c.b16 %v625, %v624
  %v782 = vpack.c.b16 %v627, %v626
  %v783 = vpack.c.b16 %v629, %v628
  %v784 = vpack.c.b16 %v631, %v630
  %v785 = vpack.c.b16 %v633, %v632
  %v786 = vpack.c.b16 %v635, %v634
  %v787 = vpack.c.b16 %v637, %v636
  %v788 = vpack.c.b16 %v639, %v638
  %v789 = vpack.c.b16 %v641, %v640
  %v790 = vpack.c.b16 %v643, %v642
  %v791 = vpack.c.b16 %v645, %v644
  %v792 = vpack.c.b16 %v647, %v646
  %v793 = vpack.c.b16 %v649, %v648
  %v794 = vpack.c.b16 %v651, %v650
  %v795 = vpack.c.b16 %v653, %v652
  %v796 = vpack.c.b16 %v655, %v654
  %v797 = vpack.c.b16 %v657, %v656
  %v798 = vpack.c.b16 %v659, %v658
  %v799 = vpack.c.b16 %v661, %v660
  %v800 = vpack.c.b16 %v663, %v662
  %v801 = vpack.c.b16 %v665, %v664
  %v802 = vpack.c.b16 %v667, %v666
  %v803 = vpack.c.b16 %v669, %v668
  %v804 = vpack.c.b16 %v671, %v670
  %v805 = vpack.c.b16 %v673, %v672
  %v806 = vpack.c.b16 %v675, %v674
  %v807 = vpack.c.b16 %v677, %v676
  %v808 = vpack.c.b16 %v679, %v678
  %v809 = vpack.c.b16 %v681, %v680
  %v810 = vpack.c.b16 %v683, %v682
  %v811 = vpack.c.b16 %v685, %v684
  %v812 = vpack.c.b16 %v687, %v686
  %v813 = vpack.c.b16 %v689, %v688
  %v814 = vpack.c.b16 %v691, %v690
  %v815 = vpack.c.b16 %v693, %v692
  %v816 = vpack.c.b16 %v695, %v694
  %v817 = vpack.c.b16 %v697, %v696
  %v818 = vpack.c.b16 %v699, %v698
  %v819 = vpack.c.b16 %v701, %v700
  %v820 = vpack.c.b16 %v703, %v702
  %v821 = vpack.c.b16 %v705, %v704
  %v822 = vpack.c.b16 %v707, %v706
  %v823 = vpack.c.b16 %v709, %v708
  %v824 = vpack.c.b16 %v711, %v710
  %v825 = vpack.c.b16 %v713, %v712
  %v826 = vpack.c.b16 %v715, %v714
  %v827 = vpack.c.b16 %v717, %v716
  %v828 = vpack.c.b16 %v719, %v718
  %v829 = vpack.c.b16 %v721, %v720
  %vm938 = vcmask 523264
  %v940 = vsel %vm938, %v276, 0
  %942 = vmatpush.bf16.msra.mxu0 %v729
  %943 = vmatpush.bf16.msra.mxu0 %v728
  %944 = vmatpush.bf16.msra.mxu0 %v727
  %945 = vmatpush.bf16.msra.mxu0 %v726
  %946 = vmatpush.bf16.msra.mxu0 %v725
  %947 = vmatpush.bf16.msra.mxu0 %v724
  %948 = vmatpush.bf16.msra.mxu0 %v723
  %949 = vmatpush.bf16.msra.mxu0 %v722
  %950 = vmatmul.bf16.gmra.mxu0 %v263
  %v951 = vpop.f32.mrf.mxu0
  %v952 = vadd.f32 %v240, %v951
  %v953 = vpop.f32.mrf.mxu0
  %954 = vdwg.mxu0
  %955 = vmatpush.bf16.msra.mxu0 %v737
  %956 = vmatpush.bf16.msra.mxu0 %v736
  %957 = vmatpush.bf16.msra.mxu0 %v735
  %958 = vmatpush.bf16.msra.mxu0 %v734
  %959 = vmatpush.bf16.msra.mxu0 %v733
  %960 = vmatpush.bf16.msra.mxu0 %v732
  %961 = vmatpush.bf16.msra.mxu0 %v731
  %962 = vmatpush.bf16.msra.mxu0 %v730
  %963 = vmatmul.bf16.gmra.mxu0 %v264
  %v964 = vpop.f32.mrf.mxu0
  %v965 = vadd.f32 %v952, %v964
  %v966 = vpop.f32.mrf.mxu0
  %967 = vdwg.mxu0
  %968 = vmatpush.bf16.msra.mxu0 %v745
  %969 = vmatpush.bf16.msra.mxu0 %v744
  %970 = vmatpush.bf16.msra.mxu0 %v743
  %971 = vmatpush.bf16.msra.mxu0 %v742
  %972 = vmatpush.bf16.msra.mxu0 %v741
  %973 = vmatpush.bf16.msra.mxu0 %v740
  %974 = vmatpush.bf16.msra.mxu0 %v739
  %975 = vmatpush.bf16.msra.mxu0 %v738
  %976 = vmatmul.bf16.gmra.mxu0 %v265
  %v977 = vpop.f32.mrf.mxu0
  %v978 = vadd.f32 %v965, %v977
  %v979 = vpop.f32.mrf.mxu0
  %980 = vdwg.mxu0
  %981 = vmatpush.bf16.msra.mxu0 %v753
  %982 = vmatpush.bf16.msra.mxu0 %v752
  %983 = vmatpush.bf16.msra.mxu0 %v751
  %984 = vmatpush.bf16.msra.mxu0 %v750
  %985 = vmatpush.bf16.msra.mxu0 %v749
  %986 = vmatpush.bf16.msra.mxu0 %v748
  %987 = vmatpush.bf16.msra.mxu0 %v747
  %988 = vmatpush.bf16.msra.mxu0 %v746
  %989 = vmatmul.bf16.gmra.mxu0 %v266
  %v990 = vpop.f32.mrf.mxu0
  %v991 = vadd.f32 %v978, %v990
  %v992 = vpop.f32.mrf.mxu0
  %993 = vdwg.mxu0
  %994 = vmatpush.bf16.msra.mxu0 %v761
  %995 = vmatpush.bf16.msra.mxu0 %v760
  %996 = vmatpush.bf16.msra.mxu0 %v759
  %997 = vmatpush.bf16.msra.mxu0 %v758
  %998 = vmatpush.bf16.msra.mxu0 %v757
  %999 = vmatpush.bf16.msra.mxu0 %v756
  %1000 = vmatpush.bf16.msra.mxu0 %v755
  %1001 = vmatpush.bf16.msra.mxu0 %v754
  %1002 = vmatmul.bf16.gmra.mxu0 %v267
  %v1003 = vpop.f32.mrf.mxu0
  %v1004 = vadd.f32 %v991, %v1003
  %v1005 = vpop.f32.mrf.mxu0
  %1006 = vdwg.mxu0
  %1007 = vmatpush.bf16.msra.mxu0 %v769
  %1008 = vmatpush.bf16.msra.mxu0 %v768
  %1009 = vmatpush.bf16.msra.mxu0 %v767
  %1010 = vmatpush.bf16.msra.mxu0 %v766
  %1011 = vmatpush.bf16.msra.mxu0 %v765
  %1012 = vmatpush.bf16.msra.mxu0 %v764
  %1013 = vmatpush.bf16.msra.mxu0 %v763
  %1014 = vmatpush.bf16.msra.mxu0 %v762
  %1015 = vmatmul.bf16.gmra.mxu0 %v268
  %v1016 = vpop.f32.mrf.mxu0
  %v1017 = vadd.f32 %v1004, %v1016
  %v1018 = vpop.f32.mrf.mxu0
  %1019 = vdwg.mxu0
  %1020 = vmatpush.bf16.msra.mxu0 %v777
  %1021 = vmatpush.bf16.msra.mxu0 %v776
  %1022 = vmatpush.bf16.msra.mxu0 %v775
  %1023 = vmatpush.bf16.msra.mxu0 %v774
  %1024 = vmatpush.bf16.msra.mxu0 %v773
  %1025 = vmatpush.bf16.msra.mxu0 %v772
  %1026 = vmatpush.bf16.msra.mxu0 %v771
  %1027 = vmatpush.bf16.msra.mxu0 %v770
  %1028 = vmatmul.bf16.gmra.mxu0 %v269
  %v1029 = vpop.f32.mrf.mxu0
  %v1030 = vadd.f32 %v1017, %v1029
  %v1031 = vpop.f32.mrf.mxu0
  %1032 = vdwg.mxu0
  %1033 = vmatpush.bf16.msra.mxu0 %v785
  %1034 = vmatpush.bf16.msra.mxu0 %v784
  %1035 = vmatpush.bf16.msra.mxu0 %v783
  %1036 = vmatpush.bf16.msra.mxu0 %v782
  %1037 = vmatpush.bf16.msra.mxu0 %v781
  %1038 = vmatpush.bf16.msra.mxu0 %v780
  %1039 = vmatpush.bf16.msra.mxu0 %v779
  %1040 = vmatpush.bf16.msra.mxu0 %v778
  %1041 = vmatmul.bf16.gmra.mxu0 %v270
  %v1042 = vpop.f32.mrf.mxu0
  %v1043 = vadd.f32 %v1030, %v1042
  %v1044 = vpop.f32.mrf.mxu0
  %1045 = vdwg.mxu0
  %1046 = vmatpush.bf16.msra.mxu0 %v793
  %1047 = vmatpush.bf16.msra.mxu0 %v792
  %1048 = vmatpush.bf16.msra.mxu0 %v791
  %1049 = vmatpush.bf16.msra.mxu0 %v790
  %1050 = vmatpush.bf16.msra.mxu0 %v789
  %1051 = vmatpush.bf16.msra.mxu0 %v788
  %1052 = vmatpush.bf16.msra.mxu0 %v787
  %1053 = vmatpush.bf16.msra.mxu0 %v786
  %1054 = vmatmul.bf16.gmra.mxu0 %v271
  %v1055 = vpop.f32.mrf.mxu0
  %v1056 = vadd.f32 %v1043, %v1055
  %v1057 = vpop.f32.mrf.mxu0
  %1058 = vdwg.mxu0
  %1059 = vmatpush.bf16.msra.mxu0 %v801
  %1060 = vmatpush.bf16.msra.mxu0 %v800
  %1061 = vmatpush.bf16.msra.mxu0 %v799
  %1062 = vmatpush.bf16.msra.mxu0 %v798
  %1063 = vmatpush.bf16.msra.mxu0 %v797
  %1064 = vmatpush.bf16.msra.mxu0 %v796
  %1065 = vmatpush.bf16.msra.mxu0 %v795
  %1066 = vmatpush.bf16.msra.mxu0 %v794
  %1067 = vmatmul.bf16.gmra.mxu0 %v272
  %v1068 = vpop.f32.mrf.mxu0
  %v1069 = vadd.f32 %v1056, %v1068
  %v1070 = vpop.f32.mrf.mxu0
  %1071 = vdwg.mxu0
  %1072 = vmatpush.bf16.msra.mxu0 %v809
  %1073 = vmatpush.bf16.msra.mxu0 %v808
  %1074 = vmatpush.bf16.msra.mxu0 %v807
  %1075 = vmatpush.bf16.msra.mxu0 %v806
  %1076 = vmatpush.bf16.msra.mxu0 %v805
  %1077 = vmatpush.bf16.msra.mxu0 %v804
  %1078 = vmatpush.bf16.msra.mxu0 %v803
  %1079 = vmatpush.bf16.msra.mxu0 %v802
  %1080 = vmatmul.bf16.gmra.mxu0 %v273
  %v1081 = vpop.f32.mrf.mxu0
  %v1082 = vadd.f32 %v1069, %v1081
  %v1083 = vpop.f32.mrf.mxu0
  %1084 = vdwg.mxu0
  %1085 = vmatpush.bf16.msra.mxu0 %v817
  %1086 = vmatpush.bf16.msra.mxu0 %v816
  %1087 = vmatpush.bf16.msra.mxu0 %v815
  %1088 = vmatpush.bf16.msra.mxu0 %v814
  %1089 = vmatpush.bf16.msra.mxu0 %v813
  %1090 = vmatpush.bf16.msra.mxu0 %v812
  %1091 = vmatpush.bf16.msra.mxu0 %v811
  %1092 = vmatpush.bf16.msra.mxu0 %v810
  %1093 = vmatmul.bf16.gmra.mxu0 %v274
  %v1094 = vpop.f32.mrf.mxu0
  %v1095 = vadd.f32 %v1082, %v1094
  %v1096 = vpop.f32.mrf.mxu0
  %1097 = vdwg.mxu0
  %1098 = vmatpush.bf16.msra.mxu0 %v825
  %1099 = vmatpush.bf16.msra.mxu0 %v824
  %1100 = vmatpush.bf16.msra.mxu0 %v823
  %1101 = vmatpush.bf16.msra.mxu0 %v822
  %1102 = vmatpush.bf16.msra.mxu0 %v821
  %1103 = vmatpush.bf16.msra.mxu0 %v820
  %1104 = vmatpush.bf16.msra.mxu0 %v819
  %1105 = vmatpush.bf16.msra.mxu0 %v818
  %1106 = vmatmul.bf16.gmra.mxu0 %v275
  %v1107 = vpop.f32.mrf.mxu0
  %v1108 = vadd.f32 %v1095, %v1107
  %v1109 = vpop.f32.mrf.mxu0
  %1110 = vdwg.mxu0
  %1111 = vmatpush.bf16.msra.mxu0 0
  %1112 = vmatpush.bf16.msra.mxu0 0
  %1113 = vmatpush.bf16.msra.mxu0 0
  %1114 = vmatpush.bf16.msra.mxu0 0
  %1115 = vmatpush.bf16.msra.mxu0 %v829
  %1116 = vmatpush.bf16.msra.mxu0 %v828
  %1117 = vmatpush.bf16.msra.mxu0 %v827
  %1118 = vmatpush.bf16.msra.mxu0 %v826
  %1119 = vmatmul.bf16.gmra.mxu0 %v940
  %v1120 = vpop.f32.mrf.mxu0
  %v1121 = vadd.f32 %v1108, %v1120
  %v1122 = vpop.f32.mrf.mxu0
  %1123 = vdwg.mxu0
  %v1124 = vmul.f32 %v1121, 0.2
  %v1125 = vmax.f32 %v1121, %v1124
  %v1126 = vpack.c.bf16 %v1125, %v1125
  %1127 = vst [vmem:[%s3] sm:$0xf] %v1126
  // Predicated region
  $region14: #{autoencoder3d_forward.10} parent=0 // pred_check
    _
  $region15: #{autoencoder3d_forward.10} parent=0 // pred_check_branch
    %1129 = sbr.rel (0) target = $region17
  $region16: #{autoencoder3d_forward.10} parent=0 // pred_region
    _
  $region17: #{autoencoder3d_forward.10} parent=0 // pred_fallthru
    _
  // Predicated region
  $region18: #{autoencoder3d_forward.10} parent=0 // pred_check
    _
  $region19: #{autoencoder3d_forward.10} parent=0 // pred_check_branch
    %1131 = sbr.rel (0) target = $region21
  $region20: #{autoencoder3d_forward.10} parent=0 // pred_region
    _
  $region21: #{autoencoder3d_forward.10} parent=0 // pred_fallthru
    _

// kernel: autoencoder3d_forward.11
$region0: #{autoencoder3d_forward.11}
  #allocation0 [shape = 'u32[]', space=smem, size = 0x4, offset = 0x4, fixed_abs, tag = 'smem constant byte address 0x4 - core index']
  #allocation1 [shape = 'u32[72,128]{1,0:T(1,128)}', space=vmem, size = 0x9000, scoped, tag = 'internal scratch']
  %s0 = inlined_call_operand.vmem [shape: bf16[8,3456], index: 0, kind: input, shape index: {}]
  %s1 = inlined_call_operand.vmem [shape: bf16[3456,128], index: 1, kind: input, shape index: {}]
  %s2 = inlined_call_operand.vmem [shape: f32[1,128], index: 2, kind: input, shape index: {}]
  %s3 = inlined_call_operand.vmem [shape: bf16[8,128], index: 3, kind: output, shape index: {}]
  %s4 = sld [smem:[#allocation0]]
  $region22: #{autoencoder3d_forward.11} parent=0
    _
  %s6 = ssub.s32 1, %s4
  %s7 = scalar_select 0, %s6, %s4
  // Predicated region
  $region2: #{autoencoder3d_forward.11} parent=0 // pred_check
    _
  $region3: #{autoencoder3d_forward.11} parent=0 // pred_check_branch
    %9 = sbr.rel (0) target = $region5
  $region4: #{autoencoder3d_forward.11} parent=0 // pred_region
    _
  $region5: #{autoencoder3d_forward.11} parent=0 // pred_fallthru
    _
  // Predicated region
  $region6: #{autoencoder3d_forward.11} parent=0 // pred_check
    _
  $region7: #{autoencoder3d_forward.11} parent=0 // pred_check_branch
    %11 = sbr.rel (0) target = $region9
  $region8: #{autoencoder3d_forward.11} parent=0 // pred_region
    _
  $region9: #{autoencoder3d_forward.11} parent=0 // pred_fallthru
    _
  // Predicated region
  $region10: #{autoencoder3d_forward.11} parent=0 // pred_check
    _
  $region11: #{autoencoder3d_forward.11} parent=0 // pred_check_branch
    %13 = sbr.rel (0) target = $region13
  $region12: #{autoencoder3d_forward.11} parent=0 // pred_region
    _
  $region13: #{autoencoder3d_forward.11} parent=0 // pred_fallthru
    _
  %v14 = vld [vmem:[%s0] sm:$0xff]
  %v15 = vld [vmem:[%s0 + $0x8] sm:$0xff]
  %v16 = vld [vmem:[%s0 + $0x10] sm:$0xff]
  %v17 = vld [vmem:[%s0 + $0x18] sm:$0xff]
  %v18 = vld [vmem:[%s0 + $0x20] sm:$0xff]
  %v19 = vld [vmem:[%s0 + $0x28] sm:$0xff]
  %v20 = vld [vmem:[%s0 + $0x30] sm:$0xff]
  %v21 = vld [vmem:[%s0 + $0x38] sm:$0xff]
  %v22 = vld [vmem:[%s0 + $0x40] sm:$0xff]
  %v23 = vld [vmem:[%s0 + $0x48] sm:$0xff]
  %v24 = vld [vmem:[%s0 + $0x50] sm:$0xff]
  %v25 = vld [vmem:[%s0 + $0x58] sm:$0xff]
  %v26 = vld [vmem:[%s0 + $0x60] sm:$0xff]
  %v27 = vld [vmem:[%s0 + $0x68] sm:$0xf]
  %v28 = vld [vmem:[%s1] sm:$0xf]
  %v29 = vld [vmem:[%s1 + $0x4] sm:$0xf]
  %v30 = vld [vmem:[%s1 + $0x8] sm:$0xf]
  %v31 = vld [vmem:[%s1 + $0xc] sm:$0xf]
  %v32 = vld [vmem:[%s1 + $0x10] sm:$0xf]
  %v33 = vld [vmem:[%s1 + $0x14] sm:$0xf]
  %v34 = vld [vmem:[%s1 + $0x18] sm:$0xf]
  %v35 = vld [vmem:[%s1 + $0x1c] sm:$0xf]
  %v36 = vld [vmem:[%s1 + $0x20] sm:$0xf]
  %v37 = vld [vmem:[%s1 + $0x24] sm:$0xf]
  %v38 = vld [vmem:[%s1 + $0x28] sm:$0xf]
  %v39 = vld [vmem:[%s1 + $0x2c] sm:$0xf]
  %v40 = vld [vmem:[%s1 + $0x30] sm:$0xf]
  %v41 = vld [vmem:[%s1 + $0x34] sm:$0xf]
  %v42 = vld [vmem:[%s1 + $0x38] sm:$0xf]
  %v43 = vld [vmem:[%s1 + $0x3c] sm:$0xf]
  %v44 = vld [vmem:[%s1 + $0x40] sm:$0xf]
  %v45 = vld [vmem:[%s1 + $0x44] sm:$0xf]
  %v46 = vld [vmem:[%s1 + $0x48] sm:$0xf]
  %v47 = vld [vmem:[%s1 + $0x4c] sm:$0xf]
  %v48 = vld [vmem:[%s1 + $0x50] sm:$0xf]
  %v49 = vld [vmem:[%s1 + $0x54] sm:$0xf]
  %v50 = vld [vmem:[%s1 + $0x58] sm:$0xf]
  %v51 = vld [vmem:[%s1 + $0x5c] sm:$0xf]
  %v52 = vld [vmem:[%s1 + $0x60] sm:$0xf]
  %v53 = vld [vmem:[%s1 + $0x64] sm:$0xf]
  %v54 = vld [vmem:[%s1 + $0x68] sm:$0xf]
  %v55 = vld [vmem:[%s1 + $0x6c] sm:$0xf]
  %v56 = vld [vmem:[%s1 + $0x70] sm:$0xf]
  %v57 = vld [vmem:[%s1 + $0x74] sm:$0xf]
  %v58 = vld [vmem:[%s1 + $0x78] sm:$0xf]
  %v59 = vld [vmem:[%s1 + $0x7c] sm:$0xf]
  %v60 = vld [vmem:[%s1 + $0x80] sm:$0xf]
  %v61 = vld [vmem:[%s1 + $0x84] sm:$0xf]
  %v62 = vld [vmem:[%s1 + $0x88] sm:$0xf]
  %v63 = vld [vmem:[%s1 + $0x8c] sm:$0xf]
  %v64 = vld [vmem:[%s1 + $0x90] sm:$0xf]
  %v65 = vld [vmem:[%s1 + $0x94] sm:$0xf]
  %v66 = vld [vmem:[%s1 + $0x98] sm:$0xf]
  %v67 = vld [vmem:[%s1 + $0x9c] sm:$0xf]
  %v68 = vld [vmem:[%s1 + $0xa0] sm:$0xf]
  %v69 = vld [vmem:[%s1 + $0xa4] sm:$0xf]
  %v70 = vld [vmem:[%s1 + $0xa8] sm:$0xf]
  %v71 = vld [vmem:[%s1 + $0xac] sm:$0xf]
  %v72 = vld [vmem:[%s1 + $0xb0] sm:$0xf]
  %v73 = vld [vmem:[%s1 + $0xb4] sm:$0xf]
  %v74 = vld [vmem:[%s1 + $0xb8] sm:$0xf]
  %v75 = vld [vmem:[%s1 + $0xbc] sm:$0xf]
  %v76 = vld [vmem:[%s1 + $0xc0] sm:$0xf]
  %v77 = vld [vmem:[%s1 + $0xc4] sm:$0xf]
  %v78 = vld [vmem:[%s1 + $0xc8] sm:$0xf]
  %v79 = vld [vmem:[%s1 + $0xcc] sm:$0xf]
  %v80 = vld [vmem:[%s1 + $0xd0] sm:$0xf]
  %v81 = vld [vmem:[%s1 + $0xd4] sm:$0xf]
  %v82 = vld [vmem:[%s1 + $0xd8] sm:$0xf]
  %v83 = vld [vmem:[%s1 + $0xdc] sm:$0xf]
  %v84 = vld [vmem:[%s1 + $0xe0] sm:$0xf]
  %v85 = vld [vmem:[%s1 + $0xe4] sm:$0xf]
  %v86 = vld [vmem:[%s1 + $0xe8] sm:$0xf]
  %v87 = vld [vmem:[%s1 + $0xec] sm:$0xf]
  %v88 = vld [vmem:[%s1 + $0xf0] sm:$0xf]
  %v89 = vld [vmem:[%s1 + $0xf4] sm:$0xf]
  %v90 = vld [vmem:[%s1 + $0xf8] sm:$0xf]
  %v91 = vld [vmem:[%s1 + $0xfc] sm:$0xf]
  %v92 = vld [vmem:[%s1 + $0x100] sm:$0xf]
  %v93 = vld [vmem:[%s1 + $0x104] sm:$0xf]
  %v94 = vld [vmem:[%s1 + $0x108] sm:$0xf]
  %v95 = vld [vmem:[%s1 + $0x10c] sm:$0xf]
  %v96 = vld [vmem:[%s1 + $0x110] sm:$0xf]
  %v97 = vld [vmem:[%s1 + $0x114] sm:$0xf]
  %v98 = vld [vmem:[%s1 + $0x118] sm:$0xf]
  %v99 = vld [vmem:[%s1 + $0x11c] sm:$0xf]
  %v100 = vld [vmem:[%s1 + $0x120] sm:$0xf]
  %v101 = vld [vmem:[%s1 + $0x124] sm:$0xf]
  %v102 = vld [vmem:[%s1 + $0x128] sm:$0xf]
  %v103 = vld [vmem:[%s1 + $0x12c] sm:$0xf]
  %v104 = vld [vmem:[%s1 + $0x130] sm:$0xf]
  %v105 = vld [vmem:[%s1 + $0x134] sm:$0xf]
  %v106 = vld [vmem:[%s1 + $0x138] sm:$0xf]
  %v107 = vld [vmem:[%s1 + $0x13c] sm:$0xf]
  %v108 = vld [vmem:[%s1 + $0x140] sm:$0xf]
  %v109 = vld [vmem:[%s1 + $0x144] sm:$0xf]
  %v110 = vld [vmem:[%s1 + $0x148] sm:$0xf]
  %v111 = vld [vmem:[%s1 + $0x14c] sm:$0xf]
  %v112 = vld [vmem:[%s1 + $0x150] sm:$0xf]
  %v113 = vld [vmem:[%s1 + $0x154] sm:$0xf]
  %v114 = vld [vmem:[%s1 + $0x158] sm:$0xf]
  %v115 = vld [vmem:[%s1 + $0x15c] sm:$0xf]
  %v116 = vld [vmem:[%s1 + $0x160] sm:$0xf]
  %v117 = vld [vmem:[%s1 + $0x164] sm:$0xf]
  %v118 = vld [vmem:[%s1 + $0x168] sm:$0xf]
  %v119 = vld [vmem:[%s1 + $0x16c] sm:$0xf]
  %v120 = vld [vmem:[%s1 + $0x170] sm:$0xf]
  %v121 = vld [vmem:[%s1 + $0x174] sm:$0xf]
  %v122 = vld [vmem:[%s1 + $0x178] sm:$0xf]
  %v123 = vld [vmem:[%s1 + $0x17c] sm:$0xf]
  %v124 = vld [vmem:[%s1 + $0x180] sm:$0xf]
  %v125 = vld [vmem:[%s1 + $0x184] sm:$0xf]
  %v126 = vld [vmem:[%s1 + $0x188] sm:$0xf]
  %v127 = vld [vmem:[%s1 + $0x18c] sm:$0xf]
  %v128 = vld [vmem:[%s1 + $0x190] sm:$0xf]
  %v129 = vld [vmem:[%s1 + $0x194] sm:$0xf]
  %v130 = vld [vmem:[%s1 + $0x198] sm:$0xf]
  %v131 = vld [vmem:[%s1 + $0x19c] sm:$0xf]
  %v132 = vld [vmem:[%s1 + $0x1a0] sm:$0xf]
  %v133 = vld [vmem:[%s1 + $0x1a4] sm:$0xf]
  %v134 = vld [vmem:[%s1 + $0x1a8] sm:$0xf]
  %v135 = vld [vmem:[%s1 + $0x1ac] sm:$0xf]
  %v136 = vld [vmem:[%s1 + $0x1b0] sm:$0xf]
  %v137 = vld [vmem:[%s1 + $0x1b4] sm:$0xf]
  %v138 = vld [vmem:[%s1 + $0x1b8] sm:$0xf]
  %v139 = vld [vmem:[%s1 + $0x1bc] sm:$0xf]
  %v140 = vld [vmem:[%s1 + $0x1c0] sm:$0xf]
  %v141 = vld [vmem:[%s1 + $0x1c4] sm:$0xf]
  %v142 = vld [vmem:[%s1 + $0x1c8] sm:$0xf]
  %v143 = vld [vmem:[%s1 + $0x1cc] sm:$0xf]
  %v144 = vld [vmem:[%s1 + $0x1d0] sm:$0xf]
  %v145 = vld [vmem:[%s1 + $0x1d4] sm:$0xf]
  %v146 = vld [vmem:[%s1 + $0x1d8] sm:$0xf]
  %v147 = vld [vmem:[%s1 + $0x1dc] sm:$0xf]
  %v148 = vld [vmem:[%s1 + $0x1e0] sm:$0xf]
  %v149 = vld [vmem:[%s1 + $0x1e4] sm:$0xf]
  %v150 = vld [vmem:[%s1 + $0x1e8] sm:$0xf]
  %v151 = vld [vmem:[%s1 + $0x1ec] sm:$0xf]
  %v152 = vld [vmem:[%s1 + $0x1f0] sm:$0xf]
  %v153 = vld [vmem:[%s1 + $0x1f4] sm:$0xf]
  %v154 = vld [vmem:[%s1 + $0x1f8] sm:$0xf]
  %v155 = vld [vmem:[%s1 + $0x1fc] sm:$0xf]
  %v156 = vld [vmem:[%s1 + $0x200] sm:$0xf]
  %v157 = vld [vmem:[%s1 + $0x204] sm:$0xf]
  %v158 = vld [vmem:[%s1 + $0x208] sm:$0xf]
  %v159 = vld [vmem:[%s1 + $0x20c] sm:$0xf]
  %v160 = vld [vmem:[%s1 + $0x210] sm:$0xf]
  %v161 = vld [vmem:[%s1 + $0x214] sm:$0xf]
  %v162 = vld [vmem:[%s1 + $0x218] sm:$0xf]
  %v163 = vld [vmem:[%s1 + $0x21c] sm:$0xf]
  %v164 = vld [vmem:[%s1 + $0x220] sm:$0xf]
  %v165 = vld [vmem:[%s1 + $0x224] sm:$0xf]
  %v166 = vld [vmem:[%s1 + $0x228] sm:$0xf]
  %v167 = vld [vmem:[%s1 + $0x22c] sm:$0xf]
  %v168 = vld [vmem:[%s1 + $0x230] sm:$0xf]
  %v169 = vld [vmem:[%s1 + $0x234] sm:$0xf]
  %v170 = vld [vmem:[%s1 + $0x238] sm:$0xf]
  %v171 = vld [vmem:[%s1 + $0x23c] sm:$0xf]
  %v172 = vld [vmem:[%s1 + $0x240] sm:$0xf]
  %v173 = vld [vmem:[%s1 + $0x244] sm:$0xf]
  %v174 = vld [vmem:[%s1 + $0x248] sm:$0xf]
  %v175 = vld [vmem:[%s1 + $0x24c] sm:$0xf]
  %v176 = vld [vmem:[%s1 + $0x250] sm:$0xf]
  %v177 = vld [vmem:[%s1 + $0x254] sm:$0xf]
  %v178 = vld [vmem:[%s1 + $0x258] sm:$0xf]
  %v179 = vld [vmem:[%s1 + $0x25c] sm:$0xf]
  %v180 = vld [vmem:[%s1 + $0x260] sm:$0xf]
  %v181 = vld [vmem:[%s1 + $0x264] sm:$0xf]
  %v182 = vld [vmem:[%s1 + $0x268] sm:$0xf]
  %v183 = vld [vmem:[%s1 + $0x26c] sm:$0xf]
  %v184 = vld [vmem:[%s1 + $0x270] sm:$0xf]
  %v185 = vld [vmem:[%s1 + $0x274] sm:$0xf]
  %v186 = vld [vmem:[%s1 + $0x278] sm:$0xf]
  %v187 = vld [vmem:[%s1 + $0x27c] sm:$0xf]
  %v188 = vld [vmem:[%s1 + $0x280] sm:$0xf]
  %v189 = vld [vmem:[%s1 + $0x284] sm:$0xf]
  %v190 = vld [vmem:[%s1 + $0x288] sm:$0xf]
  %v191 = vld [vmem:[%s1 + $0x28c] sm:$0xf]
  %v192 = vld [vmem:[%s1 + $0x290] sm:$0xf]
  %v193 = vld [vmem:[%s1 + $0x294] sm:$0xf]
  %v194 = vld [vmem:[%s1 + $0x298] sm:$0xf]
  %v195 = vld [vmem:[%s1 + $0x29c] sm:$0xf]
  %v196 = vld [vmem:[%s1 + $0x2a0] sm:$0xf]
  %v197 = vld [vmem:[%s1 + $0x2a4] sm:$0xf]
  %v198 = vld [vmem:[%s1 + $0x2a8] sm:$0xf]
  %v199 = vld [vmem:[%s1 + $0x2ac] sm:$0xf]
  %v200 = vld [vmem:[%s1 + $0x2b0] sm:$0xf]
  %v201 = vld [vmem:[%s1 + $0x2b4] sm:$0xf]
  %v202 = vld [vmem:[%s1 + $0x2b8] sm:$0xf]
  %v203 = vld [vmem:[%s1 + $0x2bc] sm:$0xf]
  %v204 = vld [vmem:[%s1 + $0x2c0] sm:$0xf]
  %v205 = vld [vmem:[%s1 + $0x2c4] sm:$0xf]
  %v206 = vld [vmem:[%s1 + $0x2c8] sm:$0xf]
  %v207 = vld [vmem:[%s1 + $0x2cc] sm:$0xf]
  %v208 = vld [vmem:[%s1 + $0x2d0] sm:$0xf]
  %v209 = vld [vmem:[%s1 + $0x2d4] sm:$0xf]
  %v210 = vld [vmem:[%s1 + $0x2d8] sm:$0xf]
  %v211 = vld [vmem:[%s1 + $0x2dc] sm:$0xf]
  %v212 = vld [vmem:[%s1 + $0x2e0] sm:$0xf]
  %v213 = vld [vmem:[%s1 + $0x2e4] sm:$0xf]
  %v214 = vld [vmem:[%s1 + $0x2e8] sm:$0xf]
  %v215 = vld [vmem:[%s1 + $0x2ec] sm:$0xf]
  %v216 = vld [vmem:[%s1 + $0x2f0] sm:$0xf]
  %v217 = vld [vmem:[%s1 + $0x2f4] sm:$0xf]
  %v218 = vld [vmem:[%s1 + $0x2f8] sm:$0xf]
  %v219 = vld [vmem:[%s1 + $0x2fc] sm:$0xf]
  %v220 = vld [vmem:[%s1 + $0x300] sm:$0xf]
  %v221 = vld [vmem:[%s1 + $0x304] sm:$0xf]
  %v222 = vld [vmem:[%s1 + $0x308] sm:$0xf]
  %v223 = vld [vmem:[%s1 + $0x30c] sm:$0xf]
  %v224 = vld [vmem:[%s1 + $0x310] sm:$0xf]
  %v225 = vld [vmem:[%s1 + $0x314] sm:$0xf]
  %v226 = vld [vmem:[%s1 + $0x318] sm:$0xf]
  %v227 = vld [vmem:[%s1 + $0x31c] sm:$0xf]
  %v228 = vld [vmem:[%s1 + $0x320] sm:$0xf]
  %v229 = vld [vmem:[%s1 + $0x324] sm:$0xf]
  %v230 = vld [vmem:[%s1 + $0x328] sm:$0xf]
  %v231 = vld [vmem:[%s1 + $0x32c] sm:$0xf]
  %v232 = vld [vmem:[%s1 + $0x330] sm:$0xf]
  %v233 = vld [vmem:[%s1 + $0x334] sm:$0xf]
  %v234 = vld [vmem:[%s1 + $0x338] sm:$0xf]
  %v235 = vld [vmem:[%s1 + $0x33c] sm:$0xf]
  %v236 = vld [vmem:[%s1 + $0x340] sm:$0xf]
  %v237 = vld [vmem:[%s1 + $0x344] sm:$0xf]
  %v238 = vld [vmem:[%s1 + $0x348] sm:$0xf]
  %v239 = vld [vmem:[%s1 + $0x34c] sm:$0xf]
  %v240 = vld [vmem:[%s1 + $0x350] sm:$0xf]
  %v241 = vld [vmem:[%s1 + $0x354] sm:$0xf]
  %v242 = vld [vmem:[%s1 + $0x358] sm:$0xf]
  %v243 = vld [vmem:[%s1 + $0x35c] sm:$0xf]
  %v244 = vld [vmem:[%s1 + $0x360] sm:$0xf]
  %v245 = vld [vmem:[%s1 + $0x364] sm:$0xf]
  %v246 = vld [vmem:[%s1 + $0x368] sm:$0xf]
  %v247 = vld [vmem:[%s1 + $0x36c] sm:$0xf]
  %v248 = vld [vmem:[%s1 + $0x370] sm:$0xf]
  %v249 = vld [vmem:[%s1 + $0x374] sm:$0xf]
  %v250 = vld [vmem:[%s1 + $0x378] sm:$0xf]
  %v251 = vld [vmem:[%s1 + $0x37c] sm:$0xf]
  %v252 = vld [vmem:[%s1 + $0x380] sm:$0xf]
  %v253 = vld [vmem:[%s1 + $0x384] sm:$0xf]
  %v254 = vld [vmem:[%s1 + $0x388] sm:$0xf]
  %v255 = vld [vmem:[%s1 + $0x38c] sm:$0xf]
  %v256 = vld [vmem:[%s1 + $0x390] sm:$0xf]
  %v257 = vld [vmem:[%s1 + $0x394] sm:$0xf]
  %v258 = vld [vmem:[%s1 + $0x398] sm:$0xf]
  %v259 = vld [vmem:[%s1 + $0x39c] sm:$0xf]
  %v260 = vld [vmem:[%s1 + $0x3a0] sm:$0xf]
  %v261 = vld [vmem:[%s1 + $0x3a4] sm:$0xf]
  %v262 = vld [vmem:[%s1 + $0x3a8] sm:$0xf]
  %v263 = vld [vmem:[%s1 + $0x3ac] sm:$0xf]
  %v264 = vld [vmem:[%s1 + $0x3b0] sm:$0xf]
  %v265 = vld [vmem:[%s1 + $0x3b4] sm:$0xf]
  %v266 = vld [vmem:[%s1 + $0x3b8] sm:$0xf]
  %v267 = vld [vmem:[%s1 + $0x3bc] sm:$0xf]
  %v268 = vld [vmem:[%s1 + $0x3c0] sm:$0xf]
  %v269 = vld [vmem:[%s1 + $0x3c4] sm:$0xf]
  %v270 = vld [vmem:[%s1 + $0x3c8] sm:$0xf]
  %v271 = vld [vmem:[%s1 + $0x3cc] sm:$0xf]
  %v272 = vld [vmem:[%s1 + $0x3d0] sm:$0xf]
  %v273 = vld [vmem:[%s1 + $0x3d4] sm:$0xf]
  %v274 = vld [vmem:[%s1 + $0x3d8] sm:$0xf]
  %v275 = vld [vmem:[%s1 + $0x3dc] sm:$0xf]
  %v276 = vld [vmem:[%s1 + $0x3e0] sm:$0xf]
  %v277 = vld [vmem:[%s1 + $0x3e4] sm:$0xf]
  %v278 = vld [vmem:[%s1 + $0x3e8] sm:$0xf]
  %v279 = vld [vmem:[%s1 + $0x3ec] sm:$0xf]
  %v280 = vld [vmem:[%s1 + $0x3f0] sm:$0xf]
  %v281 = vld [vmem:[%s1 + $0x3f4] sm:$0xf]
  %v282 = vld [vmem:[%s1 + $0x3f8] sm:$0xf]
  %v283 = vld [vmem:[%s1 + $0x3fc] sm:$0xf]
  %v284 = vld [vmem:[%s1 + $0x400] sm:$0xf]
  %v285 = vld [vmem:[%s1 + $0x404] sm:$0xf]
  %v286 = vld [vmem:[%s1 + $0x408] sm:$0xf]
  %v287 = vld [vmem:[%s1 + $0x40c] sm:$0xf]
  %v288 = vld [vmem:[%s1 + $0x410] sm:$0xf]
  %v289 = vld [vmem:[%s1 + $0x414] sm:$0xf]
  %v290 = vld [vmem:[%s1 + $0x418] sm:$0xf]
  %v291 = vld [vmem:[%s1 + $0x41c] sm:$0xf]
  %v292 = vld [vmem:[%s1 + $0x420] sm:$0xf]
  %v293 = vld [vmem:[%s1 + $0x424] sm:$0xf]
  %v294 = vld [vmem:[%s1 + $0x428] sm:$0xf]
  %v295 = vld [vmem:[%s1 + $0x42c] sm:$0xf]
  %v296 = vld [vmem:[%s1 + $0x430] sm:$0xf]
  %v297 = vld [vmem:[%s1 + $0x434] sm:$0xf]
  %v298 = vld [vmem:[%s1 + $0x438] sm:$0xf]
  %v299 = vld [vmem:[%s1 + $0x43c] sm:$0xf]
  %v300 = vld [vmem:[%s1 + $0x440] sm:$0xf]
  %v301 = vld [vmem:[%s1 + $0x444] sm:$0xf]
  %v302 = vld [vmem:[%s1 + $0x448] sm:$0xf]
  %v303 = vld [vmem:[%s1 + $0x44c] sm:$0xf]
  %v304 = vld [vmem:[%s1 + $0x450] sm:$0xf]
  %v305 = vld [vmem:[%s1 + $0x454] sm:$0xf]
  %v306 = vld [vmem:[%s1 + $0x458] sm:$0xf]
  %v307 = vld [vmem:[%s1 + $0x45c] sm:$0xf]
  %v308 = vld [vmem:[%s1 + $0x460] sm:$0xf]
  %v309 = vld [vmem:[%s1 + $0x464] sm:$0xf]
  %v310 = vld [vmem:[%s1 + $0x468] sm:$0xf]
  %v311 = vld [vmem:[%s1 + $0x46c] sm:$0xf]
  %v312 = vld [vmem:[%s1 + $0x470] sm:$0xf]
  %v313 = vld [vmem:[%s1 + $0x474] sm:$0xf]
  %v314 = vld [vmem:[%s1 + $0x478] sm:$0xf]
  %v315 = vld [vmem:[%s1 + $0x47c] sm:$0xf]
  %v316 = vld [vmem:[%s1 + $0x480] sm:$0xf]
  %v317 = vld [vmem:[%s1 + $0x484] sm:$0xf]
  %v318 = vld [vmem:[%s1 + $0x488] sm:$0xf]
  %v319 = vld [vmem:[%s1 + $0x48c] sm:$0xf]
  %v320 = vld [vmem:[%s1 + $0x490] sm:$0xf]
  %v321 = vld [vmem:[%s1 + $0x494] sm:$0xf]
  %v322 = vld [vmem:[%s1 + $0x498] sm:$0xf]
  %v323 = vld [vmem:[%s1 + $0x49c] sm:$0xf]
  %v324 = vld [vmem:[%s1 + $0x4a0] sm:$0xf]
  %v325 = vld [vmem:[%s1 + $0x4a4] sm:$0xf]
  %v326 = vld [vmem:[%s1 + $0x4a8] sm:$0xf]
  %v327 = vld [vmem:[%s1 + $0x4ac] sm:$0xf]
  %v328 = vld [vmem:[%s1 + $0x4b0] sm:$0xf]
  %v329 = vld [vmem:[%s1 + $0x4b4] sm:$0xf]
  %v330 = vld [vmem:[%s1 + $0x4b8] sm:$0xf]
  %v331 = vld [vmem:[%s1 + $0x4bc] sm:$0xf]
  %v332 = vld [vmem:[%s1 + $0x4c0] sm:$0xf]
  %v333 = vld [vmem:[%s1 + $0x4c4] sm:$0xf]
  %v334 = vld [vmem:[%s1 + $0x4c8] sm:$0xf]
  %v335 = vld [vmem:[%s1 + $0x4cc] sm:$0xf]
  %v336 = vld [vmem:[%s1 + $0x4d0] sm:$0xf]
  %v337 = vld [vmem:[%s1 + $0x4d4] sm:$0xf]
  %v338 = vld [vmem:[%s1 + $0x4d8] sm:$0xf]
  %v339 = vld [vmem:[%s1 + $0x4dc] sm:$0xf]
  %v340 = vld [vmem:[%s1 + $0x4e0] sm:$0xf]
  %v341 = vld [vmem:[%s1 + $0x4e4] sm:$0xf]
  %v342 = vld [vmem:[%s1 + $0x4e8] sm:$0xf]
  %v343 = vld [vmem:[%s1 + $0x4ec] sm:$0xf]
  %v344 = vld [vmem:[%s1 + $0x4f0] sm:$0xf]
  %v345 = vld [vmem:[%s1 + $0x4f4] sm:$0xf]
  %v346 = vld [vmem:[%s1 + $0x4f8] sm:$0xf]
  %v347 = vld [vmem:[%s1 + $0x4fc] sm:$0xf]
  %v348 = vld [vmem:[%s1 + $0x500] sm:$0xf]
  %v349 = vld [vmem:[%s1 + $0x504] sm:$0xf]
  %v350 = vld [vmem:[%s1 + $0x508] sm:$0xf]
  %v351 = vld [vmem:[%s1 + $0x50c] sm:$0xf]
  %v352 = vld [vmem:[%s1 + $0x510] sm:$0xf]
  %v353 = vld [vmem:[%s1 + $0x514] sm:$0xf]
  %v354 = vld [vmem:[%s1 + $0x518] sm:$0xf]
  %v355 = vld [vmem:[%s1 + $0x51c] sm:$0xf]
  %v356 = vld [vmem:[%s1 + $0x520] sm:$0xf]
  %v357 = vld [vmem:[%s1 + $0x524] sm:$0xf]
  %v358 = vld [vmem:[%s1 + $0x528] sm:$0xf]
  %v359 = vld [vmem:[%s1 + $0x52c] sm:$0xf]
  %v360 = vld [vmem:[%s1 + $0x530] sm:$0xf]
  %v361 = vld [vmem:[%s1 + $0x534] sm:$0xf]
  %v362 = vld [vmem:[%s1 + $0x538] sm:$0xf]
  %v363 = vld [vmem:[%s1 + $0x53c] sm:$0xf]
  %v364 = vld [vmem:[%s1 + $0x540] sm:$0xf]
  %v365 = vld [vmem:[%s1 + $0x544] sm:$0xf]
  %v366 = vld [vmem:[%s1 + $0x548] sm:$0xf]
  %v367 = vld [vmem:[%s1 + $0x54c] sm:$0xf]
  %v368 = vld [vmem:[%s1 + $0x550] sm:$0xf]
  %v369 = vld [vmem:[%s1 + $0x554] sm:$0xf]
  %v370 = vld [vmem:[%s1 + $0x558] sm:$0xf]
  %v371 = vld [vmem:[%s1 + $0x55c] sm:$0xf]
  %v372 = vld [vmem:[%s1 + $0x560] sm:$0xf]
  %v373 = vld [vmem:[%s1 + $0x564] sm:$0xf]
  %v374 = vld [vmem:[%s1 + $0x568] sm:$0xf]
  %v375 = vld [vmem:[%s1 + $0x56c] sm:$0xf]
  %v376 = vld [vmem:[%s1 + $0x570] sm:$0xf]
  %v377 = vld [vmem:[%s1 + $0x574] sm:$0xf]
  %v378 = vld [vmem:[%s1 + $0x578] sm:$0xf]
  %v379 = vld [vmem:[%s1 + $0x57c] sm:$0xf]
  %v380 = vld [vmem:[%s1 + $0x580] sm:$0xf]
  %v381 = vld [vmem:[%s1 + $0x584] sm:$0xf]
  %v382 = vld [vmem:[%s1 + $0x588] sm:$0xf]
  %v383 = vld [vmem:[%s1 + $0x58c] sm:$0xf]
  %v384 = vld [vmem:[%s1 + $0x590] sm:$0xf]
  %v385 = vld [vmem:[%s1 + $0x594] sm:$0xf]
  %v386 = vld [vmem:[%s1 + $0x598] sm:$0xf]
  %v387 = vld [vmem:[%s1 + $0x59c] sm:$0xf]
  %v388 = vld [vmem:[%s1 + $0x5a0] sm:$0xf]
  %v389 = vld [vmem:[%s1 + $0x5a4] sm:$0xf]
  %v390 = vld [vmem:[%s1 + $0x5a8] sm:$0xf]
  %v391 = vld [vmem:[%s1 + $0x5ac] sm:$0xf]
  %v392 = vld [vmem:[%s1 + $0x5b0] sm:$0xf]
  %v393 = vld [vmem:[%s1 + $0x5b4] sm:$0xf]
  %v394 = vld [vmem:[%s1 + $0x5b8] sm:$0xf]
  %v395 = vld [vmem:[%s1 + $0x5bc] sm:$0xf]
  %v396 = vld [vmem:[%s1 + $0x5c0] sm:$0xf]
  %v397 = vld [vmem:[%s1 + $0x5c4] sm:$0xf]
  %v398 = vld [vmem:[%s1 + $0x5c8] sm:$0xf]
  %v399 = vld [vmem:[%s1 + $0x5cc] sm:$0xf]
  %v400 = vld [vmem:[%s1 + $0x5d0] sm:$0xf]
  %v401 = vld [vmem:[%s1 + $0x5d4] sm:$0xf]
  %v402 = vld [vmem:[%s1 + $0x5d8] sm:$0xf]
  %v403 = vld [vmem:[%s1 + $0x5dc] sm:$0xf]
  %v404 = vld [vmem:[%s1 + $0x5e0] sm:$0xf]
  %v405 = vld [vmem:[%s1 + $0x5e4] sm:$0xf]
  %v406 = vld [vmem:[%s1 + $0x5e8] sm:$0xf]
  %v407 = vld [vmem:[%s1 + $0x5ec] sm:$0xf]
  %v408 = vld [vmem:[%s1 + $0x5f0] sm:$0xf]
  %v409 = vld [vmem:[%s1 + $0x5f4] sm:$0xf]
  %v410 = vld [vmem:[%s1 + $0x5f8] sm:$0xf]
  %v411 = vld [vmem:[%s1 + $0x5fc] sm:$0xf]
  %v412 = vld [vmem:[%s1 + $0x600] sm:$0xf]
  %v413 = vld [vmem:[%s1 + $0x604] sm:$0xf]
  %v414 = vld [vmem:[%s1 + $0x608] sm:$0xf]
  %v415 = vld [vmem:[%s1 + $0x60c] sm:$0xf]
  %v416 = vld [vmem:[%s1 + $0x610] sm:$0xf]
  %v417 = vld [vmem:[%s1 + $0x614] sm:$0xf]
  %v418 = vld [vmem:[%s1 + $0x618] sm:$0xf]
  %v419 = vld [vmem:[%s1 + $0x61c] sm:$0xf]
  %v420 = vld [vmem:[%s1 + $0x620] sm:$0xf]
  %v421 = vld [vmem:[%s1 + $0x624] sm:$0xf]
  %v422 = vld [vmem:[%s1 + $0x628] sm:$0xf]
  %v423 = vld [vmem:[%s1 + $0x62c] sm:$0xf]
  %v424 = vld [vmem:[%s1 + $0x630] sm:$0xf]
  %v425 = vld [vmem:[%s1 + $0x634] sm:$0xf]
  %v426 = vld [vmem:[%s1 + $0x638] sm:$0xf]
  %v427 = vld [vmem:[%s1 + $0x63c] sm:$0xf]
  %v428 = vld [vmem:[%s1 + $0x640] sm:$0xf]
  %v429 = vld [vmem:[%s1 + $0x644] sm:$0xf]
  %v430 = vld [vmem:[%s1 + $0x648] sm:$0xf]
  %v431 = vld [vmem:[%s1 + $0x64c] sm:$0xf]
  %v432 = vld [vmem:[%s1 + $0x650] sm:$0xf]
  %v433 = vld [vmem:[%s1 + $0x654] sm:$0xf]
  %v434 = vld [vmem:[%s1 + $0x658] sm:$0xf]
  %v435 = vld [vmem:[%s1 + $0x65c] sm:$0xf]
  %v436 = vld [vmem:[%s1 + $0x660] sm:$0xf]
  %v437 = vld [vmem:[%s1 + $0x664] sm:$0xf]
  %v438 = vld [vmem:[%s1 + $0x668] sm:$0xf]
  %v439 = vld [vmem:[%s1 + $0x66c] sm:$0xf]
  %v440 = vld [vmem:[%s1 + $0x670] sm:$0xf]
  %v441 = vld [vmem:[%s1 + $0x674] sm:$0xf]
  %v442 = vld [vmem:[%s1 + $0x678] sm:$0xf]
  %v443 = vld [vmem:[%s1 + $0x67c] sm:$0xf]
  %v444 = vld [vmem:[%s1 + $0x680] sm:$0xf]
  %v445 = vld [vmem:[%s1 + $0x684] sm:$0xf]
  %v446 = vld [vmem:[%s1 + $0x688] sm:$0xf]
  %v447 = vld [vmem:[%s1 + $0x68c] sm:$0xf]
  %v448 = vld [vmem:[%s1 + $0x690] sm:$0xf]
  %v449 = vld [vmem:[%s1 + $0x694] sm:$0xf]
  %v450 = vld [vmem:[%s1 + $0x698] sm:$0xf]
  %v451 = vld [vmem:[%s1 + $0x69c] sm:$0xf]
  %v452 = vld [vmem:[%s1 + $0x6a0] sm:$0xf]
  %v453 = vld [vmem:[%s1 + $0x6a4] sm:$0xf]
  %v454 = vld [vmem:[%s1 + $0x6a8] sm:$0xf]
  %v455 = vld [vmem:[%s1 + $0x6ac] sm:$0xf]
  %v456 = vld [vmem:[%s1 + $0x6b0] sm:$0xf]
  %v457 = vld [vmem:[%s1 + $0x6b4] sm:$0xf]
  %v458 = vld [vmem:[%s1 + $0x6b8] sm:$0xf]
  %v459 = vld [vmem:[%s1 + $0x6bc] sm:$0xf]
  %v460 = vld [vmem:[%s2] sm:$0x1]
  %v462 = vperm.slane %v460, 0
  %v478 = vunpack.c.l.b16 %v14
  %v479 = vunpack.c.h.b16 %v14
  %v480 = vunpack.c.l.b16 %v15
  %v481 = vunpack.c.h.b16 %v15
  %v482 = vunpack.c.l.b16 %v16
  %v483 = vunpack.c.h.b16 %v16
  %v484 = vunpack.c.l.b16 %v17
  %v485 = vunpack.c.h.b16 %v17
  %v486 = vunpack.c.l.b16 %v18
  %v487 = vunpack.c.h.b16 %v18
  %v488 = vunpack.c.l.b16 %v19
  %v489 = vunpack.c.h.b16 %v19
  %v490 = vunpack.c.l.b16 %v20
  %v491 = vunpack.c.h.b16 %v20
  %v492 = vunpack.c.l.b16 %v21
  %v493 = vunpack.c.h.b16 %v21
  %v494 = vunpack.c.l.b16 %v22
  %v495 = vunpack.c.h.b16 %v22
  %v496 = vunpack.c.l.b16 %v23
  %v497 = vunpack.c.h.b16 %v23
  %v498 = vunpack.c.l.b16 %v24
  %v499 = vunpack.c.h.b16 %v24
  %v500 = vunpack.c.l.b16 %v25
  %v501 = vunpack.c.h.b16 %v25
  %v502 = vunpack.c.l.b16 %v26
  %v503 = vunpack.c.h.b16 %v26
  %v504 = vunpack.c.l.b16 %v27
  %v505 = vpack.c.b16 %v478, %v478
  %v506 = vpack.c.b16 %v479, %v479
  %v507 = vpack.c.b16 %v480, %v480
  %v508 = vpack.c.b16 %v481, %v481
  %v509 = vpack.c.b16 %v482, %v482
  %v510 = vpack.c.b16 %v483, %v483
  %v511 = vpack.c.b16 %v484, %v484
  %v512 = vpack.c.b16 %v485, %v485
  %v513 = vpack.c.b16 %v486, %v486
  %v514 = vpack.c.b16 %v487, %v487
  %v515 = vpack.c.b16 %v488, %v488
  %v516 = vpack.c.b16 %v489, %v489
  %v517 = vpack.c.b16 %v490, %v490
  %v518 = vpack.c.b16 %v491, %v491
  %v519 = vpack.c.b16 %v492, %v492
  %v520 = vpack.c.b16 %v493, %v493
  %v521 = vpack.c.b16 %v494, %v494
  %v522 = vpack.c.b16 %v495, %v495
  %v523 = vpack.c.b16 %v496, %v496
  %v524 = vpack.c.b16 %v497, %v497
  %v525 = vpack.c.b16 %v498, %v498
  %v526 = vpack.c.b16 %v499, %v499
  %v527 = vpack.c.b16 %v500, %v500
  %v528 = vpack.c.b16 %v501, %v501
  %v529 = vpack.c.b16 %v502, %v502
  %v530 = vpack.c.b16 %v503, %v503
  %v531 = vpack.c.b16 %v504, %v504
  %v991 = vunpack.c.l.b16 %v28
  %v992 = vunpack.c.l.b16 %v29
  %v993 = vunpack.c.l.b16 %v30
  %v994 = vunpack.c.l.b16 %v31
  %v995 = vunpack.c.l.b16 %v32
  %v996 = vunpack.c.l.b16 %v33
  %v997 = vunpack.c.l.b16 %v34
  %v998 = vunpack.c.l.b16 %v35
  %v999 = vunpack.c.l.b16 %v36
  %v1000 = vunpack.c.l.b16 %v37
  %v1001 = vunpack.c.l.b16 %v38
  %v1002 = vunpack.c.l.b16 %v39
  %v1003 = vunpack.c.l.b16 %v40
  %v1004 = vunpack.c.l.b16 %v41
  %v1005 = vunpack.c.l.b16 %v42
  %v1006 = vunpack.c.l.b16 %v43
  %v1007 = vunpack.c.l.b16 %v44
  %v1008 = vunpack.c.l.b16 %v45
  %v1009 = vunpack.c.l.b16 %v46
  %v1010 = vunpack.c.l.b16 %v47
  %v1011 = vunpack.c.l.b16 %v48
  %v1012 = vunpack.c.l.b16 %v49
  %v1013 = vunpack.c.l.b16 %v50
  %v1014 = vunpack.c.l.b16 %v51
  %v1015 = vunpack.c.l.b16 %v52
  %v1016 = vunpack.c.l.b16 %v53
  %v1017 = vunpack.c.l.b16 %v54
  %v1018 = vunpack.c.l.b16 %v55
  %v1019 = vunpack.c.l.b16 %v56
  %v1020 = vunpack.c.l.b16 %v57
  %v1021 = vunpack.c.l.b16 %v58
  %v1022 = vunpack.c.l.b16 %v59
  %v1023 = vunpack.c.l.b16 %v60
  %v1024 = vunpack.c.l.b16 %v61
  %v1025 = vunpack.c.l.b16 %v62
  %v1026 = vunpack.c.l.b16 %v63
  %v1027 = vunpack.c.l.b16 %v64
  %v1028 = vunpack.c.l.b16 %v65
  %v1029 = vunpack.c.l.b16 %v66
  %v1030 = vunpack.c.l.b16 %v67
  %v1031 = vunpack.c.l.b16 %v68
  %v1032 = vunpack.c.l.b16 %v69
  %v1033 = vunpack.c.l.b16 %v70
  %v1034 = vunpack.c.l.b16 %v71
  %v1035 = vunpack.c.l.b16 %v72
  %v1036 = vunpack.c.l.b16 %v73
  %v1037 = vunpack.c.l.b16 %v74
  %v1038 = vunpack.c.l.b16 %v75
  %v1039 = vunpack.c.l.b16 %v76
  %v1040 = vunpack.c.l.b16 %v77
  %v1041 = vunpack.c.l.b16 %v78
  %v1042 = vunpack.c.l.b16 %v79
  %v1043 = vunpack.c.l.b16 %v80
  %v1044 = vunpack.c.l.b16 %v81
  %v1045 = vunpack.c.l.b16 %v82
  %v1046 = vunpack.c.l.b16 %v83
  %v1047 = vunpack.c.l.b16 %v84
  %v1048 = vunpack.c.l.b16 %v85
  %v1049 = vunpack.c.l.b16 %v86
  %v1050 = vunpack.c.l.b16 %v87
  %v1051 = vunpack.c.l.b16 %v88
  %v1052 = vunpack.c.l.b16 %v89
  %v1053 = vunpack.c.l.b16 %v90
  %v1054 = vunpack.c.l.b16 %v91
  %v1055 = vunpack.c.l.b16 %v92
  %v1056 = vunpack.c.l.b16 %v93
  %v1057 = vunpack.c.l.b16 %v94
  %v1058 = vunpack.c.l.b16 %v95
  %v1059 = vunpack.c.l.b16 %v96
  %v1060 = vunpack.c.l.b16 %v97
  %v1061 = vunpack.c.l.b16 %v98
  %v1062 = vunpack.c.l.b16 %v99
  %v1063 = vunpack.c.l.b16 %v100
  %v1064 = vunpack.c.l.b16 %v101
  %v1065 = vunpack.c.l.b16 %v102
  %v1066 = vunpack.c.l.b16 %v103
  %v1067 = vunpack.c.l.b16 %v104
  %v1068 = vunpack.c.l.b16 %v105
  %v1069 = vunpack.c.l.b16 %v106
  %v1070 = vunpack.c.l.b16 %v107
  %v1071 = vunpack.c.l.b16 %v108
  %v1072 = vunpack.c.l.b16 %v109
  %v1073 = vunpack.c.l.b16 %v110
  %v1074 = vunpack.c.l.b16 %v111
  %v1075 = vunpack.c.l.b16 %v112
  %v1076 = vunpack.c.l.b16 %v113
  %v1077 = vunpack.c.l.b16 %v114
  %v1078 = vunpack.c.l.b16 %v115
  %v1079 = vunpack.c.l.b16 %v116
  %v1080 = vunpack.c.l.b16 %v117
  %v1081 = vunpack.c.l.b16 %v118
  %v1082 = vunpack.c.l.b16 %v119
  %v1083 = vunpack.c.l.b16 %v120
  %v1084 = vunpack.c.l.b16 %v121
  %v1085 = vunpack.c.l.b16 %v122
  %v1086 = vunpack.c.l.b16 %v123
  %v1087 = vunpack.c.l.b16 %v124
  %v1088 = vunpack.c.l.b16 %v125
  %v1089 = vunpack.c.l.b16 %v126
  %v1090 = vunpack.c.l.b16 %v127
  %v1091 = vunpack.c.l.b16 %v128
  %v1092 = vunpack.c.l.b16 %v129
  %v1093 = vunpack.c.l.b16 %v130
  %v1094 = vunpack.c.l.b16 %v131
  %v1095 = vunpack.c.l.b16 %v132
  %v1096 = vunpack.c.l.b16 %v133
  %v1097 = vunpack.c.l.b16 %v134
  %v1098 = vunpack.c.l.b16 %v135
  %v1099 = vunpack.c.l.b16 %v136
  %v1100 = vunpack.c.l.b16 %v137
  %v1101 = vunpack.c.l.b16 %v138
  %v1102 = vunpack.c.l.b16 %v139
  %v1103 = vunpack.c.l.b16 %v140
  %v1104 = vunpack.c.l.b16 %v141
  %v1105 = vunpack.c.l.b16 %v142
  %v1106 = vunpack.c.l.b16 %v143
  %v1107 = vunpack.c.l.b16 %v144
  %v1108 = vunpack.c.l.b16 %v145
  %v1109 = vunpack.c.l.b16 %v146
  %v1110 = vunpack.c.l.b16 %v147
  %v1111 = vunpack.c.l.b16 %v148
  %v1112 = vunpack.c.l.b16 %v149
  %v1113 = vunpack.c.l.b16 %v150
  %v1114 = vunpack.c.l.b16 %v151
  %v1115 = vunpack.c.l.b16 %v152
  %v1116 = vunpack.c.l.b16 %v153
  %v1117 = vunpack.c.l.b16 %v154
  %v1118 = vunpack.c.l.b16 %v155
  %v1119 = vunpack.c.l.b16 %v156
  %v1120 = vunpack.c.l.b16 %v157
  %v1121 = vunpack.c.l.b16 %v158
  %v1122 = vunpack.c.l.b16 %v159
  %v1123 = vunpack.c.l.b16 %v160
  %v1124 = vunpack.c.l.b16 %v161
  %v1125 = vunpack.c.l.b16 %v162
  %v1126 = vunpack.c.l.b16 %v163
  %v1127 = vunpack.c.l.b16 %v164
  %v1128 = vunpack.c.l.b16 %v165
  %v1129 = vunpack.c.l.b16 %v166
  %v1130 = vunpack.c.l.b16 %v167
  %v1131 = vunpack.c.l.b16 %v168
  %v1132 = vunpack.c.l.b16 %v169
  %v1133 = vunpack.c.l.b16 %v170
  %v1134 = vunpack.c.l.b16 %v171
  %v1135 = vunpack.c.l.b16 %v172
  %v1136 = vunpack.c.l.b16 %v173
  %v1137 = vunpack.c.l.b16 %v174
  %v1138 = vunpack.c.l.b16 %v175
  %v1139 = vunpack.c.l.b16 %v176
  %v1140 = vunpack.c.l.b16 %v177
  %v1141 = vunpack.c.l.b16 %v178
  %v1142 = vunpack.c.l.b16 %v179
  %v1143 = vunpack.c.l.b16 %v180
  %v1144 = vunpack.c.l.b16 %v181
  %v1145 = vunpack.c.l.b16 %v182
  %v1146 = vunpack.c.l.b16 %v183
  %v1147 = vunpack.c.l.b16 %v184
  %v1148 = vunpack.c.l.b16 %v185
  %v1149 = vunpack.c.l.b16 %v186
  %v1150 = vunpack.c.l.b16 %v187
  %v1151 = vunpack.c.l.b16 %v188
  %v1152 = vunpack.c.l.b16 %v189
  %v1153 = vunpack.c.l.b16 %v190
  %v1154 = vunpack.c.l.b16 %v191
  %v1155 = vunpack.c.l.b16 %v192
  %v1156 = vunpack.c.l.b16 %v193
  %v1157 = vunpack.c.l.b16 %v194
  %v1158 = vunpack.c.l.b16 %v195
  %v1159 = vunpack.c.l.b16 %v196
  %v1160 = vunpack.c.l.b16 %v197
  %v1161 = vunpack.c.l.b16 %v198
  %v1162 = vunpack.c.l.b16 %v199
  %v1163 = vunpack.c.l.b16 %v200
  %v1164 = vunpack.c.l.b16 %v201
  %v1165 = vunpack.c.l.b16 %v202
  %v1166 = vunpack.c.l.b16 %v203
  %v1167 = vunpack.c.l.b16 %v204
  %v1168 = vunpack.c.l.b16 %v205
  %v1169 = vunpack.c.l.b16 %v206
  %v1170 = vunpack.c.l.b16 %v207
  %v1171 = vunpack.c.l.b16 %v208
  %v1172 = vunpack.c.l.b16 %v209
  %v1173 = vunpack.c.l.b16 %v210
  %v1174 = vunpack.c.l.b16 %v211
  %v1175 = vunpack.c.l.b16 %v212
  %v1176 = vunpack.c.l.b16 %v213
  %v1177 = vunpack.c.l.b16 %v214
  %v1178 = vunpack.c.l.b16 %v215
  %v1179 = vunpack.c.l.b16 %v216
  %v1180 = vunpack.c.l.b16 %v217
  %v1181 = vunpack.c.l.b16 %v218
  %v1182 = vunpack.c.l.b16 %v219
  %v1183 = vunpack.c.l.b16 %v220
  %v1184 = vunpack.c.l.b16 %v221
  %v1185 = vunpack.c.l.b16 %v222
  %v1186 = vunpack.c.l.b16 %v223
  %v1187 = vunpack.c.l.b16 %v224
  %v1188 = vunpack.c.l.b16 %v225
  %v1189 = vunpack.c.l.b16 %v226
  %v1190 = vunpack.c.l.b16 %v227
  %v1191 = vunpack.c.l.b16 %v228
  %v1192 = vunpack.c.l.b16 %v229
  %v1193 = vunpack.c.l.b16 %v230
  %v1194 = vunpack.c.l.b16 %v231
  %v1195 = vunpack.c.l.b16 %v232
  %v1196 = vunpack.c.l.b16 %v233
  %v1197 = vunpack.c.l.b16 %v234
  %v1198 = vunpack.c.l.b16 %v235
  %v1199 = vunpack.c.l.b16 %v236
  %v1200 = vunpack.c.l.b16 %v237
  %v1201 = vunpack.c.l.b16 %v238
  %v1202 = vunpack.c.l.b16 %v239
  %v1203 = vunpack.c.l.b16 %v240
  %v1204 = vunpack.c.l.b16 %v241
  %v1205 = vunpack.c.l.b16 %v242
  %v1206 = vunpack.c.l.b16 %v243
  %v1207 = vunpack.c.l.b16 %v244
  %v1208 = vunpack.c.l.b16 %v245
  %v1209 = vunpack.c.l.b16 %v246
  %v1210 = vunpack.c.l.b16 %v247
  %v1211 = vunpack.c.l.b16 %v248
  %v1212 = vunpack.c.l.b16 %v249
  %v1213 = vunpack.c.l.b16 %v250
  %v1214 = vunpack.c.l.b16 %v251
  %v1215 = vunpack.c.l.b16 %v252
  %v1216 = vunpack.c.l.b16 %v253
  %v1217 = vunpack.c.l.b16 %v254
  %v1218 = vunpack.c.l.b16 %v255
  %v1219 = vunpack.c.l.b16 %v256
  %v1220 = vunpack.c.l.b16 %v257
  %v1221 = vunpack.c.l.b16 %v258
  %v1222 = vunpack.c.l.b16 %v259
  %v1223 = vunpack.c.l.b16 %v260
  %v1224 = vunpack.c.l.b16 %v261
  %v1225 = vunpack.c.l.b16 %v262
  %v1226 = vunpack.c.l.b16 %v263
  %v1227 = vunpack.c.l.b16 %v264
  %v1228 = vunpack.c.l.b16 %v265
  %v1229 = vunpack.c.l.b16 %v266
  %v1230 = vunpack.c.l.b16 %v267
  %v1231 = vunpack.c.l.b16 %v268
  %v1232 = vunpack.c.l.b16 %v269
  %v1233 = vunpack.c.l.b16 %v270
  %v1234 = vunpack.c.l.b16 %v271
  %v1235 = vunpack.c.l.b16 %v272
  %v1236 = vunpack.c.l.b16 %v273
  %v1237 = vunpack.c.l.b16 %v274
  %v1238 = vunpack.c.l.b16 %v275
  %v1239 = vunpack.c.l.b16 %v276
  %v1240 = vunpack.c.l.b16 %v277
  %v1241 = vunpack.c.l.b16 %v278
  %v1242 = vunpack.c.l.b16 %v279
  %v1243 = vunpack.c.l.b16 %v280
  %v1244 = vunpack.c.l.b16 %v281
  %v1245 = vunpack.c.l.b16 %v282
  %v1246 = vunpack.c.l.b16 %v283
  %v1247 = vunpack.c.l.b16 %v284
  %v1248 = vunpack.c.l.b16 %v285
  %v1249 = vunpack.c.l.b16 %v286
  %v1250 = vunpack.c.l.b16 %v287
  %v1251 = vunpack.c.l.b16 %v288
  %v1252 = vunpack.c.l.b16 %v289
  %v1253 = vunpack.c.l.b16 %v290
  %v1254 = vunpack.c.l.b16 %v291
  %v1255 = vunpack.c.l.b16 %v292
  %v1256 = vunpack.c.l.b16 %v293
  %v1257 = vunpack.c.l.b16 %v294
  %v1258 = vunpack.c.l.b16 %v295
  %v1259 = vunpack.c.l.b16 %v296
  %v1260 = vunpack.c.l.b16 %v297
  %v1261 = vunpack.c.l.b16 %v298
  %v1262 = vunpack.c.l.b16 %v299
  %v1263 = vunpack.c.l.b16 %v300
  %v1264 = vunpack.c.l.b16 %v301
  %v1265 = vunpack.c.l.b16 %v302
  %v1266 = vunpack.c.l.b16 %v303
  %v1267 = vunpack.c.l.b16 %v304
  %v1268 = vunpack.c.l.b16 %v305
  %v1269 = vunpack.c.l.b16 %v306
  %v1270 = vunpack.c.l.b16 %v307
  %v1271 = vunpack.c.l.b16 %v308
  %v1272 = vunpack.c.l.b16 %v309
  %v1273 = vunpack.c.l.b16 %v310
  %v1274 = vunpack.c.l.b16 %v311
  %v1275 = vunpack.c.l.b16 %v312
  %v1276 = vunpack.c.l.b16 %v313
  %v1277 = vunpack.c.l.b16 %v314
  %v1278 = vunpack.c.l.b16 %v315
  %v1279 = vunpack.c.l.b16 %v316
  %v1280 = vunpack.c.l.b16 %v317
  %v1281 = vunpack.c.l.b16 %v318
  %v1282 = vunpack.c.l.b16 %v319
  %v1283 = vunpack.c.l.b16 %v320
  %v1284 = vunpack.c.l.b16 %v321
  %v1285 = vunpack.c.l.b16 %v322
  %v1286 = vunpack.c.l.b16 %v323
  %v1287 = vunpack.c.l.b16 %v324
  %v1288 = vunpack.c.l.b16 %v325
  %v1289 = vunpack.c.l.b16 %v326
  %v1290 = vunpack.c.l.b16 %v327
  %v1291 = vunpack.c.l.b16 %v328
  %v1292 = vunpack.c.l.b16 %v329
  %v1293 = vunpack.c.l.b16 %v330
  %v1294 = vunpack.c.l.b16 %v331
  %v1295 = vunpack.c.l.b16 %v332
  %v1296 = vunpack.c.l.b16 %v333
  %v1297 = vunpack.c.l.b16 %v334
  %v1298 = vunpack.c.l.b16 %v335
  %v1299 = vunpack.c.l.b16 %v336
  %v1300 = vunpack.c.l.b16 %v337
  %v1301 = vunpack.c.l.b16 %v338
  %v1302 = vunpack.c.l.b16 %v339
  %v1303 = vunpack.c.l.b16 %v340
  %v1304 = vunpack.c.l.b16 %v341
  %v1305 = vunpack.c.l.b16 %v342
  %v1306 = vunpack.c.l.b16 %v343
  %v1307 = vunpack.c.l.b16 %v344
  %v1308 = vunpack.c.l.b16 %v345
  %v1309 = vunpack.c.l.b16 %v346
  %v1310 = vunpack.c.l.b16 %v347
  %v1311 = vunpack.c.l.b16 %v348
  %v1312 = vunpack.c.l.b16 %v349
  %v1313 = vunpack.c.l.b16 %v350
  %v1314 = vunpack.c.l.b16 %v351
  %v1315 = vunpack.c.l.b16 %v352
  %v1316 = vunpack.c.l.b16 %v353
  %v1317 = vunpack.c.l.b16 %v354
  %v1318 = vunpack.c.l.b16 %v355
  %v1319 = vunpack.c.l.b16 %v356
  %v1320 = vunpack.c.l.b16 %v357
  %v1321 = vunpack.c.l.b16 %v358
  %v1322 = vunpack.c.l.b16 %v359
  %v1323 = vunpack.c.l.b16 %v360
  %v1324 = vunpack.c.l.b16 %v361
  %v1325 = vunpack.c.l.b16 %v362
  %v1326 = vunpack.c.l.b16 %v363
  %v1327 = vunpack.c.l.b16 %v364
  %v1328 = vunpack.c.l.b16 %v365
  %v1329 = vunpack.c.l.b16 %v366
  %v1330 = vunpack.c.l.b16 %v367
  %v1331 = vunpack.c.l.b16 %v368
  %v1332 = vunpack.c.l.b16 %v369
  %v1333 = vunpack.c.l.b16 %v370
  %v1334 = vunpack.c.l.b16 %v371
  %v1335 = vunpack.c.l.b16 %v372
  %v1336 = vunpack.c.l.b16 %v373
  %v1337 = vunpack.c.l.b16 %v374
  %v1338 = vunpack.c.l.b16 %v375
  %v1339 = vunpack.c.l.b16 %v376
  %v1340 = vunpack.c.l.b16 %v377
  %v1341 = vunpack.c.l.b16 %v378
  %v1342 = vunpack.c.l.b16 %v379
  %v1343 = vunpack.c.l.b16 %v380
  %v1344 = vunpack.c.l.b16 %v381
  %v1345 = vunpack.c.l.b16 %v382
  %v1346 = vunpack.c.l.b16 %v383
  %v1347 = vunpack.c.l.b16 %v384
  %v1348 = vunpack.c.l.b16 %v385
  %v1349 = vunpack.c.l.b16 %v386
  %v1350 = vunpack.c.l.b16 %v387
  %v1351 = vunpack.c.l.b16 %v388
  %v1352 = vunpack.c.l.b16 %v389
  %v1353 = vunpack.c.l.b16 %v390
  %v1354 = vunpack.c.l.b16 %v391
  %v1355 = vunpack.c.l.b16 %v392
  %v1356 = vunpack.c.l.b16 %v393
  %v1357 = vunpack.c.l.b16 %v394
  %v1358 = vunpack.c.l.b16 %v395
  %v1359 = vunpack.c.l.b16 %v396
  %v1360 = vunpack.c.l.b16 %v397
  %v1361 = vunpack.c.l.b16 %v398
  %v1362 = vunpack.c.l.b16 %v399
  %v1363 = vunpack.c.l.b16 %v400
  %v1364 = vunpack.c.l.b16 %v401
  %v1365 = vunpack.c.l.b16 %v402
  %v1366 = vunpack.c.l.b16 %v403
  %v1367 = vunpack.c.l.b16 %v404
  %v1368 = vunpack.c.l.b16 %v405
  %v1369 = vunpack.c.l.b16 %v406
  %v1370 = vunpack.c.l.b16 %v407
  %v1371 = vunpack.c.l.b16 %v408
  %v1372 = vunpack.c.l.b16 %v409
  %v1373 = vunpack.c.l.b16 %v410
  %v1374 = vunpack.c.l.b16 %v411
  %v1375 = vunpack.c.l.b16 %v412
  %v1376 = vunpack.c.l.b16 %v413
  %v1377 = vunpack.c.l.b16 %v414
  %v1378 = vunpack.c.l.b16 %v415
  %v1379 = vunpack.c.l.b16 %v416
  %v1380 = vunpack.c.l.b16 %v417
  %v1381 = vunpack.c.l.b16 %v418
  %v1382 = vunpack.c.l.b16 %v419
  %v1383 = vunpack.c.l.b16 %v420
  %v1384 = vunpack.c.l.b16 %v421
  %v1385 = vunpack.c.l.b16 %v422
  %v1386 = vunpack.c.l.b16 %v423
  %v1387 = vunpack.c.l.b16 %v424
  %v1388 = vunpack.c.l.b16 %v425
  %v1389 = vunpack.c.l.b16 %v426
  %v1390 = vunpack.c.l.b16 %v427
  %v1391 = vunpack.c.l.b16 %v428
  %v1392 = vunpack.c.l.b16 %v429
  %v1393 = vunpack.c.l.b16 %v430
  %v1394 = vunpack.c.l.b16 %v431
  %v1395 = vunpack.c.l.b16 %v432
  %v1396 = vunpack.c.l.b16 %v433
  %v1397 = vunpack.c.l.b16 %v434
  %v1398 = vunpack.c.l.b16 %v435
  %v1399 = vunpack.c.l.b16 %v436
  %v1400 = vunpack.c.l.b16 %v437
  %v1401 = vunpack.c.l.b16 %v438
  %v1402 = vunpack.c.l.b16 %v439
  %v1403 = vunpack.c.l.b16 %v440
  %v1404 = vunpack.c.l.b16 %v441
  %v1405 = vunpack.c.l.b16 %v442
  %v1406 = vunpack.c.l.b16 %v443
  %v1407 = vunpack.c.l.b16 %v444
  %v1408 = vunpack.c.l.b16 %v445
  %v1409 = vunpack.c.l.b16 %v446
  %v1410 = vunpack.c.l.b16 %v447
  %v1411 = vunpack.c.l.b16 %v448
  %v1412 = vunpack.c.l.b16 %v449
  %v1413 = vunpack.c.l.b16 %v450
  %v1414 = vunpack.c.l.b16 %v451
  %v1415 = vunpack.c.l.b16 %v452
  %v1416 = vunpack.c.l.b16 %v453
  %v1417 = vunpack.c.l.b16 %v454
  %v1418 = vunpack.c.l.b16 %v455
  %v1419 = vunpack.c.l.b16 %v456
  %v1420 = vunpack.c.l.b16 %v457
  %v1421 = vunpack.c.l.b16 %v458
  %v1422 = vunpack.c.l.b16 %v459
  %v1423 = vpack.c.b16 %v992, %v991
  %v1424 = vpack.c.b16 %v994, %v993
  %v1425 = vpack.c.b16 %v996, %v995
  %v1426 = vpack.c.b16 %v998, %v997
  %v1427 = vpack.c.b16 %v1000, %v999
  %v1428 = vpack.c.b16 %v1002, %v1001
  %v1429 = vpack.c.b16 %v1004, %v1003
  %v1430 = vpack.c.b16 %v1006, %v1005
  %v1431 = vpack.c.b16 %v1008, %v1007
  %v1432 = vpack.c.b16 %v1010, %v1009
  %v1433 = vpack.c.b16 %v1012, %v1011
  %v1434 = vpack.c.b16 %v1014, %v1013
  %v1435 = vpack.c.b16 %v1016, %v1015
  %v1436 = vpack.c.b16 %v1018, %v1017
  %v1437 = vpack.c.b16 %v1020, %v1019
  %v1438 = vpack.c.b16 %v1022, %v1021
  %v1439 = vpack.c.b16 %v1024, %v1023
  %v1440 = vpack.c.b16 %v1026, %v1025
  %v1441 = vpack.c.b16 %v1028, %v1027
  %v1442 = vpack.c.b16 %v1030, %v1029
  %v1443 = vpack.c.b16 %v1032, %v1031
  %v1444 = vpack.c.b16 %v1034, %v1033
  %v1445 = vpack.c.b16 %v1036, %v1035
  %v1446 = vpack.c.b16 %v1038, %v1037
  %v1447 = vpack.c.b16 %v1040, %v1039
  %v1448 = vpack.c.b16 %v1042, %v1041
  %v1449 = vpack.c.b16 %v1044, %v1043
  %v1450 = vpack.c.b16 %v1046, %v1045
  %v1451 = vpack.c.b16 %v1048, %v1047
  %v1452 = vpack.c.b16 %v1050, %v1049
  %v1453 = vpack.c.b16 %v1052, %v1051
  %v1454 = vpack.c.b16 %v1054, %v1053
  %v1455 = vpack.c.b16 %v1056, %v1055
  %v1456 = vpack.c.b16 %v1058, %v1057
  %v1457 = vpack.c.b16 %v1060, %v1059
  %v1458 = vpack.c.b16 %v1062, %v1061
  %v1459 = vpack.c.b16 %v1064, %v1063
  %v1460 = vpack.c.b16 %v1066, %v1065
  %v1461 = vpack.c.b16 %v1068, %v1067
  %v1462 = vpack.c.b16 %v1070, %v1069
  %v1463 = vpack.c.b16 %v1072, %v1071
  %v1464 = vpack.c.b16 %v1074, %v1073
  %v1465 = vpack.c.b16 %v1076, %v1075
  %v1466 = vpack.c.b16 %v1078, %v1077
  %v1467 = vpack.c.b16 %v1080, %v1079
  %v1468 = vpack.c.b16 %v1082, %v1081
  %v1469 = vpack.c.b16 %v1084, %v1083
  %v1470 = vpack.c.b16 %v1086, %v1085
  %v1471 = vpack.c.b16 %v1088, %v1087
  %v1472 = vpack.c.b16 %v1090, %v1089
  %v1473 = vpack.c.b16 %v1092, %v1091
  %v1474 = vpack.c.b16 %v1094, %v1093
  %v1475 = vpack.c.b16 %v1096, %v1095
  %v1476 = vpack.c.b16 %v1098, %v1097
  %v1477 = vpack.c.b16 %v1100, %v1099
  %v1478 = vpack.c.b16 %v1102, %v1101
  %v1479 = vpack.c.b16 %v1104, %v1103
  %v1480 = vpack.c.b16 %v1106, %v1105
  %v1481 = vpack.c.b16 %v1108, %v1107
  %v1482 = vpack.c.b16 %v1110, %v1109
  %v1483 = vpack.c.b16 %v1112, %v1111
  %v1484 = vpack.c.b16 %v1114, %v1113
  %v1485 = vpack.c.b16 %v1116, %v1115
  %v1486 = vpack.c.b16 %v1118, %v1117
  %v1487 = vpack.c.b16 %v1120, %v1119
  %v1488 = vpack.c.b16 %v1122, %v1121
  %v1489 = vpack.c.b16 %v1124, %v1123
  %v1490 = vpack.c.b16 %v1126, %v1125
  %v1491 = vpack.c.b16 %v1128, %v1127
  %v1492 = vpack.c.b16 %v1130, %v1129
  %v1493 = vpack.c.b16 %v1132, %v1131
  %v1494 = vpack.c.b16 %v1134, %v1133
  %v1495 = vpack.c.b16 %v1136, %v1135
  %v1496 = vpack.c.b16 %v1138, %v1137
  %v1497 = vpack.c.b16 %v1140, %v1139
  %v1498 = vpack.c.b16 %v1142, %v1141
  %v1499 = vpack.c.b16 %v1144, %v1143
  %v1500 = vpack.c.b16 %v1146, %v1145
  %v1501 = vpack.c.b16 %v1148, %v1147
  %v1502 = vpack.c.b16 %v1150, %v1149
  %v1503 = vpack.c.b16 %v1152, %v1151
  %v1504 = vpack.c.b16 %v1154, %v1153
  %v1505 = vpack.c.b16 %v1156, %v1155
  %v1506 = vpack.c.b16 %v1158, %v1157
  %v1507 = vpack.c.b16 %v1160, %v1159
  %v1508 = vpack.c.b16 %v1162, %v1161
  %v1509 = vpack.c.b16 %v1164, %v1163
  %v1510 = vpack.c.b16 %v1166, %v1165
  %v1511 = vpack.c.b16 %v1168, %v1167
  %v1512 = vpack.c.b16 %v1170, %v1169
  %v1513 = vpack.c.b16 %v1172, %v1171
  %v1514 = vpack.c.b16 %v1174, %v1173
  %v1515 = vpack.c.b16 %v1176, %v1175
  %v1516 = vpack.c.b16 %v1178, %v1177
  %v1517 = vpack.c.b16 %v1180, %v1179
  %v1518 = vpack.c.b16 %v1182, %v1181
  %v1519 = vpack.c.b16 %v1184, %v1183
  %v1520 = vpack.c.b16 %v1186, %v1185
  %v1521 = vpack.c.b16 %v1188, %v1187
  %v1522 = vpack.c.b16 %v1190, %v1189
  %v1523 = vpack.c.b16 %v1192, %v1191
  %v1524 = vpack.c.b16 %v1194, %v1193
  %v1525 = vpack.c.b16 %v1196, %v1195
  %v1526 = vpack.c.b16 %v1198, %v1197
  %v1527 = vpack.c.b16 %v1200, %v1199
  %v1528 = vpack.c.b16 %v1202, %v1201
  %v1529 = vpack.c.b16 %v1204, %v1203
  %v1530 = vpack.c.b16 %v1206, %v1205
  %v1531 = vpack.c.b16 %v1208, %v1207
  %v1532 = vpack.c.b16 %v1210, %v1209
  %v1533 = vpack.c.b16 %v1212, %v1211
  %v1534 = vpack.c.b16 %v1214, %v1213
  %v1535 = vpack.c.b16 %v1216, %v1215
  %v1536 = vpack.c.b16 %v1218, %v1217
  %v1537 = vpack.c.b16 %v1220, %v1219
  %v1538 = vpack.c.b16 %v1222, %v1221
  %v1539 = vpack.c.b16 %v1224, %v1223
  %v1540 = vpack.c.b16 %v1226, %v1225
  %v1541 = vpack.c.b16 %v1228, %v1227
  %v1542 = vpack.c.b16 %v1230, %v1229
  %v1543 = vpack.c.b16 %v1232, %v1231
  %v1544 = vpack.c.b16 %v1234, %v1233
  %v1545 = vpack.c.b16 %v1236, %v1235
  %v1546 = vpack.c.b16 %v1238, %v1237
  %v1547 = vpack.c.b16 %v1240, %v1239
  %v1548 = vpack.c.b16 %v1242, %v1241
  %v1549 = vpack.c.b16 %v1244, %v1243
  %v1550 = vpack.c.b16 %v1246, %v1245
  %v1551 = vpack.c.b16 %v1248, %v1247
  %v1552 = vpack.c.b16 %v1250, %v1249
  %v1553 = vpack.c.b16 %v1252, %v1251
  %v1554 = vpack.c.b16 %v1254, %v1253
  %v1555 = vpack.c.b16 %v1256, %v1255
  %v1556 = vpack.c.b16 %v1258, %v1257
  %v1557 = vpack.c.b16 %v1260, %v1259
  %v1558 = vpack.c.b16 %v1262, %v1261
  %v1559 = vpack.c.b16 %v1264, %v1263
  %v1560 = vpack.c.b16 %v1266, %v1265
  %v1561 = vpack.c.b16 %v1268, %v1267
  %v1562 = vpack.c.b16 %v1270, %v1269
  %v1563 = vpack.c.b16 %v1272, %v1271
  %v1564 = vpack.c.b16 %v1274, %v1273
  %v1565 = vpack.c.b16 %v1276, %v1275
  %v1566 = vpack.c.b16 %v1278, %v1277
  %v1567 = vpack.c.b16 %v1280, %v1279
  %v1568 = vpack.c.b16 %v1282, %v1281
  %v1569 = vpack.c.b16 %v1284, %v1283
  %v1570 = vpack.c.b16 %v1286, %v1285
  %v1571 = vpack.c.b16 %v1288, %v1287
  %v1572 = vpack.c.b16 %v1290, %v1289
  %v1573 = vpack.c.b16 %v1292, %v1291
  %v1574 = vpack.c.b16 %v1294, %v1293
  %v1575 = vpack.c.b16 %v1296, %v1295
  %v1576 = vpack.c.b16 %v1298, %v1297
  %v1577 = vpack.c.b16 %v1300, %v1299
  %v1578 = vpack.c.b16 %v1302, %v1301
  %v1579 = vpack.c.b16 %v1304, %v1303
  %v1580 = vpack.c.b16 %v1306, %v1305
  %v1581 = vpack.c.b16 %v1308, %v1307
  %v1582 = vpack.c.b16 %v1310, %v1309
  %v1583 = vpack.c.b16 %v1312, %v1311
  %v1584 = vpack.c.b16 %v1314, %v1313
  %v1585 = vpack.c.b16 %v1316, %v1315
  %v1586 = vpack.c.b16 %v1318, %v1317
  %v1587 = vpack.c.b16 %v1320, %v1319
  %v1588 = vpack.c.b16 %v1322, %v1321
  %v1589 = vpack.c.b16 %v1324, %v1323
  %v1590 = vpack.c.b16 %v1326, %v1325
  %v1591 = vpack.c.b16 %v1328, %v1327
  %v1592 = vpack.c.b16 %v1330, %v1329
  %v1593 = vpack.c.b16 %v1332, %v1331
  %v1594 = vpack.c.b16 %v1334, %v1333
  %v1595 = vpack.c.b16 %v1336, %v1335
  %v1596 = vpack.c.b16 %v1338, %v1337
  %v1597 = vpack.c.b16 %v1340, %v1339
  %v1598 = vpack.c.b16 %v1342, %v1341
  %v1599 = vpack.c.b16 %v1344, %v1343
  %v1600 = vpack.c.b16 %v1346, %v1345
  %v1601 = vpack.c.b16 %v1348, %v1347
  %v1602 = vpack.c.b16 %v1350, %v1349
  %v1603 = vpack.c.b16 %v1352, %v1351
  %v1604 = vpack.c.b16 %v1354, %v1353
  %v1605 = vpack.c.b16 %v1356, %v1355
  %v1606 = vpack.c.b16 %v1358, %v1357
  %v1607 = vpack.c.b16 %v1360, %v1359
  %v1608 = vpack.c.b16 %v1362, %v1361
  %v1609 = vpack.c.b16 %v1364, %v1363
  %v1610 = vpack.c.b16 %v1366, %v1365
  %v1611 = vpack.c.b16 %v1368, %v1367
  %v1612 = vpack.c.b16 %v1370, %v1369
  %v1613 = vpack.c.b16 %v1372, %v1371
  %v1614 = vpack.c.b16 %v1374, %v1373
  %v1615 = vpack.c.b16 %v1376, %v1375
  %v1616 = vpack.c.b16 %v1378, %v1377
  %v1617 = vpack.c.b16 %v1380, %v1379
  %v1618 = vpack.c.b16 %v1382, %v1381
  %v1619 = vpack.c.b16 %v1384, %v1383
  %v1620 = vpack.c.b16 %v1386, %v1385
  %v1621 = vpack.c.b16 %v1388, %v1387
  %v1622 = vpack.c.b16 %v1390, %v1389
  %v1623 = vpack.c.b16 %v1392, %v1391
  %v1624 = vpack.c.b16 %v1394, %v1393
  %v1625 = vpack.c.b16 %v1396, %v1395
  %v1626 = vpack.c.b16 %v1398, %v1397
  %v1627 = vpack.c.b16 %v1400, %v1399
  %v1628 = vpack.c.b16 %v1402, %v1401
  %v1629 = vpack.c.b16 %v1404, %v1403
  %v1630 = vpack.c.b16 %v1406, %v1405
  %v1631 = vpack.c.b16 %v1408, %v1407
  %v1632 = vpack.c.b16 %v1410, %v1409
  %v1633 = vpack.c.b16 %v1412, %v1411
  %v1634 = vpack.c.b16 %v1414, %v1413
  %v1635 = vpack.c.b16 %v1416, %v1415
  %v1636 = vpack.c.b16 %v1418, %v1417
  %v1637 = vpack.c.b16 %v1420, %v1419
  %v1638 = vpack.c.b16 %v1422, %v1421
  %1855 = vmatpush.bf16.msra.mxu0 %v1430
  %1856 = vmatpush.bf16.msra.mxu0 %v1429
  %1857 = vmatpush.bf16.msra.mxu0 %v1428
  %1858 = vmatpush.bf16.msra.mxu0 %v1427
  %1859 = vmatpush.bf16.msra.mxu0 %v1426
  %1860 = vmatpush.bf16.msra.mxu0 %v1425
  %1861 = vmatpush.bf16.msra.mxu0 %v1424
  %1862 = vmatpush.bf16.msra.mxu0 %v1423
  %1863 = vmatmul.bf16.gmra.mxu0 %v505
  %v1864 = vpop.f32.mrf.mxu0
  %v1865 = vadd.f32 %v462, %v1864
  %v1866 = vpop.f32.mrf.mxu0
  %1867 = vdwg.mxu0
  %1868 = vmatpush.bf16.msra.mxu0 %v1438
  %1869 = vmatpush.bf16.msra.mxu0 %v1437
  %1870 = vmatpush.bf16.msra.mxu0 %v1436
  %1871 = vmatpush.bf16.msra.mxu0 %v1435
  %1872 = vmatpush.bf16.msra.mxu0 %v1434
  %1873 = vmatpush.bf16.msra.mxu0 %v1433
  %1874 = vmatpush.bf16.msra.mxu0 %v1432
  %1875 = vmatpush.bf16.msra.mxu0 %v1431
  %1876 = vmatmul.bf16.gmra.mxu0 %v506
  %v1877 = vpop.f32.mrf.mxu0
  %v1878 = vadd.f32 %v1865, %v1877
  %v1879 = vpop.f32.mrf.mxu0
  %1880 = vdwg.mxu0
  %1881 = vmatpush.bf16.msra.mxu0 %v1446
  %1882 = vmatpush.bf16.msra.mxu0 %v1445
  %1883 = vmatpush.bf16.msra.mxu0 %v1444
  %1884 = vmatpush.bf16.msra.mxu0 %v1443
  %1885 = vmatpush.bf16.msra.mxu0 %v1442
  %1886 = vmatpush.bf16.msra.mxu0 %v1441
  %1887 = vmatpush.bf16.msra.mxu0 %v1440
  %1888 = vmatpush.bf16.msra.mxu0 %v1439
  %1889 = vmatmul.bf16.gmra.mxu0 %v507
  %v1890 = vpop.f32.mrf.mxu0
  %v1891 = vadd.f32 %v1878, %v1890
  %v1892 = vpop.f32.mrf.mxu0
  %1893 = vdwg.mxu0
  %1894 = vmatpush.bf16.msra.mxu0 %v1454
  %1895 = vmatpush.bf16.msra.mxu0 %v1453
  %1896 = vmatpush.bf16.msra.mxu0 %v1452
  %1897 = vmatpush.bf16.msra.mxu0 %v1451
  %1898 = vmatpush.bf16.msra.mxu0 %v1450
  %1899 = vmatpush.bf16.msra.mxu0 %v1449
  %1900 = vmatpush.bf16.msra.mxu0 %v1448
  %1901 = vmatpush.bf16.msra.mxu0 %v1447
  %1902 = vmatmul.bf16.gmra.mxu0 %v508
  %v1903 = vpop.f32.mrf.mxu0
  %v1904 = vadd.f32 %v1891, %v1903
  %v1905 = vpop.f32.mrf.mxu0
  %1906 = vdwg.mxu0
  %1907 = vmatpush.bf16.msra.mxu0 %v1462
  %1908 = vmatpush.bf16.msra.mxu0 %v1461
  %1909 = vmatpush.bf16.msra.mxu0 %v1460
  %1910 = vmatpush.bf16.msra.mxu0 %v1459
  %1911 = vmatpush.bf16.msra.mxu0 %v1458
  %1912 = vmatpush.bf16.msra.mxu0 %v1457
  %1913 = vmatpush.bf16.msra.mxu0 %v1456
  %1914 = vmatpush.bf16.msra.mxu0 %v1455
  %1915 = vmatmul.bf16.gmra.mxu0 %v509
  %v1916 = vpop.f32.mrf.mxu0
  %v1917 = vadd.f32 %v1904, %v1916
  %v1918 = vpop.f32.mrf.mxu0
  %1919 = vdwg.mxu0
  %1920 = vmatpush.bf16.msra.mxu0 %v1470
  %1921 = vmatpush.bf16.msra.mxu0 %v1469
  %1922 = vmatpush.bf16.msra.mxu0 %v1468
  %1923 = vmatpush.bf16.msra.mxu0 %v1467
  %1924 = vmatpush.bf16.msra.mxu0 %v1466
  %1925 = vmatpush.bf16.msra.mxu0 %v1465
  %1926 = vmatpush.bf16.msra.mxu0 %v1464
  %1927 = vmatpush.bf16.msra.mxu0 %v1463
  %1928 = vmatmul.bf16.gmra.mxu0 %v510
  %v1929 = vpop.f32.mrf.mxu0
  %v1930 = vadd.f32 %v1917, %v1929
  %v1931 = vpop.f32.mrf.mxu0
  %1932 = vdwg.mxu0
  %1933 = vmatpush.bf16.msra.mxu0 %v1478
  %1934 = vmatpush.bf16.msra.mxu0 %v1477
  %1935 = vmatpush.bf16.msra.mxu0 %v1476
  %1936 = vmatpush.bf16.msra.mxu0 %v1475
  %1937 = vmatpush.bf16.msra.mxu0 %v1474
  %1938 = vmatpush.bf16.msra.mxu0 %v1473
  %1939 = vmatpush.bf16.msra.mxu0 %v1472
  %1940 = vmatpush.bf16.msra.mxu0 %v1471
  %1941 = vmatmul.bf16.gmra.mxu0 %v511
  %v1942 = vpop.f32.mrf.mxu0
  %v1943 = vadd.f32 %v1930, %v1942
  %v1944 = vpop.f32.mrf.mxu0
  %1945 = vdwg.mxu0
  %1946 = vmatpush.bf16.msra.mxu0 %v1486
  %1947 = vmatpush.bf16.msra.mxu0 %v1485
  %1948 = vmatpush.bf16.msra.mxu0 %v1484
  %1949 = vmatpush.bf16.msra.mxu0 %v1483
  %1950 = vmatpush.bf16.msra.mxu0 %v1482
  %1951 = vmatpush.bf16.msra.mxu0 %v1481
  %1952 = vmatpush.bf16.msra.mxu0 %v1480
  %1953 = vmatpush.bf16.msra.mxu0 %v1479
  %1954 = vmatmul.bf16.gmra.mxu0 %v512
  %v1955 = vpop.f32.mrf.mxu0
  %v1956 = vadd.f32 %v1943, %v1955
  %v1957 = vpop.f32.mrf.mxu0
  %1958 = vdwg.mxu0
  %1959 = vmatpush.bf16.msra.mxu0 %v1494
  %1960 = vmatpush.bf16.msra.mxu0 %v1493
  %1961 = vmatpush.bf16.msra.mxu0 %v1492
  %1962 = vmatpush.bf16.msra.mxu0 %v1491
  %1963 = vmatpush.bf16.msra.mxu0 %v1490
  %1964 = vmatpush.bf16.msra.mxu0 %v1489
  %1965 = vmatpush.bf16.msra.mxu0 %v1488
  %1966 = vmatpush.bf16.msra.mxu0 %v1487
  %1967 = vmatmul.bf16.gmra.mxu0 %v513
  %v1968 = vpop.f32.mrf.mxu0
  %v1969 = vadd.f32 %v1956, %v1968
  %v1970 = vpop.f32.mrf.mxu0
  %1971 = vdwg.mxu0
  %1972 = vmatpush.bf16.msra.mxu0 %v1502
  %1973 = vmatpush.bf16.msra.mxu0 %v1501
  %1974 = vmatpush.bf16.msra.mxu0 %v1500
  %1975 = vmatpush.bf16.msra.mxu0 %v1499
  %1976 = vmatpush.bf16.msra.mxu0 %v1498
  %1977 = vmatpush.bf16.msra.mxu0 %v1497
  %1978 = vmatpush.bf16.msra.mxu0 %v1496
  %1979 = vmatpush.bf16.msra.mxu0 %v1495
  %1980 = vmatmul.bf16.gmra.mxu0 %v514
  %v1981 = vpop.f32.mrf.mxu0
  %v1982 = vadd.f32 %v1969, %v1981
  %v1983 = vpop.f32.mrf.mxu0
  %1984 = vdwg.mxu0
  %1985 = vmatpush.bf16.msra.mxu0 %v1510
  %1986 = vmatpush.bf16.msra.mxu0 %v1509
  %1987 = vmatpush.bf16.msra.mxu0 %v1508
  %1988 = vmatpush.bf16.msra.mxu0 %v1507
  %1989 = vmatpush.bf16.msra.mxu0 %v1506
  %1990 = vmatpush.bf16.msra.mxu0 %v1505
  %1991 = vmatpush.bf16.msra.mxu0 %v1504
  %1992 = vmatpush.bf16.msra.mxu0 %v1503
  %1993 = vmatmul.bf16.gmra.mxu0 %v515
  %v1994 = vpop.f32.mrf.mxu0
  %v1995 = vadd.f32 %v1982, %v1994
  %v1996 = vpop.f32.mrf.mxu0
  %1997 = vdwg.mxu0
  %1998 = vmatpush.bf16.msra.mxu0 %v1518
  %1999 = vmatpush.bf16.msra.mxu0 %v1517
  %2000 = vmatpush.bf16.msra.mxu0 %v1516
  %2001 = vmatpush.bf16.msra.mxu0 %v1515
  %2002 = vmatpush.bf16.msra.mxu0 %v1514
  %2003 = vmatpush.bf16.msra.mxu0 %v1513
  %2004 = vmatpush.bf16.msra.mxu0 %v1512
  %2005 = vmatpush.bf16.msra.mxu0 %v1511
  %2006 = vmatmul.bf16.gmra.mxu0 %v516
  %v2007 = vpop.f32.mrf.mxu0
  %v2008 = vadd.f32 %v1995, %v2007
  %v2009 = vpop.f32.mrf.mxu0
  %2010 = vdwg.mxu0
  %2011 = vmatpush.bf16.msra.mxu0 %v1526
  %2012 = vmatpush.bf16.msra.mxu0 %v1525
  %2013 = vmatpush.bf16.msra.mxu0 %v1524
  %2014 = vmatpush.bf16.msra.mxu0 %v1523
  %2015 = vmatpush.bf16.msra.mxu0 %v1522
  %2016 = vmatpush.bf16.msra.mxu0 %v1521
  %2017 = vmatpush.bf16.msra.mxu0 %v1520
  %2018 = vmatpush.bf16.msra.mxu0 %v1519
  %2019 = vmatmul.bf16.gmra.mxu0 %v517
  %v2020 = vpop.f32.mrf.mxu0
  %v2021 = vadd.f32 %v2008, %v2020
  %v2022 = vpop.f32.mrf.mxu0
  %2023 = vdwg.mxu0
  %2024 = vmatpush.bf16.msra.mxu0 %v1534
  %2025 = vmatpush.bf16.msra.mxu0 %v1533
  %2026 = vmatpush.bf16.msra.mxu0 %v1532
  %2027 = vmatpush.bf16.msra.mxu0 %v1531
  %2028 = vmatpush.bf16.msra.mxu0 %v1530
  %2029 = vmatpush.bf16.msra.mxu0 %v1529
  %2030 = vmatpush.bf16.msra.mxu0 %v1528
  %2031 = vmatpush.bf16.msra.mxu0 %v1527
  %2032 = vmatmul.bf16.gmra.mxu0 %v518
  %v2033 = vpop.f32.mrf.mxu0
  %v2034 = vadd.f32 %v2021, %v2033
  %v2035 = vpop.f32.mrf.mxu0
  %2036 = vdwg.mxu0
  %2037 = vmatpush.bf16.msra.mxu0 %v1542
  %2038 = vmatpush.bf16.msra.mxu0 %v1541
  %2039 = vmatpush.bf16.msra.mxu0 %v1540
  %2040 = vmatpush.bf16.msra.mxu0 %v1539
  %2041 = vmatpush.bf16.msra.mxu0 %v1538
  %2042 = vmatpush.bf16.msra.mxu0 %v1537
  %2043 = vmatpush.bf16.msra.mxu0 %v1536
  %2044 = vmatpush.bf16.msra.mxu0 %v1535
  %2045 = vmatmul.bf16.gmra.mxu0 %v519
  %v2046 = vpop.f32.mrf.mxu0
  %v2047 = vadd.f32 %v2034, %v2046
  %v2048 = vpop.f32.mrf.mxu0
  %2049 = vdwg.mxu0
  %2050 = vmatpush.bf16.msra.mxu0 %v1550
  %2051 = vmatpush.bf16.msra.mxu0 %v1549
  %2052 = vmatpush.bf16.msra.mxu0 %v1548
  %2053 = vmatpush.bf16.msra.mxu0 %v1547
  %2054 = vmatpush.bf16.msra.mxu0 %v1546
  %2055 = vmatpush.bf16.msra.mxu0 %v1545
  %2056 = vmatpush.bf16.msra.mxu0 %v1544
  %2057 = vmatpush.bf16.msra.mxu0 %v1543
  %2058 = vmatmul.bf16.gmra.mxu0 %v520
  %v2059 = vpop.f32.mrf.mxu0
  %v2060 = vadd.f32 %v2047, %v2059
  %v2061 = vpop.f32.mrf.mxu0
  %2062 = vdwg.mxu0
  %2063 = vmatpush.bf16.msra.mxu0 %v1558
  %2064 = vmatpush.bf16.msra.mxu0 %v1557
  %2065 = vmatpush.bf16.msra.mxu0 %v1556
  %2066 = vmatpush.bf16.msra.mxu0 %v1555
  %2067 = vmatpush.bf16.msra.mxu0 %v1554
  %2068 = vmatpush.bf16.msra.mxu0 %v1553
  %2069 = vmatpush.bf16.msra.mxu0 %v1552
  %2070 = vmatpush.bf16.msra.mxu0 %v1551
  %2071 = vmatmul.bf16.gmra.mxu0 %v521
  %v2072 = vpop.f32.mrf.mxu0
  %v2073 = vadd.f32 %v2060, %v2072
  %v2074 = vpop.f32.mrf.mxu0
  %2075 = vdwg.mxu0
  %2076 = vmatpush.bf16.msra.mxu0 %v1566
  %2077 = vmatpush.bf16.msra.mxu0 %v1565
  %2078 = vmatpush.bf16.msra.mxu0 %v1564
  %2079 = vmatpush.bf16.msra.mxu0 %v1563
  %2080 = vmatpush.bf16.msra.mxu0 %v1562
  %2081 = vmatpush.bf16.msra.mxu0 %v1561
  %2082 = vmatpush.bf16.msra.mxu0 %v1560
  %2083 = vmatpush.bf16.msra.mxu0 %v1559
  %2084 = vmatmul.bf16.gmra.mxu0 %v522
  %v2085 = vpop.f32.mrf.mxu0
  %v2086 = vadd.f32 %v2073, %v2085
  %v2087 = vpop.f32.mrf.mxu0
  %2088 = vdwg.mxu0
  %2089 = vmatpush.bf16.msra.mxu0 %v1574
  %2090 = vmatpush.bf16.msra.mxu0 %v1573
  %2091 = vmatpush.bf16.msra.mxu0 %v1572
  %2092 = vmatpush.bf16.msra.mxu0 %v1571
  %2093 = vmatpush.bf16.msra.mxu0 %v1570
  %2094 = vmatpush.bf16.msra.mxu0 %v1569
  %2095 = vmatpush.bf16.msra.mxu0 %v1568
  %2096 = vmatpush.bf16.msra.mxu0 %v1567
  %2097 = vmatmul.bf16.gmra.mxu0 %v523
  %v2098 = vpop.f32.mrf.mxu0
  %v2099 = vadd.f32 %v2086, %v2098
  %v2100 = vpop.f32.mrf.mxu0
  %2101 = vdwg.mxu0
  %2102 = vmatpush.bf16.msra.mxu0 %v1582
  %2103 = vmatpush.bf16.msra.mxu0 %v1581
  %2104 = vmatpush.bf16.msra.mxu0 %v1580
  %2105 = vmatpush.bf16.msra.mxu0 %v1579
  %2106 = vmatpush.bf16.msra.mxu0 %v1578
  %2107 = vmatpush.bf16.msra.mxu0 %v1577
  %2108 = vmatpush.bf16.msra.mxu0 %v1576
  %2109 = vmatpush.bf16.msra.mxu0 %v1575
  %2110 = vmatmul.bf16.gmra.mxu0 %v524
  %v2111 = vpop.f32.mrf.mxu0
  %v2112 = vadd.f32 %v2099, %v2111
  %v2113 = vpop.f32.mrf.mxu0
  %2114 = vdwg.mxu0
  %2115 = vmatpush.bf16.msra.mxu0 %v1590
  %2116 = vmatpush.bf16.msra.mxu0 %v1589
  %2117 = vmatpush.bf16.msra.mxu0 %v1588
  %2118 = vmatpush.bf16.msra.mxu0 %v1587
  %2119 = vmatpush.bf16.msra.mxu0 %v1586
  %2120 = vmatpush.bf16.msra.mxu0 %v1585
  %2121 = vmatpush.bf16.msra.mxu0 %v1584
  %2122 = vmatpush.bf16.msra.mxu0 %v1583
  %2123 = vmatmul.bf16.gmra.mxu0 %v525
  %v2124 = vpop.f32.mrf.mxu0
  %v2125 = vadd.f32 %v2112, %v2124
  %v2126 = vpop.f32.mrf.mxu0
  %2127 = vdwg.mxu0
  %2128 = vmatpush.bf16.msra.mxu0 %v1598
  %2129 = vmatpush.bf16.msra.mxu0 %v1597
  %2130 = vmatpush.bf16.msra.mxu0 %v1596
  %2131 = vmatpush.bf16.msra.mxu0 %v1595
  %2132 = vmatpush.bf16.msra.mxu0 %v1594
  %2133 = vmatpush.bf16.msra.mxu0 %v1593
  %2134 = vmatpush.bf16.msra.mxu0 %v1592
  %2135 = vmatpush.bf16.msra.mxu0 %v1591
  %2136 = vmatmul.bf16.gmra.mxu0 %v526
  %v2137 = vpop.f32.mrf.mxu0
  %v2138 = vadd.f32 %v2125, %v2137
  %v2139 = vpop.f32.mrf.mxu0
  %2140 = vdwg.mxu0
  %2141 = vmatpush.bf16.msra.mxu0 %v1606
  %2142 = vmatpush.bf16.msra.mxu0 %v1605
  %2143 = vmatpush.bf16.msra.mxu0 %v1604
  %2144 = vmatpush.bf16.msra.mxu0 %v1603
  %2145 = vmatpush.bf16.msra.mxu0 %v1602
  %2146 = vmatpush.bf16.msra.mxu0 %v1601
  %2147 = vmatpush.bf16.msra.mxu0 %v1600
  %2148 = vmatpush.bf16.msra.mxu0 %v1599
  %2149 = vmatmul.bf16.gmra.mxu0 %v527
  %v2150 = vpop.f32.mrf.mxu0
  %v2151 = vadd.f32 %v2138, %v2150
  %v2152 = vpop.f32.mrf.mxu0
  %2153 = vdwg.mxu0
  %2154 = vmatpush.bf16.msra.mxu0 %v1614
  %2155 = vmatpush.bf16.msra.mxu0 %v1613
  %2156 = vmatpush.bf16.msra.mxu0 %v1612
  %2157 = vmatpush.bf16.msra.mxu0 %v1611
  %2158 = vmatpush.bf16.msra.mxu0 %v1610
  %2159 = vmatpush.bf16.msra.mxu0 %v1609
  %2160 = vmatpush.bf16.msra.mxu0 %v1608
  %2161 = vmatpush.bf16.msra.mxu0 %v1607
  %2162 = vmatmul.bf16.gmra.mxu0 %v528
  %v2163 = vpop.f32.mrf.mxu0
  %v2164 = vadd.f32 %v2151, %v2163
  %v2165 = vpop.f32.mrf.mxu0
  %2166 = vdwg.mxu0
  %2167 = vmatpush.bf16.msra.mxu0 %v1622
  %2168 = vmatpush.bf16.msra.mxu0 %v1621
  %2169 = vmatpush.bf16.msra.mxu0 %v1620
  %2170 = vmatpush.bf16.msra.mxu0 %v1619
  %2171 = vmatpush.bf16.msra.mxu0 %v1618
  %2172 = vmatpush.bf16.msra.mxu0 %v1617
  %2173 = vmatpush.bf16.msra.mxu0 %v1616
  %2174 = vmatpush.bf16.msra.mxu0 %v1615
  %2175 = vmatmul.bf16.gmra.mxu0 %v529
  %v2176 = vpop.f32.mrf.mxu0
  %v2177 = vadd.f32 %v2164, %v2176
  %v2178 = vpop.f32.mrf.mxu0
  %2179 = vdwg.mxu0
  %2180 = vmatpush.bf16.msra.mxu0 %v1630
  %2181 = vmatpush.bf16.msra.mxu0 %v1629
  %2182 = vmatpush.bf16.msra.mxu0 %v1628
  %2183 = vmatpush.bf16.msra.mxu0 %v1627
  %2184 = vmatpush.bf16.msra.mxu0 %v1626
  %2185 = vmatpush.bf16.msra.mxu0 %v1625
  %2186 = vmatpush.bf16.msra.mxu0 %v1624
  %2187 = vmatpush.bf16.msra.mxu0 %v1623
  %2188 = vmatmul.bf16.gmra.mxu0 %v530
  %v2189 = vpop.f32.mrf.mxu0
  %v2190 = vadd.f32 %v2177, %v2189
  %v2191 = vpop.f32.mrf.mxu0
  %2192 = vdwg.mxu0
  %2193 = vmatpush.bf16.msra.mxu0 %v1638
  %2194 = vmatpush.bf16.msra.mxu0 %v1637
  %2195 = vmatpush.bf16.msra.mxu0 %v1636
  %2196 = vmatpush.bf16.msra.mxu0 %v1635
  %2197 = vmatpush.bf16.msra.mxu0 %v1634
  %2198 = vmatpush.bf16.msra.mxu0 %v1633
  %2199 = vmatpush.bf16.msra.mxu0 %v1632
  %2200 = vmatpush.bf16.msra.mxu0 %v1631
  %2201 = vmatmul.bf16.gmra.mxu0 %v531
  %v2202 = vpop.f32.mrf.mxu0
  %v2203 = vadd.f32 %v2190, %v2202
  %v2204 = vpop.f32.mrf.mxu0
  %2205 = vdwg.mxu0
  %v2206 = vmul.f32 %v2203, 0.2
  %v2207 = vmax.f32 %v2203, %v2206
  %v2208 = vpack.c.bf16 %v2207, %v2207
  %2209 = vst [vmem:[%s3] sm:$0xf] %v2208
  // Predicated region
  $region14: #{autoencoder3d_forward.11} parent=0 // pred_check
    _
  $region15: #{autoencoder3d_forward.11} parent=0 // pred_check_branch
    %2211 = sbr.rel (0) target = $region17
  $region16: #{autoencoder3d_forward.11} parent=0 // pred_region
    _
  $region17: #{autoencoder3d_forward.11} parent=0 // pred_fallthru
    _
  // Predicated region
  $region18: #{autoencoder3d_forward.11} parent=0 // pred_check
    _
  $region19: #{autoencoder3d_forward.11} parent=0 // pred_check_branch
    %2213 = sbr.rel (0) target = $region21
  $region20: #{autoencoder3d_forward.11} parent=0 // pred_region
    _
  $region21: #{autoencoder3d_forward.11} parent=0 // pred_fallthru
    _

// kernel: autoencoder3d_forward.13
$region0: #{autoencoder3d_forward.13}
  #allocation0 [shape = 'u32[]', space=smem, size = 0x4, offset = 0x4, fixed_abs, tag = 'smem constant byte address 0x4 - core index']
  #allocation1 [shape = 'u32[72,128]{1,0:T(1,128)}', space=vmem, size = 0x9000, scoped, tag = 'internal scratch']
  %s0 = inlined_call_operand.vmem [shape: bf16[8,1024], index: 0, kind: input, shape index: {}]
  %s1 = inlined_call_operand.vmem [shape: bf16[1024,512], index: 1, kind: input, shape index: {}]
  %s2 = inlined_call_operand.vmem [shape: f32[1,512], index: 2, kind: input, shape index: {}]
  %s3 = inlined_call_operand.vmem [shape: bf16[8,512], index: 3, kind: output, shape index: {}]
  %s4 = sld [smem:[#allocation0]]
  $region22: #{autoencoder3d_forward.13} parent=0
    _
  %s6 = ssub.s32 1, %s4
  %s7 = scalar_select 0, %s6, %s4
  // Predicated region
  $region2: #{autoencoder3d_forward.13} parent=0 // pred_check
    _
  $region3: #{autoencoder3d_forward.13} parent=0 // pred_check_branch
    %9 = sbr.rel (0) target = $region5
  $region4: #{autoencoder3d_forward.13} parent=0 // pred_region
    _
  $region5: #{autoencoder3d_forward.13} parent=0 // pred_fallthru
    _
  // Predicated region
  $region6: #{autoencoder3d_forward.13} parent=0 // pred_check
    _
  $region7: #{autoencoder3d_forward.13} parent=0 // pred_check_branch
    %11 = sbr.rel (0) target = $region9
  $region8: #{autoencoder3d_forward.13} parent=0 // pred_region
    _
  $region9: #{autoencoder3d_forward.13} parent=0 // pred_fallthru
    _
  // Predicated region
  $region10: #{autoencoder3d_forward.13} parent=0 // pred_check
    _
  $region11: #{autoencoder3d_forward.13} parent=0 // pred_check_branch
    %13 = sbr.rel (0) target = $region13
  $region12: #{autoencoder3d_forward.13} parent=0 // pred_region
    _
  $region13: #{autoencoder3d_forward.13} parent=0 // pred_fallthru
    _
  %v14 = vld [vmem:[%s0] sm:$0xff]
  %v15 = vld [vmem:[%s0 + $0x8] sm:$0xff]
  %v16 = vld [vmem:[%s0 + $0x10] sm:$0xff]
  %v17 = vld [vmem:[%s0 + $0x18] sm:$0xff]
  %v18 = vld [vmem:[%s1] sm:$0xff]
  %v19 = vld [vmem:[%s1 + $0x8] sm:$0xff]
  %v20 = vld [vmem:[%s1 + $0x10] sm:$0xff]
  %v21 = vld [vmem:[%s1 + $0x18] sm:$0xff]
  %v22 = vld [vmem:[%s1 + $0x20] sm:$0xff]
  %v23 = vld [vmem:[%s1 + $0x28] sm:$0xff]
  %v24 = vld [vmem:[%s1 + $0x30] sm:$0xff]
  %v25 = vld [vmem:[%s1 + $0x38] sm:$0xff]
  %v26 = vld [vmem:[%s1 + $0x40] sm:$0xff]
  %v27 = vld [vmem:[%s1 + $0x48] sm:$0xff]
  %v28 = vld [vmem:[%s1 + $0x50] sm:$0xff]
  %v29 = vld [vmem:[%s1 + $0x58] sm:$0xff]
  %v30 = vld [vmem:[%s1 + $0x60] sm:$0xff]
  %v31 = vld [vmem:[%s1 + $0x68] sm:$0xff]
  %v32 = vld [vmem:[%s1 + $0x70] sm:$0xff]
  %v33 = vld [vmem:[%s1 + $0x78] sm:$0xff]
  %v34 = vld [vmem:[%s1 + $0x80] sm:$0xff]
  %v35 = vld [vmem:[%s1 + $0x88] sm:$0xff]
  %v36 = vld [vmem:[%s1 + $0x90] sm:$0xff]
  %v37 = vld [vmem:[%s1 + $0x98] sm:$0xff]
  %v38 = vld [vmem:[%s1 + $0xa0] sm:$0xff]
  %v39 = vld [vmem:[%s1 + $0xa8] sm:$0xff]
  %v40 = vld [vmem:[%s1 + $0xb0] sm:$0xff]
  %v41 = vld [vmem:[%s1 + $0xb8] sm:$0xff]
  %v42 = vld [vmem:[%s1 + $0xc0] sm:$0xff]
  %v43 = vld [vmem:[%s1 + $0xc8] sm:$0xff]
  %v44 = vld [vmem:[%s1 + $0xd0] sm:$0xff]
  %v45 = vld [vmem:[%s1 + $0xd8] sm:$0xff]
  %v46 = vld [vmem:[%s1 + $0xe0] sm:$0xff]
  %v47 = vld [vmem:[%s1 + $0xe8] sm:$0xff]
  %v48 = vld [vmem:[%s1 + $0xf0] sm:$0xff]
  %v49 = vld [vmem:[%s1 + $0xf8] sm:$0xff]
  %v50 = vld [vmem:[%s1 + $0x100] sm:$0xff]
  %v51 = vld [vmem:[%s1 + $0x108] sm:$0xff]
  %v52 = vld [vmem:[%s1 + $0x110] sm:$0xff]
  %v53 = vld [vmem:[%s1 + $0x118] sm:$0xff]
  %v54 = vld [vmem:[%s1 + $0x120] sm:$0xff]
  %v55 = vld [vmem:[%s1 + $0x128] sm:$0xff]
  %v56 = vld [vmem:[%s1 + $0x130] sm:$0xff]
  %v57 = vld [vmem:[%s1 + $0x138] sm:$0xff]
  %v58 = vld [vmem:[%s1 + $0x140] sm:$0xff]
  %v59 = vld [vmem:[%s1 + $0x148] sm:$0xff]
  %v60 = vld [vmem:[%s1 + $0x150] sm:$0xff]
  %v61 = vld [vmem:[%s1 + $0x158] sm:$0xff]
  %v62 = vld [vmem:[%s1 + $0x160] sm:$0xff]
  %v63 = vld [vmem:[%s1 + $0x168] sm:$0xff]
  %v64 = vld [vmem:[%s1 + $0x170] sm:$0xff]
  %v65 = vld [vmem:[%s1 + $0x178] sm:$0xff]
  %v66 = vld [vmem:[%s1 + $0x180] sm:$0xff]
  %v67 = vld [vmem:[%s1 + $0x188] sm:$0xff]
  %v68 = vld [vmem:[%s1 + $0x190] sm:$0xff]
  %v69 = vld [vmem:[%s1 + $0x198] sm:$0xff]
  %v70 = vld [vmem:[%s1 + $0x1a0] sm:$0xff]
  %v71 = vld [vmem:[%s1 + $0x1a8] sm:$0xff]
  %v72 = vld [vmem:[%s1 + $0x1b0] sm:$0xff]
  %v73 = vld [vmem:[%s1 + $0x1b8] sm:$0xff]
  %v74 = vld [vmem:[%s1 + $0x1c0] sm:$0xff]
  %v75 = vld [vmem:[%s1 + $0x1c8] sm:$0xff]
  %v76 = vld [vmem:[%s1 + $0x1d0] sm:$0xff]
  %v77 = vld [vmem:[%s1 + $0x1d8] sm:$0xff]
  %v78 = vld [vmem:[%s1 + $0x1e0] sm:$0xff]
  %v79 = vld [vmem:[%s1 + $0x1e8] sm:$0xff]
  %v80 = vld [vmem:[%s1 + $0x1f0] sm:$0xff]
  %v81 = vld [vmem:[%s1 + $0x1f8] sm:$0xff]
  %v82 = vld [vmem:[%s1 + $0x200] sm:$0xff]
  %v83 = vld [vmem:[%s1 + $0x208] sm:$0xff]
  %v84 = vld [vmem:[%s1 + $0x210] sm:$0xff]
  %v85 = vld [vmem:[%s1 + $0x218] sm:$0xff]
  %v86 = vld [vmem:[%s1 + $0x220] sm:$0xff]
  %v87 = vld [vmem:[%s1 + $0x228] sm:$0xff]
  %v88 = vld [vmem:[%s1 + $0x230] sm:$0xff]
  %v89 = vld [vmem:[%s1 + $0x238] sm:$0xff]
  %v90 = vld [vmem:[%s1 + $0x240] sm:$0xff]
  %v91 = vld [vmem:[%s1 + $0x248] sm:$0xff]
  %v92 = vld [vmem:[%s1 + $0x250] sm:$0xff]
  %v93 = vld [vmem:[%s1 + $0x258] sm:$0xff]
  %v94 = vld [vmem:[%s1 + $0x260] sm:$0xff]
  %v95 = vld [vmem:[%s1 + $0x268] sm:$0xff]
  %v96 = vld [vmem:[%s1 + $0x270] sm:$0xff]
  %v97 = vld [vmem:[%s1 + $0x278] sm:$0xff]
  %v98 = vld [vmem:[%s1 + $0x280] sm:$0xff]
  %v99 = vld [vmem:[%s1 + $0x288] sm:$0xff]
  %v100 = vld [vmem:[%s1 + $0x290] sm:$0xff]
  %v101 = vld [vmem:[%s1 + $0x298] sm:$0xff]
  %v102 = vld [vmem:[%s1 + $0x2a0] sm:$0xff]
  %v103 = vld [vmem:[%s1 + $0x2a8] sm:$0xff]
  %v104 = vld [vmem:[%s1 + $0x2b0] sm:$0xff]
  %v105 = vld [vmem:[%s1 + $0x2b8] sm:$0xff]
  %v106 = vld [vmem:[%s1 + $0x2c0] sm:$0xff]
  %v107 = vld [vmem:[%s1 + $0x2c8] sm:$0xff]
  %v108 = vld [vmem:[%s1 + $0x2d0] sm:$0xff]
  %v109 = vld [vmem:[%s1 + $0x2d8] sm:$0xff]
  %v110 = vld [vmem:[%s1 + $0x2e0] sm:$0xff]
  %v111 = vld [vmem:[%s1 + $0x2e8] sm:$0xff]
  %v112 = vld [vmem:[%s1 + $0x2f0] sm:$0xff]
  %v113 = vld [vmem:[%s1 + $0x2f8] sm:$0xff]
  %v114 = vld [vmem:[%s1 + $0x300] sm:$0xff]
  %v115 = vld [vmem:[%s1 + $0x308] sm:$0xff]
  %v116 = vld [vmem:[%s1 + $0x310] sm:$0xff]
  %v117 = vld [vmem:[%s1 + $0x318] sm:$0xff]
  %v118 = vld [vmem:[%s1 + $0x320] sm:$0xff]
  %v119 = vld [vmem:[%s1 + $0x328] sm:$0xff]
  %v120 = vld [vmem:[%s1 + $0x330] sm:$0xff]
  %v121 = vld [vmem:[%s1 + $0x338] sm:$0xff]
  %v122 = vld [vmem:[%s1 + $0x340] sm:$0xff]
  %v123 = vld [vmem:[%s1 + $0x348] sm:$0xff]
  %v124 = vld [vmem:[%s1 + $0x350] sm:$0xff]
  %v125 = vld [vmem:[%s1 + $0x358] sm:$0xff]
  %v126 = vld [vmem:[%s1 + $0x360] sm:$0xff]
  %v127 = vld [vmem:[%s1 + $0x368] sm:$0xff]
  %v128 = vld [vmem:[%s1 + $0x370] sm:$0xff]
  %v129 = vld [vmem:[%s1 + $0x378] sm:$0xff]
  %v130 = vld [vmem:[%s1 + $0x380] sm:$0xff]
  %v131 = vld [vmem:[%s1 + $0x388] sm:$0xff]
  %v132 = vld [vmem:[%s1 + $0x390] sm:$0xff]
  %v133 = vld [vmem:[%s1 + $0x398] sm:$0xff]
  %v134 = vld [vmem:[%s1 + $0x3a0] sm:$0xff]
  %v135 = vld [vmem:[%s1 + $0x3a8] sm:$0xff]
  %v136 = vld [vmem:[%s1 + $0x3b0] sm:$0xff]
  %v137 = vld [vmem:[%s1 + $0x3b8] sm:$0xff]
  %v138 = vld [vmem:[%s1 + $0x3c0] sm:$0xff]
  %v139 = vld [vmem:[%s1 + $0x3c8] sm:$0xff]
  %v140 = vld [vmem:[%s1 + $0x3d0] sm:$0xff]
  %v141 = vld [vmem:[%s1 + $0x3d8] sm:$0xff]
  %v142 = vld [vmem:[%s1 + $0x3e0] sm:$0xff]
  %v143 = vld [vmem:[%s1 + $0x3e8] sm:$0xff]
  %v144 = vld [vmem:[%s1 + $0x3f0] sm:$0xff]
  %v145 = vld [vmem:[%s1 + $0x3f8] sm:$0xff]
  %v146 = vld [vmem:[%s1 + $0x400] sm:$0xff]
  %v147 = vld [vmem:[%s1 + $0x408] sm:$0xff]
  %v148 = vld [vmem:[%s1 + $0x410] sm:$0xff]
  %v149 = vld [vmem:[%s1 + $0x418] sm:$0xff]
  %v150 = vld [vmem:[%s1 + $0x420] sm:$0xff]
  %v151 = vld [vmem:[%s1 + $0x428] sm:$0xff]
  %v152 = vld [vmem:[%s1 + $0x430] sm:$0xff]
  %v153 = vld [vmem:[%s1 + $0x438] sm:$0xff]
  %v154 = vld [vmem:[%s1 + $0x440] sm:$0xff]
  %v155 = vld [vmem:[%s1 + $0x448] sm:$0xff]
  %v156 = vld [vmem:[%s1 + $0x450] sm:$0xff]
  %v157 = vld [vmem:[%s1 + $0x458] sm:$0xff]
  %v158 = vld [vmem:[%s1 + $0x460] sm:$0xff]
  %v159 = vld [vmem:[%s1 + $0x468] sm:$0xff]
  %v160 = vld [vmem:[%s1 + $0x470] sm:$0xff]
  %v161 = vld [vmem:[%s1 + $0x478] sm:$0xff]
  %v162 = vld [vmem:[%s1 + $0x480] sm:$0xff]
  %v163 = vld [vmem:[%s1 + $0x488] sm:$0xff]
  %v164 = vld [vmem:[%s1 + $0x490] sm:$0xff]
  %v165 = vld [vmem:[%s1 + $0x498] sm:$0xff]
  %v166 = vld [vmem:[%s1 + $0x4a0] sm:$0xff]
  %v167 = vld [vmem:[%s1 + $0x4a8] sm:$0xff]
  %v168 = vld [vmem:[%s1 + $0x4b0] sm:$0xff]
  %v169 = vld [vmem:[%s1 + $0x4b8] sm:$0xff]
  %v170 = vld [vmem:[%s1 + $0x4c0] sm:$0xff]
  %v171 = vld [vmem:[%s1 + $0x4c8] sm:$0xff]
  %v172 = vld [vmem:[%s1 + $0x4d0] sm:$0xff]
  %v173 = vld [vmem:[%s1 + $0x4d8] sm:$0xff]
  %v174 = vld [vmem:[%s1 + $0x4e0] sm:$0xff]
  %v175 = vld [vmem:[%s1 + $0x4e8] sm:$0xff]
  %v176 = vld [vmem:[%s1 + $0x4f0] sm:$0xff]
  %v177 = vld [vmem:[%s1 + $0x4f8] sm:$0xff]
  %v178 = vld [vmem:[%s1 + $0x500] sm:$0xff]
  %v179 = vld [vmem:[%s1 + $0x508] sm:$0xff]
  %v180 = vld [vmem:[%s1 + $0x510] sm:$0xff]
  %v181 = vld [vmem:[%s1 + $0x518] sm:$0xff]
  %v182 = vld [vmem:[%s1 + $0x520] sm:$0xff]
  %v183 = vld [vmem:[%s1 + $0x528] sm:$0xff]
  %v184 = vld [vmem:[%s1 + $0x530] sm:$0xff]
  %v185 = vld [vmem:[%s1 + $0x538] sm:$0xff]
  %v186 = vld [vmem:[%s1 + $0x540] sm:$0xff]
  %v187 = vld [vmem:[%s1 + $0x548] sm:$0xff]
  %v188 = vld [vmem:[%s1 + $0x550] sm:$0xff]
  %v189 = vld [vmem:[%s1 + $0x558] sm:$0xff]
  %v190 = vld [vmem:[%s1 + $0x560] sm:$0xff]
  %v191 = vld [vmem:[%s1 + $0x568] sm:$0xff]
  %v192 = vld [vmem:[%s1 + $0x570] sm:$0xff]
  %v193 = vld [vmem:[%s1 + $0x578] sm:$0xff]
  %v194 = vld [vmem:[%s1 + $0x580] sm:$0xff]
  %v195 = vld [vmem:[%s1 + $0x588] sm:$0xff]
  %v196 = vld [vmem:[%s1 + $0x590] sm:$0xff]
  %v197 = vld [vmem:[%s1 + $0x598] sm:$0xff]
  %v198 = vld [vmem:[%s1 + $0x5a0] sm:$0xff]
  %v199 = vld [vmem:[%s1 + $0x5a8] sm:$0xff]
  %v200 = vld [vmem:[%s1 + $0x5b0] sm:$0xff]
  %v201 = vld [vmem:[%s1 + $0x5b8] sm:$0xff]
  %v202 = vld [vmem:[%s1 + $0x5c0] sm:$0xff]
  %v203 = vld [vmem:[%s1 + $0x5c8] sm:$0xff]
  %v204 = vld [vmem:[%s1 + $0x5d0] sm:$0xff]
  %v205 = vld [vmem:[%s1 + $0x5d8] sm:$0xff]
  %v206 = vld [vmem:[%s1 + $0x5e0] sm:$0xff]
  %v207 = vld [vmem:[%s1 + $0x5e8] sm:$0xff]
  %v208 = vld [vmem:[%s1 + $0x5f0] sm:$0xff]
  %v209 = vld [vmem:[%s1 + $0x5f8] sm:$0xff]
  %v210 = vld [vmem:[%s1 + $0x600] sm:$0xff]
  %v211 = vld [vmem:[%s1 + $0x608] sm:$0xff]
  %v212 = vld [vmem:[%s1 + $0x610] sm:$0xff]
  %v213 = vld [vmem:[%s1 + $0x618] sm:$0xff]
  %v214 = vld [vmem:[%s1 + $0x620] sm:$0xff]
  %v215 = vld [vmem:[%s1 + $0x628] sm:$0xff]
  %v216 = vld [vmem:[%s1 + $0x630] sm:$0xff]
  %v217 = vld [vmem:[%s1 + $0x638] sm:$0xff]
  %v218 = vld [vmem:[%s1 + $0x640] sm:$0xff]
  %v219 = vld [vmem:[%s1 + $0x648] sm:$0xff]
  %v220 = vld [vmem:[%s1 + $0x650] sm:$0xff]
  %v221 = vld [vmem:[%s1 + $0x658] sm:$0xff]
  %v222 = vld [vmem:[%s1 + $0x660] sm:$0xff]
  %v223 = vld [vmem:[%s1 + $0x668] sm:$0xff]
  %v224 = vld [vmem:[%s1 + $0x670] sm:$0xff]
  %v225 = vld [vmem:[%s1 + $0x678] sm:$0xff]
  %v226 = vld [vmem:[%s1 + $0x680] sm:$0xff]
  %v227 = vld [vmem:[%s1 + $0x688] sm:$0xff]
  %v228 = vld [vmem:[%s1 + $0x690] sm:$0xff]
  %v229 = vld [vmem:[%s1 + $0x698] sm:$0xff]
  %v230 = vld [vmem:[%s1 + $0x6a0] sm:$0xff]
  %v231 = vld [vmem:[%s1 + $0x6a8] sm:$0xff]
  %v232 = vld [vmem:[%s1 + $0x6b0] sm:$0xff]
  %v233 = vld [vmem:[%s1 + $0x6b8] sm:$0xff]
  %v234 = vld [vmem:[%s1 + $0x6c0] sm:$0xff]
  %v235 = vld [vmem:[%s1 + $0x6c8] sm:$0xff]
  %v236 = vld [vmem:[%s1 + $0x6d0] sm:$0xff]
  %v237 = vld [vmem:[%s1 + $0x6d8] sm:$0xff]
  %v238 = vld [vmem:[%s1 + $0x6e0] sm:$0xff]
  %v239 = vld [vmem:[%s1 + $0x6e8] sm:$0xff]
  %v240 = vld [vmem:[%s1 + $0x6f0] sm:$0xff]
  %v241 = vld [vmem:[%s1 + $0x6f8] sm:$0xff]
  %v242 = vld [vmem:[%s1 + $0x700] sm:$0xff]
  %v243 = vld [vmem:[%s1 + $0x708] sm:$0xff]
  %v244 = vld [vmem:[%s1 + $0x710] sm:$0xff]
  %v245 = vld [vmem:[%s1 + $0x718] sm:$0xff]
  %v246 = vld [vmem:[%s1 + $0x720] sm:$0xff]
  %v247 = vld [vmem:[%s1 + $0x728] sm:$0xff]
  %v248 = vld [vmem:[%s1 + $0x730] sm:$0xff]
  %v249 = vld [vmem:[%s1 + $0x738] sm:$0xff]
  %v250 = vld [vmem:[%s1 + $0x740] sm:$0xff]
  %v251 = vld [vmem:[%s1 + $0x748] sm:$0xff]
  %v252 = vld [vmem:[%s1 + $0x750] sm:$0xff]
  %v253 = vld [vmem:[%s1 + $0x758] sm:$0xff]
  %v254 = vld [vmem:[%s1 + $0x760] sm:$0xff]
  %v255 = vld [vmem:[%s1 + $0x768] sm:$0xff]
  %v256 = vld [vmem:[%s1 + $0x770] sm:$0xff]
  %v257 = vld [vmem:[%s1 + $0x778] sm:$0xff]
  %v258 = vld [vmem:[%s1 + $0x780] sm:$0xff]
  %v259 = vld [vmem:[%s1 + $0x788] sm:$0xff]
  %v260 = vld [vmem:[%s1 + $0x790] sm:$0xff]
  %v261 = vld [vmem:[%s1 + $0x798] sm:$0xff]
  %v262 = vld [vmem:[%s1 + $0x7a0] sm:$0xff]
  %v263 = vld [vmem:[%s1 + $0x7a8] sm:$0xff]
  %v264 = vld [vmem:[%s1 + $0x7b0] sm:$0xff]
  %v265 = vld [vmem:[%s1 + $0x7b8] sm:$0xff]
  %v266 = vld [vmem:[%s1 + $0x7c0] sm:$0xff]
  %v267 = vld [vmem:[%s1 + $0x7c8] sm:$0xff]
  %v268 = vld [vmem:[%s1 + $0x7d0] sm:$0xff]
  %v269 = vld [vmem:[%s1 + $0x7d8] sm:$0xff]
  %v270 = vld [vmem:[%s1 + $0x7e0] sm:$0xff]
  %v271 = vld [vmem:[%s1 + $0x7e8] sm:$0xff]
  %v272 = vld [vmem:[%s1 + $0x7f0] sm:$0xff]
  %v273 = vld [vmem:[%s1 + $0x7f8] sm:$0xff]
  %v274 = vld [vmem:[%s2] sm:$0xf]
  %v276 = vperm.slane %v274, 0
  %v277 = vperm.slane %v274, 1
  %v278 = vperm.slane %v274, 2
  %v279 = vperm.slane %v274, 3
  %v288 = vunpack.c.l.b16 %v14
  %v289 = vunpack.c.h.b16 %v14
  %v290 = vunpack.c.l.b16 %v15
  %v291 = vunpack.c.h.b16 %v15
  %v292 = vunpack.c.l.b16 %v16
  %v293 = vunpack.c.h.b16 %v16
  %v294 = vunpack.c.l.b16 %v17
  %v295 = vunpack.c.h.b16 %v17
  %v296 = vpack.c.b16 %v288, %v288
  %v297 = vpack.c.b16 %v289, %v289
  %v298 = vpack.c.b16 %v290, %v290
  %v299 = vpack.c.b16 %v291, %v291
  %v300 = vpack.c.b16 %v292, %v292
  %v301 = vpack.c.b16 %v293, %v293
  %v302 = vpack.c.b16 %v294, %v294
  %v303 = vpack.c.b16 %v295, %v295
  %v568 = vunpack.c.l.b16 %v18
  %v569 = vunpack.c.h.b16 %v18
  %v570 = vunpack.c.l.b16 %v19
  %v571 = vunpack.c.h.b16 %v19
  %v572 = vunpack.c.l.b16 %v20
  %v573 = vunpack.c.h.b16 %v20
  %v574 = vunpack.c.l.b16 %v21
  %v575 = vunpack.c.h.b16 %v21
  %v576 = vunpack.c.l.b16 %v22
  %v577 = vunpack.c.h.b16 %v22
  %v578 = vunpack.c.l.b16 %v23
  %v579 = vunpack.c.h.b16 %v23
  %v580 = vunpack.c.l.b16 %v24
  %v581 = vunpack.c.h.b16 %v24
  %v582 = vunpack.c.l.b16 %v25
  %v583 = vunpack.c.h.b16 %v25
  %v584 = vunpack.c.l.b16 %v26
  %v585 = vunpack.c.h.b16 %v26
  %v586 = vunpack.c.l.b16 %v27
  %v587 = vunpack.c.h.b16 %v27
  %v588 = vunpack.c.l.b16 %v28
  %v589 = vunpack.c.h.b16 %v28
  %v590 = vunpack.c.l.b16 %v29
  %v591 = vunpack.c.h.b16 %v29
  %v592 = vunpack.c.l.b16 %v30
  %v593 = vunpack.c.h.b16 %v30
  %v594 = vunpack.c.l.b16 %v31
  %v595 = vunpack.c.h.b16 %v31
  %v596 = vunpack.c.l.b16 %v32
  %v597 = vunpack.c.h.b16 %v32
  %v598 = vunpack.c.l.b16 %v33
  %v599 = vunpack.c.h.b16 %v33
  %v600 = vunpack.c.l.b16 %v34
  %v601 = vunpack.c.h.b16 %v34
  %v602 = vunpack.c.l.b16 %v35
  %v603 = vunpack.c.h.b16 %v35
  %v604 = vunpack.c.l.b16 %v36
  %v605 = vunpack.c.h.b16 %v36
  %v606 = vunpack.c.l.b16 %v37
  %v607 = vunpack.c.h.b16 %v37
  %v608 = vunpack.c.l.b16 %v38
  %v609 = vunpack.c.h.b16 %v38
  %v610 = vunpack.c.l.b16 %v39
  %v611 = vunpack.c.h.b16 %v39
  %v612 = vunpack.c.l.b16 %v40
  %v613 = vunpack.c.h.b16 %v40
  %v614 = vunpack.c.l.b16 %v41
  %v615 = vunpack.c.h.b16 %v41
  %v616 = vunpack.c.l.b16 %v42
  %v617 = vunpack.c.h.b16 %v42
  %v618 = vunpack.c.l.b16 %v43
  %v619 = vunpack.c.h.b16 %v43
  %v620 = vunpack.c.l.b16 %v44
  %v621 = vunpack.c.h.b16 %v44
  %v622 = vunpack.c.l.b16 %v45
  %v623 = vunpack.c.h.b16 %v45
  %v624 = vunpack.c.l.b16 %v46
  %v625 = vunpack.c.h.b16 %v46
  %v626 = vunpack.c.l.b16 %v47
  %v627 = vunpack.c.h.b16 %v47
  %v628 = vunpack.c.l.b16 %v48
  %v629 = vunpack.c.h.b16 %v48
  %v630 = vunpack.c.l.b16 %v49
  %v631 = vunpack.c.h.b16 %v49
  %v632 = vunpack.c.l.b16 %v50
  %v633 = vunpack.c.h.b16 %v50
  %v634 = vunpack.c.l.b16 %v51
  %v635 = vunpack.c.h.b16 %v51
  %v636 = vunpack.c.l.b16 %v52
  %v637 = vunpack.c.h.b16 %v52
  %v638 = vunpack.c.l.b16 %v53
  %v639 = vunpack.c.h.b16 %v53
  %v640 = vunpack.c.l.b16 %v54
  %v641 = vunpack.c.h.b16 %v54
  %v642 = vunpack.c.l.b16 %v55
  %v643 = vunpack.c.h.b16 %v55
  %v644 = vunpack.c.l.b16 %v56
  %v645 = vunpack.c.h.b16 %v56
  %v646 = vunpack.c.l.b16 %v57
  %v647 = vunpack.c.h.b16 %v57
  %v648 = vunpack.c.l.b16 %v58
  %v649 = vunpack.c.h.b16 %v58
  %v650 = vunpack.c.l.b16 %v59
  %v651 = vunpack.c.h.b16 %v59
  %v652 = vunpack.c.l.b16 %v60
  %v653 = vunpack.c.h.b16 %v60
  %v654 = vunpack.c.l.b16 %v61
  %v655 = vunpack.c.h.b16 %v61
  %v656 = vunpack.c.l.b16 %v62
  %v657 = vunpack.c.h.b16 %v62
  %v658 = vunpack.c.l.b16 %v63
  %v659 = vunpack.c.h.b16 %v63
  %v660 = vunpack.c.l.b16 %v64
  %v661 = vunpack.c.h.b16 %v64
  %v662 = vunpack.c.l.b16 %v65
  %v663 = vunpack.c.h.b16 %v65
  %v664 = vunpack.c.l.b16 %v66
  %v665 = vunpack.c.h.b16 %v66
  %v666 = vunpack.c.l.b16 %v67
  %v667 = vunpack.c.h.b16 %v67
  %v668 = vunpack.c.l.b16 %v68
  %v669 = vunpack.c.h.b16 %v68
  %v670 = vunpack.c.l.b16 %v69
  %v671 = vunpack.c.h.b16 %v69
  %v672 = vunpack.c.l.b16 %v70
  %v673 = vunpack.c.h.b16 %v70
  %v674 = vunpack.c.l.b16 %v71
  %v675 = vunpack.c.h.b16 %v71
  %v676 = vunpack.c.l.b16 %v72
  %v677 = vunpack.c.h.b16 %v72
  %v678 = vunpack.c.l.b16 %v73
  %v679 = vunpack.c.h.b16 %v73
  %v680 = vunpack.c.l.b16 %v74
  %v681 = vunpack.c.h.b16 %v74
  %v682 = vunpack.c.l.b16 %v75
  %v683 = vunpack.c.h.b16 %v75
  %v684 = vunpack.c.l.b16 %v76
  %v685 = vunpack.c.h.b16 %v76
  %v686 = vunpack.c.l.b16 %v77
  %v687 = vunpack.c.h.b16 %v77
  %v688 = vunpack.c.l.b16 %v78
  %v689 = vunpack.c.h.b16 %v78
  %v690 = vunpack.c.l.b16 %v79
  %v691 = vunpack.c.h.b16 %v79
  %v692 = vunpack.c.l.b16 %v80
  %v693 = vunpack.c.h.b16 %v80
  %v694 = vunpack.c.l.b16 %v81
  %v695 = vunpack.c.h.b16 %v81
  %v696 = vunpack.c.l.b16 %v82
  %v697 = vunpack.c.h.b16 %v82
  %v698 = vunpack.c.l.b16 %v83
  %v699 = vunpack.c.h.b16 %v83
  %v700 = vunpack.c.l.b16 %v84
  %v701 = vunpack.c.h.b16 %v84
  %v702 = vunpack.c.l.b16 %v85
  %v703 = vunpack.c.h.b16 %v85
  %v704 = vunpack.c.l.b16 %v86
  %v705 = vunpack.c.h.b16 %v86
  %v706 = vunpack.c.l.b16 %v87
  %v707 = vunpack.c.h.b16 %v87
  %v708 = vunpack.c.l.b16 %v88
  %v709 = vunpack.c.h.b16 %v88
  %v710 = vunpack.c.l.b16 %v89
  %v711 = vunpack.c.h.b16 %v89
  %v712 = vunpack.c.l.b16 %v90
  %v713 = vunpack.c.h.b16 %v90
  %v714 = vunpack.c.l.b16 %v91
  %v715 = vunpack.c.h.b16 %v91
  %v716 = vunpack.c.l.b16 %v92
  %v717 = vunpack.c.h.b16 %v92
  %v718 = vunpack.c.l.b16 %v93
  %v719 = vunpack.c.h.b16 %v93
  %v720 = vunpack.c.l.b16 %v94
  %v721 = vunpack.c.h.b16 %v94
  %v722 = vunpack.c.l.b16 %v95
  %v723 = vunpack.c.h.b16 %v95
  %v724 = vunpack.c.l.b16 %v96
  %v725 = vunpack.c.h.b16 %v96
  %v726 = vunpack.c.l.b16 %v97
  %v727 = vunpack.c.h.b16 %v97
  %v728 = vunpack.c.l.b16 %v98
  %v729 = vunpack.c.h.b16 %v98
  %v730 = vunpack.c.l.b16 %v99
  %v731 = vunpack.c.h.b16 %v99
  %v732 = vunpack.c.l.b16 %v100
  %v733 = vunpack.c.h.b16 %v100
  %v734 = vunpack.c.l.b16 %v101
  %v735 = vunpack.c.h.b16 %v101
  %v736 = vunpack.c.l.b16 %v102
  %v737 = vunpack.c.h.b16 %v102
  %v738 = vunpack.c.l.b16 %v103
  %v739 = vunpack.c.h.b16 %v103
  %v740 = vunpack.c.l.b16 %v104
  %v741 = vunpack.c.h.b16 %v104
  %v742 = vunpack.c.l.b16 %v105
  %v743 = vunpack.c.h.b16 %v105
  %v744 = vunpack.c.l.b16 %v106
  %v745 = vunpack.c.h.b16 %v106
  %v746 = vunpack.c.l.b16 %v107
  %v747 = vunpack.c.h.b16 %v107
  %v748 = vunpack.c.l.b16 %v108
  %v749 = vunpack.c.h.b16 %v108
  %v750 = vunpack.c.l.b16 %v109
  %v751 = vunpack.c.h.b16 %v109
  %v752 = vunpack.c.l.b16 %v110
  %v753 = vunpack.c.h.b16 %v110
  %v754 = vunpack.c.l.b16 %v111
  %v755 = vunpack.c.h.b16 %v111
  %v756 = vunpack.c.l.b16 %v112
  %v757 = vunpack.c.h.b16 %v112
  %v758 = vunpack.c.l.b16 %v113
  %v759 = vunpack.c.h.b16 %v113
  %v760 = vunpack.c.l.b16 %v114
  %v761 = vunpack.c.h.b16 %v114
  %v762 = vunpack.c.l.b16 %v115
  %v763 = vunpack.c.h.b16 %v115
  %v764 = vunpack.c.l.b16 %v116
  %v765 = vunpack.c.h.b16 %v116
  %v766 = vunpack.c.l.b16 %v117
  %v767 = vunpack.c.h.b16 %v117
  %v768 = vunpack.c.l.b16 %v118
  %v769 = vunpack.c.h.b16 %v118
  %v770 = vunpack.c.l.b16 %v119
  %v771 = vunpack.c.h.b16 %v119
  %v772 = vunpack.c.l.b16 %v120
  %v773 = vunpack.c.h.b16 %v120
  %v774 = vunpack.c.l.b16 %v121
  %v775 = vunpack.c.h.b16 %v121
  %v776 = vunpack.c.l.b16 %v122
  %v777 = vunpack.c.h.b16 %v122
  %v778 = vunpack.c.l.b16 %v123
  %v779 = vunpack.c.h.b16 %v123
  %v780 = vunpack.c.l.b16 %v124
  %v781 = vunpack.c.h.b16 %v124
  %v782 = vunpack.c.l.b16 %v125
  %v783 = vunpack.c.h.b16 %v125
  %v784 = vunpack.c.l.b16 %v126
  %v785 = vunpack.c.h.b16 %v126
  %v786 = vunpack.c.l.b16 %v127
  %v787 = vunpack.c.h.b16 %v127
  %v788 = vunpack.c.l.b16 %v128
  %v789 = vunpack.c.h.b16 %v128
  %v790 = vunpack.c.l.b16 %v129
  %v791 = vunpack.c.h.b16 %v129
  %v792 = vunpack.c.l.b16 %v130
  %v793 = vunpack.c.h.b16 %v130
  %v794 = vunpack.c.l.b16 %v131
  %v795 = vunpack.c.h.b16 %v131
  %v796 = vunpack.c.l.b16 %v132
  %v797 = vunpack.c.h.b16 %v132
  %v798 = vunpack.c.l.b16 %v133
  %v799 = vunpack.c.h.b16 %v133
  %v800 = vunpack.c.l.b16 %v134
  %v801 = vunpack.c.h.b16 %v134
  %v802 = vunpack.c.l.b16 %v135
  %v803 = vunpack.c.h.b16 %v135
  %v804 = vunpack.c.l.b16 %v136
  %v805 = vunpack.c.h.b16 %v136
  %v806 = vunpack.c.l.b16 %v137
  %v807 = vunpack.c.h.b16 %v137
  %v808 = vunpack.c.l.b16 %v138
  %v809 = vunpack.c.h.b16 %v138
  %v810 = vunpack.c.l.b16 %v139
  %v811 = vunpack.c.h.b16 %v139
  %v812 = vunpack.c.l.b16 %v140
  %v813 = vunpack.c.h.b16 %v140
  %v814 = vunpack.c.l.b16 %v141
  %v815 = vunpack.c.h.b16 %v141
  %v816 = vunpack.c.l.b16 %v142
  %v817 = vunpack.c.h.b16 %v142
  %v818 = vunpack.c.l.b16 %v143
  %v819 = vunpack.c.h.b16 %v143
  %v820 = vunpack.c.l.b16 %v144
  %v821 = vunpack.c.h.b16 %v144
  %v822 = vunpack.c.l.b16 %v145
  %v823 = vunpack.c.h.b16 %v145
  %v824 = vunpack.c.l.b16 %v146
  %v825 = vunpack.c.h.b16 %v146
  %v826 = vunpack.c.l.b16 %v147
  %v827 = vunpack.c.h.b16 %v147
  %v828 = vunpack.c.l.b16 %v148
  %v829 = vunpack.c.h.b16 %v148
  %v830 = vunpack.c.l.b16 %v149
  %v831 = vunpack.c.h.b16 %v149
  %v832 = vunpack.c.l.b16 %v150
  %v833 = vunpack.c.h.b16 %v150
  %v834 = vunpack.c.l.b16 %v151
  %v835 = vunpack.c.h.b16 %v151
  %v836 = vunpack.c.l.b16 %v152
  %v837 = vunpack.c.h.b16 %v152
  %v838 = vunpack.c.l.b16 %v153
  %v839 = vunpack.c.h.b16 %v153
  %v840 = vunpack.c.l.b16 %v154
  %v841 = vunpack.c.h.b16 %v154
  %v842 = vunpack.c.l.b16 %v155
  %v843 = vunpack.c.h.b16 %v155
  %v844 = vunpack.c.l.b16 %v156
  %v845 = vunpack.c.h.b16 %v156
  %v846 = vunpack.c.l.b16 %v157
  %v847 = vunpack.c.h.b16 %v157
  %v848 = vunpack.c.l.b16 %v158
  %v849 = vunpack.c.h.b16 %v158
  %v850 = vunpack.c.l.b16 %v159
  %v851 = vunpack.c.h.b16 %v159
  %v852 = vunpack.c.l.b16 %v160
  %v853 = vunpack.c.h.b16 %v160
  %v854 = vunpack.c.l.b16 %v161
  %v855 = vunpack.c.h.b16 %v161
  %v856 = vunpack.c.l.b16 %v162
  %v857 = vunpack.c.h.b16 %v162
  %v858 = vunpack.c.l.b16 %v163
  %v859 = vunpack.c.h.b16 %v163
  %v860 = vunpack.c.l.b16 %v164
  %v861 = vunpack.c.h.b16 %v164
  %v862 = vunpack.c.l.b16 %v165
  %v863 = vunpack.c.h.b16 %v165
  %v864 = vunpack.c.l.b16 %v166
  %v865 = vunpack.c.h.b16 %v166
  %v866 = vunpack.c.l.b16 %v167
  %v867 = vunpack.c.h.b16 %v167
  %v868 = vunpack.c.l.b16 %v168
  %v869 = vunpack.c.h.b16 %v168
  %v870 = vunpack.c.l.b16 %v169
  %v871 = vunpack.c.h.b16 %v169
  %v872 = vunpack.c.l.b16 %v170
  %v873 = vunpack.c.h.b16 %v170
  %v874 = vunpack.c.l.b16 %v171
  %v875 = vunpack.c.h.b16 %v171
  %v876 = vunpack.c.l.b16 %v172
  %v877 = vunpack.c.h.b16 %v172
  %v878 = vunpack.c.l.b16 %v173
  %v879 = vunpack.c.h.b16 %v173
  %v880 = vunpack.c.l.b16 %v174
  %v881 = vunpack.c.h.b16 %v174
  %v882 = vunpack.c.l.b16 %v175
  %v883 = vunpack.c.h.b16 %v175
  %v884 = vunpack.c.l.b16 %v176
  %v885 = vunpack.c.h.b16 %v176
  %v886 = vunpack.c.l.b16 %v177
  %v887 = vunpack.c.h.b16 %v177
  %v888 = vunpack.c.l.b16 %v178
  %v889 = vunpack.c.h.b16 %v178
  %v890 = vunpack.c.l.b16 %v179
  %v891 = vunpack.c.h.b16 %v179
  %v892 = vunpack.c.l.b16 %v180
  %v893 = vunpack.c.h.b16 %v180
  %v894 = vunpack.c.l.b16 %v181
  %v895 = vunpack.c.h.b16 %v181
  %v896 = vunpack.c.l.b16 %v182
  %v897 = vunpack.c.h.b16 %v182
  %v898 = vunpack.c.l.b16 %v183
  %v899 = vunpack.c.h.b16 %v183
  %v900 = vunpack.c.l.b16 %v184
  %v901 = vunpack.c.h.b16 %v184
  %v902 = vunpack.c.l.b16 %v185
  %v903 = vunpack.c.h.b16 %v185
  %v904 = vunpack.c.l.b16 %v186
  %v905 = vunpack.c.h.b16 %v186
  %v906 = vunpack.c.l.b16 %v187
  %v907 = vunpack.c.h.b16 %v187
  %v908 = vunpack.c.l.b16 %v188
  %v909 = vunpack.c.h.b16 %v188
  %v910 = vunpack.c.l.b16 %v189
  %v911 = vunpack.c.h.b16 %v189
  %v912 = vunpack.c.l.b16 %v190
  %v913 = vunpack.c.h.b16 %v190
  %v914 = vunpack.c.l.b16 %v191
  %v915 = vunpack.c.h.b16 %v191
  %v916 = vunpack.c.l.b16 %v192
  %v917 = vunpack.c.h.b16 %v192
  %v918 = vunpack.c.l.b16 %v193
  %v919 = vunpack.c.h.b16 %v193
  %v920 = vunpack.c.l.b16 %v194
  %v921 = vunpack.c.h.b16 %v194
  %v922 = vunpack.c.l.b16 %v195
  %v923 = vunpack.c.h.b16 %v195
  %v924 = vunpack.c.l.b16 %v196
  %v925 = vunpack.c.h.b16 %v196
  %v926 = vunpack.c.l.b16 %v197
  %v927 = vunpack.c.h.b16 %v197
  %v928 = vunpack.c.l.b16 %v198
  %v929 = vunpack.c.h.b16 %v198
  %v930 = vunpack.c.l.b16 %v199
  %v931 = vunpack.c.h.b16 %v199
  %v932 = vunpack.c.l.b16 %v200
  %v933 = vunpack.c.h.b16 %v200
  %v934 = vunpack.c.l.b16 %v201
  %v935 = vunpack.c.h.b16 %v201
  %v936 = vunpack.c.l.b16 %v202
  %v937 = vunpack.c.h.b16 %v202
  %v938 = vunpack.c.l.b16 %v203
  %v939 = vunpack.c.h.b16 %v203
  %v940 = vunpack.c.l.b16 %v204
  %v941 = vunpack.c.h.b16 %v204
  %v942 = vunpack.c.l.b16 %v205
  %v943 = vunpack.c.h.b16 %v205
  %v944 = vunpack.c.l.b16 %v206
  %v945 = vunpack.c.h.b16 %v206
  %v946 = vunpack.c.l.b16 %v207
  %v947 = vunpack.c.h.b16 %v207
  %v948 = vunpack.c.l.b16 %v208
  %v949 = vunpack.c.h.b16 %v208
  %v950 = vunpack.c.l.b16 %v209
  %v951 = vunpack.c.h.b16 %v209
  %v952 = vunpack.c.l.b16 %v210
  %v953 = vunpack.c.h.b16 %v210
  %v954 = vunpack.c.l.b16 %v211
  %v955 = vunpack.c.h.b16 %v211
  %v956 = vunpack.c.l.b16 %v212
  %v957 = vunpack.c.h.b16 %v212
  %v958 = vunpack.c.l.b16 %v213
  %v959 = vunpack.c.h.b16 %v213
  %v960 = vunpack.c.l.b16 %v214
  %v961 = vunpack.c.h.b16 %v214
  %v962 = vunpack.c.l.b16 %v215
  %v963 = vunpack.c.h.b16 %v215
  %v964 = vunpack.c.l.b16 %v216
  %v965 = vunpack.c.h.b16 %v216
  %v966 = vunpack.c.l.b16 %v217
  %v967 = vunpack.c.h.b16 %v217
  %v968 = vunpack.c.l.b16 %v218
  %v969 = vunpack.c.h.b16 %v218
  %v970 = vunpack.c.l.b16 %v219
  %v971 = vunpack.c.h.b16 %v219
  %v972 = vunpack.c.l.b16 %v220
  %v973 = vunpack.c.h.b16 %v220
  %v974 = vunpack.c.l.b16 %v221
  %v975 = vunpack.c.h.b16 %v221
  %v976 = vunpack.c.l.b16 %v222
  %v977 = vunpack.c.h.b16 %v222
  %v978 = vunpack.c.l.b16 %v223
  %v979 = vunpack.c.h.b16 %v223
  %v980 = vunpack.c.l.b16 %v224
  %v981 = vunpack.c.h.b16 %v224
  %v982 = vunpack.c.l.b16 %v225
  %v983 = vunpack.c.h.b16 %v225
  %v984 = vunpack.c.l.b16 %v226
  %v985 = vunpack.c.h.b16 %v226
  %v986 = vunpack.c.l.b16 %v227
  %v987 = vunpack.c.h.b16 %v227
  %v988 = vunpack.c.l.b16 %v228
  %v989 = vunpack.c.h.b16 %v228
  %v990 = vunpack.c.l.b16 %v229
  %v991 = vunpack.c.h.b16 %v229
  %v992 = vunpack.c.l.b16 %v230
  %v993 = vunpack.c.h.b16 %v230
  %v994 = vunpack.c.l.b16 %v231
  %v995 = vunpack.c.h.b16 %v231
  %v996 = vunpack.c.l.b16 %v232
  %v997 = vunpack.c.h.b16 %v232
  %v998 = vunpack.c.l.b16 %v233
  %v999 = vunpack.c.h.b16 %v233
  %v1000 = vunpack.c.l.b16 %v234
  %v1001 = vunpack.c.h.b16 %v234
  %v1002 = vunpack.c.l.b16 %v235
  %v1003 = vunpack.c.h.b16 %v235
  %v1004 = vunpack.c.l.b16 %v236
  %v1005 = vunpack.c.h.b16 %v236
  %v1006 = vunpack.c.l.b16 %v237
  %v1007 = vunpack.c.h.b16 %v237
  %v1008 = vunpack.c.l.b16 %v238
  %v1009 = vunpack.c.h.b16 %v238
  %v1010 = vunpack.c.l.b16 %v239
  %v1011 = vunpack.c.h.b16 %v239
  %v1012 = vunpack.c.l.b16 %v240
  %v1013 = vunpack.c.h.b16 %v240
  %v1014 = vunpack.c.l.b16 %v241
  %v1015 = vunpack.c.h.b16 %v241
  %v1016 = vunpack.c.l.b16 %v242
  %v1017 = vunpack.c.h.b16 %v242
  %v1018 = vunpack.c.l.b16 %v243
  %v1019 = vunpack.c.h.b16 %v243
  %v1020 = vunpack.c.l.b16 %v244
  %v1021 = vunpack.c.h.b16 %v244
  %v1022 = vunpack.c.l.b16 %v245
  %v1023 = vunpack.c.h.b16 %v245
  %v1024 = vunpack.c.l.b16 %v246
  %v1025 = vunpack.c.h.b16 %v246
  %v1026 = vunpack.c.l.b16 %v247
  %v1027 = vunpack.c.h.b16 %v247
  %v1028 = vunpack.c.l.b16 %v248
  %v1029 = vunpack.c.h.b16 %v248
  %v1030 = vunpack.c.l.b16 %v249
  %v1031 = vunpack.c.h.b16 %v249
  %v1032 = vunpack.c.l.b16 %v250
  %v1033 = vunpack.c.h.b16 %v250
  %v1034 = vunpack.c.l.b16 %v251
  %v1035 = vunpack.c.h.b16 %v251
  %v1036 = vunpack.c.l.b16 %v252
  %v1037 = vunpack.c.h.b16 %v252
  %v1038 = vunpack.c.l.b16 %v253
  %v1039 = vunpack.c.h.b16 %v253
  %v1040 = vunpack.c.l.b16 %v254
  %v1041 = vunpack.c.h.b16 %v254
  %v1042 = vunpack.c.l.b16 %v255
  %v1043 = vunpack.c.h.b16 %v255
  %v1044 = vunpack.c.l.b16 %v256
  %v1045 = vunpack.c.h.b16 %v256
  %v1046 = vunpack.c.l.b16 %v257
  %v1047 = vunpack.c.h.b16 %v257
  %v1048 = vunpack.c.l.b16 %v258
  %v1049 = vunpack.c.h.b16 %v258
  %v1050 = vunpack.c.l.b16 %v259
  %v1051 = vunpack.c.h.b16 %v259
  %v1052 = vunpack.c.l.b16 %v260
  %v1053 = vunpack.c.h.b16 %v260
  %v1054 = vunpack.c.l.b16 %v261
  %v1055 = vunpack.c.h.b16 %v261
  %v1056 = vunpack.c.l.b16 %v262
  %v1057 = vunpack.c.h.b16 %v262
  %v1058 = vunpack.c.l.b16 %v263
  %v1059 = vunpack.c.h.b16 %v263
  %v1060 = vunpack.c.l.b16 %v264
  %v1061 = vunpack.c.h.b16 %v264
  %v1062 = vunpack.c.l.b16 %v265
  %v1063 = vunpack.c.h.b16 %v265
  %v1064 = vunpack.c.l.b16 %v266
  %v1065 = vunpack.c.h.b16 %v266
  %v1066 = vunpack.c.l.b16 %v267
  %v1067 = vunpack.c.h.b16 %v267
  %v1068 = vunpack.c.l.b16 %v268
  %v1069 = vunpack.c.h.b16 %v268
  %v1070 = vunpack.c.l.b16 %v269
  %v1071 = vunpack.c.h.b16 %v269
  %v1072 = vunpack.c.l.b16 %v270
  %v1073 = vunpack.c.h.b16 %v270
  %v1074 = vunpack.c.l.b16 %v271
  %v1075 = vunpack.c.h.b16 %v271
  %v1076 = vunpack.c.l.b16 %v272
  %v1077 = vunpack.c.h.b16 %v272
  %v1078 = vunpack.c.l.b16 %v273
  %v1079 = vunpack.c.h.b16 %v273
  %v1080 = vpack.c.b16 %v572, %v568
  %v1081 = vpack.c.b16 %v573, %v569
  %v1082 = vpack.c.b16 %v574, %v570
  %v1083 = vpack.c.b16 %v575, %v571
  %v1084 = vpack.c.b16 %v580, %v576
  %v1085 = vpack.c.b16 %v581, %v577
  %v1086 = vpack.c.b16 %v582, %v578
  %v1087 = vpack.c.b16 %v583, %v579
  %v1088 = vpack.c.b16 %v588, %v584
  %v1089 = vpack.c.b16 %v589, %v585
  %v1090 = vpack.c.b16 %v590, %v586
  %v1091 = vpack.c.b16 %v591, %v587
  %v1092 = vpack.c.b16 %v596, %v592
  %v1093 = vpack.c.b16 %v597, %v593
  %v1094 = vpack.c.b16 %v598, %v594
  %v1095 = vpack.c.b16 %v599, %v595
  %v1096 = vpack.c.b16 %v604, %v600
  %v1097 = vpack.c.b16 %v605, %v601
  %v1098 = vpack.c.b16 %v606, %v602
  %v1099 = vpack.c.b16 %v607, %v603
  %v1100 = vpack.c.b16 %v612, %v608
  %v1101 = vpack.c.b16 %v613, %v609
  %v1102 = vpack.c.b16 %v614, %v610
  %v1103 = vpack.c.b16 %v615, %v611
  %v1104 = vpack.c.b16 %v620, %v616
  %v1105 = vpack.c.b16 %v621, %v617
  %v1106 = vpack.c.b16 %v622, %v618
  %v1107 = vpack.c.b16 %v623, %v619
  %v1108 = vpack.c.b16 %v628, %v624
  %v1109 = vpack.c.b16 %v629, %v625
  %v1110 = vpack.c.b16 %v630, %v626
  %v1111 = vpack.c.b16 %v631, %v627
  %v1112 = vpack.c.b16 %v636, %v632
  %v1113 = vpack.c.b16 %v637, %v633
  %v1114 = vpack.c.b16 %v638, %v634
  %v1115 = vpack.c.b16 %v639, %v635
  %v1116 = vpack.c.b16 %v644, %v640
  %v1117 = vpack.c.b16 %v645, %v641
  %v1118 = vpack.c.b16 %v646, %v642
  %v1119 = vpack.c.b16 %v647, %v643
  %v1120 = vpack.c.b16 %v652, %v648
  %v1121 = vpack.c.b16 %v653, %v649
  %v1122 = vpack.c.b16 %v654, %v650
  %v1123 = vpack.c.b16 %v655, %v651
  %v1124 = vpack.c.b16 %v660, %v656
  %v1125 = vpack.c.b16 %v661, %v657
  %v1126 = vpack.c.b16 %v662, %v658
  %v1127 = vpack.c.b16 %v663, %v659
  %v1128 = vpack.c.b16 %v668, %v664
  %v1129 = vpack.c.b16 %v669, %v665
  %v1130 = vpack.c.b16 %v670, %v666
  %v1131 = vpack.c.b16 %v671, %v667
  %v1132 = vpack.c.b16 %v676, %v672
  %v1133 = vpack.c.b16 %v677, %v673
  %v1134 = vpack.c.b16 %v678, %v674
  %v1135 = vpack.c.b16 %v679, %v675
  %v1136 = vpack.c.b16 %v684, %v680
  %v1137 = vpack.c.b16 %v685, %v681
  %v1138 = vpack.c.b16 %v686, %v682
  %v1139 = vpack.c.b16 %v687, %v683
  %v1140 = vpack.c.b16 %v692, %v688
  %v1141 = vpack.c.b16 %v693, %v689
  %v1142 = vpack.c.b16 %v694, %v690
  %v1143 = vpack.c.b16 %v695, %v691
  %v1144 = vpack.c.b16 %v700, %v696
  %v1145 = vpack.c.b16 %v701, %v697
  %v1146 = vpack.c.b16 %v702, %v698
  %v1147 = vpack.c.b16 %v703, %v699
  %v1148 = vpack.c.b16 %v708, %v704
  %v1149 = vpack.c.b16 %v709, %v705
  %v1150 = vpack.c.b16 %v710, %v706
  %v1151 = vpack.c.b16 %v711, %v707
  %v1152 = vpack.c.b16 %v716, %v712
  %v1153 = vpack.c.b16 %v717, %v713
  %v1154 = vpack.c.b16 %v718, %v714
  %v1155 = vpack.c.b16 %v719, %v715
  %v1156 = vpack.c.b16 %v724, %v720
  %v1157 = vpack.c.b16 %v725, %v721
  %v1158 = vpack.c.b16 %v726, %v722
  %v1159 = vpack.c.b16 %v727, %v723
  %v1160 = vpack.c.b16 %v732, %v728
  %v1161 = vpack.c.b16 %v733, %v729
  %v1162 = vpack.c.b16 %v734, %v730
  %v1163 = vpack.c.b16 %v735, %v731
  %v1164 = vpack.c.b16 %v740, %v736
  %v1165 = vpack.c.b16 %v741, %v737
  %v1166 = vpack.c.b16 %v742, %v738
  %v1167 = vpack.c.b16 %v743, %v739
  %v1168 = vpack.c.b16 %v748, %v744
  %v1169 = vpack.c.b16 %v749, %v745
  %v1170 = vpack.c.b16 %v750, %v746
  %v1171 = vpack.c.b16 %v751, %v747
  %v1172 = vpack.c.b16 %v756, %v752
  %v1173 = vpack.c.b16 %v757, %v753
  %v1174 = vpack.c.b16 %v758, %v754
  %v1175 = vpack.c.b16 %v759, %v755
  %v1176 = vpack.c.b16 %v764, %v760
  %v1177 = vpack.c.b16 %v765, %v761
  %v1178 = vpack.c.b16 %v766, %v762
  %v1179 = vpack.c.b16 %v767, %v763
  %v1180 = vpack.c.b16 %v772, %v768
  %v1181 = vpack.c.b16 %v773, %v769
  %v1182 = vpack.c.b16 %v774, %v770
  %v1183 = vpack.c.b16 %v775, %v771
  %v1184 = vpack.c.b16 %v780, %v776
  %v1185 = vpack.c.b16 %v781, %v777
  %v1186 = vpack.c.b16 %v782, %v778
  %v1187 = vpack.c.b16 %v783, %v779
  %v1188 = vpack.c.b16 %v788, %v784
  %v1189 = vpack.c.b16 %v789, %v785
  %v1190 = vpack.c.b16 %v790, %v786
  %v1191 = vpack.c.b16 %v791, %v787
  %v1192 = vpack.c.b16 %v796, %v792
  %v1193 = vpack.c.b16 %v797, %v793
  %v1194 = vpack.c.b16 %v798, %v794
  %v1195 = vpack.c.b16 %v799, %v795
  %v1196 = vpack.c.b16 %v804, %v800
  %v1197 = vpack.c.b16 %v805, %v801
  %v1198 = vpack.c.b16 %v806, %v802
  %v1199 = vpack.c.b16 %v807, %v803
  %v1200 = vpack.c.b16 %v812, %v808
  %v1201 = vpack.c.b16 %v813, %v809
  %v1202 = vpack.c.b16 %v814, %v810
  %v1203 = vpack.c.b16 %v815, %v811
  %v1204 = vpack.c.b16 %v820, %v816
  %v1205 = vpack.c.b16 %v821, %v817
  %v1206 = vpack.c.b16 %v822, %v818
  %v1207 = vpack.c.b16 %v823, %v819
  %v1208 = vpack.c.b16 %v828, %v824
  %v1209 = vpack.c.b16 %v829, %v825
  %v1210 = vpack.c.b16 %v830, %v826
  %v1211 = vpack.c.b16 %v831, %v827
  %v1212 = vpack.c.b16 %v836, %v832
  %v1213 = vpack.c.b16 %v837, %v833
  %v1214 = vpack.c.b16 %v838, %v834
  %v1215 = vpack.c.b16 %v839, %v835
  %v1216 = vpack.c.b16 %v844, %v840
  %v1217 = vpack.c.b16 %v845, %v841
  %v1218 = vpack.c.b16 %v846, %v842
  %v1219 = vpack.c.b16 %v847, %v843
  %v1220 = vpack.c.b16 %v852, %v848
  %v1221 = vpack.c.b16 %v853, %v849
  %v1222 = vpack.c.b16 %v854, %v850
  %v1223 = vpack.c.b16 %v855, %v851
  %v1224 = vpack.c.b16 %v860, %v856
  %v1225 = vpack.c.b16 %v861, %v857
  %v1226 = vpack.c.b16 %v862, %v858
  %v1227 = vpack.c.b16 %v863, %v859
  %v1228 = vpack.c.b16 %v868, %v864
  %v1229 = vpack.c.b16 %v869, %v865
  %v1230 = vpack.c.b16 %v870, %v866
  %v1231 = vpack.c.b16 %v871, %v867
  %v1232 = vpack.c.b16 %v876, %v872
  %v1233 = vpack.c.b16 %v877, %v873
  %v1234 = vpack.c.b16 %v878, %v874
  %v1235 = vpack.c.b16 %v879, %v875
  %v1236 = vpack.c.b16 %v884, %v880
  %v1237 = vpack.c.b16 %v885, %v881
  %v1238 = vpack.c.b16 %v886, %v882
  %v1239 = vpack.c.b16 %v887, %v883
  %v1240 = vpack.c.b16 %v892, %v888
  %v1241 = vpack.c.b16 %v893, %v889
  %v1242 = vpack.c.b16 %v894, %v890
  %v1243 = vpack.c.b16 %v895, %v891
  %v1244 = vpack.c.b16 %v900, %v896
  %v1245 = vpack.c.b16 %v901, %v897
  %v1246 = vpack.c.b16 %v902, %v898
  %v1247 = vpack.c.b16 %v903, %v899
  %v1248 = vpack.c.b16 %v908, %v904
  %v1249 = vpack.c.b16 %v909, %v905
  %v1250 = vpack.c.b16 %v910, %v906
  %v1251 = vpack.c.b16 %v911, %v907
  %v1252 = vpack.c.b16 %v916, %v912
  %v1253 = vpack.c.b16 %v917, %v913
  %v1254 = vpack.c.b16 %v918, %v914
  %v1255 = vpack.c.b16 %v919, %v915
  %v1256 = vpack.c.b16 %v924, %v920
  %v1257 = vpack.c.b16 %v925, %v921
  %v1258 = vpack.c.b16 %v926, %v922
  %v1259 = vpack.c.b16 %v927, %v923
  %v1260 = vpack.c.b16 %v932, %v928
  %v1261 = vpack.c.b16 %v933, %v929
  %v1262 = vpack.c.b16 %v934, %v930
  %v1263 = vpack.c.b16 %v935, %v931
  %v1264 = vpack.c.b16 %v940, %v936
  %v1265 = vpack.c.b16 %v941, %v937
  %v1266 = vpack.c.b16 %v942, %v938
  %v1267 = vpack.c.b16 %v943, %v939
  %v1268 = vpack.c.b16 %v948, %v944
  %v1269 = vpack.c.b16 %v949, %v945
  %v1270 = vpack.c.b16 %v950, %v946
  %v1271 = vpack.c.b16 %v951, %v947
  %v1272 = vpack.c.b16 %v956, %v952
  %v1273 = vpack.c.b16 %v957, %v953
  %v1274 = vpack.c.b16 %v958, %v954
  %v1275 = vpack.c.b16 %v959, %v955
  %v1276 = vpack.c.b16 %v964, %v960
  %v1277 = vpack.c.b16 %v965, %v961
  %v1278 = vpack.c.b16 %v966, %v962
  %v1279 = vpack.c.b16 %v967, %v963
  %v1280 = vpack.c.b16 %v972, %v968
  %v1281 = vpack.c.b16 %v973, %v969
  %v1282 = vpack.c.b16 %v974, %v970
  %v1283 = vpack.c.b16 %v975, %v971
  %v1284 = vpack.c.b16 %v980, %v976
  %v1285 = vpack.c.b16 %v981, %v977
  %v1286 = vpack.c.b16 %v982, %v978
  %v1287 = vpack.c.b16 %v983, %v979
  %v1288 = vpack.c.b16 %v988, %v984
  %v1289 = vpack.c.b16 %v989, %v985
  %v1290 = vpack.c.b16 %v990, %v986
  %v1291 = vpack.c.b16 %v991, %v987
  %v1292 = vpack.c.b16 %v996, %v992
  %v1293 = vpack.c.b16 %v997, %v993
  %v1294 = vpack.c.b16 %v998, %v994
  %v1295 = vpack.c.b16 %v999, %v995
  %v1296 = vpack.c.b16 %v1004, %v1000
  %v1297 = vpack.c.b16 %v1005, %v1001
  %v1298 = vpack.c.b16 %v1006, %v1002
  %v1299 = vpack.c.b16 %v1007, %v1003
  %v1300 = vpack.c.b16 %v1012, %v1008
  %v1301 = vpack.c.b16 %v1013, %v1009
  %v1302 = vpack.c.b16 %v1014, %v1010
  %v1303 = vpack.c.b16 %v1015, %v1011
  %v1304 = vpack.c.b16 %v1020, %v1016
  %v1305 = vpack.c.b16 %v1021, %v1017
  %v1306 = vpack.c.b16 %v1022, %v1018
  %v1307 = vpack.c.b16 %v1023, %v1019
  %v1308 = vpack.c.b16 %v1028, %v1024
  %v1309 = vpack.c.b16 %v1029, %v1025
  %v1310 = vpack.c.b16 %v1030, %v1026
  %v1311 = vpack.c.b16 %v1031, %v1027
  %v1312 = vpack.c.b16 %v1036, %v1032
  %v1313 = vpack.c.b16 %v1037, %v1033
  %v1314 = vpack.c.b16 %v1038, %v1034
  %v1315 = vpack.c.b16 %v1039, %v1035
  %v1316 = vpack.c.b16 %v1044, %v1040
  %v1317 = vpack.c.b16 %v1045, %v1041
  %v1318 = vpack.c.b16 %v1046, %v1042
  %v1319 = vpack.c.b16 %v1047, %v1043
  %v1320 = vpack.c.b16 %v1052, %v1048
  %v1321 = vpack.c.b16 %v1053, %v1049
  %v1322 = vpack.c.b16 %v1054, %v1050
  %v1323 = vpack.c.b16 %v1055, %v1051
  %v1324 = vpack.c.b16 %v1060, %v1056
  %v1325 = vpack.c.b16 %v1061, %v1057
  %v1326 = vpack.c.b16 %v1062, %v1058
  %v1327 = vpack.c.b16 %v1063, %v1059
  %v1328 = vpack.c.b16 %v1068, %v1064
  %v1329 = vpack.c.b16 %v1069, %v1065
  %v1330 = vpack.c.b16 %v1070, %v1066
  %v1331 = vpack.c.b16 %v1071, %v1067
  %v1332 = vpack.c.b16 %v1076, %v1072
  %v1333 = vpack.c.b16 %v1077, %v1073
  %v1334 = vpack.c.b16 %v1078, %v1074
  %v1335 = vpack.c.b16 %v1079, %v1075
  %1592 = vmatpush.bf16.msra.mxu0 %v1108
  %1593 = vmatpush.bf16.msra.mxu0 %v1104
  %1594 = vmatpush.bf16.msra.mxu0 %v1100
  %1595 = vmatpush.bf16.msra.mxu0 %v1096
  %1596 = vmatpush.bf16.msra.mxu0 %v1092
  %1597 = vmatpush.bf16.msra.mxu0 %v1088
  %1598 = vmatpush.bf16.msra.mxu0 %v1084
  %1599 = vmatpush.bf16.msra.mxu0 %v1080
  %1600 = vmatmul.bf16.gmra.mxu0 %v296
  %v1601 = vpop.f32.mrf.mxu0
  %v1602 = vadd.f32 %v276, %v1601
  %v1603 = vpop.f32.mrf.mxu0
  %1604 = vdwg.mxu0
  %1605 = vmatpush.bf16.msra.mxu0 %v1140
  %1606 = vmatpush.bf16.msra.mxu0 %v1136
  %1607 = vmatpush.bf16.msra.mxu0 %v1132
  %1608 = vmatpush.bf16.msra.mxu0 %v1128
  %1609 = vmatpush.bf16.msra.mxu0 %v1124
  %1610 = vmatpush.bf16.msra.mxu0 %v1120
  %1611 = vmatpush.bf16.msra.mxu0 %v1116
  %1612 = vmatpush.bf16.msra.mxu0 %v1112
  %1613 = vmatmul.bf16.gmra.mxu0 %v297
  %v1614 = vpop.f32.mrf.mxu0
  %v1615 = vadd.f32 %v1602, %v1614
  %v1616 = vpop.f32.mrf.mxu0
  %1617 = vdwg.mxu0
  %1618 = vmatpush.bf16.msra.mxu0 %v1172
  %1619 = vmatpush.bf16.msra.mxu0 %v1168
  %1620 = vmatpush.bf16.msra.mxu0 %v1164
  %1621 = vmatpush.bf16.msra.mxu0 %v1160
  %1622 = vmatpush.bf16.msra.mxu0 %v1156
  %1623 = vmatpush.bf16.msra.mxu0 %v1152
  %1624 = vmatpush.bf16.msra.mxu0 %v1148
  %1625 = vmatpush.bf16.msra.mxu0 %v1144
  %1626 = vmatmul.bf16.gmra.mxu0 %v298
  %v1627 = vpop.f32.mrf.mxu0
  %v1628 = vadd.f32 %v1615, %v1627
  %v1629 = vpop.f32.mrf.mxu0
  %1630 = vdwg.mxu0
  %1631 = vmatpush.bf16.msra.mxu0 %v1204
  %1632 = vmatpush.bf16.msra.mxu0 %v1200
  %1633 = vmatpush.bf16.msra.mxu0 %v1196
  %1634 = vmatpush.bf16.msra.mxu0 %v1192
  %1635 = vmatpush.bf16.msra.mxu0 %v1188
  %1636 = vmatpush.bf16.msra.mxu0 %v1184
  %1637 = vmatpush.bf16.msra.mxu0 %v1180
  %1638 = vmatpush.bf16.msra.mxu0 %v1176
  %1639 = vmatmul.bf16.gmra.mxu0 %v299
  %v1640 = vpop.f32.mrf.mxu0
  %v1641 = vadd.f32 %v1628, %v1640
  %v1642 = vpop.f32.mrf.mxu0
  %1643 = vdwg.mxu0
  %1644 = vmatpush.bf16.msra.mxu0 %v1236
  %1645 = vmatpush.bf16.msra.mxu0 %v1232
  %1646 = vmatpush.bf16.msra.mxu0 %v1228
  %1647 = vmatpush.bf16.msra.mxu0 %v1224
  %1648 = vmatpush.bf16.msra.mxu0 %v1220
  %1649 = vmatpush.bf16.msra.mxu0 %v1216
  %1650 = vmatpush.bf16.msra.mxu0 %v1212
  %1651 = vmatpush.bf16.msra.mxu0 %v1208
  %1652 = vmatmul.bf16.gmra.mxu0 %v300
  %v1653 = vpop.f32.mrf.mxu0
  %v1654 = vadd.f32 %v1641, %v1653
  %v1655 = vpop.f32.mrf.mxu0
  %1656 = vdwg.mxu0
  %1657 = vmatpush.bf16.msra.mxu0 %v1268
  %1658 = vmatpush.bf16.msra.mxu0 %v1264
  %1659 = vmatpush.bf16.msra.mxu0 %v1260
  %1660 = vmatpush.bf16.msra.mxu0 %v1256
  %1661 = vmatpush.bf16.msra.mxu0 %v1252
  %1662 = vmatpush.bf16.msra.mxu0 %v1248
  %1663 = vmatpush.bf16.msra.mxu0 %v1244
  %1664 = vmatpush.bf16.msra.mxu0 %v1240
  %1665 = vmatmul.bf16.gmra.mxu0 %v301
  %v1666 = vpop.f32.mrf.mxu0
  %v1667 = vadd.f32 %v1654, %v1666
  %v1668 = vpop.f32.mrf.mxu0
  %1669 = vdwg.mxu0
  %1670 = vmatpush.bf16.msra.mxu0 %v1300
  %1671 = vmatpush.bf16.msra.mxu0 %v1296
  %1672 = vmatpush.bf16.msra.mxu0 %v1292
  %1673 = vmatpush.bf16.msra.mxu0 %v1288
  %1674 = vmatpush.bf16.msra.mxu0 %v1284
  %1675 = vmatpush.bf16.msra.mxu0 %v1280
  %1676 = vmatpush.bf16.msra.mxu0 %v1276
  %1677 = vmatpush.bf16.msra.mxu0 %v1272
  %1678 = vmatmul.bf16.gmra.mxu0 %v302
  %v1679 = vpop.f32.mrf.mxu0
  %v1680 = vadd.f32 %v1667, %v1679
  %v1681 = vpop.f32.mrf.mxu0
  %1682 = vdwg.mxu0
  %1683 = vmatpush.bf16.msra.mxu0 %v1332
  %1684 = vmatpush.bf16.msra.mxu0 %v1328
  %1685 = vmatpush.bf16.msra.mxu0 %v1324
  %1686 = vmatpush.bf16.msra.mxu0 %v1320
  %1687 = vmatpush.bf16.msra.mxu0 %v1316
  %1688 = vmatpush.bf16.msra.mxu0 %v1312
  %1689 = vmatpush.bf16.msra.mxu0 %v1308
  %1690 = vmatpush.bf16.msra.mxu0 %v1304
  %1691 = vmatmul.bf16.gmra.mxu0 %v303
  %v1692 = vpop.f32.mrf.mxu0
  %v1693 = vadd.f32 %v1680, %v1692
  %v1694 = vpop.f32.mrf.mxu0
  %1695 = vdwg.mxu0
  %1696 = vmatpush.bf16.msra.mxu0 %v1109
  %1697 = vmatpush.bf16.msra.mxu0 %v1105
  %1698 = vmatpush.bf16.msra.mxu0 %v1101
  %1699 = vmatpush.bf16.msra.mxu0 %v1097
  %1700 = vmatpush.bf16.msra.mxu0 %v1093
  %1701 = vmatpush.bf16.msra.mxu0 %v1089
  %1702 = vmatpush.bf16.msra.mxu0 %v1085
  %1703 = vmatpush.bf16.msra.mxu0 %v1081
  %1704 = vmatmul.bf16.gmra.mxu0 %v296
  %v1705 = vpop.f32.mrf.mxu0
  %v1706 = vadd.f32 %v277, %v1705
  %v1707 = vpop.f32.mrf.mxu0
  %1708 = vdwg.mxu0
  %1709 = vmatpush.bf16.msra.mxu0 %v1141
  %1710 = vmatpush.bf16.msra.mxu0 %v1137
  %1711 = vmatpush.bf16.msra.mxu0 %v1133
  %1712 = vmatpush.bf16.msra.mxu0 %v1129
  %1713 = vmatpush.bf16.msra.mxu0 %v1125
  %1714 = vmatpush.bf16.msra.mxu0 %v1121
  %1715 = vmatpush.bf16.msra.mxu0 %v1117
  %1716 = vmatpush.bf16.msra.mxu0 %v1113
  %1717 = vmatmul.bf16.gmra.mxu0 %v297
  %v1718 = vpop.f32.mrf.mxu0
  %v1719 = vadd.f32 %v1706, %v1718
  %v1720 = vpop.f32.mrf.mxu0
  %1721 = vdwg.mxu0
  %1722 = vmatpush.bf16.msra.mxu0 %v1173
  %1723 = vmatpush.bf16.msra.mxu0 %v1169
  %1724 = vmatpush.bf16.msra.mxu0 %v1165
  %1725 = vmatpush.bf16.msra.mxu0 %v1161
  %1726 = vmatpush.bf16.msra.mxu0 %v1157
  %1727 = vmatpush.bf16.msra.mxu0 %v1153
  %1728 = vmatpush.bf16.msra.mxu0 %v1149
  %1729 = vmatpush.bf16.msra.mxu0 %v1145
  %1730 = vmatmul.bf16.gmra.mxu0 %v298
  %v1731 = vpop.f32.mrf.mxu0
  %v1732 = vadd.f32 %v1719, %v1731
  %v1733 = vpop.f32.mrf.mxu0
  %1734 = vdwg.mxu0
  %1735 = vmatpush.bf16.msra.mxu0 %v1205
  %1736 = vmatpush.bf16.msra.mxu0 %v1201
  %1737 = vmatpush.bf16.msra.mxu0 %v1197
  %1738 = vmatpush.bf16.msra.mxu0 %v1193
  %1739 = vmatpush.bf16.msra.mxu0 %v1189
  %1740 = vmatpush.bf16.msra.mxu0 %v1185
  %1741 = vmatpush.bf16.msra.mxu0 %v1181
  %1742 = vmatpush.bf16.msra.mxu0 %v1177
  %1743 = vmatmul.bf16.gmra.mxu0 %v299
  %v1744 = vpop.f32.mrf.mxu0
  %v1745 = vadd.f32 %v1732, %v1744
  %v1746 = vpop.f32.mrf.mxu0
  %1747 = vdwg.mxu0
  %1748 = vmatpush.bf16.msra.mxu0 %v1237
  %1749 = vmatpush.bf16.msra.mxu0 %v1233
  %1750 = vmatpush.bf16.msra.mxu0 %v1229
  %1751 = vmatpush.bf16.msra.mxu0 %v1225
  %1752 = vmatpush.bf16.msra.mxu0 %v1221
  %1753 = vmatpush.bf16.msra.mxu0 %v1217
  %1754 = vmatpush.bf16.msra.mxu0 %v1213
  %1755 = vmatpush.bf16.msra.mxu0 %v1209
  %1756 = vmatmul.bf16.gmra.mxu0 %v300
  %v1757 = vpop.f32.mrf.mxu0
  %v1758 = vadd.f32 %v1745, %v1757
  %v1759 = vpop.f32.mrf.mxu0
  %1760 = vdwg.mxu0
  %1761 = vmatpush.bf16.msra.mxu0 %v1269
  %1762 = vmatpush.bf16.msra.mxu0 %v1265
  %1763 = vmatpush.bf16.msra.mxu0 %v1261
  %1764 = vmatpush.bf16.msra.mxu0 %v1257
  %1765 = vmatpush.bf16.msra.mxu0 %v1253
  %1766 = vmatpush.bf16.msra.mxu0 %v1249
  %1767 = vmatpush.bf16.msra.mxu0 %v1245
  %1768 = vmatpush.bf16.msra.mxu0 %v1241
  %1769 = vmatmul.bf16.gmra.mxu0 %v301
  %v1770 = vpop.f32.mrf.mxu0
  %v1771 = vadd.f32 %v1758, %v1770
  %v1772 = vpop.f32.mrf.mxu0
  %1773 = vdwg.mxu0
  %1774 = vmatpush.bf16.msra.mxu0 %v1301
  %1775 = vmatpush.bf16.msra.mxu0 %v1297
  %1776 = vmatpush.bf16.msra.mxu0 %v1293
  %1777 = vmatpush.bf16.msra.mxu0 %v1289
  %1778 = vmatpush.bf16.msra.mxu0 %v1285
  %1779 = vmatpush.bf16.msra.mxu0 %v1281
  %1780 = vmatpush.bf16.msra.mxu0 %v1277
  %1781 = vmatpush.bf16.msra.mxu0 %v1273
  %1782 = vmatmul.bf16.gmra.mxu0 %v302
  %v1783 = vpop.f32.mrf.mxu0
  %v1784 = vadd.f32 %v1771, %v1783
  %v1785 = vpop.f32.mrf.mxu0
  %1786 = vdwg.mxu0
  %1787 = vmatpush.bf16.msra.mxu0 %v1333
  %1788 = vmatpush.bf16.msra.mxu0 %v1329
  %1789 = vmatpush.bf16.msra.mxu0 %v1325
  %1790 = vmatpush.bf16.msra.mxu0 %v1321
  %1791 = vmatpush.bf16.msra.mxu0 %v1317
  %1792 = vmatpush.bf16.msra.mxu0 %v1313
  %1793 = vmatpush.bf16.msra.mxu0 %v1309
  %1794 = vmatpush.bf16.msra.mxu0 %v1305
  %1795 = vmatmul.bf16.gmra.mxu0 %v303
  %v1796 = vpop.f32.mrf.mxu0
  %v1797 = vadd.f32 %v1784, %v1796
  %v1798 = vpop.f32.mrf.mxu0
  %1799 = vdwg.mxu0
  %1800 = vmatpush.bf16.msra.mxu0 %v1110
  %1801 = vmatpush.bf16.msra.mxu0 %v1106
  %1802 = vmatpush.bf16.msra.mxu0 %v1102
  %1803 = vmatpush.bf16.msra.mxu0 %v1098
  %1804 = vmatpush.bf16.msra.mxu0 %v1094
  %1805 = vmatpush.bf16.msra.mxu0 %v1090
  %1806 = vmatpush.bf16.msra.mxu0 %v1086
  %1807 = vmatpush.bf16.msra.mxu0 %v1082
  %1808 = vmatmul.bf16.gmra.mxu0 %v296
  %v1809 = vpop.f32.mrf.mxu0
  %v1810 = vadd.f32 %v278, %v1809
  %v1811 = vpop.f32.mrf.mxu0
  %1812 = vdwg.mxu0
  %1813 = vmatpush.bf16.msra.mxu0 %v1142
  %1814 = vmatpush.bf16.msra.mxu0 %v1138
  %1815 = vmatpush.bf16.msra.mxu0 %v1134
  %1816 = vmatpush.bf16.msra.mxu0 %v1130
  %1817 = vmatpush.bf16.msra.mxu0 %v1126
  %1818 = vmatpush.bf16.msra.mxu0 %v1122
  %1819 = vmatpush.bf16.msra.mxu0 %v1118
  %1820 = vmatpush.bf16.msra.mxu0 %v1114
  %1821 = vmatmul.bf16.gmra.mxu0 %v297
  %v1822 = vpop.f32.mrf.mxu0
  %v1823 = vadd.f32 %v1810, %v1822
  %v1824 = vpop.f32.mrf.mxu0
  %1825 = vdwg.mxu0
  %1826 = vmatpush.bf16.msra.mxu0 %v1174
  %1827 = vmatpush.bf16.msra.mxu0 %v1170
  %1828 = vmatpush.bf16.msra.mxu0 %v1166
  %1829 = vmatpush.bf16.msra.mxu0 %v1162
  %1830 = vmatpush.bf16.msra.mxu0 %v1158
  %1831 = vmatpush.bf16.msra.mxu0 %v1154
  %1832 = vmatpush.bf16.msra.mxu0 %v1150
  %1833 = vmatpush.bf16.msra.mxu0 %v1146
  %1834 = vmatmul.bf16.gmra.mxu0 %v298
  %v1835 = vpop.f32.mrf.mxu0
  %v1836 = vadd.f32 %v1823, %v1835
  %v1837 = vpop.f32.mrf.mxu0
  %1838 = vdwg.mxu0
  %1839 = vmatpush.bf16.msra.mxu0 %v1206
  %1840 = vmatpush.bf16.msra.mxu0 %v1202
  %1841 = vmatpush.bf16.msra.mxu0 %v1198
  %1842 = vmatpush.bf16.msra.mxu0 %v1194
  %1843 = vmatpush.bf16.msra.mxu0 %v1190
  %1844 = vmatpush.bf16.msra.mxu0 %v1186
  %1845 = vmatpush.bf16.msra.mxu0 %v1182
  %1846 = vmatpush.bf16.msra.mxu0 %v1178
  %1847 = vmatmul.bf16.gmra.mxu0 %v299
  %v1848 = vpop.f32.mrf.mxu0
  %v1849 = vadd.f32 %v1836, %v1848
  %v1850 = vpop.f32.mrf.mxu0
  %1851 = vdwg.mxu0
  %1852 = vmatpush.bf16.msra.mxu0 %v1238
  %1853 = vmatpush.bf16.msra.mxu0 %v1234
  %1854 = vmatpush.bf16.msra.mxu0 %v1230
  %1855 = vmatpush.bf16.msra.mxu0 %v1226
  %1856 = vmatpush.bf16.msra.mxu0 %v1222
  %1857 = vmatpush.bf16.msra.mxu0 %v1218
  %1858 = vmatpush.bf16.msra.mxu0 %v1214
  %1859 = vmatpush.bf16.msra.mxu0 %v1210
  %1860 = vmatmul.bf16.gmra.mxu0 %v300
  %v1861 = vpop.f32.mrf.mxu0
  %v1862 = vadd.f32 %v1849, %v1861
  %v1863 = vpop.f32.mrf.mxu0
  %1864 = vdwg.mxu0
  %1865 = vmatpush.bf16.msra.mxu0 %v1270
  %1866 = vmatpush.bf16.msra.mxu0 %v1266
  %1867 = vmatpush.bf16.msra.mxu0 %v1262
  %1868 = vmatpush.bf16.msra.mxu0 %v1258
  %1869 = vmatpush.bf16.msra.mxu0 %v1254
  %1870 = vmatpush.bf16.msra.mxu0 %v1250
  %1871 = vmatpush.bf16.msra.mxu0 %v1246
  %1872 = vmatpush.bf16.msra.mxu0 %v1242
  %1873 = vmatmul.bf16.gmra.mxu0 %v301
  %v1874 = vpop.f32.mrf.mxu0
  %v1875 = vadd.f32 %v1862, %v1874
  %v1876 = vpop.f32.mrf.mxu0
  %1877 = vdwg.mxu0
  %1878 = vmatpush.bf16.msra.mxu0 %v1302
  %1879 = vmatpush.bf16.msra.mxu0 %v1298
  %1880 = vmatpush.bf16.msra.mxu0 %v1294
  %1881 = vmatpush.bf16.msra.mxu0 %v1290
  %1882 = vmatpush.bf16.msra.mxu0 %v1286
  %1883 = vmatpush.bf16.msra.mxu0 %v1282
  %1884 = vmatpush.bf16.msra.mxu0 %v1278
  %1885 = vmatpush.bf16.msra.mxu0 %v1274
  %1886 = vmatmul.bf16.gmra.mxu0 %v302
  %v1887 = vpop.f32.mrf.mxu0
  %v1888 = vadd.f32 %v1875, %v1887
  %v1889 = vpop.f32.mrf.mxu0
  %1890 = vdwg.mxu0
  %1891 = vmatpush.bf16.msra.mxu0 %v1334
  %1892 = vmatpush.bf16.msra.mxu0 %v1330
  %1893 = vmatpush.bf16.msra.mxu0 %v1326
  %1894 = vmatpush.bf16.msra.mxu0 %v1322
  %1895 = vmatpush.bf16.msra.mxu0 %v1318
  %1896 = vmatpush.bf16.msra.mxu0 %v1314
  %1897 = vmatpush.bf16.msra.mxu0 %v1310
  %1898 = vmatpush.bf16.msra.mxu0 %v1306
  %1899 = vmatmul.bf16.gmra.mxu0 %v303
  %v1900 = vpop.f32.mrf.mxu0
  %v1901 = vadd.f32 %v1888, %v1900
  %v1902 = vpop.f32.mrf.mxu0
  %1903 = vdwg.mxu0
  %1904 = vmatpush.bf16.msra.mxu0 %v1111
  %1905 = vmatpush.bf16.msra.mxu0 %v1107
  %1906 = vmatpush.bf16.msra.mxu0 %v1103
  %1907 = vmatpush.bf16.msra.mxu0 %v1099
  %1908 = vmatpush.bf16.msra.mxu0 %v1095
  %1909 = vmatpush.bf16.msra.mxu0 %v1091
  %1910 = vmatpush.bf16.msra.mxu0 %v1087
  %1911 = vmatpush.bf16.msra.mxu0 %v1083
  %1912 = vmatmul.bf16.gmra.mxu0 %v296
  %v1913 = vpop.f32.mrf.mxu0
  %v1914 = vadd.f32 %v279, %v1913
  %v1915 = vpop.f32.mrf.mxu0
  %1916 = vdwg.mxu0
  %1917 = vmatpush.bf16.msra.mxu0 %v1143
  %1918 = vmatpush.bf16.msra.mxu0 %v1139
  %1919 = vmatpush.bf16.msra.mxu0 %v1135
  %1920 = vmatpush.bf16.msra.mxu0 %v1131
  %1921 = vmatpush.bf16.msra.mxu0 %v1127
  %1922 = vmatpush.bf16.msra.mxu0 %v1123
  %1923 = vmatpush.bf16.msra.mxu0 %v1119
  %1924 = vmatpush.bf16.msra.mxu0 %v1115
  %1925 = vmatmul.bf16.gmra.mxu0 %v297
  %v1926 = vpop.f32.mrf.mxu0
  %v1927 = vadd.f32 %v1914, %v1926
  %v1928 = vpop.f32.mrf.mxu0
  %1929 = vdwg.mxu0
  %1930 = vmatpush.bf16.msra.mxu0 %v1175
  %1931 = vmatpush.bf16.msra.mxu0 %v1171
  %1932 = vmatpush.bf16.msra.mxu0 %v1167
  %1933 = vmatpush.bf16.msra.mxu0 %v1163
  %1934 = vmatpush.bf16.msra.mxu0 %v1159
  %1935 = vmatpush.bf16.msra.mxu0 %v1155
  %1936 = vmatpush.bf16.msra.mxu0 %v1151
  %1937 = vmatpush.bf16.msra.mxu0 %v1147
  %1938 = vmatmul.bf16.gmra.mxu0 %v298
  %v1939 = vpop.f32.mrf.mxu0
  %v1940 = vadd.f32 %v1927, %v1939
  %v1941 = vpop.f32.mrf.mxu0
  %1942 = vdwg.mxu0
  %1943 = vmatpush.bf16.msra.mxu0 %v1207
  %1944 = vmatpush.bf16.msra.mxu0 %v1203
  %1945 = vmatpush.bf16.msra.mxu0 %v1199
  %1946 = vmatpush.bf16.msra.mxu0 %v1195
  %1947 = vmatpush.bf16.msra.mxu0 %v1191
  %1948 = vmatpush.bf16.msra.mxu0 %v1187
  %1949 = vmatpush.bf16.msra.mxu0 %v1183
  %1950 = vmatpush.bf16.msra.mxu0 %v1179
  %1951 = vmatmul.bf16.gmra.mxu0 %v299
  %v1952 = vpop.f32.mrf.mxu0
  %v1953 = vadd.f32 %v1940, %v1952
  %v1954 = vpop.f32.mrf.mxu0
  %1955 = vdwg.mxu0
  %1956 = vmatpush.bf16.msra.mxu0 %v1239
  %1957 = vmatpush.bf16.msra.mxu0 %v1235
  %1958 = vmatpush.bf16.msra.mxu0 %v1231
  %1959 = vmatpush.bf16.msra.mxu0 %v1227
  %1960 = vmatpush.bf16.msra.mxu0 %v1223
  %1961 = vmatpush.bf16.msra.mxu0 %v1219
  %1962 = vmatpush.bf16.msra.mxu0 %v1215
  %1963 = vmatpush.bf16.msra.mxu0 %v1211
  %1964 = vmatmul.bf16.gmra.mxu0 %v300
  %v1965 = vpop.f32.mrf.mxu0
  %v1966 = vadd.f32 %v1953, %v1965
  %v1967 = vpop.f32.mrf.mxu0
  %1968 = vdwg.mxu0
  %1969 = vmatpush.bf16.msra.mxu0 %v1271
  %1970 = vmatpush.bf16.msra.mxu0 %v1267
  %1971 = vmatpush.bf16.msra.mxu0 %v1263
  %1972 = vmatpush.bf16.msra.mxu0 %v1259
  %1973 = vmatpush.bf16.msra.mxu0 %v1255
  %1974 = vmatpush.bf16.msra.mxu0 %v1251
  %1975 = vmatpush.bf16.msra.mxu0 %v1247
  %1976 = vmatpush.bf16.msra.mxu0 %v1243
  %1977 = vmatmul.bf16.gmra.mxu0 %v301
  %v1978 = vpop.f32.mrf.mxu0
  %v1979 = vadd.f32 %v1966, %v1978
  %v1980 = vpop.f32.mrf.mxu0
  %1981 = vdwg.mxu0
  %1982 = vmatpush.bf16.msra.mxu0 %v1303
  %1983 = vmatpush.bf16.msra.mxu0 %v1299
  %1984 = vmatpush.bf16.msra.mxu0 %v1295
  %1985 = vmatpush.bf16.msra.mxu0 %v1291
  %1986 = vmatpush.bf16.msra.mxu0 %v1287
  %1987 = vmatpush.bf16.msra.mxu0 %v1283
  %1988 = vmatpush.bf16.msra.mxu0 %v1279
  %1989 = vmatpush.bf16.msra.mxu0 %v1275
  %1990 = vmatmul.bf16.gmra.mxu0 %v302
  %v1991 = vpop.f32.mrf.mxu0
  %v1992 = vadd.f32 %v1979, %v1991
  %v1993 = vpop.f32.mrf.mxu0
  %1994 = vdwg.mxu0
  %1995 = vmatpush.bf16.msra.mxu0 %v1335
  %1996 = vmatpush.bf16.msra.mxu0 %v1331
  %1997 = vmatpush.bf16.msra.mxu0 %v1327
  %1998 = vmatpush.bf16.msra.mxu0 %v1323
  %1999 = vmatpush.bf16.msra.mxu0 %v1319
  %2000 = vmatpush.bf16.msra.mxu0 %v1315
  %2001 = vmatpush.bf16.msra.mxu0 %v1311
  %2002 = vmatpush.bf16.msra.mxu0 %v1307
  %2003 = vmatmul.bf16.gmra.mxu0 %v303
  %v2004 = vpop.f32.mrf.mxu0
  %v2005 = vadd.f32 %v1992, %v2004
  %v2006 = vpop.f32.mrf.mxu0
  %2007 = vdwg.mxu0
  %v2008 = vmul.f32 %v1693, 0.2
  %v2009 = vmul.f32 %v1797, 0.2
  %v2010 = vmul.f32 %v1901, 0.2
  %v2011 = vmul.f32 %v2005, 0.2
  %v2012 = vmax.f32 %v1693, %v2008
  %v2013 = vmax.f32 %v1797, %v2009
  %v2014 = vmax.f32 %v1901, %v2010
  %v2015 = vmax.f32 %v2005, %v2011
  %v2016 = vpack.c.bf16 %v2013, %v2012
  %v2017 = vpack.c.bf16 %v2015, %v2014
  %2018 = vst [vmem:[%s3] sm:$0xff] %v2016
  %2019 = vst [vmem:[%s3 + $0x8] sm:$0xff] %v2017
  // Predicated region
  $region14: #{autoencoder3d_forward.13} parent=0 // pred_check
    _
  $region15: #{autoencoder3d_forward.13} parent=0 // pred_check_branch
    %2021 = sbr.rel (0) target = $region17
  $region16: #{autoencoder3d_forward.13} parent=0 // pred_region
    _
  $region17: #{autoencoder3d_forward.13} parent=0 // pred_fallthru
    _
  // Predicated region
  $region18: #{autoencoder3d_forward.13} parent=0 // pred_check
    _
  $region19: #{autoencoder3d_forward.13} parent=0 // pred_check_branch
    %2023 = sbr.rel (0) target = $region21
  $region20: #{autoencoder3d_forward.13} parent=0 // pred_region
    _
  $region21: #{autoencoder3d_forward.13} parent=0 // pred_fallthru
    _

// kernel: autoencoder3d_forward.14
$region0: #{autoencoder3d_forward.14}
  #allocation0 [shape = 'u32[]', space=smem, size = 0x4, offset = 0x4, fixed_abs, tag = 'smem constant byte address 0x4 - core index']
  #allocation1 [shape = 'u32[72,128]{1,0:T(1,128)}', space=vmem, size = 0x9000, scoped, tag = 'internal scratch']
  %s0 = inlined_call_operand.vmem [shape: bf16[64,512], index: 0, kind: input, shape index: {}]
  %s1 = inlined_call_operand.vmem [shape: bf16[512,256], index: 1, kind: input, shape index: {}]
  %s2 = inlined_call_operand.vmem [shape: f32[1,256], index: 2, kind: input, shape index: {}]
  %s3 = inlined_call_operand.vmem [shape: bf16[64,256], index: 3, kind: output, shape index: {}]
  %s4 = sld [smem:[#allocation0]]
  $region22: #{autoencoder3d_forward.14} parent=0
    _
  %s6 = ssub.s32 1, %s4
  %s7 = scalar_select 0, %s6, %s4
  // Predicated region
  $region2: #{autoencoder3d_forward.14} parent=0 // pred_check
    _
  $region3: #{autoencoder3d_forward.14} parent=0 // pred_check_branch
    %9 = sbr.rel (0) target = $region5
  $region4: #{autoencoder3d_forward.14} parent=0 // pred_region
    _
  $region5: #{autoencoder3d_forward.14} parent=0 // pred_fallthru
    _
  // Predicated region
  $region6: #{autoencoder3d_forward.14} parent=0 // pred_check
    _
  $region7: #{autoencoder3d_forward.14} parent=0 // pred_check_branch
    %11 = sbr.rel (0) target = $region9
  $region8: #{autoencoder3d_forward.14} parent=0 // pred_region
    _
  $region9: #{autoencoder3d_forward.14} parent=0 // pred_fallthru
    _
  // Predicated region
  $region10: #{autoencoder3d_forward.14} parent=0 // pred_check
    _
  $region11: #{autoencoder3d_forward.14} parent=0 // pred_check_branch
    %13 = sbr.rel (0) target = $region13
  $region12: #{autoencoder3d_forward.14} parent=0 // pred_region
    _
  $region13: #{autoencoder3d_forward.14} parent=0 // pred_fallthru
    _
  %v14 = vld [vmem:[%s0] sm:$0xff]
  %v15 = vld [vmem:[%s0 + $0x8] sm:$0xff]
  %v16 = vld [vmem:[%s0 + $0x10] sm:$0xff]
  %v17 = vld [vmem:[%s0 + $0x18] sm:$0xff]
  %v18 = vld [vmem:[%s0 + $0x20] sm:$0xff]
  %v19 = vld [vmem:[%s0 + $0x28] sm:$0xff]
  %v20 = vld [vmem:[%s0 + $0x30] sm:$0xff]
  %v21 = vld [vmem:[%s0 + $0x38] sm:$0xff]
  %v22 = vld [vmem:[%s0 + $0x40] sm:$0xff]
  %v23 = vld [vmem:[%s0 + $0x48] sm:$0xff]
  %v24 = vld [vmem:[%s0 + $0x50] sm:$0xff]
  %v25 = vld [vmem:[%s0 + $0x58] sm:$0xff]
  %v26 = vld [vmem:[%s0 + $0x60] sm:$0xff]
  %v27 = vld [vmem:[%s0 + $0x68] sm:$0xff]
  %v28 = vld [vmem:[%s0 + $0x70] sm:$0xff]
  %v29 = vld [vmem:[%s0 + $0x78] sm:$0xff]
  %v30 = vld [vmem:[%s1] sm:$0xff]
  %v31 = vld [vmem:[%s1 + $0x8] sm:$0xff]
  %v32 = vld [vmem:[%s1 + $0x10] sm:$0xff]
  %v33 = vld [vmem:[%s1 + $0x18] sm:$0xff]
  %v34 = vld [vmem:[%s1 + $0x20] sm:$0xff]
  %v35 = vld [vmem:[%s1 + $0x28] sm:$0xff]
  %v36 = vld [vmem:[%s1 + $0x30] sm:$0xff]
  %v37 = vld [vmem:[%s1 + $0x38] sm:$0xff]
  %v38 = vld [vmem:[%s1 + $0x40] sm:$0xff]
  %v39 = vld [vmem:[%s1 + $0x48] sm:$0xff]
  %v40 = vld [vmem:[%s1 + $0x50] sm:$0xff]
  %v41 = vld [vmem:[%s1 + $0x58] sm:$0xff]
  %v42 = vld [vmem:[%s1 + $0x60] sm:$0xff]
  %v43 = vld [vmem:[%s1 + $0x68] sm:$0xff]
  %v44 = vld [vmem:[%s1 + $0x70] sm:$0xff]
  %v45 = vld [vmem:[%s1 + $0x78] sm:$0xff]
  %v46 = vld [vmem:[%s1 + $0x80] sm:$0xff]
  %v47 = vld [vmem:[%s1 + $0x88] sm:$0xff]
  %v48 = vld [vmem:[%s1 + $0x90] sm:$0xff]
  %v49 = vld [vmem:[%s1 + $0x98] sm:$0xff]
  %v50 = vld [vmem:[%s1 + $0xa0] sm:$0xff]
  %v51 = vld [vmem:[%s1 + $0xa8] sm:$0xff]
  %v52 = vld [vmem:[%s1 + $0xb0] sm:$0xff]
  %v53 = vld [vmem:[%s1 + $0xb8] sm:$0xff]
  %v54 = vld [vmem:[%s1 + $0xc0] sm:$0xff]
  %v55 = vld [vmem:[%s1 + $0xc8] sm:$0xff]
  %v56 = vld [vmem:[%s1 + $0xd0] sm:$0xff]
  %v57 = vld [vmem:[%s1 + $0xd8] sm:$0xff]
  %v58 = vld [vmem:[%s1 + $0xe0] sm:$0xff]
  %v59 = vld [vmem:[%s1 + $0xe8] sm:$0xff]
  %v60 = vld [vmem:[%s1 + $0xf0] sm:$0xff]
  %v61 = vld [vmem:[%s1 + $0xf8] sm:$0xff]
  %v62 = vld [vmem:[%s1 + $0x100] sm:$0xff]
  %v63 = vld [vmem:[%s1 + $0x108] sm:$0xff]
  %v64 = vld [vmem:[%s1 + $0x110] sm:$0xff]
  %v65 = vld [vmem:[%s1 + $0x118] sm:$0xff]
  %v66 = vld [vmem:[%s1 + $0x120] sm:$0xff]
  %v67 = vld [vmem:[%s1 + $0x128] sm:$0xff]
  %v68 = vld [vmem:[%s1 + $0x130] sm:$0xff]
  %v69 = vld [vmem:[%s1 + $0x138] sm:$0xff]
  %v70 = vld [vmem:[%s1 + $0x140] sm:$0xff]
  %v71 = vld [vmem:[%s1 + $0x148] sm:$0xff]
  %v72 = vld [vmem:[%s1 + $0x150] sm:$0xff]
  %v73 = vld [vmem:[%s1 + $0x158] sm:$0xff]
  %v74 = vld [vmem:[%s1 + $0x160] sm:$0xff]
  %v75 = vld [vmem:[%s1 + $0x168] sm:$0xff]
  %v76 = vld [vmem:[%s1 + $0x170] sm:$0xff]
  %v77 = vld [vmem:[%s1 + $0x178] sm:$0xff]
  %v78 = vld [vmem:[%s1 + $0x180] sm:$0xff]
  %v79 = vld [vmem:[%s1 + $0x188] sm:$0xff]
  %v80 = vld [vmem:[%s1 + $0x190] sm:$0xff]
  %v81 = vld [vmem:[%s1 + $0x198] sm:$0xff]
  %v82 = vld [vmem:[%s1 + $0x1a0] sm:$0xff]
  %v83 = vld [vmem:[%s1 + $0x1a8] sm:$0xff]
  %v84 = vld [vmem:[%s1 + $0x1b0] sm:$0xff]
  %v85 = vld [vmem:[%s1 + $0x1b8] sm:$0xff]
  %v86 = vld [vmem:[%s1 + $0x1c0] sm:$0xff]
  %v87 = vld [vmem:[%s1 + $0x1c8] sm:$0xff]
  %v88 = vld [vmem:[%s1 + $0x1d0] sm:$0xff]
  %v89 = vld [vmem:[%s1 + $0x1d8] sm:$0xff]
  %v90 = vld [vmem:[%s1 + $0x1e0] sm:$0xff]
  %v91 = vld [vmem:[%s1 + $0x1e8] sm:$0xff]
  %v92 = vld [vmem:[%s1 + $0x1f0] sm:$0xff]
  %v93 = vld [vmem:[%s1 + $0x1f8] sm:$0xff]
  %v94 = vld [vmem:[%s2] sm:$0x3]
  %v96 = vperm.slane %v94, 0
  %v97 = vperm.slane %v94, 1
  %v116 = vunpack.c.l.b16 %v14
  %v117 = vunpack.c.h.b16 %v14
  %v118 = vunpack.c.l.b16 %v15
  %v119 = vunpack.c.h.b16 %v15
  %v120 = vunpack.c.l.b16 %v16
  %v121 = vunpack.c.h.b16 %v16
  %v122 = vunpack.c.l.b16 %v17
  %v123 = vunpack.c.h.b16 %v17
  %v124 = vunpack.c.l.b16 %v18
  %v125 = vunpack.c.h.b16 %v18
  %v126 = vunpack.c.l.b16 %v19
  %v127 = vunpack.c.h.b16 %v19
  %v128 = vunpack.c.l.b16 %v20
  %v129 = vunpack.c.h.b16 %v20
  %v130 = vunpack.c.l.b16 %v21
  %v131 = vunpack.c.h.b16 %v21
  %v132 = vunpack.c.l.b16 %v22
  %v133 = vunpack.c.h.b16 %v22
  %v134 = vunpack.c.l.b16 %v23
  %v135 = vunpack.c.h.b16 %v23
  %v136 = vunpack.c.l.b16 %v24
  %v137 = vunpack.c.h.b16 %v24
  %v138 = vunpack.c.l.b16 %v25
  %v139 = vunpack.c.h.b16 %v25
  %v140 = vunpack.c.l.b16 %v26
  %v141 = vunpack.c.h.b16 %v26
  %v142 = vunpack.c.l.b16 %v27
  %v143 = vunpack.c.h.b16 %v27
  %v144 = vunpack.c.l.b16 %v28
  %v145 = vunpack.c.h.b16 %v28
  %v146 = vunpack.c.l.b16 %v29
  %v147 = vunpack.c.h.b16 %v29
  %v148 = vpack.c.b16 %v120, %v116
  %v149 = vpack.c.b16 %v121, %v117
  %v150 = vpack.c.b16 %v122, %v118
  %v151 = vpack.c.b16 %v123, %v119
  %v152 = vpack.c.b16 %v128, %v124
  %v153 = vpack.c.b16 %v129, %v125
  %v154 = vpack.c.b16 %v130, %v126
  %v155 = vpack.c.b16 %v131, %v127
  %v156 = vpack.c.b16 %v136, %v132
  %v157 = vpack.c.b16 %v137, %v133
  %v158 = vpack.c.b16 %v138, %v134
  %v159 = vpack.c.b16 %v139, %v135
  %v160 = vpack.c.b16 %v144, %v140
  %v161 = vpack.c.b16 %v145, %v141
  %v162 = vpack.c.b16 %v146, %v142
  %v163 = vpack.c.b16 %v147, %v143
  %v244 = vunpack.c.l.b16 %v30
  %v245 = vunpack.c.h.b16 %v30
  %v246 = vunpack.c.l.b16 %v31
  %v247 = vunpack.c.h.b16 %v31
  %v248 = vunpack.c.l.b16 %v32
  %v249 = vunpack.c.h.b16 %v32
  %v250 = vunpack.c.l.b16 %v33
  %v251 = vunpack.c.h.b16 %v33
  %v252 = vunpack.c.l.b16 %v34
  %v253 = vunpack.c.h.b16 %v34
  %v254 = vunpack.c.l.b16 %v35
  %v255 = vunpack.c.h.b16 %v35
  %v256 = vunpack.c.l.b16 %v36
  %v257 = vunpack.c.h.b16 %v36
  %v258 = vunpack.c.l.b16 %v37
  %v259 = vunpack.c.h.b16 %v37
  %v260 = vunpack.c.l.b16 %v38
  %v261 = vunpack.c.h.b16 %v38
  %v262 = vunpack.c.l.b16 %v39
  %v263 = vunpack.c.h.b16 %v39
  %v264 = vunpack.c.l.b16 %v40
  %v265 = vunpack.c.h.b16 %v40
  %v266 = vunpack.c.l.b16 %v41
  %v267 = vunpack.c.h.b16 %v41
  %v268 = vunpack.c.l.b16 %v42
  %v269 = vunpack.c.h.b16 %v42
  %v270 = vunpack.c.l.b16 %v43
  %v271 = vunpack.c.h.b16 %v43
  %v272 = vunpack.c.l.b16 %v44
  %v273 = vunpack.c.h.b16 %v44
  %v274 = vunpack.c.l.b16 %v45
  %v275 = vunpack.c.h.b16 %v45
  %v276 = vunpack.c.l.b16 %v46
  %v277 = vunpack.c.h.b16 %v46
  %v278 = vunpack.c.l.b16 %v47
  %v279 = vunpack.c.h.b16 %v47
  %v280 = vunpack.c.l.b16 %v48
  %v281 = vunpack.c.h.b16 %v48
  %v282 = vunpack.c.l.b16 %v49
  %v283 = vunpack.c.h.b16 %v49
  %v284 = vunpack.c.l.b16 %v50
  %v285 = vunpack.c.h.b16 %v50
  %v286 = vunpack.c.l.b16 %v51
  %v287 = vunpack.c.h.b16 %v51
  %v288 = vunpack.c.l.b16 %v52
  %v289 = vunpack.c.h.b16 %v52
  %v290 = vunpack.c.l.b16 %v53
  %v291 = vunpack.c.h.b16 %v53
  %v292 = vunpack.c.l.b16 %v54
  %v293 = vunpack.c.h.b16 %v54
  %v294 = vunpack.c.l.b16 %v55
  %v295 = vunpack.c.h.b16 %v55
  %v296 = vunpack.c.l.b16 %v56
  %v297 = vunpack.c.h.b16 %v56
  %v298 = vunpack.c.l.b16 %v57
  %v299 = vunpack.c.h.b16 %v57
  %v300 = vunpack.c.l.b16 %v58
  %v301 = vunpack.c.h.b16 %v58
  %v302 = vunpack.c.l.b16 %v59
  %v303 = vunpack.c.h.b16 %v59
  %v304 = vunpack.c.l.b16 %v60
  %v305 = vunpack.c.h.b16 %v60
  %v306 = vunpack.c.l.b16 %v61
  %v307 = vunpack.c.h.b16 %v61
  %v308 = vunpack.c.l.b16 %v62
  %v309 = vunpack.c.h.b16 %v62
  %v310 = vunpack.c.l.b16 %v63
  %v311 = vunpack.c.h.b16 %v63
  %v312 = vunpack.c.l.b16 %v64
  %v313 = vunpack.c.h.b16 %v64
  %v314 = vunpack.c.l.b16 %v65
  %v315 = vunpack.c.h.b16 %v65
  %v316 = vunpack.c.l.b16 %v66
  %v317 = vunpack.c.h.b16 %v66
  %v318 = vunpack.c.l.b16 %v67
  %v319 = vunpack.c.h.b16 %v67
  %v320 = vunpack.c.l.b16 %v68
  %v321 = vunpack.c.h.b16 %v68
  %v322 = vunpack.c.l.b16 %v69
  %v323 = vunpack.c.h.b16 %v69
  %v324 = vunpack.c.l.b16 %v70
  %v325 = vunpack.c.h.b16 %v70
  %v326 = vunpack.c.l.b16 %v71
  %v327 = vunpack.c.h.b16 %v71
  %v328 = vunpack.c.l.b16 %v72
  %v329 = vunpack.c.h.b16 %v72
  %v330 = vunpack.c.l.b16 %v73
  %v331 = vunpack.c.h.b16 %v73
  %v332 = vunpack.c.l.b16 %v74
  %v333 = vunpack.c.h.b16 %v74
  %v334 = vunpack.c.l.b16 %v75
  %v335 = vunpack.c.h.b16 %v75
  %v336 = vunpack.c.l.b16 %v76
  %v337 = vunpack.c.h.b16 %v76
  %v338 = vunpack.c.l.b16 %v77
  %v339 = vunpack.c.h.b16 %v77
  %v340 = vunpack.c.l.b16 %v78
  %v341 = vunpack.c.h.b16 %v78
  %v342 = vunpack.c.l.b16 %v79
  %v343 = vunpack.c.h.b16 %v79
  %v344 = vunpack.c.l.b16 %v80
  %v345 = vunpack.c.h.b16 %v80
  %v346 = vunpack.c.l.b16 %v81
  %v347 = vunpack.c.h.b16 %v81
  %v348 = vunpack.c.l.b16 %v82
  %v349 = vunpack.c.h.b16 %v82
  %v350 = vunpack.c.l.b16 %v83
  %v351 = vunpack.c.h.b16 %v83
  %v352 = vunpack.c.l.b16 %v84
  %v353 = vunpack.c.h.b16 %v84
  %v354 = vunpack.c.l.b16 %v85
  %v355 = vunpack.c.h.b16 %v85
  %v356 = vunpack.c.l.b16 %v86
  %v357 = vunpack.c.h.b16 %v86
  %v358 = vunpack.c.l.b16 %v87
  %v359 = vunpack.c.h.b16 %v87
  %v360 = vunpack.c.l.b16 %v88
  %v361 = vunpack.c.h.b16 %v88
  %v362 = vunpack.c.l.b16 %v89
  %v363 = vunpack.c.h.b16 %v89
  %v364 = vunpack.c.l.b16 %v90
  %v365 = vunpack.c.h.b16 %v90
  %v366 = vunpack.c.l.b16 %v91
  %v367 = vunpack.c.h.b16 %v91
  %v368 = vunpack.c.l.b16 %v92
  %v369 = vunpack.c.h.b16 %v92
  %v370 = vunpack.c.l.b16 %v93
  %v371 = vunpack.c.h.b16 %v93
  %v372 = vpack.c.b16 %v246, %v244
  %v373 = vpack.c.b16 %v247, %v245
  %v374 = vpack.c.b16 %v250, %v248
  %v375 = vpack.c.b16 %v251, %v249
  %v376 = vpack.c.b16 %v254, %v252
  %v377 = vpack.c.b16 %v255, %v253
  %v378 = vpack.c.b16 %v258, %v256
  %v379 = vpack.c.b16 %v259, %v257
  %v380 = vpack.c.b16 %v262, %v260
  %v381 = vpack.c.b16 %v263, %v261
  %v382 = vpack.c.b16 %v266, %v264
  %v383 = vpack.c.b16 %v267, %v265
  %v384 = vpack.c.b16 %v270, %v268
  %v385 = vpack.c.b16 %v271, %v269
  %v386 = vpack.c.b16 %v274, %v272
  %v387 = vpack.c.b16 %v275, %v273
  %v388 = vpack.c.b16 %v278, %v276
  %v389 = vpack.c.b16 %v279, %v277
  %v390 = vpack.c.b16 %v282, %v280
  %v391 = vpack.c.b16 %v283, %v281
  %v392 = vpack.c.b16 %v286, %v284
  %v393 = vpack.c.b16 %v287, %v285
  %v394 = vpack.c.b16 %v290, %v288
  %v395 = vpack.c.b16 %v291, %v289
  %v396 = vpack.c.b16 %v294, %v292
  %v397 = vpack.c.b16 %v295, %v293
  %v398 = vpack.c.b16 %v298, %v296
  %v399 = vpack.c.b16 %v299, %v297
  %v400 = vpack.c.b16 %v302, %v300
  %v401 = vpack.c.b16 %v303, %v301
  %v402 = vpack.c.b16 %v306, %v304
  %v403 = vpack.c.b16 %v307, %v305
  %v404 = vpack.c.b16 %v310, %v308
  %v405 = vpack.c.b16 %v311, %v309
  %v406 = vpack.c.b16 %v314, %v312
  %v407 = vpack.c.b16 %v315, %v313
  %v408 = vpack.c.b16 %v318, %v316
  %v409 = vpack.c.b16 %v319, %v317
  %v410 = vpack.c.b16 %v322, %v320
  %v411 = vpack.c.b16 %v323, %v321
  %v412 = vpack.c.b16 %v326, %v324
  %v413 = vpack.c.b16 %v327, %v325
  %v414 = vpack.c.b16 %v330, %v328
  %v415 = vpack.c.b16 %v331, %v329
  %v416 = vpack.c.b16 %v334, %v332
  %v417 = vpack.c.b16 %v335, %v333
  %v418 = vpack.c.b16 %v338, %v336
  %v419 = vpack.c.b16 %v339, %v337
  %v420 = vpack.c.b16 %v342, %v340
  %v421 = vpack.c.b16 %v343, %v341
  %v422 = vpack.c.b16 %v346, %v344
  %v423 = vpack.c.b16 %v347, %v345
  %v424 = vpack.c.b16 %v350, %v348
  %v425 = vpack.c.b16 %v351, %v349
  %v426 = vpack.c.b16 %v354, %v352
  %v427 = vpack.c.b16 %v355, %v353
  %v428 = vpack.c.b16 %v358, %v356
  %v429 = vpack.c.b16 %v359, %v357
  %v430 = vpack.c.b16 %v362, %v360
  %v431 = vpack.c.b16 %v363, %v361
  %v432 = vpack.c.b16 %v366, %v364
  %v433 = vpack.c.b16 %v367, %v365
  %v434 = vpack.c.b16 %v370, %v368
  %v435 = vpack.c.b16 %v371, %v369
  %500 = vmatpush.bf16.msra.mxu0 %v386
  %501 = vmatpush.bf16.msra.mxu0 %v384
  %502 = vmatpush.bf16.msra.mxu0 %v382
  %503 = vmatpush.bf16.msra.mxu0 %v380
  %504 = vmatpush.bf16.msra.mxu0 %v378
  %505 = vmatpush.bf16.msra.mxu0 %v376
  %506 = vmatpush.bf16.msra.mxu0 %v374
  %507 = vmatpush.bf16.msra.mxu0 %v372
  %508 = vmatmul.bf16.gmra.mxu0 %v148
  %v509 = vpop.f32.mrf.mxu0
  %v510 = vadd.f32 %v96, %v509
  %v511 = vpop.f32.mrf.mxu0
  %v512 = vadd.f32 %v96, %v511
  %513 = vmatmul.bf16.gmra.mxu0 %v152
  %v514 = vpop.f32.mrf.mxu0
  %v515 = vadd.f32 %v96, %v514
  %v516 = vpop.f32.mrf.mxu0
  %v517 = vadd.f32 %v96, %v516
  %518 = vmatmul.bf16.gmra.mxu0 %v156
  %v519 = vpop.f32.mrf.mxu0
  %v520 = vadd.f32 %v96, %v519
  %v521 = vpop.f32.mrf.mxu0
  %v522 = vadd.f32 %v96, %v521
  %523 = vmatmul.bf16.gmra.mxu0 %v160
  %v524 = vpop.f32.mrf.mxu0
  %v525 = vadd.f32 %v96, %v524
  %v526 = vpop.f32.mrf.mxu0
  %v527 = vadd.f32 %v96, %v526
  %528 = vdwg.mxu0
  %529 = vmatpush.bf16.msra.mxu0 %v402
  %530 = vmatpush.bf16.msra.mxu0 %v400
  %531 = vmatpush.bf16.msra.mxu0 %v398
  %532 = vmatpush.bf16.msra.mxu0 %v396
  %533 = vmatpush.bf16.msra.mxu0 %v394
  %534 = vmatpush.bf16.msra.mxu0 %v392
  %535 = vmatpush.bf16.msra.mxu0 %v390
  %536 = vmatpush.bf16.msra.mxu0 %v388
  %537 = vmatmul.bf16.gmra.mxu0 %v149
  %v538 = vpop.f32.mrf.mxu0
  %v539 = vadd.f32 %v510, %v538
  %v540 = vpop.f32.mrf.mxu0
  %v541 = vadd.f32 %v512, %v540
  %542 = vmatmul.bf16.gmra.mxu0 %v153
  %v543 = vpop.f32.mrf.mxu0
  %v544 = vadd.f32 %v515, %v543
  %v545 = vpop.f32.mrf.mxu0
  %v546 = vadd.f32 %v517, %v545
  %547 = vmatmul.bf16.gmra.mxu0 %v157
  %v548 = vpop.f32.mrf.mxu0
  %v549 = vadd.f32 %v520, %v548
  %v550 = vpop.f32.mrf.mxu0
  %v551 = vadd.f32 %v522, %v550
  %552 = vmatmul.bf16.gmra.mxu0 %v161
  %v553 = vpop.f32.mrf.mxu0
  %v554 = vadd.f32 %v525, %v553
  %v555 = vpop.f32.mrf.mxu0
  %v556 = vadd.f32 %v527, %v555
  %557 = vdwg.mxu0
  %558 = vmatpush.bf16.msra.mxu0 %v418
  %559 = vmatpush.bf16.msra.mxu0 %v416
  %560 = vmatpush.bf16.msra.mxu0 %v414
  %561 = vmatpush.bf16.msra.mxu0 %v412
  %562 = vmatpush.bf16.msra.mxu0 %v410
  %563 = vmatpush.bf16.msra.mxu0 %v408
  %564 = vmatpush.bf16.msra.mxu0 %v406
  %565 = vmatpush.bf16.msra.mxu0 %v404
  %566 = vmatmul.bf16.gmra.mxu0 %v150
  %v567 = vpop.f32.mrf.mxu0
  %v568 = vadd.f32 %v539, %v567
  %v569 = vpop.f32.mrf.mxu0
  %v570 = vadd.f32 %v541, %v569
  %571 = vmatmul.bf16.gmra.mxu0 %v154
  %v572 = vpop.f32.mrf.mxu0
  %v573 = vadd.f32 %v544, %v572
  %v574 = vpop.f32.mrf.mxu0
  %v575 = vadd.f32 %v546, %v574
  %576 = vmatmul.bf16.gmra.mxu0 %v158
  %v577 = vpop.f32.mrf.mxu0
  %v578 = vadd.f32 %v549, %v577
  %v579 = vpop.f32.mrf.mxu0
  %v580 = vadd.f32 %v551, %v579
  %581 = vmatmul.bf16.gmra.mxu0 %v162
  %v582 = vpop.f32.mrf.mxu0
  %v583 = vadd.f32 %v554, %v582
  %v584 = vpop.f32.mrf.mxu0
  %v585 = vadd.f32 %v556, %v584
  %586 = vdwg.mxu0
  %587 = vmatpush.bf16.msra.mxu0 %v434
  %588 = vmatpush.bf16.msra.mxu0 %v432
  %589 = vmatpush.bf16.msra.mxu0 %v430
  %590 = vmatpush.bf16.msra.mxu0 %v428
  %591 = vmatpush.bf16.msra.mxu0 %v426
  %592 = vmatpush.bf16.msra.mxu0 %v424
  %593 = vmatpush.bf16.msra.mxu0 %v422
  %594 = vmatpush.bf16.msra.mxu0 %v420
  %595 = vmatmul.bf16.gmra.mxu0 %v151
  %v596 = vpop.f32.mrf.mxu0
  %v597 = vadd.f32 %v568, %v596
  %v598 = vpop.f32.mrf.mxu0
  %v599 = vadd.f32 %v570, %v598
  %600 = vmatmul.bf16.gmra.mxu0 %v155
  %v601 = vpop.f32.mrf.mxu0
  %v602 = vadd.f32 %v573, %v601
  %v603 = vpop.f32.mrf.mxu0
  %v604 = vadd.f32 %v575, %v603
  %605 = vmatmul.bf16.gmra.mxu0 %v159
  %v606 = vpop.f32.mrf.mxu0
  %v607 = vadd.f32 %v578, %v606
  %v608 = vpop.f32.mrf.mxu0
  %v609 = vadd.f32 %v580, %v608
  %610 = vmatmul.bf16.gmra.mxu0 %v163
  %v611 = vpop.f32.mrf.mxu0
  %v612 = vadd.f32 %v583, %v611
  %v613 = vpop.f32.mrf.mxu0
  %v614 = vadd.f32 %v585, %v613
  %615 = vdwg.mxu0
  %616 = vmatpush.bf16.msra.mxu0 %v387
  %617 = vmatpush.bf16.msra.mxu0 %v385
  %618 = vmatpush.bf16.msra.mxu0 %v383
  %619 = vmatpush.bf16.msra.mxu0 %v381
  %620 = vmatpush.bf16.msra.mxu0 %v379
  %621 = vmatpush.bf16.msra.mxu0 %v377
  %622 = vmatpush.bf16.msra.mxu0 %v375
  %623 = vmatpush.bf16.msra.mxu0 %v373
  %624 = vmatmul.bf16.gmra.mxu0 %v148
  %v625 = vpop.f32.mrf.mxu0
  %v626 = vadd.f32 %v97, %v625
  %v627 = vpop.f32.mrf.mxu0
  %v628 = vadd.f32 %v97, %v627
  %629 = vmatmul.bf16.gmra.mxu0 %v152
  %v630 = vpop.f32.mrf.mxu0
  %v631 = vadd.f32 %v97, %v630
  %v632 = vpop.f32.mrf.mxu0
  %v633 = vadd.f32 %v97, %v632
  %634 = vmatmul.bf16.gmra.mxu0 %v156
  %v635 = vpop.f32.mrf.mxu0
  %v636 = vadd.f32 %v97, %v635
  %v637 = vpop.f32.mrf.mxu0
  %v638 = vadd.f32 %v97, %v637
  %639 = vmatmul.bf16.gmra.mxu0 %v160
  %v640 = vpop.f32.mrf.mxu0
  %v641 = vadd.f32 %v97, %v640
  %v642 = vpop.f32.mrf.mxu0
  %v643 = vadd.f32 %v97, %v642
  %644 = vdwg.mxu0
  %645 = vmatpush.bf16.msra.mxu0 %v403
  %646 = vmatpush.bf16.msra.mxu0 %v401
  %647 = vmatpush.bf16.msra.mxu0 %v399
  %648 = vmatpush.bf16.msra.mxu0 %v397
  %649 = vmatpush.bf16.msra.mxu0 %v395
  %650 = vmatpush.bf16.msra.mxu0 %v393
  %651 = vmatpush.bf16.msra.mxu0 %v391
  %652 = vmatpush.bf16.msra.mxu0 %v389
  %653 = vmatmul.bf16.gmra.mxu0 %v149
  %v654 = vpop.f32.mrf.mxu0
  %v655 = vadd.f32 %v626, %v654
  %v656 = vpop.f32.mrf.mxu0
  %v657 = vadd.f32 %v628, %v656
  %658 = vmatmul.bf16.gmra.mxu0 %v153
  %v659 = vpop.f32.mrf.mxu0
  %v660 = vadd.f32 %v631, %v659
  %v661 = vpop.f32.mrf.mxu0
  %v662 = vadd.f32 %v633, %v661
  %663 = vmatmul.bf16.gmra.mxu0 %v157
  %v664 = vpop.f32.mrf.mxu0
  %v665 = vadd.f32 %v636, %v664
  %v666 = vpop.f32.mrf.mxu0
  %v667 = vadd.f32 %v638, %v666
  %668 = vmatmul.bf16.gmra.mxu0 %v161
  %v669 = vpop.f32.mrf.mxu0
  %v670 = vadd.f32 %v641, %v669
  %v671 = vpop.f32.mrf.mxu0
  %v672 = vadd.f32 %v643, %v671
  %673 = vdwg.mxu0
  %674 = vmatpush.bf16.msra.mxu0 %v419
  %675 = vmatpush.bf16.msra.mxu0 %v417
  %676 = vmatpush.bf16.msra.mxu0 %v415
  %677 = vmatpush.bf16.msra.mxu0 %v413
  %678 = vmatpush.bf16.msra.mxu0 %v411
  %679 = vmatpush.bf16.msra.mxu0 %v409
  %680 = vmatpush.bf16.msra.mxu0 %v407
  %681 = vmatpush.bf16.msra.mxu0 %v405
  %682 = vmatmul.bf16.gmra.mxu0 %v150
  %v683 = vpop.f32.mrf.mxu0
  %v684 = vadd.f32 %v655, %v683
  %v685 = vpop.f32.mrf.mxu0
  %v686 = vadd.f32 %v657, %v685
  %687 = vmatmul.bf16.gmra.mxu0 %v154
  %v688 = vpop.f32.mrf.mxu0
  %v689 = vadd.f32 %v660, %v688
  %v690 = vpop.f32.mrf.mxu0
  %v691 = vadd.f32 %v662, %v690
  %692 = vmatmul.bf16.gmra.mxu0 %v158
  %v693 = vpop.f32.mrf.mxu0
  %v694 = vadd.f32 %v665, %v693
  %v695 = vpop.f32.mrf.mxu0
  %v696 = vadd.f32 %v667, %v695
  %697 = vmatmul.bf16.gmra.mxu0 %v162
  %v698 = vpop.f32.mrf.mxu0
  %v699 = vadd.f32 %v670, %v698
  %v700 = vpop.f32.mrf.mxu0
  %v701 = vadd.f32 %v672, %v700
  %702 = vdwg.mxu0
  %703 = vmatpush.bf16.msra.mxu0 %v435
  %704 = vmatpush.bf16.msra.mxu0 %v433
  %705 = vmatpush.bf16.msra.mxu0 %v431
  %706 = vmatpush.bf16.msra.mxu0 %v429
  %707 = vmatpush.bf16.msra.mxu0 %v427
  %708 = vmatpush.bf16.msra.mxu0 %v425
  %709 = vmatpush.bf16.msra.mxu0 %v423
  %710 = vmatpush.bf16.msra.mxu0 %v421
  %711 = vmatmul.bf16.gmra.mxu0 %v151
  %v712 = vpop.f32.mrf.mxu0
  %v713 = vadd.f32 %v684, %v712
  %v714 = vpop.f32.mrf.mxu0
  %v715 = vadd.f32 %v686, %v714
  %716 = vmatmul.bf16.gmra.mxu0 %v155
  %v717 = vpop.f32.mrf.mxu0
  %v718 = vadd.f32 %v689, %v717
  %v719 = vpop.f32.mrf.mxu0
  %v720 = vadd.f32 %v691, %v719
  %721 = vmatmul.bf16.gmra.mxu0 %v159
  %v722 = vpop.f32.mrf.mxu0
  %v723 = vadd.f32 %v694, %v722
  %v724 = vpop.f32.mrf.mxu0
  %v725 = vadd.f32 %v696, %v724
  %726 = vmatmul.bf16.gmra.mxu0 %v163
  %v727 = vpop.f32.mrf.mxu0
  %v728 = vadd.f32 %v699, %v727
  %v729 = vpop.f32.mrf.mxu0
  %v730 = vadd.f32 %v701, %v729
  %731 = vdwg.mxu0
  %v732 = vmul.f32 %v597, 0.2
  %v733 = vmul.f32 %v713, 0.2
  %v734 = vmul.f32 %v599, 0.2
  %v735 = vmul.f32 %v715, 0.2
  %v736 = vmul.f32 %v602, 0.2
  %v737 = vmul.f32 %v718, 0.2
  %v738 = vmul.f32 %v604, 0.2
  %v739 = vmul.f32 %v720, 0.2
  %v740 = vmul.f32 %v607, 0.2
  %v741 = vmul.f32 %v723, 0.2
  %v742 = vmul.f32 %v609, 0.2
  %v743 = vmul.f32 %v725, 0.2
  %v744 = vmul.f32 %v612, 0.2
  %v745 = vmul.f32 %v728, 0.2
  %v746 = vmul.f32 %v614, 0.2
  %v747 = vmul.f32 %v730, 0.2
  %v748 = vmax.f32 %v597, %v732
  %v749 = vmax.f32 %v713, %v733
  %v750 = vmax.f32 %v599, %v734
  %v751 = vmax.f32 %v715, %v735
  %v752 = vmax.f32 %v602, %v736
  %v753 = vmax.f32 %v718, %v737
  %v754 = vmax.f32 %v604, %v738
  %v755 = vmax.f32 %v720, %v739
  %v756 = vmax.f32 %v607, %v740
  %v757 = vmax.f32 %v723, %v741
  %v758 = vmax.f32 %v609, %v742
  %v759 = vmax.f32 %v725, %v743
  %v760 = vmax.f32 %v612, %v744
  %v761 = vmax.f32 %v728, %v745
  %v762 = vmax.f32 %v614, %v746
  %v763 = vmax.f32 %v730, %v747
  %v764 = vpack.c.bf16 %v749, %v748
  %v765 = vpack.c.bf16 %v751, %v750
  %v766 = vpack.c.bf16 %v753, %v752
  %v767 = vpack.c.bf16 %v755, %v754
  %v768 = vpack.c.bf16 %v757, %v756
  %v769 = vpack.c.bf16 %v759, %v758
  %v770 = vpack.c.bf16 %v761, %v760
  %v771 = vpack.c.bf16 %v763, %v762
  %772 = vst [vmem:[%s3] sm:$0xff] %v764
  %773 = vst [vmem:[%s3 + $0x8] sm:$0xff] %v765
  %774 = vst [vmem:[%s3 + $0x10] sm:$0xff] %v766
  %775 = vst [vmem:[%s3 + $0x18] sm:$0xff] %v767
  %776 = vst [vmem:[%s3 + $0x20] sm:$0xff] %v768
  %777 = vst [vmem:[%s3 + $0x28] sm:$0xff] %v769
  %778 = vst [vmem:[%s3 + $0x30] sm:$0xff] %v770
  %779 = vst [vmem:[%s3 + $0x38] sm:$0xff] %v771
  // Predicated region
  $region14: #{autoencoder3d_forward.14} parent=0 // pred_check
    _
  $region15: #{autoencoder3d_forward.14} parent=0 // pred_check_branch
    %781 = sbr.rel (0) target = $region17
  $region16: #{autoencoder3d_forward.14} parent=0 // pred_region
    _
  $region17: #{autoencoder3d_forward.14} parent=0 // pred_fallthru
    _
  // Predicated region
  $region18: #{autoencoder3d_forward.14} parent=0 // pred_check
    _
  $region19: #{autoencoder3d_forward.14} parent=0 // pred_check_branch
    %783 = sbr.rel (0) target = $region21
  $region20: #{autoencoder3d_forward.14} parent=0 // pred_region
    _
  $region21: #{autoencoder3d_forward.14} parent=0 // pred_fallthru
    _

// kernel: autoencoder3d_forward.15
$region0: #{autoencoder3d_forward.15}
  #allocation0 [shape = 'u32[]', space=smem, size = 0x4, offset = 0x4, fixed_abs, tag = 'smem constant byte address 0x4 - core index']
  #allocation1 [shape = 'u32[72,128]{1,0:T(1,128)}', space=vmem, size = 0x9000, scoped, tag = 'internal scratch']
  %s0 = inlined_call_operand.vmem [shape: bf16[512,256], index: 0, kind: input, shape index: {}]
  %s1 = inlined_call_operand.vmem [shape: bf16[256,128], index: 1, kind: input, shape index: {}]
  %s2 = inlined_call_operand.vmem [shape: f32[1,128], index: 2, kind: input, shape index: {}]
  %s3 = inlined_call_operand.vmem [shape: f32[512,128], index: 3, kind: output, shape index: {}]
  %s4 = sld [smem:[#allocation0]]
  $region45: #{autoencoder3d_forward.15} parent=0
    _
  %s6 = ssub.s32 1, %s4
  %s7 = scalar_select 0, %s6, %s4
  loop: start=0, step=1, limit=4
  $region2: #{autoencoder3d_forward.15} parent=0 // loop_pre_header
    _
  $region3: #{autoencoder3d_forward.15} parent=0 // loop_header
    %s9 = sphi 0, %s13
    %p10 = scmp.ge.s32.totalorder %s9, 4
    %s16 = sphi 0, %s28
    %s17 = sphi 0, %s24
    %s18 = sphi 0, %s16
    %s19 = sphi 0, %s17
    %s20 = sphi 0, %s18
    %s21 = sphi 0, %s19
    %s31 = sphi 0, %s33
    %s34 = sphi 0, %s31
    %s35 = sphi 0, %s34
    %s51 = sphi 0, %s35
    %s57 = sphi 0, %s59
    %s60 = sphi 0, %s57
    %s61 = sphi 0, %s60
    %s77 = sphi 0, %s61
    %s83 = sphi 0, %s85
    %s86 = sphi 0, %s83
    %s87 = sphi 0, %s86
    %s103 = sphi 0, %s87
    %s111 = sphi 0, %s113
    %s114 = sphi 0, %s111
    %s115 = sphi 0, %s114
    %s131 = sphi 0, %s115
  $region4: #{autoencoder3d_forward.15} parent=0 // loop_header_branch
    %12 = sbr.rel (%p10) target = $region8
  $region5: #{autoencoder3d_forward.15} parent=0 // loop_body
    %s14 = ssub.s32 %s9, 1
    %s15 = ssub.s32 %s9, 2
    %s22 = sadd.s32 1, %s17
    %p23 = scmp.ge.s32.totalorder %s22, 1
    %s24 = scalar_select %p23, 0, %s22
    %s25 = sadd.s32 1, %s16
    %s26 = scalar_select %p23, %s25, %s16
    %p27 = scmp.ge.s32.totalorder %s26, 2
    %s28 = scalar_select %p27, 0, %s26
    %s29 = ssub.s32 %s16, %s28
    %p30 = scmp.eq.s32.totalorder %s29, 0
    %s32 = sadd.s32 %s31, 1
    %s33 = scalar_select %p30, %s31, %s32
    %p36 = pneg %p30
    %p37 = scmp.eq.s32.totalorder %s9, 1
    %p38 = por %p36, %p37
    %p39 = scmp.ne.s32.totalorder %s31, %s34
    %p40 = scmp.eq.s32.totalorder %s9, 0
    %p41 = por %p39, %p40
    %p42 = scmp.ne.s32.totalorder %s31, %s34
    %p43 = scmp.eq.s32.totalorder %s14, 1
    %p44 = por %p42, %p43
    %p45 = scmp.ne.s32.totalorder %s34, %s35
    %p46 = scmp.eq.s32.totalorder %s14, 0
    %p47 = por %p45, %p46
    %p48 = scmp.ne.s32.totalorder %s34, %s35
    %p49 = scmp.eq.s32.totalorder %s15, 1
    %p50 = por %p48, %p49
    %p52 = scmp.ne.s32.totalorder %s35, %s51
    %p53 = scmp.eq.s32.totalorder %s15, 0
    %p54 = por %p52, %p53
    %s55 = ssub.s32 %s17, %s24
    %p56 = scmp.eq.s32.totalorder %s55, 0
    %s58 = sadd.s32 %s57, 1
    %s59 = scalar_select %p56, %s57, %s58
    %p62 = pneg %p56
    %p63 = scmp.eq.s32.totalorder %s9, 1
    %p64 = por %p62, %p63
    %p65 = scmp.ne.s32.totalorder %s57, %s60
    %p66 = scmp.eq.s32.totalorder %s9, 0
    %p67 = por %p65, %p66
    %p68 = scmp.ne.s32.totalorder %s57, %s60
    %p69 = scmp.eq.s32.totalorder %s14, 1
    %p70 = por %p68, %p69
    %p71 = scmp.ne.s32.totalorder %s60, %s61
    %p72 = scmp.eq.s32.totalorder %s14, 0
    %p73 = por %p71, %p72
    %p74 = scmp.ne.s32.totalorder %s60, %s61
    %p75 = scmp.eq.s32.totalorder %s15, 1
    %p76 = por %p74, %p75
    %p78 = scmp.ne.s32.totalorder %s61, %s77
    %p79 = scmp.eq.s32.totalorder %s15, 0
    %p80 = por %p78, %p79
    %s81 = ssub.s32 %s17, %s24
    %p82 = scmp.eq.s32.totalorder %s81, 0
    %s84 = sadd.s32 %s83, 1
    %s85 = scalar_select %p82, %s83, %s84
    %p88 = pneg %p82
    %p89 = scmp.eq.s32.totalorder %s9, 1
    %p90 = por %p88, %p89
    %p91 = scmp.ne.s32.totalorder %s83, %s86
    %p92 = scmp.eq.s32.totalorder %s9, 0
    %p93 = por %p91, %p92
    %p94 = scmp.ne.s32.totalorder %s83, %s86
    %p95 = scmp.eq.s32.totalorder %s14, 1
    %p96 = por %p94, %p95
    %p97 = scmp.ne.s32.totalorder %s86, %s87
    %p98 = scmp.eq.s32.totalorder %s14, 0
    %p99 = por %p97, %p98
    %p100 = scmp.ne.s32.totalorder %s86, %s87
    %p101 = scmp.eq.s32.totalorder %s15, 1
    %p102 = por %p100, %p101
    %p104 = scmp.ne.s32.totalorder %s87, %s103
    %p105 = scmp.eq.s32.totalorder %s15, 0
    %p106 = por %p104, %p105
    %s107 = ssub.s32 %s16, %s28
    %s108 = ssub.s32 %s17, %s24
    %s109 = sor.u32 %s107, %s108
    %p110 = scmp.eq.s32.totalorder %s109, 0
    %s112 = sadd.s32 %s111, 1
    %s113 = scalar_select %p110, %s111, %s112
    %p116 = pneg %p110
    %p117 = scmp.eq.s32.totalorder %s9, 1
    %p118 = por %p116, %p117
    %p119 = scmp.ne.s32.totalorder %s111, %s114
    %p120 = scmp.eq.s32.totalorder %s9, 0
    %p121 = por %p119, %p120
    %p122 = scmp.ne.s32.totalorder %s111, %s114
    %p123 = scmp.eq.s32.totalorder %s14, 1
    %p124 = por %p122, %p123
    %p125 = scmp.ne.s32.totalorder %s114, %s115
    %p126 = scmp.eq.s32.totalorder %s14, 0
    %p127 = por %p125, %p126
    %p128 = scmp.ne.s32.totalorder %s114, %s115
    %p129 = scmp.eq.s32.totalorder %s15, 1
    %p130 = por %p128, %p129
    %p132 = scmp.ne.s32.totalorder %s115, %s131
    %p133 = scmp.eq.s32.totalorder %s15, 0
    %p134 = por %p132, %p133
    %p135 = scmp.le.s32.totalorder 1, %s9
    %p136 = scmp.lt.s32.totalorder %s9, 3
    %p137 = pnand %p135, %p136
    %p138 = pneg %p137
    // Predicated region
    $region9: #{autoencoder3d_forward.15} parent=5 // pred_check
      _
    $region10: #{autoencoder3d_forward.15} parent=5 // pred_check_branch
      %140 = sbr.rel (%p137) target = $region12
    $region11: #{autoencoder3d_forward.15} parent=5 // pred_region
      %s141 = ssub.s32 %s9, 1
      // Predicated region
      $region13: #{autoencoder3d_forward.15} parent=11 // pred_check
        %p142 = pneg %p73
      $region14: #{autoencoder3d_forward.15} parent=11 // pred_check_branch
        %144 = sbr.rel (%p142) target = $region16
      $region15: #{autoencoder3d_forward.15} parent=11 // pred_region
        %p145 = scmp.lt.s32.totalorder %s19, 0
        %s146 = scalar_select %p145, %s19, 0
        %s147 = smul.addr %s146, 4
        %s148 = scalar_lea.vmem %s1, %s147
      $region16: #{autoencoder3d_forward.15} parent=11 // pred_fallthru
        _
      // Predicated region
      $region17: #{autoencoder3d_forward.15} parent=11 // pred_check
        %p149 = pneg %p99
      $region18: #{autoencoder3d_forward.15} parent=11 // pred_check_branch
        %151 = sbr.rel (%p149) target = $region20
      $region19: #{autoencoder3d_forward.15} parent=11 // pred_region
        %p152 = scmp.lt.s32.totalorder %s19, 0
        %s153 = scalar_select %p152, %s19, 0
        %s154 = scalar_lea.vmem %s2, %s153
      $region20: #{autoencoder3d_forward.15} parent=11 // pred_fallthru
        _
    $region12: #{autoencoder3d_forward.15} parent=5 // pred_fallthru
      _
    %p155 = scmp.lt.s32.totalorder %s9, 2
    // Predicated region
    $region21: #{autoencoder3d_forward.15} parent=5 // pred_check
      %p156 = pneg %p155
    $region22: #{autoencoder3d_forward.15} parent=5 // pred_check_branch
      %158 = sbr.rel (%p156) target = $region24
    $region23: #{autoencoder3d_forward.15} parent=5 // pred_region
      // Predicated region
      $region25: #{autoencoder3d_forward.15} parent=23 // pred_check
        %p159 = pneg %p41
      $region26: #{autoencoder3d_forward.15} parent=23 // pred_check_branch
        %161 = sbr.rel (%p159) target = $region28
      $region27: #{autoencoder3d_forward.15} parent=23 // pred_region
        %s162 = smul.u32 32, %s16
        %p163 = scmp.lt.s32.totalorder %s162, 63
        %s164 = scalar_select %p163, %s162, 63
        %s165 = smul.addr %s164, 2
        %s166 = smul.addr %s165, 4
        %s167 = scalar_lea.vmem %s0, %s166
        %s168 = smul.u32 32, %s16
      $region28: #{autoencoder3d_forward.15} parent=23 // pred_fallthru
        _
    $region24: #{autoencoder3d_forward.15} parent=5 // pred_fallthru
      _
    %p169 = scmp.le.s32.totalorder 1, %s9
    %p170 = scmp.lt.s32.totalorder %s9, 3
    %p171 = pnand %p169, %p170
    %p172 = pneg %p171
    // Predicated region
    $region29: #{autoencoder3d_forward.15} parent=5 // pred_check
      _
    $region30: #{autoencoder3d_forward.15} parent=5 // pred_check_branch
      %174 = sbr.rel (%p171) target = $region32
    $region31: #{autoencoder3d_forward.15} parent=5 // pred_region
      %s175 = ssub.s32 %s9, 1
      %s176 = smul.u32 32, %s18
      %p177 = scmp.lt.s32.totalorder %s176, 63
      %s178 = scalar_select %p177, %s176, 63
      %s179 = smul.addr %s178, 2
      %s180 = smul.addr %s179, 4
      %s181 = scalar_lea.vmem %s0, %s180
      %p182 = pneg %p47
      %p183 = pneg %p44
      %p184 = scmp.lt.s32.totalorder %s19, 0
      %s185 = scalar_select %p184, %s19, 0
      %s186 = smul.addr %s185, 4
      %s187 = scalar_lea.vmem %s1, %s186
      %p188 = pneg %p73
      %p189 = pneg %p70
      %p190 = scmp.lt.s32.totalorder %s19, 0
      %s191 = scalar_select %p190, %s19, 0
      %s192 = scalar_lea.vmem %s2, %s191
      %p193 = pneg %p99
      %p194 = pneg %p96
      %p195 = pneg %p127
      %p196 = pneg %p124
      %s197 = smul.u32 32, %s18
      %p198 = scmp.lt.s32.totalorder %s197, 63
      %s199 = scalar_select %p198, %s197, 63
      %p200 = scmp.lt.s32.totalorder %s19, 0
      %s201 = scalar_select %p200, %s19, 0
      %s202 = sadd.s32 %s201, %s199
      %s203 = smul.addr %s202, 8
      %s204 = scalar_lea.vmem %s3, %s203
      %s205 = smul.u32 32, %s18
      %p206 = scmp.lt.s32.totalorder %s205, 63
      %s207 = scalar_select %p206, %s205, 63
      %s208 = smul.addr %s207, 2
      %s209 = smul.addr %s208, 4
      %s210 = scalar_lea.vmem %s0, %s209
      %s211 = smul.u32 32, %s18
      %p212 = scmp.lt.s32.totalorder %s19, 0
      %s213 = scalar_select %p212, %s19, 0
      %s214 = smul.addr %s213, 4
      %s215 = scalar_lea.vmem %s1, %s214
      %p216 = scmp.lt.s32.totalorder %s19, 0
      %s217 = scalar_select %p216, %s19, 0
      %s218 = scalar_lea.vmem %s2, %s217
      %s219 = smul.u32 32, %s18
      %p220 = scmp.lt.s32.totalorder %s219, 63
      %s221 = scalar_select %p220, %s219, 63
      %p222 = scmp.lt.s32.totalorder %s19, 0
      %s223 = scalar_select %p222, %s19, 0
      %s224 = sadd.s32 %s223, %s221
      %s225 = smul.addr %s224, 8
      %s226 = scalar_lea.vmem %s3, %s225
      %s227 = smul.u32 32, %s18
      %v228 = vld [vmem:[%s210] sm:$0xff]
      %v229 = vld [vmem:[%s210 + $0x8] sm:$0xff]
      %v230 = vld [vmem:[%s210 + $0x10] sm:$0xff]
      %v231 = vld [vmem:[%s210 + $0x18] sm:$0xff]
      %v232 = vld [vmem:[%s210 + $0x20] sm:$0xff]
      %v233 = vld [vmem:[%s210 + $0x28] sm:$0xff]
      %v234 = vld [vmem:[%s210 + $0x30] sm:$0xff]
      %v235 = vld [vmem:[%s210 + $0x38] sm:$0xff]
      %v236 = vld [vmem:[%s210 + $0x40] sm:$0xff]
      %v237 = vld [vmem:[%s210 + $0x48] sm:$0xff]
      %v238 = vld [vmem:[%s210 + $0x50] sm:$0xff]
      %v239 = vld [vmem:[%s210 + $0x58] sm:$0xff]
      %v240 = vld [vmem:[%s210 + $0x60] sm:$0xff]
      %v241 = vld [vmem:[%s210 + $0x68] sm:$0xff]
      %v242 = vld [vmem:[%s210 + $0x70] sm:$0xff]
      %v243 = vld [vmem:[%s210 + $0x78] sm:$0xff]
      %v244 = vld [vmem:[%s210 + $0x80] sm:$0xff]
      %v245 = vld [vmem:[%s210 + $0x88] sm:$0xff]
      %v246 = vld [vmem:[%s210 + $0x90] sm:$0xff]
      %v247 = vld [vmem:[%s210 + $0x98] sm:$0xff]
      %v248 = vld [vmem:[%s210 + $0xa0] sm:$0xff]
      %v249 = vld [vmem:[%s210 + $0xa8] sm:$0xff]
      %v250 = vld [vmem:[%s210 + $0xb0] sm:$0xff]
      %v251 = vld [vmem:[%s210 + $0xb8] sm:$0xff]
      %v252 = vld [vmem:[%s210 + $0xc0] sm:$0xff]
      %v253 = vld [vmem:[%s210 + $0xc8] sm:$0xff]
      %v254 = vld [vmem:[%s210 + $0xd0] sm:$0xff]
      %v255 = vld [vmem:[%s210 + $0xd8] sm:$0xff]
      %v256 = vld [vmem:[%s210 + $0xe0] sm:$0xff]
      %v257 = vld [vmem:[%s210 + $0xe8] sm:$0xff]
      %v258 = vld [vmem:[%s210 + $0xf0] sm:$0xff]
      %v259 = vld [vmem:[%s210 + $0xf8] sm:$0xff]
      %v260 = vld [vmem:[%s215] sm:$0xf]
      %v261 = vld [vmem:[%s215 + $0x4] sm:$0xf]
      %v262 = vld [vmem:[%s215 + $0x8] sm:$0xf]
      %v263 = vld [vmem:[%s215 + $0xc] sm:$0xf]
      %v264 = vld [vmem:[%s215 + $0x10] sm:$0xf]
      %v265 = vld [vmem:[%s215 + $0x14] sm:$0xf]
      %v266 = vld [vmem:[%s215 + $0x18] sm:$0xf]
      %v267 = vld [vmem:[%s215 + $0x1c] sm:$0xf]
      %v268 = vld [vmem:[%s215 + $0x20] sm:$0xf]
      %v269 = vld [vmem:[%s215 + $0x24] sm:$0xf]
      %v270 = vld [vmem:[%s215 + $0x28] sm:$0xf]
      %v271 = vld [vmem:[%s215 + $0x2c] sm:$0xf]
      %v272 = vld [vmem:[%s215 + $0x30] sm:$0xf]
      %v273 = vld [vmem:[%s215 + $0x34] sm:$0xf]
      %v274 = vld [vmem:[%s215 + $0x38] sm:$0xf]
      %v275 = vld [vmem:[%s215 + $0x3c] sm:$0xf]
      %v276 = vld [vmem:[%s215 + $0x40] sm:$0xf]
      %v277 = vld [vmem:[%s215 + $0x44] sm:$0xf]
      %v278 = vld [vmem:[%s215 + $0x48] sm:$0xf]
      %v279 = vld [vmem:[%s215 + $0x4c] sm:$0xf]
      %v280 = vld [vmem:[%s215 + $0x50] sm:$0xf]
      %v281 = vld [vmem:[%s215 + $0x54] sm:$0xf]
      %v282 = vld [vmem:[%s215 + $0x58] sm:$0xf]
      %v283 = vld [vmem:[%s215 + $0x5c] sm:$0xf]
      %v284 = vld [vmem:[%s215 + $0x60] sm:$0xf]
      %v285 = vld [vmem:[%s215 + $0x64] sm:$0xf]
      %v286 = vld [vmem:[%s215 + $0x68] sm:$0xf]
      %v287 = vld [vmem:[%s215 + $0x6c] sm:$0xf]
      %v288 = vld [vmem:[%s215 + $0x70] sm:$0xf]
      %v289 = vld [vmem:[%s215 + $0x74] sm:$0xf]
      %v290 = vld [vmem:[%s215 + $0x78] sm:$0xf]
      %v291 = vld [vmem:[%s215 + $0x7c] sm:$0xf]
      %v292 = vld [vmem:[%s218] sm:$0x1]
      %v294 = vperm.slane %v292, 0
      %v328 = vunpack.c.l.b16 %v228
      %v329 = vunpack.c.h.b16 %v228
      %v330 = vunpack.c.l.b16 %v229
      %v331 = vunpack.c.h.b16 %v229
      %v332 = vunpack.c.l.b16 %v230
      %v333 = vunpack.c.h.b16 %v230
      %v334 = vunpack.c.l.b16 %v231
      %v335 = vunpack.c.h.b16 %v231
      %v336 = vunpack.c.l.b16 %v232
      %v337 = vunpack.c.h.b16 %v232
      %v338 = vunpack.c.l.b16 %v233
      %v339 = vunpack.c.h.b16 %v233
      %v340 = vunpack.c.l.b16 %v234
      %v341 = vunpack.c.h.b16 %v234
      %v342 = vunpack.c.l.b16 %v235
      %v343 = vunpack.c.h.b16 %v235
      %v344 = vunpack.c.l.b16 %v236
      %v345 = vunpack.c.h.b16 %v236
      %v346 = vunpack.c.l.b16 %v237
      %v347 = vunpack.c.h.b16 %v237
      %v348 = vunpack.c.l.b16 %v238
      %v349 = vunpack.c.h.b16 %v238
      %v350 = vunpack.c.l.b16 %v239
      %v351 = vunpack.c.h.b16 %v239
      %v352 = vunpack.c.l.b16 %v240
      %v353 = vunpack.c.h.b16 %v240
      %v354 = vunpack.c.l.b16 %v241
      %v355 = vunpack.c.h.b16 %v241
      %v356 = vunpack.c.l.b16 %v242
      %v357 = vunpack.c.h.b16 %v242
      %v358 = vunpack.c.l.b16 %v243
      %v359 = vunpack.c.h.b16 %v243
      %v360 = vunpack.c.l.b16 %v244
      %v361 = vunpack.c.h.b16 %v244
      %v362 = vunpack.c.l.b16 %v245
      %v363 = vunpack.c.h.b16 %v245
      %v364 = vunpack.c.l.b16 %v246
      %v365 = vunpack.c.h.b16 %v246
      %v366 = vunpack.c.l.b16 %v247
      %v367 = vunpack.c.h.b16 %v247
      %v368 = vunpack.c.l.b16 %v248
      %v369 = vunpack.c.h.b16 %v248
      %v370 = vunpack.c.l.b16 %v249
      %v371 = vunpack.c.h.b16 %v249
      %v372 = vunpack.c.l.b16 %v250
      %v373 = vunpack.c.h.b16 %v250
      %v374 = vunpack.c.l.b16 %v251
      %v375 = vunpack.c.h.b16 %v251
      %v376 = vunpack.c.l.b16 %v252
      %v377 = vunpack.c.h.b16 %v252
      %v378 = vunpack.c.l.b16 %v253
      %v379 = vunpack.c.h.b16 %v253
      %v380 = vunpack.c.l.b16 %v254
      %v381 = vunpack.c.h.b16 %v254
      %v382 = vunpack.c.l.b16 %v255
      %v383 = vunpack.c.h.b16 %v255
      %v384 = vunpack.c.l.b16 %v256
      %v385 = vunpack.c.h.b16 %v256
      %v386 = vunpack.c.l.b16 %v257
      %v387 = vunpack.c.h.b16 %v257
      %v388 = vunpack.c.l.b16 %v258
      %v389 = vunpack.c.h.b16 %v258
      %v390 = vunpack.c.l.b16 %v259
      %v391 = vunpack.c.h.b16 %v259
      %v392 = vpack.c.b16 %v330, %v328
      %v393 = vpack.c.b16 %v331, %v329
      %v394 = vpack.c.b16 %v334, %v332
      %v395 = vpack.c.b16 %v335, %v333
      %v396 = vpack.c.b16 %v338, %v336
      %v397 = vpack.c.b16 %v339, %v337
      %v398 = vpack.c.b16 %v342, %v340
      %v399 = vpack.c.b16 %v343, %v341
      %v400 = vpack.c.b16 %v346, %v344
      %v401 = vpack.c.b16 %v347, %v345
      %v402 = vpack.c.b16 %v350, %v348
      %v403 = vpack.c.b16 %v351, %v349
      %v404 = vpack.c.b16 %v354, %v352
      %v405 = vpack.c.b16 %v355, %v353
      %v406 = vpack.c.b16 %v358, %v356
      %v407 = vpack.c.b16 %v359, %v357
      %v408 = vpack.c.b16 %v362, %v360
      %v409 = vpack.c.b16 %v363, %v361
      %v410 = vpack.c.b16 %v366, %v364
      %v411 = vpack.c.b16 %v367, %v365
      %v412 = vpack.c.b16 %v370, %v368
      %v413 = vpack.c.b16 %v371, %v369
      %v414 = vpack.c.b16 %v374, %v372
      %v415 = vpack.c.b16 %v375, %v373
      %v416 = vpack.c.b16 %v378, %v376
      %v417 = vpack.c.b16 %v379, %v377
      %v418 = vpack.c.b16 %v382, %v380
      %v419 = vpack.c.b16 %v383, %v381
      %v420 = vpack.c.b16 %v386, %v384
      %v421 = vpack.c.b16 %v387, %v385
      %v422 = vpack.c.b16 %v390, %v388
      %v423 = vpack.c.b16 %v391, %v389
      %v488 = vunpack.c.l.b16 %v260
      %v489 = vunpack.c.l.b16 %v261
      %v490 = vunpack.c.l.b16 %v262
      %v491 = vunpack.c.l.b16 %v263
      %v492 = vunpack.c.l.b16 %v264
      %v493 = vunpack.c.l.b16 %v265
      %v494 = vunpack.c.l.b16 %v266
      %v495 = vunpack.c.l.b16 %v267
      %v496 = vunpack.c.l.b16 %v268
      %v497 = vunpack.c.l.b16 %v269
      %v498 = vunpack.c.l.b16 %v270
      %v499 = vunpack.c.l.b16 %v271
      %v500 = vunpack.c.l.b16 %v272
      %v501 = vunpack.c.l.b16 %v273
      %v502 = vunpack.c.l.b16 %v274
      %v503 = vunpack.c.l.b16 %v275
      %v504 = vunpack.c.l.b16 %v276
      %v505 = vunpack.c.l.b16 %v277
      %v506 = vunpack.c.l.b16 %v278
      %v507 = vunpack.c.l.b16 %v279
      %v508 = vunpack.c.l.b16 %v280
      %v509 = vunpack.c.l.b16 %v281
      %v510 = vunpack.c.l.b16 %v282
      %v511 = vunpack.c.l.b16 %v283
      %v512 = vunpack.c.l.b16 %v284
      %v513 = vunpack.c.l.b16 %v285
      %v514 = vunpack.c.l.b16 %v286
      %v515 = vunpack.c.l.b16 %v287
      %v516 = vunpack.c.l.b16 %v288
      %v517 = vunpack.c.l.b16 %v289
      %v518 = vunpack.c.l.b16 %v290
      %v519 = vunpack.c.l.b16 %v291
      %v520 = vpack.c.b16 %v489, %v488
      %v521 = vpack.c.b16 %v491, %v490
      %v522 = vpack.c.b16 %v493, %v492
      %v523 = vpack.c.b16 %v495, %v494
      %v524 = vpack.c.b16 %v497, %v496
      %v525 = vpack.c.b16 %v499, %v498
      %v526 = vpack.c.b16 %v501, %v500
      %v527 = vpack.c.b16 %v503, %v502
      %v528 = vpack.c.b16 %v505, %v504
      %v529 = vpack.c.b16 %v507, %v506
      %v530 = vpack.c.b16 %v509, %v508
      %v531 = vpack.c.b16 %v511, %v510
      %v532 = vpack.c.b16 %v513, %v512
      %v533 = vpack.c.b16 %v515, %v514
      %v534 = vpack.c.b16 %v517, %v516
      %v535 = vpack.c.b16 %v519, %v518
      %552 = vmatpush.bf16.msra.mxu0 %v527
      %553 = vmatpush.bf16.msra.mxu0 %v526
      %554 = vmatpush.bf16.msra.mxu0 %v525
      %555 = vmatpush.bf16.msra.mxu0 %v524
      %556 = vmatpush.bf16.msra.mxu0 %v523
      %557 = vmatpush.bf16.msra.mxu0 %v522
      %558 = vmatpush.bf16.msra.mxu0 %v521
      %559 = vmatpush.bf16.msra.mxu0 %v520
      %560 = vmatmul.bf16.gmra.mxu0 %v392
      %v561 = vpop.f32.mrf.mxu0
      %v562 = vadd.f32 %v294, %v561
      %v563 = vpop.f32.mrf.mxu0
      %v564 = vadd.f32 %v294, %v563
      %565 = vmatmul.bf16.gmra.mxu0 %v394
      %v566 = vpop.f32.mrf.mxu0
      %v567 = vadd.f32 %v294, %v566
      %v568 = vpop.f32.mrf.mxu0
      %v569 = vadd.f32 %v294, %v568
      %570 = vmatmul.bf16.gmra.mxu0 %v396
      %v571 = vpop.f32.mrf.mxu0
      %v572 = vadd.f32 %v294, %v571
      %v573 = vpop.f32.mrf.mxu0
      %v574 = vadd.f32 %v294, %v573
      %575 = vmatmul.bf16.gmra.mxu0 %v398
      %v576 = vpop.f32.mrf.mxu0
      %v577 = vadd.f32 %v294, %v576
      %v578 = vpop.f32.mrf.mxu0
      %v579 = vadd.f32 %v294, %v578
      %580 = vmatmul.bf16.gmra.mxu0 %v400
      %v581 = vpop.f32.mrf.mxu0
      %v582 = vadd.f32 %v294, %v581
      %v583 = vpop.f32.mrf.mxu0
      %v584 = vadd.f32 %v294, %v583
      %585 = vmatmul.bf16.gmra.mxu0 %v402
      %v586 = vpop.f32.mrf.mxu0
      %v587 = vadd.f32 %v294, %v586
      %v588 = vpop.f32.mrf.mxu0
      %v589 = vadd.f32 %v294, %v588
      %590 = vmatmul.bf16.gmra.mxu0 %v404
      %v591 = vpop.f32.mrf.mxu0
      %v592 = vadd.f32 %v294, %v591
      %v593 = vpop.f32.mrf.mxu0
      %v594 = vadd.f32 %v294, %v593
      %595 = vmatmul.bf16.gmra.mxu0 %v406
      %v596 = vpop.f32.mrf.mxu0
      %v597 = vadd.f32 %v294, %v596
      %v598 = vpop.f32.mrf.mxu0
      %v599 = vadd.f32 %v294, %v598
      %600 = vmatmul.bf16.gmra.mxu0 %v408
      %v601 = vpop.f32.mrf.mxu0
      %v602 = vadd.f32 %v294, %v601
      %v603 = vpop.f32.mrf.mxu0
      %v604 = vadd.f32 %v294, %v603
      %605 = vmatmul.bf16.gmra.mxu0 %v410
      %v606 = vpop.f32.mrf.mxu0
      %v607 = vadd.f32 %v294, %v606
      %v608 = vpop.f32.mrf.mxu0
      %v609 = vadd.f32 %v294, %v608
      %610 = vmatmul.bf16.gmra.mxu0 %v412
      %v611 = vpop.f32.mrf.mxu0
      %v612 = vadd.f32 %v294, %v611
      %v613 = vpop.f32.mrf.mxu0
      %v614 = vadd.f32 %v294, %v613
      %615 = vmatmul.bf16.gmra.mxu0 %v414
      %v616 = vpop.f32.mrf.mxu0
      %v617 = vadd.f32 %v294, %v616
      %v618 = vpop.f32.mrf.mxu0
      %v619 = vadd.f32 %v294, %v618
      %620 = vmatmul.bf16.gmra.mxu0 %v416
      %v621 = vpop.f32.mrf.mxu0
      %v622 = vadd.f32 %v294, %v621
      %v623 = vpop.f32.mrf.mxu0
      %v624 = vadd.f32 %v294, %v623
      %625 = vmatmul.bf16.gmra.mxu0 %v418
      %v626 = vpop.f32.mrf.mxu0
      %v627 = vadd.f32 %v294, %v626
      %v628 = vpop.f32.mrf.mxu0
      %v629 = vadd.f32 %v294, %v628
      %630 = vmatmul.bf16.gmra.mxu0 %v420
      %v631 = vpop.f32.mrf.mxu0
      %v632 = vadd.f32 %v294, %v631
      %v633 = vpop.f32.mrf.mxu0
      %v634 = vadd.f32 %v294, %v633
      %635 = vmatmul.bf16.gmra.mxu0 %v422
      %v636 = vpop.f32.mrf.mxu0
      %v637 = vadd.f32 %v294, %v636
      %v638 = vpop.f32.mrf.mxu0
      %v639 = vadd.f32 %v294, %v638
      %640 = vdwg.mxu0
      %641 = vmatpush.bf16.msra.mxu0 %v535
      %642 = vmatpush.bf16.msra.mxu0 %v534
      %643 = vmatpush.bf16.msra.mxu0 %v533
      %644 = vmatpush.bf16.msra.mxu0 %v532
      %645 = vmatpush.bf16.msra.mxu0 %v531
      %646 = vmatpush.bf16.msra.mxu0 %v530
      %647 = vmatpush.bf16.msra.mxu0 %v529
      %648 = vmatpush.bf16.msra.mxu0 %v528
      %649 = vmatmul.bf16.gmra.mxu0 %v393
      %v650 = vpop.f32.mrf.mxu0
      %v651 = vadd.f32 %v562, %v650
      %v652 = vpop.f32.mrf.mxu0
      %v653 = vadd.f32 %v564, %v652
      %654 = vmatmul.bf16.gmra.mxu0 %v395
      %v655 = vpop.f32.mrf.mxu0
      %v656 = vadd.f32 %v567, %v655
      %v657 = vpop.f32.mrf.mxu0
      %v658 = vadd.f32 %v569, %v657
      %659 = vmatmul.bf16.gmra.mxu0 %v397
      %v660 = vpop.f32.mrf.mxu0
      %v661 = vadd.f32 %v572, %v660
      %v662 = vpop.f32.mrf.mxu0
      %v663 = vadd.f32 %v574, %v662
      %664 = vmatmul.bf16.gmra.mxu0 %v399
      %v665 = vpop.f32.mrf.mxu0
      %v666 = vadd.f32 %v577, %v665
      %v667 = vpop.f32.mrf.mxu0
      %v668 = vadd.f32 %v579, %v667
      %669 = vmatmul.bf16.gmra.mxu0 %v401
      %v670 = vpop.f32.mrf.mxu0
      %v671 = vadd.f32 %v582, %v670
      %v672 = vpop.f32.mrf.mxu0
      %v673 = vadd.f32 %v584, %v672
      %674 = vmatmul.bf16.gmra.mxu0 %v403
      %v675 = vpop.f32.mrf.mxu0
      %v676 = vadd.f32 %v587, %v675
      %v677 = vpop.f32.mrf.mxu0
      %v678 = vadd.f32 %v589, %v677
      %679 = vmatmul.bf16.gmra.mxu0 %v405
      %v680 = vpop.f32.mrf.mxu0
      %v681 = vadd.f32 %v592, %v680
      %v682 = vpop.f32.mrf.mxu0
      %v683 = vadd.f32 %v594, %v682
      %684 = vmatmul.bf16.gmra.mxu0 %v407
      %v685 = vpop.f32.mrf.mxu0
      %v686 = vadd.f32 %v597, %v685
      %v687 = vpop.f32.mrf.mxu0
      %v688 = vadd.f32 %v599, %v687
      %689 = vmatmul.bf16.gmra.mxu0 %v409
      %v690 = vpop.f32.mrf.mxu0
      %v691 = vadd.f32 %v602, %v690
      %v692 = vpop.f32.mrf.mxu0
      %v693 = vadd.f32 %v604, %v692
      %694 = vmatmul.bf16.gmra.mxu0 %v411
      %v695 = vpop.f32.mrf.mxu0
      %v696 = vadd.f32 %v607, %v695
      %v697 = vpop.f32.mrf.mxu0
      %v698 = vadd.f32 %v609, %v697
      %699 = vmatmul.bf16.gmra.mxu0 %v413
      %v700 = vpop.f32.mrf.mxu0
      %v701 = vadd.f32 %v612, %v700
      %v702 = vpop.f32.mrf.mxu0
      %v703 = vadd.f32 %v614, %v702
      %704 = vmatmul.bf16.gmra.mxu0 %v415
      %v705 = vpop.f32.mrf.mxu0
      %v706 = vadd.f32 %v617, %v705
      %v707 = vpop.f32.mrf.mxu0
      %v708 = vadd.f32 %v619, %v707
      %709 = vmatmul.bf16.gmra.mxu0 %v417
      %v710 = vpop.f32.mrf.mxu0
      %v711 = vadd.f32 %v622, %v710
      %v712 = vpop.f32.mrf.mxu0
      %v713 = vadd.f32 %v624, %v712
      %714 = vmatmul.bf16.gmra.mxu0 %v419
      %v715 = vpop.f32.mrf.mxu0
      %v716 = vadd.f32 %v627, %v715
      %v717 = vpop.f32.mrf.mxu0
      %v718 = vadd.f32 %v629, %v717
      %719 = vmatmul.bf16.gmra.mxu0 %v421
      %v720 = vpop.f32.mrf.mxu0
      %v721 = vadd.f32 %v632, %v720
      %v722 = vpop.f32.mrf.mxu0
      %v723 = vadd.f32 %v634, %v722
      %724 = vmatmul.bf16.gmra.mxu0 %v423
      %v725 = vpop.f32.mrf.mxu0
      %v726 = vadd.f32 %v637, %v725
      %v727 = vpop.f32.mrf.mxu0
      %v728 = vadd.f32 %v639, %v727
      %729 = vdwg.mxu0
      %v730 = vtanh.pop %v651
      %v731 = vtanh.pop %v653
      %v732 = vtanh.pop %v656
      %v733 = vtanh.pop %v658
      %v734 = vtanh.pop %v661
      %v735 = vtanh.pop %v663
      %v736 = vtanh.pop %v666
      %v737 = vtanh.pop %v668
      %v738 = vtanh.pop %v671
      %v739 = vtanh.pop %v673
      %v740 = vtanh.pop %v676
      %v741 = vtanh.pop %v678
      %v742 = vtanh.pop %v681
      %v743 = vtanh.pop %v683
      %v744 = vtanh.pop %v686
      %v745 = vtanh.pop %v688
      %v746 = vtanh.pop %v691
      %v747 = vtanh.pop %v693
      %v748 = vtanh.pop %v696
      %v749 = vtanh.pop %v698
      %v750 = vtanh.pop %v701
      %v751 = vtanh.pop %v703
      %v752 = vtanh.pop %v706
      %v753 = vtanh.pop %v708
      %v754 = vtanh.pop %v711
      %v755 = vtanh.pop %v713
      %v756 = vtanh.pop %v716
      %v757 = vtanh.pop %v718
      %v758 = vtanh.pop %v721
      %v759 = vtanh.pop %v723
      %v760 = vtanh.pop %v726
      %v761 = vtanh.pop %v728
      %762 = vst [vmem:[%s226] sm:$0xff] %v730
      %763 = vst [vmem:[%s226 + $0x8] sm:$0xff] %v731
      %764 = vst [vmem:[%s226 + $0x10] sm:$0xff] %v732
      %765 = vst [vmem:[%s226 + $0x18] sm:$0xff] %v733
      %766 = vst [vmem:[%s226 + $0x20] sm:$0xff] %v734
      %767 = vst [vmem:[%s226 + $0x28] sm:$0xff] %v735
      %768 = vst [vmem:[%s226 + $0x30] sm:$0xff] %v736
      %769 = vst [vmem:[%s226 + $0x38] sm:$0xff] %v737
      %770 = vst [vmem:[%s226 + $0x40] sm:$0xff] %v738
      %771 = vst [vmem:[%s226 + $0x48] sm:$0xff] %v739
      %772 = vst [vmem:[%s226 + $0x50] sm:$0xff] %v740
      %773 = vst [vmem:[%s226 + $0x58] sm:$0xff] %v741
      %774 = vst [vmem:[%s226 + $0x60] sm:$0xff] %v742
      %775 = vst [vmem:[%s226 + $0x68] sm:$0xff] %v743
      %776 = vst [vmem:[%s226 + $0x70] sm:$0xff] %v744
      %777 = vst [vmem:[%s226 + $0x78] sm:$0xff] %v745
      %778 = vst [vmem:[%s226 + $0x80] sm:$0xff] %v746
      %779 = vst [vmem:[%s226 + $0x88] sm:$0xff] %v747
      %780 = vst [vmem:[%s226 + $0x90] sm:$0xff] %v748
      %781 = vst [vmem:[%s226 + $0x98] sm:$0xff] %v749
      %782 = vst [vmem:[%s226 + $0xa0] sm:$0xff] %v750
      %783 = vst [vmem:[%s226 + $0xa8] sm:$0xff] %v751
      %784 = vst [vmem:[%s226 + $0xb0] sm:$0xff] %v752
      %785 = vst [vmem:[%s226 + $0xb8] sm:$0xff] %v753
      %786 = vst [vmem:[%s226 + $0xc0] sm:$0xff] %v754
      %787 = vst [vmem:[%s226 + $0xc8] sm:$0xff] %v755
      %788 = vst [vmem:[%s226 + $0xd0] sm:$0xff] %v756
      %789 = vst [vmem:[%s226 + $0xd8] sm:$0xff] %v757
      %790 = vst [vmem:[%s226 + $0xe0] sm:$0xff] %v758
      %791 = vst [vmem:[%s226 + $0xe8] sm:$0xff] %v759
      %792 = vst [vmem:[%s226 + $0xf0] sm:$0xff] %v760
      %793 = vst [vmem:[%s226 + $0xf8] sm:$0xff] %v761
      %s794 = smul.u32 32, %s18
      %p795 = scmp.lt.s32.totalorder %s794, 63
      %s796 = scalar_select %p795, %s794, 63
      %p797 = scmp.lt.s32.totalorder %s19, 0
      %s798 = scalar_select %p797, %s19, 0
      %s799 = sadd.s32 %s798, %s796
      %s800 = smul.addr %s799, 8
      %s801 = scalar_lea.vmem %s3, %s800
      // Predicated region
      $region33: #{autoencoder3d_forward.15} parent=31 // pred_check
        %p802 = pneg %p124
      $region34: #{autoencoder3d_forward.15} parent=31 // pred_check_branch
        %804 = sbr.rel (%p802) target = $region36
      $region35: #{autoencoder3d_forward.15} parent=31 // pred_region
        %s805 = smul.u32 32, %s18
      $region36: #{autoencoder3d_forward.15} parent=31 // pred_fallthru
        _
    $region32: #{autoencoder3d_forward.15} parent=5 // pred_fallthru
      _
    %p806 = scmp.le.s32.totalorder 2, %s9
    // Predicated region
    $region37: #{autoencoder3d_forward.15} parent=5 // pred_check
      %p807 = pneg %p806
    $region38: #{autoencoder3d_forward.15} parent=5 // pred_check_branch
      %809 = sbr.rel (%p807) target = $region40
    $region39: #{autoencoder3d_forward.15} parent=5 // pred_region
      %s810 = ssub.s32 %s9, 2
      // Predicated region
      $region41: #{autoencoder3d_forward.15} parent=39 // pred_check
        %p811 = pneg %p130
      $region42: #{autoencoder3d_forward.15} parent=39 // pred_check_branch
        %813 = sbr.rel (%p811) target = $region44
      $region43: #{autoencoder3d_forward.15} parent=39 // pred_region
        %s814 = smul.u32 32, %s20
        %p815 = scmp.lt.s32.totalorder %s814, 63
        %s816 = scalar_select %p815, %s814, 63
        %p817 = scmp.lt.s32.totalorder %s21, 0
        %s818 = scalar_select %p817, %s21, 0
        %s819 = sadd.s32 %s818, %s816
        %s820 = smul.addr %s819, 8
        %s821 = scalar_lea.vmem %s3, %s820
      $region44: #{autoencoder3d_forward.15} parent=39 // pred_fallthru
        _
    $region40: #{autoencoder3d_forward.15} parent=5 // pred_fallthru
      _
  $region6: #{autoencoder3d_forward.15} parent=0 // loop_footer
    %s13 = sadd.s32 1, %s9
  $region7: #{autoencoder3d_forward.15} parent=0 // loop_footer_branch
    %8 = sbr.rel target = $region3
  $region8: #{autoencoder3d_forward.15} parent=0 // loop_exit
    _

</llo_original>
